<compile_context>
chip_gen: v6e
topology: v6e:2x2x1
jax: 0.10.0
libtpu: 0.0.40
codegen_flags: <defaults>
</compile_context>

<pallas_src>
import functools
import math

import jax
import jax.numpy as jnp
from jax.experimental import pallas as pl
from jax.experimental.pallas import tpu as pltpu


def factorize(number, order):
    d = {(1, 3): [1, 1], (1, 4): [1, 1, 1], (3, 3): [1, 3], (3, 4): [1, 1, 3],
         (4, 3): [2, 2], (4, 4): [1, 2, 2], (8, 3): [2, 4], (8, 4): [2, 2, 2],
         (16, 3): [4, 4], (16, 4): [2, 2, 4], (32, 3): [4, 8], (32, 4): [2, 4, 4],
         (64, 3): [8, 8], (64, 4): [4, 4, 4], (128, 3): [8, 16], (128, 4): [4, 4, 8],
         (256, 3): [16, 16], (256, 4): [4, 8, 8], (512, 3): [16, 32],
         (512, 4): [8, 8, 8], (1024, 3): [32, 32], (1024, 4): [8, 8, 16]}
    return d[number, order]


def _round_up(x, m):
    return ((x + m - 1) // m) * m


# ----------------------------- Pallas conv kernel -----------------------------

def _conv2d_kernel(x_ref, w_ref, b_ref, o_ref, patch_ref, *, KH, KW, Cin, OH, OW, K):
    """im2col-in-VMEM + one MXU matmul per batch element, lane-dense stores.

    x_ref:     (BT, Hp, Wp, Cin)   padded bf16 NHWC input tile
    w_ref:     (Kp, Cp)            bf16 weight slab; rows [K:] and cols [Cout:] zero
    b_ref:     (1, Cp)             f32 bias (cols [Cout:] zero)
    o_ref:     (BT, OH*OW, Cp)     lane-dense (Cp = 128k) output tile
    patch_ref: (BT, OH, OW, Kp)    VMEM im2col scratch, K ordered (kh, kw, ci)
    """
    BT = x_ref.shape[0]
    Kp, Cp = w_ref.shape

    # Zero the K-pad columns every step.  Scratch persists per-core across grid
    # iterations, but with dimension_semantics=("parallel",) a step-0-only init
    # would leave the second TensorCore's pad lanes uninitialized (NaN * 0 = NaN
    # would corrupt the accumulator).  Per-step cost: one masked store region.
    if Kp > K:
        patch_ref[:, :, :, K:] = jnp.zeros((BT, OH, OW, Kp - K), patch_ref.dtype)

    # Stage the im2col patch with direct ref->ref slice copies: no per-tap value
    # relayouts and no tiny per-tap matmuls.
    # TODO(synk): if a bundle dump shows the 9 shifted taps dominate, stage one
    #             dense (BT, OH, Wp, Cin) row slab per kh and derive kw taps.
    for kh in range(KH):
        for kw in range(KW):
            k0 = (kh * KW + kw) * Cin
            patch_ref[:, :, :, k0:k0 + Cin] = (
                x_ref[:, pl.ds(kh, OH), pl.ds(kw, OW), :])

    w = w_ref[...]
    bias = b_ref[...]

    # One MXU matmul per batch element: (OH*OW, Kp) x (Kp, Cp), bf16 inputs with
    # f32 accumulation.  Chunking per element bounds the f32 accumulator to
    # (OH*OW, Cp) and every output store is a full 128-lane dense store.
    for b in range(BT):
        lhs = patch_ref[b].reshape(OH * OW, Kp)   # leading-dim merge of a
        #                                           lane-aligned value: a view.
        acc = jnp.dot(lhs, w, preferred_element_type=jnp.float32)
        acc = acc + bias                          # f32 epilogue
        o_ref[b, :, :] = acc.astype(o_ref.dtype)  # dense store, no reshape


# ------------------------------- tiling policy --------------------------------

def _vmem_policy():
    """Generation-aware VMEM budgets (v5e/v6e: 128 MiB physical; v7x: 64 MiB)."""
    kind = ""
    try:
        kind = jax.devices()[0].device_kind.lower()
    except Exception:
        pass
    is_v7x = "v7" in kind
    if is_v7x:
        budget, cap = 20 * 2 ** 20, 40 * 2 ** 20
    else:
        budget, cap = 80 * 2 ** 20, 96 * 2 ** 20
    try:  # never request more than ~75% of whatever this chip actually has
        phys = int(pltpu.get_tpu_info().vmem_capacity_bytes)
        cap = min(cap, (3 * phys) // 4)
        budget = min(budget, (5 * phys) // 8)
    except Exception:
        pass
    return budget, cap, is_v7x


def _pick_batch_tile(N, Hp, Wp, Cin, OH, OW, Kp, Cp, out_itemsize, budget, is_v7x,
                     max_bt=32):
    """Largest divisor of N whose per-step VMEM footprint fits the budget.
    On v7x prefer an even number (>=2) of grid steps so the 'parallel' axis
    balances across the two TensorCores."""
    def est_bytes(d):
        lane = lambda c: _round_up(c, 128)
        sub = lambda s: _round_up(s, 8)
        in_blk = 2 * d * Hp * sub(Wp) * lane(Cin) * 2            # 2x-buffered bf16 input
        patch = d * OH * sub(OW) * lane(Kp) * 2                  # im2col scratch
        out_blk = 2 * d * sub(OH * OW) * lane(Cp) * out_itemsize  # 2x-buffered output
        consts = 2 * (sub(Kp) * lane(Cp) * 2 + 8 * lane(Cp) * 4)  # weight + bias blocks
        return in_blk + patch + out_blk + consts

    fits = [d for d in range(1, N + 1)
            if N % d == 0 and d <= max_bt and est_bytes(d) <= budget]
    if not fits:
        # TODO(synk): very large images would additionally need OH-halo tiling.
        return 1, est_bytes(1)
    best = fits[-1]
    if is_v7x:
        for d in reversed(fits):
            steps = N // d
            if steps >= 2 and steps % 2 == 0:
                best = d
                break
    return best, est_bytes(best)


# ---------------------------------- wrapper ------------------------------------

def conv2d_pallas(x_nchw, weights_oihw, bias, padding, compute_dtype=jnp.bfloat16):
    """Zero-padded conv2d (stride=1, dilation=1, groups=1) with bias, via Pallas."""
    N, Cin, H, W = x_nchw.shape
    Cout, Cin_w, KH, KW = weights_oihw.shape
    assert Cin_w == Cin, "groups != 1 is not supported by the Pallas conv kernel."
    p = int(padding)
    assert p >= 0, "padding must be non-negative."

    # Glue: zero-pad, NCHW -> NHWC, cast matmul operands to bf16 (the TR cores
    # already approximate the weight; accumulation stays f32).
    # TODO(synk): fold the pad/transpose into the pallas_call input DMA
    #             (allow_input_fusion) to drop the extra HBM copy of x.
    x_pad = jnp.pad(x_nchw, ((0, 0), (0, 0), (p, p), (p, p)))
    x_nhwc = jnp.transpose(x_pad, (0, 2, 3, 1)).astype(compute_dtype)  # (N,Hp,Wp,Cin)

    Hp, Wp = H + 2 * p, W + 2 * p
    OH, OW = Hp - KH + 1, Wp - KW + 1
    K = KH * KW * Cin
    Kp = _round_up(K, 128)       # lane-aligned contraction (e.g. 144 -> 256)
    Cp = _round_up(Cout, 128)    # lane-dense output stores (e.g. 16 -> 128)

    # (O, I, KH, KW) -> (KH, KW, I, O) -> (K, Cout), zero-padded to (Kp, Cp).
    w2 = jnp.transpose(weights_oihw, (2, 3, 1, 0)).reshape(K, Cout)
    w_slab = jnp.zeros((Kp, Cp), compute_dtype).at[:K, :Cout].set(
        w2.astype(compute_dtype))
    b_slab = jnp.zeros((1, Cp), jnp.float32).at[0, :Cout].set(
        bias.astype(jnp.float32))

    out_dtype = x_nchw.dtype
    out_itemsize = jnp.dtype(out_dtype).itemsize
    budget, cap, is_v7x = _vmem_policy()
    BT, est = _pick_batch_tile(N, Hp, Wp, Cin, OH, OW, Kp, Cp, out_itemsize,
                               budget, is_v7x)
    grid = (N // BT,)
    vmem_limit = int(min(max(2 * est, 8 * 2 ** 20), cap))

    flops = 2 * N * OH * OW * Kp * Cp
    bytes_accessed = int(x_nhwc.size * 2 + w_slab.size * 2 + b_slab.size * 4
                         + N * OH * OW * Cp * out_itemsize)

    kernel = functools.partial(_conv2d_kernel, KH=KH, KW=KW, Cin=Cin,
                               OH=OH, OW=OW, K=K)

    # TODO(synk): pipeline_mode=pl.Buffered(1) on the constant weight/bias specs
    #             would drop their redundant second pipeline buffer; left out
    #             until single-buffer lowering support is confirmed on all gens.
    out = pl.pallas_call(
        kernel,
        out_shape=jax.ShapeDtypeStruct((N, OH * OW, Cp), out_dtype),
        grid=grid,
        in_specs=[
            pl.BlockSpec((BT, Hp, Wp, Cin), lambda n: (n, 0, 0, 0)),
            # Constant index maps -> weight/bias blocks stay VMEM-resident.
            pl.BlockSpec((Kp, Cp), lambda n: (0, 0)),
            pl.BlockSpec((1, Cp), lambda n: (0, 0)),
        ],
        out_specs=pl.BlockSpec((BT, OH * OW, Cp), lambda n: (n, 0, 0)),
        scratch_shapes=[pltpu.VMEM((BT, OH, OW, Kp), compute_dtype)],
        compiler_params=pltpu.CompilerParams(
            dimension_semantics=("parallel",),
            vmem_limit_bytes=vmem_limit),
        cost_estimate=pl.CostEstimate(flops=flops, transcendentals=0,
                                      bytes_accessed=bytes_accessed),
    )(x_nhwc, w_slab, b_slab)

    # Lane-dense (N, OH*OW, Cp) -> slice real channels -> NCHW.
    out = out[:, :, :Cout]                               # (N, OH*OW, Cout)
    out = jnp.transpose(out, (0, 2, 1)).reshape(N, Cout, OH, OW)
    return out


# ------------------------ RTR-O4 parameter construction ------------------------

def init_rtr_o4_params(key, in_channels, out_channels, kernel_size, ranks, groups=1):
    """Deterministic init matching RTR_O4_Conv2d.init_params (uniform +/- bound)."""
    order = 4
    in_shape = factorize(in_channels // groups, order)
    out_shape = factorize(out_channels // groups, order)
    keys = jax.random.split(key, order)
    kernels = []
    for l in range(order - 1):
        fan_in = in_shape[l] * ranks
        fan_out = out_shape[l] * ranks
        bound = math.sqrt(6.0 / (fan_in + fan_out))
        kernels.append(jax.random.uniform(
            keys[l], (in_shape[l], out_shape[l], ranks, ranks),
            jnp.float32, -bound, bound))
    fan_in = kernel_size * kernel_size * ranks
    fan_out = kernel_size * kernel_size * 1
    bound = math.sqrt(6.0 / (fan_in + fan_out))
    kernels.append(jax.random.uniform(
        keys[order - 1], (kernel_size, kernel_size, groups, ranks, ranks),
        jnp.float32, -bound, bound))
    bias = jnp.zeros((out_channels,), jnp.float32)
    return kernels, bias


def assemble_rtr_o4_weights(kernels, in_channels, out_channels, kernel_size, groups=1):
    """Exactly mirrors the three torch.einsum contractions + reshape of forward()."""
    weights_l = jnp.einsum('iaur,jbrs->ijabus', kernels[0], kernels[1])
    weights_r = jnp.einsum('kcst,ghwtu->ghwkcsu', kernels[2], kernels[3])
    weights = jnp.einsum('ijabus,ghwkcsu->gijkabchw', weights_l, weights_r)
    return weights.reshape(out_channels, in_channels // groups,
                           kernel_size, kernel_size)


def rtr_o4_conv2d_forward(x_nchw, kernels, bias, in_channels, out_channels,
                          kernel_size, padding, stride=1, dilation=1, groups=1,
                          padding_mode='zeros', compute_dtype=jnp.bfloat16):
    # Fail loudly on anything the Pallas conv path does not implement.
    assert (stride == 1 and dilation == 1 and groups == 1
            and padding_mode == 'zeros'), (
        "Pallas RTR_O4_Conv2d path supports stride=1, dilation=1, groups=1, "
        "padding_mode='zeros' only.")  # TODO(synk): wire the general cases.
    weights = assemble_rtr_o4_weights(kernels, in_channels, out_channels,
                                      kernel_size, groups)
    return conv2d_pallas(x_nchw, weights, bias, padding, compute_dtype=compute_dtype)


# ------------------------------------ main ------------------------------------

if __name__ == "__main__":
    # Small config consistent with the module: 16 -> 16 channels, 3x3 kernel,
    # order-4 TR decomposition with ranks=4, padding=1, stride=1, groups=1.
    batch, in_channels, out_channels = 4, 16, 16
    H = W = 16
    kernel_size, padding, ranks = 3, 1, 4

    key = jax.random.PRNGKey(0)
    key_x, key_p = jax.random.split(key)

    x = jax.random.normal(key_x, (batch, in_channels, H, W), jnp.float32)
    kernels, bias = init_rtr_o4_params(key_p, in_channels, out_channels,
                                       kernel_size, ranks)

    out = rtr_o4_conv2d_forward(x, kernels, bias, in_channels, out_channels,
                                kernel_size, padding)
    out = jax.block_until_ready(out)

    # Sanity check against an XLA reference conv fed the *same* bf16 operands
    # (the Pallas kernel computes bf16 x bf16 with f32 accumulation).
    w_full = assemble_rtr_o4_weights(kernels, in_channels, out_channels, kernel_size)
    ref = jax.lax.conv_general_dilated(
        x.astype(jnp.bfloat16), w_full.astype(jnp.bfloat16),
        window_strides=(1, 1),
        padding=((padding, padding), (padding, padding)),
        dimension_numbers=('NCHW', 'OIHW', 'NCHW'),
        preferred_element_type=jnp.float32) + bias.reshape(1, -1, 1, 1)
    ref = jax.block_until_ready(ref)

    assert out.shape == (batch, out_channels, H, W), out.shape
    max_err = float(jnp.max(jnp.abs(out.astype(jnp.float32) - ref)))
    assert max_err < 2e-2, max_err
    print("KERNEL_OK")
</pallas_src>

<mosaic_0001>
module attributes {stable_mosaic.version = 11 : i64} {
  func.func @_conv2d_kernel(%arg0: i32, %arg1: memref<4x18x18x16xbf16, #tpu.memory_space<vmem>>, %arg2: memref<256x128xbf16, #tpu.memory_space<vmem>>, %arg3: memref<1x128xf32, #tpu.memory_space<vmem>>, %arg4: memref<4x256x128xf32, #tpu.memory_space<vmem>>, %arg5: memref<4x16x16x256xbf16, #tpu.memory_space<vmem>>) attributes {dimension_semantics = [#tpu.dimension_semantics<parallel>], iteration_bounds = array<i64: 1>, scalar_prefetch = 0 : i64, scratch_operands = 1 : i64, tpu.core_type = #tpu.core_type<tc>, window_params = [{transform_indices = @transform_0, window_bounds = array<i64: 4, 18, 18, 16>}, {pipeline_mode = #tpu.pipeline_mode<synchronous>, transform_indices = @transform_1, window_bounds = array<i64: 256, 128>}, {pipeline_mode = #tpu.pipeline_mode<synchronous>, transform_indices = @transform_2, window_bounds = array<i64: 1, 128>}, {transform_indices = @transform_3, window_bounds = array<i64: 4, 256, 128>}]} {
    %cst = arith.constant 0.000000e+00 : bf16
    %0 = vector.broadcast %cst : bf16 to vector<4x16x16x112xbf16>
    %c0 = arith.constant 0 : index
    %c0_0 = arith.constant 0 : index
    %c0_1 = arith.constant 0 : index
    %c144 = arith.constant 144 : index
    %1 = vector.load %arg5[%c0, %c0_0, %c0_1, %c144] : memref<4x16x16x256xbf16, #tpu.memory_space<vmem>>, vector<4x16x16x112xbf16>
    tpu.vector_store %arg5[%c0, %c0_0, %c0_1, %c144], %0 {strides = array<i32>} : memref<4x16x16x256xbf16, #tpu.memory_space<vmem>>, vector<4x16x16x112xbf16>,
    %c0_2 = arith.constant 0 : index
    %c0_3 = arith.constant 0 : index
    %c0_4 = arith.constant 0 : index
    %c0_5 = arith.constant 0 : index
    %2 = vector.load %arg1[%c0_2, %c0_3, %c0_4, %c0_5] : memref<4x18x18x16xbf16, #tpu.memory_space<vmem>>, vector<4x16x16x16xbf16>
    %c0_6 = arith.constant 0 : index
    %c0_7 = arith.constant 0 : index
    %c0_8 = arith.constant 0 : index
    %c0_9 = arith.constant 0 : index
    %3 = vector.load %arg5[%c0_6, %c0_7, %c0_8, %c0_9] : memref<4x16x16x256xbf16, #tpu.memory_space<vmem>>, vector<4x16x16x16xbf16>
    tpu.vector_store %arg5[%c0_6, %c0_7, %c0_8, %c0_9], %2 {strides = array<i32>} : memref<4x16x16x256xbf16, #tpu.memory_space<vmem>>, vector<4x16x16x16xbf16>,
    %c0_10 = arith.constant 0 : index
    %c0_11 = arith.constant 0 : index
    %c1 = arith.constant 1 : index
    %c0_12 = arith.constant 0 : index
    %4 = vector.load %arg1[%c0_10, %c0_11, %c1, %c0_12] : memref<4x18x18x16xbf16, #tpu.memory_space<vmem>>, vector<4x16x16x16xbf16>
    %c0_13 = arith.constant 0 : index
    %c0_14 = arith.constant 0 : index
    %c0_15 = arith.constant 0 : index
    %c16 = arith.constant 16 : index
    %5 = vector.load %arg5[%c0_13, %c0_14, %c0_15, %c16] : memref<4x16x16x256xbf16, #tpu.memory_space<vmem>>, vector<4x16x16x16xbf16>
    tpu.vector_store %arg5[%c0_13, %c0_14, %c0_15, %c16], %4 {strides = array<i32>} : memref<4x16x16x256xbf16, #tpu.memory_space<vmem>>, vector<4x16x16x16xbf16>,
    %c0_16 = arith.constant 0 : index
    %c0_17 = arith.constant 0 : index
    %c2 = arith.constant 2 : index
    %c0_18 = arith.constant 0 : index
    %6 = vector.load %arg1[%c0_16, %c0_17, %c2, %c0_18] : memref<4x18x18x16xbf16, #tpu.memory_space<vmem>>, vector<4x16x16x16xbf16>
    %c0_19 = arith.constant 0 : index
    %c0_20 = arith.constant 0 : index
    %c0_21 = arith.constant 0 : index
    %c32 = arith.constant 32 : index
    %7 = vector.load %arg5[%c0_19, %c0_20, %c0_21, %c32] : memref<4x16x16x256xbf16, #tpu.memory_space<vmem>>, vector<4x16x16x16xbf16>
    tpu.vector_store %arg5[%c0_19, %c0_20, %c0_21, %c32], %6 {strides = array<i32>} : memref<4x16x16x256xbf16, #tpu.memory_space<vmem>>, vector<4x16x16x16xbf16>,
    %c0_22 = arith.constant 0 : index
    %c1_23 = arith.constant 1 : index
    %c0_24 = arith.constant 0 : index
    %c0_25 = arith.constant 0 : index
    %8 = vector.load %arg1[%c0_22, %c1_23, %c0_24, %c0_25] : memref<4x18x18x16xbf16, #tpu.memory_space<vmem>>, vector<4x16x16x16xbf16>
    %c0_26 = arith.constant 0 : index
    %c0_27 = arith.constant 0 : index
    %c0_28 = arith.constant 0 : index
    %c48 = arith.constant 48 : index
    %9 = vector.load %arg5[%c0_26, %c0_27, %c0_28, %c48] : memref<4x16x16x256xbf16, #tpu.memory_space<vmem>>, vector<4x16x16x16xbf16>
    tpu.vector_store %arg5[%c0_26, %c0_27, %c0_28, %c48], %8 {strides = array<i32>} : memref<4x16x16x256xbf16, #tpu.memory_space<vmem>>, vector<4x16x16x16xbf16>,
    %c0_29 = arith.constant 0 : index
    %c1_30 = arith.constant 1 : index
    %c1_31 = arith.constant 1 : index
    %c0_32 = arith.constant 0 : index
    %10 = vector.load %arg1[%c0_29, %c1_30, %c1_31, %c0_32] : memref<4x18x18x16xbf16, #tpu.memory_space<vmem>>, vector<4x16x16x16xbf16>
    %c0_33 = arith.constant 0 : index
    %c0_34 = arith.constant 0 : index
    %c0_35 = arith.constant 0 : index
    %c64 = arith.constant 64 : index
    %11 = vector.load %arg5[%c0_33, %c0_34, %c0_35, %c64] : memref<4x16x16x256xbf16, #tpu.memory_space<vmem>>, vector<4x16x16x16xbf16>
    tpu.vector_store %arg5[%c0_33, %c0_34, %c0_35, %c64], %10 {strides = array<i32>} : memref<4x16x16x256xbf16, #tpu.memory_space<vmem>>, vector<4x16x16x16xbf16>,
    %c0_36 = arith.constant 0 : index
    %c1_37 = arith.constant 1 : index
    %c2_38 = arith.constant 2 : index
    %c0_39 = arith.constant 0 : index
    %12 = vector.load %arg1[%c0_36, %c1_37, %c2_38, %c0_39] : memref<4x18x18x16xbf16, #tpu.memory_space<vmem>>, vector<4x16x16x16xbf16>
    %c0_40 = arith.constant 0 : index
    %c0_41 = arith.constant 0 : index
    %c0_42 = arith.constant 0 : index
    %c80 = arith.constant 80 : index
    %13 = vector.load %arg5[%c0_40, %c0_41, %c0_42, %c80] : memref<4x16x16x256xbf16, #tpu.memory_space<vmem>>, vector<4x16x16x16xbf16>
    tpu.vector_store %arg5[%c0_40, %c0_41, %c0_42, %c80], %12 {strides = array<i32>} : memref<4x16x16x256xbf16, #tpu.memory_space<vmem>>, vector<4x16x16x16xbf16>,
    %c0_43 = arith.constant 0 : index
    %c2_44 = arith.constant 2 : index
    %c0_45 = arith.constant 0 : index
    %c0_46 = arith.constant 0 : index
    %14 = vector.load %arg1[%c0_43, %c2_44, %c0_45, %c0_46] : memref<4x18x18x16xbf16, #tpu.memory_space<vmem>>, vector<4x16x16x16xbf16>
    %c0_47 = arith.constant 0 : index
    %c0_48 = arith.constant 0 : index
    %c0_49 = arith.constant 0 : index
    %c96 = arith.constant 96 : index
    %15 = vector.load %arg5[%c0_47, %c0_48, %c0_49, %c96] : memref<4x16x16x256xbf16, #tpu.memory_space<vmem>>, vector<4x16x16x16xbf16>
    tpu.vector_store %arg5[%c0_47, %c0_48, %c0_49, %c96], %14 {strides = array<i32>} : memref<4x16x16x256xbf16, #tpu.memory_space<vmem>>, vector<4x16x16x16xbf16>,
    %c0_50 = arith.constant 0 : index
    %c2_51 = arith.constant 2 : index
    %c1_52 = arith.constant 1 : index
    %c0_53 = arith.constant 0 : index
    %16 = vector.load %arg1[%c0_50, %c2_51, %c1_52, %c0_53] : memref<4x18x18x16xbf16, #tpu.memory_space<vmem>>, vector<4x16x16x16xbf16>
    %c0_54 = arith.constant 0 : index
    %c0_55 = arith.constant 0 : index
    %c0_56 = arith.constant 0 : index
    %c112 = arith.constant 112 : index
    %17 = vector.load %arg5[%c0_54, %c0_55, %c0_56, %c112] : memref<4x16x16x256xbf16, #tpu.memory_space<vmem>>, vector<4x16x16x16xbf16>
    tpu.vector_store %arg5[%c0_54, %c0_55, %c0_56, %c112], %16 {strides = array<i32>} : memref<4x16x16x256xbf16, #tpu.memory_space<vmem>>, vector<4x16x16x16xbf16>,
    %c0_57 = arith.constant 0 : index
    %c2_58 = arith.constant 2 : index
    %c2_59 = arith.constant 2 : index
    %c0_60 = arith.constant 0 : index
    %18 = vector.load %arg1[%c0_57, %c2_58, %c2_59, %c0_60] : memref<4x18x18x16xbf16, #tpu.memory_space<vmem>>, vector<4x16x16x16xbf16>
    %c0_61 = arith.constant 0 : index
    %c0_62 = arith.constant 0 : index
    %c0_63 = arith.constant 0 : index
    %c128 = arith.constant 128 : index
    %19 = vector.load %arg5[%c0_61, %c0_62, %c0_63, %c128] : memref<4x16x16x256xbf16, #tpu.memory_space<vmem>>, vector<4x16x16x16xbf16>
    tpu.vector_store %arg5[%c0_61, %c0_62, %c0_63, %c128], %18 {strides = array<i32>} : memref<4x16x16x256xbf16, #tpu.memory_space<vmem>>, vector<4x16x16x16xbf16>,
    %c0_64 = arith.constant 0 : index
    %c0_65 = arith.constant 0 : index
    %20 = vector.load %arg2[%c0_64, %c0_65] : memref<256x128xbf16, #tpu.memory_space<vmem>>, vector<256x128xbf16>
    %c0_66 = arith.constant 0 : index
    %c0_67 = arith.constant 0 : index
    %21 = vector.load %arg3[%c0_66, %c0_67] : memref<1x128xf32, #tpu.memory_space<vmem>>, vector<1x128xf32>
    %c0_68 = arith.constant 0 : index
    %c0_69 = arith.constant 0 : index
    %c0_70 = arith.constant 0 : index
    %c0_71 = arith.constant 0 : index
    %22 = vector.load %arg5[%c0_68, %c0_69, %c0_70, %c0_71] : memref<4x16x16x256xbf16, #tpu.memory_space<vmem>>, vector<1x16x16x256xbf16>
    %23 = vector.shape_cast %22 : vector<1x16x16x256xbf16> to vector<16x16x256xbf16>
    %24 = vector.shape_cast %23 : vector<16x16x256xbf16> to vector<256x256xbf16>
    %cst_72 = arith.constant dense<0.000000e+00> : vector<256x128xf32>
    %25 = tpu.matmul %24, %20, %cst_72 {dimension_numbers = #tpu.dot_dimension_numbers<[1], [0], [0], [1], [0, 0, 1, 1], [], []>} : vector<256x256xbf16>, vector<256x128xbf16>, vector<256x128xf32> -> vector<256x128xf32>
    %26 = vector.broadcast %21 : vector<1x128xf32> to vector<256x128xf32>
    %27 = arith.addf %25, %26 : vector<256x128xf32>
    %c0_73 = arith.constant 0 : index
    %c0_74 = arith.constant 0 : index
    %c0_75 = arith.constant 0 : index
    %28 = vector.load %arg4[%c0_73, %c0_74, %c0_75] : memref<4x256x128xf32, #tpu.memory_space<vmem>>, vector<1x256x128xf32>
    %29 = vector.shape_cast %28 : vector<1x256x128xf32> to vector<256x128xf32>
    %30 = vector.shape_cast %27 : vector<256x128xf32> to vector<1x256x128xf32>
    tpu.vector_store %arg4[%c0_73, %c0_74, %c0_75], %30 {strides = array<i32>} : memref<4x256x128xf32, #tpu.memory_space<vmem>>, vector<1x256x128xf32>,
    %c1_76 = arith.constant 1 : index
    %c0_77 = arith.constant 0 : index
    %c0_78 = arith.constant 0 : index
    %c0_79 = arith.constant 0 : index
    %31 = vector.load %arg5[%c1_76, %c0_77, %c0_78, %c0_79] : memref<4x16x16x256xbf16, #tpu.memory_space<vmem>>, vector<1x16x16x256xbf16>
    %32 = vector.shape_cast %31 : vector<1x16x16x256xbf16> to vector<16x16x256xbf16>
    %33 = vector.shape_cast %32 : vector<16x16x256xbf16> to vector<256x256xbf16>
    %cst_80 = arith.constant dense<0.000000e+00> : vector<256x128xf32>
    %34 = tpu.matmul %33, %20, %cst_80 {dimension_numbers = #tpu.dot_dimension_numbers<[1], [0], [0], [1], [0, 0, 1, 1], [], []>} : vector<256x256xbf16>, vector<256x128xbf16>, vector<256x128xf32> -> vector<256x128xf32>
    %35 = vector.broadcast %21 : vector<1x128xf32> to vector<256x128xf32>
    %36 = arith.addf %34, %35 : vector<256x128xf32>
    %c1_81 = arith.constant 1 : index
    %c0_82 = arith.constant 0 : index
    %c0_83 = arith.constant 0 : index
    %37 = vector.load %arg4[%c1_81, %c0_82, %c0_83] : memref<4x256x128xf32, #tpu.memory_space<vmem>>, vector<1x256x128xf32>
    %38 = vector.shape_cast %37 : vector<1x256x128xf32> to vector<256x128xf32>
    %39 = vector.shape_cast %36 : vector<256x128xf32> to vector<1x256x128xf32>
    tpu.vector_store %arg4[%c1_81, %c0_82, %c0_83], %39 {strides = array<i32>} : memref<4x256x128xf32, #tpu.memory_space<vmem>>, vector<1x256x128xf32>,
    %c2_84 = arith.constant 2 : index
    %c0_85 = arith.constant 0 : index
    %c0_86 = arith.constant 0 : index
    %c0_87 = arith.constant 0 : index
    %40 = vector.load %arg5[%c2_84, %c0_85, %c0_86, %c0_87] : memref<4x16x16x256xbf16, #tpu.memory_space<vmem>>, vector<1x16x16x256xbf16>
    %41 = vector.shape_cast %40 : vector<1x16x16x256xbf16> to vector<16x16x256xbf16>
    %42 = vector.shape_cast %41 : vector<16x16x256xbf16> to vector<256x256xbf16>
    %cst_88 = arith.constant dense<0.000000e+00> : vector<256x128xf32>
    %43 = tpu.matmul %42, %20, %cst_88 {dimension_numbers = #tpu.dot_dimension_numbers<[1], [0], [0], [1], [0, 0, 1, 1], [], []>} : vector<256x256xbf16>, vector<256x128xbf16>, vector<256x128xf32> -> vector<256x128xf32>
    %44 = vector.broadcast %21 : vector<1x128xf32> to vector<256x128xf32>
    %45 = arith.addf %43, %44 : vector<256x128xf32>
    %c2_89 = arith.constant 2 : index
    %c0_90 = arith.constant 0 : index
    %c0_91 = arith.constant 0 : index
    %46 = vector.load %arg4[%c2_89, %c0_90, %c0_91] : memref<4x256x128xf32, #tpu.memory_space<vmem>>, vector<1x256x128xf32>
    %47 = vector.shape_cast %46 : vector<1x256x128xf32> to vector<256x128xf32>
    %48 = vector.shape_cast %45 : vector<256x128xf32> to vector<1x256x128xf32>
    tpu.vector_store %arg4[%c2_89, %c0_90, %c0_91], %48 {strides = array<i32>} : memref<4x256x128xf32, #tpu.memory_space<vmem>>, vector<1x256x128xf32>,
    %c3 = arith.constant 3 : index
    %c0_92 = arith.constant 0 : index
    %c0_93 = arith.constant 0 : index
    %c0_94 = arith.constant 0 : index
    %49 = vector.load %arg5[%c3, %c0_92, %c0_93, %c0_94] : memref<4x16x16x256xbf16, #tpu.memory_space<vmem>>, vector<1x16x16x256xbf16>
    %50 = vector.shape_cast %49 : vector<1x16x16x256xbf16> to vector<16x16x256xbf16>
    %51 = vector.shape_cast %50 : vector<16x16x256xbf16> to vector<256x256xbf16>
    %cst_95 = arith.constant dense<0.000000e+00> : vector<256x128xf32>
    %52 = tpu.matmul %51, %20, %cst_95 {dimension_numbers = #tpu.dot_dimension_numbers<[1], [0], [0], [1], [0, 0, 1, 1], [], []>} : vector<256x256xbf16>, vector<256x128xbf16>, vector<256x128xf32> -> vector<256x128xf32>
    %53 = vector.broadcast %21 : vector<1x128xf32> to vector<256x128xf32>
    %54 = arith.addf %52, %53 : vector<256x128xf32>
    %c3_96 = arith.constant 3 : index
    %c0_97 = arith.constant 0 : index
    %c0_98 = arith.constant 0 : index
    %55 = vector.load %arg4[%c3_96, %c0_97, %c0_98] : memref<4x256x128xf32, #tpu.memory_space<vmem>>, vector<1x256x128xf32>
    %56 = vector.shape_cast %55 : vector<1x256x128xf32> to vector<256x128xf32>
    %57 = vector.shape_cast %54 : vector<256x128xf32> to vector<1x256x128xf32>
    tpu.vector_store %arg4[%c3_96, %c0_97, %c0_98], %57 {strides = array<i32>} : memref<4x256x128xf32, #tpu.memory_space<vmem>>, vector<1x256x128xf32>,
    return
  }
  func.func @transform_0(%arg0: i32) -> (i32, i32, i32, i32) {
    %c0_i32 = arith.constant 0 : i32
    %c0_i32_0 = arith.constant 0 : i32
    %c0_i32_1 = arith.constant 0 : i32
    %c0_i32_2 = arith.constant 0 : i32
    return %arg0, %c0_i32, %c0_i32_0, %c0_i32_1 : i32, i32, i32, i32
  }
  func.func @transform_1(%arg0: i32) -> (i32, i32) {
    %c0_i32 = arith.constant 0 : i32
    %c0_i32_0 = arith.constant 0 : i32
    %c0_i32_1 = arith.constant 0 : i32
    return %c0_i32, %c0_i32_0 : i32, i32
  }
  func.func @transform_2(%arg0: i32) -> (i32, i32) {
    %c0_i32 = arith.constant 0 : i32
    %c0_i32_0 = arith.constant 0 : i32
    %c0_i32_1 = arith.constant 0 : i32
    return %c0_i32, %c0_i32_0 : i32, i32
  }
  func.func @transform_3(%arg0: i32) -> (i32, i32, i32) {
    %c0_i32 = arith.constant 0 : i32
    %c0_i32_0 = arith.constant 0 : i32
    %c0_i32_1 = arith.constant 0 : i32
    return %arg0, %c0_i32, %c0_i32_0 : i32, i32, i32
  }
}

</mosaic_0001>

<llo_original>
// kernel: tpu_custom_call.1
$region0: #{tpu_custom_call.1}
  #allocation0 [shape = 'u32[]', space=smem, size = 0x4, offset = 0x4, fixed_abs, tag = 'smem constant byte address 0x4 - core index']
  #allocation1 [shape = 'u32[144,128]{1,0:T(1,128)}', space=vmem, size = 0x12000, scoped, tag = 'internal scratch']
  #allocation2 [shape = 'bf16[4,16,16,256]{3,2,1,0:T(8,128)(2,1)}', space=vmem, size = 0x80000, scoped, tag = 'scratch operand']
  %s0 = inlined_call_operand.vmem [shape: bf16[4,18,18,16], index: 0, kind: input, shape index: {}]
  %s1 = inlined_call_operand.vmem [shape: bf16[256,128], index: 1, kind: input, shape index: {}]
  %s2 = inlined_call_operand.vmem [shape: f32[1,128], index: 2, kind: input, shape index: {}]
  %s3 = inlined_call_operand.hbm [shape: f32[4,256,128], index: 3, kind: output, shape index: {}]
  %s4 = sld [smem:[#allocation0]]
  $region22: #{tpu_custom_call.1} parent=0
    _
  %s6 = ssub.s32 1, %s4
  %s7 = scalar_select 0, %s6, %s4
  $region1: #{tpu_custom_call.1} parent=0
    #allocation3 [shape = 'u8[524288]{0}', space=vmem, size = 0x80000, scoped, tag = 'output window, operand 0, single buffered']
    #allocation4 [shape = 's32[1]{0}', space=sflag, size = 0x4, scoped, tag = 'scoped memory for tpu_custom_call.1']
    %8 = vsyncpa [#allocation4], 0
    // Predicated region
    $region2: #{tpu_custom_call.1} parent=1 // pred_check
      _
    $region3: #{tpu_custom_call.1} parent=1 // pred_check_branch
      %10 = sbr.rel (0) target = $region5
    $region4: #{tpu_custom_call.1} parent=1 // pred_region
      _
    $region5: #{tpu_custom_call.1} parent=1 // pred_fallthru
      _
    // Predicated region
    $region6: #{tpu_custom_call.1} parent=1 // pred_check
      _
    $region7: #{tpu_custom_call.1} parent=1 // pred_check_branch
      %12 = sbr.rel (0) target = $region9
    $region8: #{tpu_custom_call.1} parent=1 // pred_region
      _
    $region9: #{tpu_custom_call.1} parent=1 // pred_fallthru
      _
    // Predicated region
    $region10: #{tpu_custom_call.1} parent=1 // pred_check
      _
    $region11: #{tpu_custom_call.1} parent=1 // pred_check_branch
      %14 = sbr.rel (0) target = $region13
    $region12: #{tpu_custom_call.1} parent=1 // pred_region
      _
    $region13: #{tpu_custom_call.1} parent=1 // pred_fallthru
      _
    %vm16 = vcmask 1043584
    %17 = vst.msk [vmem:[#allocation2 + $0x4] sm:$0xf] %vm16, 0
    %18 = vst.msk [vmem:[#allocation2 + $0xc] sm:$0xf] %vm16, 0
    %19 = vst.msk [vmem:[#allocation2 + $0x14] sm:$0xf] %vm16, 0
    %20 = vst.msk [vmem:[#allocation2 + $0x1c] sm:$0xf] %vm16, 0
    %21 = vst.msk [vmem:[#allocation2 + $0x24] sm:$0xf] %vm16, 0
    %22 = vst.msk [vmem:[#allocation2 + $0x2c] sm:$0xf] %vm16, 0
    %23 = vst.msk [vmem:[#allocation2 + $0x34] sm:$0xf] %vm16, 0
    %24 = vst.msk [vmem:[#allocation2 + $0x3c] sm:$0xf] %vm16, 0
    %25 = vst.msk [vmem:[#allocation2 + $0x44] sm:$0xf] %vm16, 0
    %26 = vst.msk [vmem:[#allocation2 + $0x4c] sm:$0xf] %vm16, 0
    %27 = vst.msk [vmem:[#allocation2 + $0x54] sm:$0xf] %vm16, 0
    %28 = vst.msk [vmem:[#allocation2 + $0x5c] sm:$0xf] %vm16, 0
    %29 = vst.msk [vmem:[#allocation2 + $0x64] sm:$0xf] %vm16, 0
    %30 = vst.msk [vmem:[#allocation2 + $0x6c] sm:$0xf] %vm16, 0
    %31 = vst.msk [vmem:[#allocation2 + $0x74] sm:$0xf] %vm16, 0
    %32 = vst.msk [vmem:[#allocation2 + $0x7c] sm:$0xf] %vm16, 0
    %33 = vst.msk [vmem:[#allocation2 + $0x84] sm:$0xf] %vm16, 0
    %34 = vst.msk [vmem:[#allocation2 + $0x8c] sm:$0xf] %vm16, 0
    %35 = vst.msk [vmem:[#allocation2 + $0x94] sm:$0xf] %vm16, 0
    %36 = vst.msk [vmem:[#allocation2 + $0x9c] sm:$0xf] %vm16, 0
    %37 = vst.msk [vmem:[#allocation2 + $0xa4] sm:$0xf] %vm16, 0
    %38 = vst.msk [vmem:[#allocation2 + $0xac] sm:$0xf] %vm16, 0
    %39 = vst.msk [vmem:[#allocation2 + $0xb4] sm:$0xf] %vm16, 0
    %40 = vst.msk [vmem:[#allocation2 + $0xbc] sm:$0xf] %vm16, 0
    %41 = vst.msk [vmem:[#allocation2 + $0xc4] sm:$0xf] %vm16, 0
    %42 = vst.msk [vmem:[#allocation2 + $0xcc] sm:$0xf] %vm16, 0
    %43 = vst.msk [vmem:[#allocation2 + $0xd4] sm:$0xf] %vm16, 0
    %44 = vst.msk [vmem:[#allocation2 + $0xdc] sm:$0xf] %vm16, 0
    %45 = vst.msk [vmem:[#allocation2 + $0xe4] sm:$0xf] %vm16, 0
    %46 = vst.msk [vmem:[#allocation2 + $0xec] sm:$0xf] %vm16, 0
    %47 = vst.msk [vmem:[#allocation2 + $0xf4] sm:$0xf] %vm16, 0
    %48 = vst.msk [vmem:[#allocation2 + $0xfc] sm:$0xf] %vm16, 0
    %49 = vst.msk [vmem:[#allocation2 + $0x104] sm:$0xf] %vm16, 0
    %50 = vst.msk [vmem:[#allocation2 + $0x10c] sm:$0xf] %vm16, 0
    %51 = vst.msk [vmem:[#allocation2 + $0x114] sm:$0xf] %vm16, 0
    %52 = vst.msk [vmem:[#allocation2 + $0x11c] sm:$0xf] %vm16, 0
    %53 = vst.msk [vmem:[#allocation2 + $0x124] sm:$0xf] %vm16, 0
    %54 = vst.msk [vmem:[#allocation2 + $0x12c] sm:$0xf] %vm16, 0
    %55 = vst.msk [vmem:[#allocation2 + $0x134] sm:$0xf] %vm16, 0
    %56 = vst.msk [vmem:[#allocation2 + $0x13c] sm:$0xf] %vm16, 0
    %57 = vst.msk [vmem:[#allocation2 + $0x144] sm:$0xf] %vm16, 0
    %58 = vst.msk [vmem:[#allocation2 + $0x14c] sm:$0xf] %vm16, 0
    %59 = vst.msk [vmem:[#allocation2 + $0x154] sm:$0xf] %vm16, 0
    %60 = vst.msk [vmem:[#allocation2 + $0x15c] sm:$0xf] %vm16, 0
    %61 = vst.msk [vmem:[#allocation2 + $0x164] sm:$0xf] %vm16, 0
    %62 = vst.msk [vmem:[#allocation2 + $0x16c] sm:$0xf] %vm16, 0
    %63 = vst.msk [vmem:[#allocation2 + $0x174] sm:$0xf] %vm16, 0
    %64 = vst.msk [vmem:[#allocation2 + $0x17c] sm:$0xf] %vm16, 0
    %65 = vst.msk [vmem:[#allocation2 + $0x184] sm:$0xf] %vm16, 0
    %66 = vst.msk [vmem:[#allocation2 + $0x18c] sm:$0xf] %vm16, 0
    %67 = vst.msk [vmem:[#allocation2 + $0x194] sm:$0xf] %vm16, 0
    %68 = vst.msk [vmem:[#allocation2 + $0x19c] sm:$0xf] %vm16, 0
    %69 = vst.msk [vmem:[#allocation2 + $0x1a4] sm:$0xf] %vm16, 0
    %70 = vst.msk [vmem:[#allocation2 + $0x1ac] sm:$0xf] %vm16, 0
    %71 = vst.msk [vmem:[#allocation2 + $0x1b4] sm:$0xf] %vm16, 0
    %72 = vst.msk [vmem:[#allocation2 + $0x1bc] sm:$0xf] %vm16, 0
    %73 = vst.msk [vmem:[#allocation2 + $0x1c4] sm:$0xf] %vm16, 0
    %74 = vst.msk [vmem:[#allocation2 + $0x1cc] sm:$0xf] %vm16, 0
    %75 = vst.msk [vmem:[#allocation2 + $0x1d4] sm:$0xf] %vm16, 0
    %76 = vst.msk [vmem:[#allocation2 + $0x1dc] sm:$0xf] %vm16, 0
    %77 = vst.msk [vmem:[#allocation2 + $0x1e4] sm:$0xf] %vm16, 0
    %78 = vst.msk [vmem:[#allocation2 + $0x1ec] sm:$0xf] %vm16, 0
    %79 = vst.msk [vmem:[#allocation2 + $0x1f4] sm:$0xf] %vm16, 0
    %80 = vst.msk [vmem:[#allocation2 + $0x1fc] sm:$0xf] %vm16, 0
    %81 = vst.msk [vmem:[#allocation2 + $0x204] sm:$0xf] %vm16, 0
    %82 = vst.msk [vmem:[#allocation2 + $0x20c] sm:$0xf] %vm16, 0
    %83 = vst.msk [vmem:[#allocation2 + $0x214] sm:$0xf] %vm16, 0
    %84 = vst.msk [vmem:[#allocation2 + $0x21c] sm:$0xf] %vm16, 0
    %85 = vst.msk [vmem:[#allocation2 + $0x224] sm:$0xf] %vm16, 0
    %86 = vst.msk [vmem:[#allocation2 + $0x22c] sm:$0xf] %vm16, 0
    %87 = vst.msk [vmem:[#allocation2 + $0x234] sm:$0xf] %vm16, 0
    %88 = vst.msk [vmem:[#allocation2 + $0x23c] sm:$0xf] %vm16, 0
    %89 = vst.msk [vmem:[#allocation2 + $0x244] sm:$0xf] %vm16, 0
    %90 = vst.msk [vmem:[#allocation2 + $0x24c] sm:$0xf] %vm16, 0
    %91 = vst.msk [vmem:[#allocation2 + $0x254] sm:$0xf] %vm16, 0
    %92 = vst.msk [vmem:[#allocation2 + $0x25c] sm:$0xf] %vm16, 0
    %93 = vst.msk [vmem:[#allocation2 + $0x264] sm:$0xf] %vm16, 0
    %94 = vst.msk [vmem:[#allocation2 + $0x26c] sm:$0xf] %vm16, 0
    %95 = vst.msk [vmem:[#allocation2 + $0x274] sm:$0xf] %vm16, 0
    %96 = vst.msk [vmem:[#allocation2 + $0x27c] sm:$0xf] %vm16, 0
    %97 = vst.msk [vmem:[#allocation2 + $0x284] sm:$0xf] %vm16, 0
    %98 = vst.msk [vmem:[#allocation2 + $0x28c] sm:$0xf] %vm16, 0
    %99 = vst.msk [vmem:[#allocation2 + $0x294] sm:$0xf] %vm16, 0
    %100 = vst.msk [vmem:[#allocation2 + $0x29c] sm:$0xf] %vm16, 0
    %101 = vst.msk [vmem:[#allocation2 + $0x2a4] sm:$0xf] %vm16, 0
    %102 = vst.msk [vmem:[#allocation2 + $0x2ac] sm:$0xf] %vm16, 0
    %103 = vst.msk [vmem:[#allocation2 + $0x2b4] sm:$0xf] %vm16, 0
    %104 = vst.msk [vmem:[#allocation2 + $0x2bc] sm:$0xf] %vm16, 0
    %105 = vst.msk [vmem:[#allocation2 + $0x2c4] sm:$0xf] %vm16, 0
    %106 = vst.msk [vmem:[#allocation2 + $0x2cc] sm:$0xf] %vm16, 0
    %107 = vst.msk [vmem:[#allocation2 + $0x2d4] sm:$0xf] %vm16, 0
    %108 = vst.msk [vmem:[#allocation2 + $0x2dc] sm:$0xf] %vm16, 0
    %109 = vst.msk [vmem:[#allocation2 + $0x2e4] sm:$0xf] %vm16, 0
    %110 = vst.msk [vmem:[#allocation2 + $0x2ec] sm:$0xf] %vm16, 0
    %111 = vst.msk [vmem:[#allocation2 + $0x2f4] sm:$0xf] %vm16, 0
    %112 = vst.msk [vmem:[#allocation2 + $0x2fc] sm:$0xf] %vm16, 0
    %113 = vst.msk [vmem:[#allocation2 + $0x304] sm:$0xf] %vm16, 0
    %114 = vst.msk [vmem:[#allocation2 + $0x30c] sm:$0xf] %vm16, 0
    %115 = vst.msk [vmem:[#allocation2 + $0x314] sm:$0xf] %vm16, 0
    %116 = vst.msk [vmem:[#allocation2 + $0x31c] sm:$0xf] %vm16, 0
    %117 = vst.msk [vmem:[#allocation2 + $0x324] sm:$0xf] %vm16, 0
    %118 = vst.msk [vmem:[#allocation2 + $0x32c] sm:$0xf] %vm16, 0
    %119 = vst.msk [vmem:[#allocation2 + $0x334] sm:$0xf] %vm16, 0
    %120 = vst.msk [vmem:[#allocation2 + $0x33c] sm:$0xf] %vm16, 0
    %121 = vst.msk [vmem:[#allocation2 + $0x344] sm:$0xf] %vm16, 0
    %122 = vst.msk [vmem:[#allocation2 + $0x34c] sm:$0xf] %vm16, 0
    %123 = vst.msk [vmem:[#allocation2 + $0x354] sm:$0xf] %vm16, 0
    %124 = vst.msk [vmem:[#allocation2 + $0x35c] sm:$0xf] %vm16, 0
    %125 = vst.msk [vmem:[#allocation2 + $0x364] sm:$0xf] %vm16, 0
    %126 = vst.msk [vmem:[#allocation2 + $0x36c] sm:$0xf] %vm16, 0
    %127 = vst.msk [vmem:[#allocation2 + $0x374] sm:$0xf] %vm16, 0
    %128 = vst.msk [vmem:[#allocation2 + $0x37c] sm:$0xf] %vm16, 0
    %129 = vst.msk [vmem:[#allocation2 + $0x384] sm:$0xf] %vm16, 0
    %130 = vst.msk [vmem:[#allocation2 + $0x38c] sm:$0xf] %vm16, 0
    %131 = vst.msk [vmem:[#allocation2 + $0x394] sm:$0xf] %vm16, 0
    %132 = vst.msk [vmem:[#allocation2 + $0x39c] sm:$0xf] %vm16, 0
    %133 = vst.msk [vmem:[#allocation2 + $0x3a4] sm:$0xf] %vm16, 0
    %134 = vst.msk [vmem:[#allocation2 + $0x3ac] sm:$0xf] %vm16, 0
    %135 = vst.msk [vmem:[#allocation2 + $0x3b4] sm:$0xf] %vm16, 0
    %136 = vst.msk [vmem:[#allocation2 + $0x3bc] sm:$0xf] %vm16, 0
    %137 = vst.msk [vmem:[#allocation2 + $0x3c4] sm:$0xf] %vm16, 0
    %138 = vst.msk [vmem:[#allocation2 + $0x3cc] sm:$0xf] %vm16, 0
    %139 = vst.msk [vmem:[#allocation2 + $0x3d4] sm:$0xf] %vm16, 0
    %140 = vst.msk [vmem:[#allocation2 + $0x3dc] sm:$0xf] %vm16, 0
    %141 = vst.msk [vmem:[#allocation2 + $0x3e4] sm:$0xf] %vm16, 0
    %142 = vst.msk [vmem:[#allocation2 + $0x3ec] sm:$0xf] %vm16, 0
    %143 = vst.msk [vmem:[#allocation2 + $0x3f4] sm:$0xf] %vm16, 0
    %144 = vst.msk [vmem:[#allocation2 + $0x3fc] sm:$0xf] %vm16, 0
    %v145 = vld [vmem:[%s0] sm:$0xf]
    %v146 = vld [vmem:[%s0 + $0x4] sm:$0xf]
    %v147 = vld [vmem:[%s0 + $0xc] sm:$0xf]
    %v148 = vld [vmem:[%s0 + $0x10] sm:$0xf]
    %v149 = vld [vmem:[%s0 + $0x18] sm:$0xf]
    %v150 = vld [vmem:[%s0 + $0x1c] sm:$0xf]
    %v151 = vld [vmem:[%s0 + $0x24] sm:$0xf]
    %v152 = vld [vmem:[%s0 + $0x28] sm:$0xf]
    %v153 = vld [vmem:[%s0 + $0x30] sm:$0xf]
    %v154 = vld [vmem:[%s0 + $0x34] sm:$0xf]
    %v155 = vld [vmem:[%s0 + $0x3c] sm:$0xf]
    %v156 = vld [vmem:[%s0 + $0x40] sm:$0xf]
    %v157 = vld [vmem:[%s0 + $0x48] sm:$0xf]
    %v158 = vld [vmem:[%s0 + $0x4c] sm:$0xf]
    %v159 = vld [vmem:[%s0 + $0x54] sm:$0xf]
    %v160 = vld [vmem:[%s0 + $0x58] sm:$0xf]
    %v161 = vld [vmem:[%s0 + $0x60] sm:$0xf]
    %v162 = vld [vmem:[%s0 + $0x64] sm:$0xf]
    %v163 = vld [vmem:[%s0 + $0x6c] sm:$0xf]
    %v164 = vld [vmem:[%s0 + $0x70] sm:$0xf]
    %v165 = vld [vmem:[%s0 + $0x78] sm:$0xf]
    %v166 = vld [vmem:[%s0 + $0x7c] sm:$0xf]
    %v167 = vld [vmem:[%s0 + $0x84] sm:$0xf]
    %v168 = vld [vmem:[%s0 + $0x88] sm:$0xf]
    %v169 = vld [vmem:[%s0 + $0x90] sm:$0xf]
    %v170 = vld [vmem:[%s0 + $0x94] sm:$0xf]
    %v171 = vld [vmem:[%s0 + $0x9c] sm:$0xf]
    %v172 = vld [vmem:[%s0 + $0xa0] sm:$0xf]
    %v173 = vld [vmem:[%s0 + $0xa8] sm:$0xf]
    %v174 = vld [vmem:[%s0 + $0xac] sm:$0xf]
    %v175 = vld [vmem:[%s0 + $0xb4] sm:$0xf]
    %v176 = vld [vmem:[%s0 + $0xb8] sm:$0xf]
    %v177 = vld [vmem:[%s0 + $0xd8] sm:$0xf]
    %v178 = vld [vmem:[%s0 + $0xdc] sm:$0xf]
    %v179 = vld [vmem:[%s0 + $0xe4] sm:$0xf]
    %v180 = vld [vmem:[%s0 + $0xe8] sm:$0xf]
    %v181 = vld [vmem:[%s0 + $0xf0] sm:$0xf]
    %v182 = vld [vmem:[%s0 + $0xf4] sm:$0xf]
    %v183 = vld [vmem:[%s0 + $0xfc] sm:$0xf]
    %v184 = vld [vmem:[%s0 + $0x100] sm:$0xf]
    %v185 = vld [vmem:[%s0 + $0x108] sm:$0xf]
    %v186 = vld [vmem:[%s0 + $0x10c] sm:$0xf]
    %v187 = vld [vmem:[%s0 + $0x114] sm:$0xf]
    %v188 = vld [vmem:[%s0 + $0x118] sm:$0xf]
    %v189 = vld [vmem:[%s0 + $0x120] sm:$0xf]
    %v190 = vld [vmem:[%s0 + $0x124] sm:$0xf]
    %v191 = vld [vmem:[%s0 + $0x12c] sm:$0xf]
    %v192 = vld [vmem:[%s0 + $0x130] sm:$0xf]
    %v193 = vld [vmem:[%s0 + $0x138] sm:$0xf]
    %v194 = vld [vmem:[%s0 + $0x13c] sm:$0xf]
    %v195 = vld [vmem:[%s0 + $0x144] sm:$0xf]
    %v196 = vld [vmem:[%s0 + $0x148] sm:$0xf]
    %v197 = vld [vmem:[%s0 + $0x150] sm:$0xf]
    %v198 = vld [vmem:[%s0 + $0x154] sm:$0xf]
    %v199 = vld [vmem:[%s0 + $0x15c] sm:$0xf]
    %v200 = vld [vmem:[%s0 + $0x160] sm:$0xf]
    %v201 = vld [vmem:[%s0 + $0x168] sm:$0xf]
    %v202 = vld [vmem:[%s0 + $0x16c] sm:$0xf]
    %v203 = vld [vmem:[%s0 + $0x174] sm:$0xf]
    %v204 = vld [vmem:[%s0 + $0x178] sm:$0xf]
    %v205 = vld [vmem:[%s0 + $0x180] sm:$0xf]
    %v206 = vld [vmem:[%s0 + $0x184] sm:$0xf]
    %v207 = vld [vmem:[%s0 + $0x18c] sm:$0xf]
    %v208 = vld [vmem:[%s0 + $0x190] sm:$0xf]
    %v209 = vld [vmem:[%s0 + $0x1b0] sm:$0xf]
    %v210 = vld [vmem:[%s0 + $0x1b4] sm:$0xf]
    %v211 = vld [vmem:[%s0 + $0x1bc] sm:$0xf]
    %v212 = vld [vmem:[%s0 + $0x1c0] sm:$0xf]
    %v213 = vld [vmem:[%s0 + $0x1c8] sm:$0xf]
    %v214 = vld [vmem:[%s0 + $0x1cc] sm:$0xf]
    %v215 = vld [vmem:[%s0 + $0x1d4] sm:$0xf]
    %v216 = vld [vmem:[%s0 + $0x1d8] sm:$0xf]
    %v217 = vld [vmem:[%s0 + $0x1e0] sm:$0xf]
    %v218 = vld [vmem:[%s0 + $0x1e4] sm:$0xf]
    %v219 = vld [vmem:[%s0 + $0x1ec] sm:$0xf]
    %v220 = vld [vmem:[%s0 + $0x1f0] sm:$0xf]
    %v221 = vld [vmem:[%s0 + $0x1f8] sm:$0xf]
    %v222 = vld [vmem:[%s0 + $0x1fc] sm:$0xf]
    %v223 = vld [vmem:[%s0 + $0x204] sm:$0xf]
    %v224 = vld [vmem:[%s0 + $0x208] sm:$0xf]
    %v225 = vld [vmem:[%s0 + $0x210] sm:$0xf]
    %v226 = vld [vmem:[%s0 + $0x214] sm:$0xf]
    %v227 = vld [vmem:[%s0 + $0x21c] sm:$0xf]
    %v228 = vld [vmem:[%s0 + $0x220] sm:$0xf]
    %v229 = vld [vmem:[%s0 + $0x228] sm:$0xf]
    %v230 = vld [vmem:[%s0 + $0x22c] sm:$0xf]
    %v231 = vld [vmem:[%s0 + $0x234] sm:$0xf]
    %v232 = vld [vmem:[%s0 + $0x238] sm:$0xf]
    %v233 = vld [vmem:[%s0 + $0x240] sm:$0xf]
    %v234 = vld [vmem:[%s0 + $0x244] sm:$0xf]
    %v235 = vld [vmem:[%s0 + $0x24c] sm:$0xf]
    %v236 = vld [vmem:[%s0 + $0x250] sm:$0xf]
    %v237 = vld [vmem:[%s0 + $0x258] sm:$0xf]
    %v238 = vld [vmem:[%s0 + $0x25c] sm:$0xf]
    %v239 = vld [vmem:[%s0 + $0x264] sm:$0xf]
    %v240 = vld [vmem:[%s0 + $0x268] sm:$0xf]
    %v241 = vld [vmem:[%s0 + $0x288] sm:$0xf]
    %v242 = vld [vmem:[%s0 + $0x28c] sm:$0xf]
    %v243 = vld [vmem:[%s0 + $0x294] sm:$0xf]
    %v244 = vld [vmem:[%s0 + $0x298] sm:$0xf]
    %v245 = vld [vmem:[%s0 + $0x2a0] sm:$0xf]
    %v246 = vld [vmem:[%s0 + $0x2a4] sm:$0xf]
    %v247 = vld [vmem:[%s0 + $0x2ac] sm:$0xf]
    %v248 = vld [vmem:[%s0 + $0x2b0] sm:$0xf]
    %v249 = vld [vmem:[%s0 + $0x2b8] sm:$0xf]
    %v250 = vld [vmem:[%s0 + $0x2bc] sm:$0xf]
    %v251 = vld [vmem:[%s0 + $0x2c4] sm:$0xf]
    %v252 = vld [vmem:[%s0 + $0x2c8] sm:$0xf]
    %v253 = vld [vmem:[%s0 + $0x2d0] sm:$0xf]
    %v254 = vld [vmem:[%s0 + $0x2d4] sm:$0xf]
    %v255 = vld [vmem:[%s0 + $0x2dc] sm:$0xf]
    %v256 = vld [vmem:[%s0 + $0x2e0] sm:$0xf]
    %v257 = vld [vmem:[%s0 + $0x2e8] sm:$0xf]
    %v258 = vld [vmem:[%s0 + $0x2ec] sm:$0xf]
    %v259 = vld [vmem:[%s0 + $0x2f4] sm:$0xf]
    %v260 = vld [vmem:[%s0 + $0x2f8] sm:$0xf]
    %v261 = vld [vmem:[%s0 + $0x300] sm:$0xf]
    %v262 = vld [vmem:[%s0 + $0x304] sm:$0xf]
    %v263 = vld [vmem:[%s0 + $0x30c] sm:$0xf]
    %v264 = vld [vmem:[%s0 + $0x310] sm:$0xf]
    %v265 = vld [vmem:[%s0 + $0x318] sm:$0xf]
    %v266 = vld [vmem:[%s0 + $0x31c] sm:$0xf]
    %v267 = vld [vmem:[%s0 + $0x324] sm:$0xf]
    %v268 = vld [vmem:[%s0 + $0x328] sm:$0xf]
    %v269 = vld [vmem:[%s0 + $0x330] sm:$0xf]
    %v270 = vld [vmem:[%s0 + $0x334] sm:$0xf]
    %v271 = vld [vmem:[%s0 + $0x33c] sm:$0xf]
    %v272 = vld [vmem:[%s0 + $0x340] sm:$0xf]
    %vm273 = vcmask 125952
    %274 = vst.msk [vmem:[#allocation2] sm:$0xf] %vm273, %v145
    %275 = vst.msk [vmem:[#allocation2 + $0x8] sm:$0xf] %vm273, %v146
    %276 = vst.msk [vmem:[#allocation2 + $0x10] sm:$0xf] %vm273, %v147
    %277 = vst.msk [vmem:[#allocation2 + $0x18] sm:$0xf] %vm273, %v148
    %278 = vst.msk [vmem:[#allocation2 + $0x20] sm:$0xf] %vm273, %v149
    %279 = vst.msk [vmem:[#allocation2 + $0x28] sm:$0xf] %vm273, %v150
    %280 = vst.msk [vmem:[#allocation2 + $0x30] sm:$0xf] %vm273, %v151
    %281 = vst.msk [vmem:[#allocation2 + $0x38] sm:$0xf] %vm273, %v152
    %282 = vst.msk [vmem:[#allocation2 + $0x40] sm:$0xf] %vm273, %v153
    %283 = vst.msk [vmem:[#allocation2 + $0x48] sm:$0xf] %vm273, %v154
    %284 = vst.msk [vmem:[#allocation2 + $0x50] sm:$0xf] %vm273, %v155
    %285 = vst.msk [vmem:[#allocation2 + $0x58] sm:$0xf] %vm273, %v156
    %286 = vst.msk [vmem:[#allocation2 + $0x60] sm:$0xf] %vm273, %v157
    %287 = vst.msk [vmem:[#allocation2 + $0x68] sm:$0xf] %vm273, %v158
    %288 = vst.msk [vmem:[#allocation2 + $0x70] sm:$0xf] %vm273, %v159
    %289 = vst.msk [vmem:[#allocation2 + $0x78] sm:$0xf] %vm273, %v160
    %290 = vst.msk [vmem:[#allocation2 + $0x80] sm:$0xf] %vm273, %v161
    %291 = vst.msk [vmem:[#allocation2 + $0x88] sm:$0xf] %vm273, %v162
    %292 = vst.msk [vmem:[#allocation2 + $0x90] sm:$0xf] %vm273, %v163
    %293 = vst.msk [vmem:[#allocation2 + $0x98] sm:$0xf] %vm273, %v164
    %294 = vst.msk [vmem:[#allocation2 + $0xa0] sm:$0xf] %vm273, %v165
    %295 = vst.msk [vmem:[#allocation2 + $0xa8] sm:$0xf] %vm273, %v166
    %296 = vst.msk [vmem:[#allocation2 + $0xb0] sm:$0xf] %vm273, %v167
    %297 = vst.msk [vmem:[#allocation2 + $0xb8] sm:$0xf] %vm273, %v168
    %298 = vst.msk [vmem:[#allocation2 + $0xc0] sm:$0xf] %vm273, %v169
    %299 = vst.msk [vmem:[#allocation2 + $0xc8] sm:$0xf] %vm273, %v170
    %300 = vst.msk [vmem:[#allocation2 + $0xd0] sm:$0xf] %vm273, %v171
    %301 = vst.msk [vmem:[#allocation2 + $0xd8] sm:$0xf] %vm273, %v172
    %302 = vst.msk [vmem:[#allocation2 + $0xe0] sm:$0xf] %vm273, %v173
    %303 = vst.msk [vmem:[#allocation2 + $0xe8] sm:$0xf] %vm273, %v174
    %304 = vst.msk [vmem:[#allocation2 + $0xf0] sm:$0xf] %vm273, %v175
    %305 = vst.msk [vmem:[#allocation2 + $0xf8] sm:$0xf] %vm273, %v176
    %306 = vst.msk [vmem:[#allocation2 + $0x100] sm:$0xf] %vm273, %v177
    %307 = vst.msk [vmem:[#allocation2 + $0x108] sm:$0xf] %vm273, %v178
    %308 = vst.msk [vmem:[#allocation2 + $0x110] sm:$0xf] %vm273, %v179
    %309 = vst.msk [vmem:[#allocation2 + $0x118] sm:$0xf] %vm273, %v180
    %310 = vst.msk [vmem:[#allocation2 + $0x120] sm:$0xf] %vm273, %v181
    %311 = vst.msk [vmem:[#allocation2 + $0x128] sm:$0xf] %vm273, %v182
    %312 = vst.msk [vmem:[#allocation2 + $0x130] sm:$0xf] %vm273, %v183
    %313 = vst.msk [vmem:[#allocation2 + $0x138] sm:$0xf] %vm273, %v184
    %314 = vst.msk [vmem:[#allocation2 + $0x140] sm:$0xf] %vm273, %v185
    %315 = vst.msk [vmem:[#allocation2 + $0x148] sm:$0xf] %vm273, %v186
    %316 = vst.msk [vmem:[#allocation2 + $0x150] sm:$0xf] %vm273, %v187
    %317 = vst.msk [vmem:[#allocation2 + $0x158] sm:$0xf] %vm273, %v188
    %318 = vst.msk [vmem:[#allocation2 + $0x160] sm:$0xf] %vm273, %v189
    %319 = vst.msk [vmem:[#allocation2 + $0x168] sm:$0xf] %vm273, %v190
    %320 = vst.msk [vmem:[#allocation2 + $0x170] sm:$0xf] %vm273, %v191
    %321 = vst.msk [vmem:[#allocation2 + $0x178] sm:$0xf] %vm273, %v192
    %322 = vst.msk [vmem:[#allocation2 + $0x180] sm:$0xf] %vm273, %v193
    %323 = vst.msk [vmem:[#allocation2 + $0x188] sm:$0xf] %vm273, %v194
    %324 = vst.msk [vmem:[#allocation2 + $0x190] sm:$0xf] %vm273, %v195
    %325 = vst.msk [vmem:[#allocation2 + $0x198] sm:$0xf] %vm273, %v196
    %326 = vst.msk [vmem:[#allocation2 + $0x1a0] sm:$0xf] %vm273, %v197
    %327 = vst.msk [vmem:[#allocation2 + $0x1a8] sm:$0xf] %vm273, %v198
    %328 = vst.msk [vmem:[#allocation2 + $0x1b0] sm:$0xf] %vm273, %v199
    %329 = vst.msk [vmem:[#allocation2 + $0x1b8] sm:$0xf] %vm273, %v200
    %330 = vst.msk [vmem:[#allocation2 + $0x1c0] sm:$0xf] %vm273, %v201
    %331 = vst.msk [vmem:[#allocation2 + $0x1c8] sm:$0xf] %vm273, %v202
    %332 = vst.msk [vmem:[#allocation2 + $0x1d0] sm:$0xf] %vm273, %v203
    %333 = vst.msk [vmem:[#allocation2 + $0x1d8] sm:$0xf] %vm273, %v204
    %334 = vst.msk [vmem:[#allocation2 + $0x1e0] sm:$0xf] %vm273, %v205
    %335 = vst.msk [vmem:[#allocation2 + $0x1e8] sm:$0xf] %vm273, %v206
    %336 = vst.msk [vmem:[#allocation2 + $0x1f0] sm:$0xf] %vm273, %v207
    %337 = vst.msk [vmem:[#allocation2 + $0x1f8] sm:$0xf] %vm273, %v208
    %338 = vst.msk [vmem:[#allocation2 + $0x200] sm:$0xf] %vm273, %v209
    %339 = vst.msk [vmem:[#allocation2 + $0x208] sm:$0xf] %vm273, %v210
    %340 = vst.msk [vmem:[#allocation2 + $0x210] sm:$0xf] %vm273, %v211
    %341 = vst.msk [vmem:[#allocation2 + $0x218] sm:$0xf] %vm273, %v212
    %342 = vst.msk [vmem:[#allocation2 + $0x220] sm:$0xf] %vm273, %v213
    %343 = vst.msk [vmem:[#allocation2 + $0x228] sm:$0xf] %vm273, %v214
    %344 = vst.msk [vmem:[#allocation2 + $0x230] sm:$0xf] %vm273, %v215
    %345 = vst.msk [vmem:[#allocation2 + $0x238] sm:$0xf] %vm273, %v216
    %346 = vst.msk [vmem:[#allocation2 + $0x240] sm:$0xf] %vm273, %v217
    %347 = vst.msk [vmem:[#allocation2 + $0x248] sm:$0xf] %vm273, %v218
    %348 = vst.msk [vmem:[#allocation2 + $0x250] sm:$0xf] %vm273, %v219
    %349 = vst.msk [vmem:[#allocation2 + $0x258] sm:$0xf] %vm273, %v220
    %350 = vst.msk [vmem:[#allocation2 + $0x260] sm:$0xf] %vm273, %v221
    %351 = vst.msk [vmem:[#allocation2 + $0x268] sm:$0xf] %vm273, %v222
    %352 = vst.msk [vmem:[#allocation2 + $0x270] sm:$0xf] %vm273, %v223
    %353 = vst.msk [vmem:[#allocation2 + $0x278] sm:$0xf] %vm273, %v224
    %354 = vst.msk [vmem:[#allocation2 + $0x280] sm:$0xf] %vm273, %v225
    %355 = vst.msk [vmem:[#allocation2 + $0x288] sm:$0xf] %vm273, %v226
    %356 = vst.msk [vmem:[#allocation2 + $0x290] sm:$0xf] %vm273, %v227
    %357 = vst.msk [vmem:[#allocation2 + $0x298] sm:$0xf] %vm273, %v228
    %358 = vst.msk [vmem:[#allocation2 + $0x2a0] sm:$0xf] %vm273, %v229
    %359 = vst.msk [vmem:[#allocation2 + $0x2a8] sm:$0xf] %vm273, %v230
    %360 = vst.msk [vmem:[#allocation2 + $0x2b0] sm:$0xf] %vm273, %v231
    %361 = vst.msk [vmem:[#allocation2 + $0x2b8] sm:$0xf] %vm273, %v232
    %362 = vst.msk [vmem:[#allocation2 + $0x2c0] sm:$0xf] %vm273, %v233
    %363 = vst.msk [vmem:[#allocation2 + $0x2c8] sm:$0xf] %vm273, %v234
    %364 = vst.msk [vmem:[#allocation2 + $0x2d0] sm:$0xf] %vm273, %v235
    %365 = vst.msk [vmem:[#allocation2 + $0x2d8] sm:$0xf] %vm273, %v236
    %366 = vst.msk [vmem:[#allocation2 + $0x2e0] sm:$0xf] %vm273, %v237
    %367 = vst.msk [vmem:[#allocation2 + $0x2e8] sm:$0xf] %vm273, %v238
    %368 = vst.msk [vmem:[#allocation2 + $0x2f0] sm:$0xf] %vm273, %v239
    %369 = vst.msk [vmem:[#allocation2 + $0x2f8] sm:$0xf] %vm273, %v240
    %370 = vst.msk [vmem:[#allocation2 + $0x300] sm:$0xf] %vm273, %v241
    %371 = vst.msk [vmem:[#allocation2 + $0x308] sm:$0xf] %vm273, %v242
    %372 = vst.msk [vmem:[#allocation2 + $0x310] sm:$0xf] %vm273, %v243
    %373 = vst.msk [vmem:[#allocation2 + $0x318] sm:$0xf] %vm273, %v244
    %374 = vst.msk [vmem:[#allocation2 + $0x320] sm:$0xf] %vm273, %v245
    %375 = vst.msk [vmem:[#allocation2 + $0x328] sm:$0xf] %vm273, %v246
    %376 = vst.msk [vmem:[#allocation2 + $0x330] sm:$0xf] %vm273, %v247
    %377 = vst.msk [vmem:[#allocation2 + $0x338] sm:$0xf] %vm273, %v248
    %378 = vst.msk [vmem:[#allocation2 + $0x340] sm:$0xf] %vm273, %v249
    %379 = vst.msk [vmem:[#allocation2 + $0x348] sm:$0xf] %vm273, %v250
    %380 = vst.msk [vmem:[#allocation2 + $0x350] sm:$0xf] %vm273, %v251
    %381 = vst.msk [vmem:[#allocation2 + $0x358] sm:$0xf] %vm273, %v252
    %382 = vst.msk [vmem:[#allocation2 + $0x360] sm:$0xf] %vm273, %v253
    %383 = vst.msk [vmem:[#allocation2 + $0x368] sm:$0xf] %vm273, %v254
    %384 = vst.msk [vmem:[#allocation2 + $0x370] sm:$0xf] %vm273, %v255
    %385 = vst.msk [vmem:[#allocation2 + $0x378] sm:$0xf] %vm273, %v256
    %386 = vst.msk [vmem:[#allocation2 + $0x380] sm:$0xf] %vm273, %v257
    %387 = vst.msk [vmem:[#allocation2 + $0x388] sm:$0xf] %vm273, %v258
    %388 = vst.msk [vmem:[#allocation2 + $0x390] sm:$0xf] %vm273, %v259
    %389 = vst.msk [vmem:[#allocation2 + $0x398] sm:$0xf] %vm273, %v260
    %390 = vst.msk [vmem:[#allocation2 + $0x3a0] sm:$0xf] %vm273, %v261
    %391 = vst.msk [vmem:[#allocation2 + $0x3a8] sm:$0xf] %vm273, %v262
    %392 = vst.msk [vmem:[#allocation2 + $0x3b0] sm:$0xf] %vm273, %v263
    %393 = vst.msk [vmem:[#allocation2 + $0x3b8] sm:$0xf] %vm273, %v264
    %394 = vst.msk [vmem:[#allocation2 + $0x3c0] sm:$0xf] %vm273, %v265
    %395 = vst.msk [vmem:[#allocation2 + $0x3c8] sm:$0xf] %vm273, %v266
    %396 = vst.msk [vmem:[#allocation2 + $0x3d0] sm:$0xf] %vm273, %v267
    %397 = vst.msk [vmem:[#allocation2 + $0x3d8] sm:$0xf] %vm273, %v268
    %398 = vst.msk [vmem:[#allocation2 + $0x3e0] sm:$0xf] %vm273, %v269
    %399 = vst.msk [vmem:[#allocation2 + $0x3e8] sm:$0xf] %vm273, %v270
    %400 = vst.msk [vmem:[#allocation2 + $0x3f0] sm:$0xf] %vm273, %v271
    %401 = vst.msk [vmem:[#allocation2 + $0x3f8] sm:$0xf] %vm273, %v272
    %v402 = vld [vmem:[%s0] sm:$0xf]
    %v403 = vld [vmem:[%s0 + $0x4] sm:$0xf]
    %v404 = vld [vmem:[%s0 + $0x8] sm:$0x1]
    %v405 = vld [vmem:[%s0 + $0xc] sm:$0xf]
    %v406 = vld [vmem:[%s0 + $0x10] sm:$0xf]
    %v407 = vld [vmem:[%s0 + $0x14] sm:$0x1]
    %v408 = vld [vmem:[%s0 + $0x18] sm:$0xf]
    %v409 = vld [vmem:[%s0 + $0x1c] sm:$0xf]
    %v410 = vld [vmem:[%s0 + $0x20] sm:$0x1]
    %v411 = vld [vmem:[%s0 + $0x24] sm:$0xf]
    %v412 = vld [vmem:[%s0 + $0x28] sm:$0xf]
    %v413 = vld [vmem:[%s0 + $0x2c] sm:$0x1]
    %v414 = vld [vmem:[%s0 + $0x30] sm:$0xf]
    %v415 = vld [vmem:[%s0 + $0x34] sm:$0xf]
    %v416 = vld [vmem:[%s0 + $0x38] sm:$0x1]
    %v417 = vld [vmem:[%s0 + $0x3c] sm:$0xf]
    %v418 = vld [vmem:[%s0 + $0x40] sm:$0xf]
    %v419 = vld [vmem:[%s0 + $0x44] sm:$0x1]
    %v420 = vld [vmem:[%s0 + $0x48] sm:$0xf]
    %v421 = vld [vmem:[%s0 + $0x4c] sm:$0xf]
    %v422 = vld [vmem:[%s0 + $0x50] sm:$0x1]
    %v423 = vld [vmem:[%s0 + $0x54] sm:$0xf]
    %v424 = vld [vmem:[%s0 + $0x58] sm:$0xf]
    %v425 = vld [vmem:[%s0 + $0x5c] sm:$0x1]
    %v426 = vld [vmem:[%s0 + $0x60] sm:$0xf]
    %v427 = vld [vmem:[%s0 + $0x64] sm:$0xf]
    %v428 = vld [vmem:[%s0 + $0x68] sm:$0x1]
    %v429 = vld [vmem:[%s0 + $0x6c] sm:$0xf]
    %v430 = vld [vmem:[%s0 + $0x70] sm:$0xf]
    %v431 = vld [vmem:[%s0 + $0x74] sm:$0x1]
    %v432 = vld [vmem:[%s0 + $0x78] sm:$0xf]
    %v433 = vld [vmem:[%s0 + $0x7c] sm:$0xf]
    %v434 = vld [vmem:[%s0 + $0x80] sm:$0x1]
    %v435 = vld [vmem:[%s0 + $0x84] sm:$0xf]
    %v436 = vld [vmem:[%s0 + $0x88] sm:$0xf]
    %v437 = vld [vmem:[%s0 + $0x8c] sm:$0x1]
    %v438 = vld [vmem:[%s0 + $0x90] sm:$0xf]
    %v439 = vld [vmem:[%s0 + $0x94] sm:$0xf]
    %v440 = vld [vmem:[%s0 + $0x98] sm:$0x1]
    %v441 = vld [vmem:[%s0 + $0x9c] sm:$0xf]
    %v442 = vld [vmem:[%s0 + $0xa0] sm:$0xf]
    %v443 = vld [vmem:[%s0 + $0xa4] sm:$0x1]
    %v444 = vld [vmem:[%s0 + $0xa8] sm:$0xf]
    %v445 = vld [vmem:[%s0 + $0xac] sm:$0xf]
    %v446 = vld [vmem:[%s0 + $0xb0] sm:$0x1]
    %v447 = vld [vmem:[%s0 + $0xb4] sm:$0xf]
    %v448 = vld [vmem:[%s0 + $0xb8] sm:$0xf]
    %v449 = vld [vmem:[%s0 + $0xbc] sm:$0x1]
    %v450 = vld [vmem:[%s0 + $0xd8] sm:$0xf]
    %v451 = vld [vmem:[%s0 + $0xdc] sm:$0xf]
    %v452 = vld [vmem:[%s0 + $0xe0] sm:$0x1]
    %v453 = vld [vmem:[%s0 + $0xe4] sm:$0xf]
    %v454 = vld [vmem:[%s0 + $0xe8] sm:$0xf]
    %v455 = vld [vmem:[%s0 + $0xec] sm:$0x1]
    %v456 = vld [vmem:[%s0 + $0xf0] sm:$0xf]
    %v457 = vld [vmem:[%s0 + $0xf4] sm:$0xf]
    %v458 = vld [vmem:[%s0 + $0xf8] sm:$0x1]
    %v459 = vld [vmem:[%s0 + $0xfc] sm:$0xf]
    %v460 = vld [vmem:[%s0 + $0x100] sm:$0xf]
    %v461 = vld [vmem:[%s0 + $0x104] sm:$0x1]
    %v462 = vld [vmem:[%s0 + $0x108] sm:$0xf]
    %v463 = vld [vmem:[%s0 + $0x10c] sm:$0xf]
    %v464 = vld [vmem:[%s0 + $0x110] sm:$0x1]
    %v465 = vld [vmem:[%s0 + $0x114] sm:$0xf]
    %v466 = vld [vmem:[%s0 + $0x118] sm:$0xf]
    %v467 = vld [vmem:[%s0 + $0x11c] sm:$0x1]
    %v468 = vld [vmem:[%s0 + $0x120] sm:$0xf]
    %v469 = vld [vmem:[%s0 + $0x124] sm:$0xf]
    %v470 = vld [vmem:[%s0 + $0x128] sm:$0x1]
    %v471 = vld [vmem:[%s0 + $0x12c] sm:$0xf]
    %v472 = vld [vmem:[%s0 + $0x130] sm:$0xf]
    %v473 = vld [vmem:[%s0 + $0x134] sm:$0x1]
    %v474 = vld [vmem:[%s0 + $0x138] sm:$0xf]
    %v475 = vld [vmem:[%s0 + $0x13c] sm:$0xf]
    %v476 = vld [vmem:[%s0 + $0x140] sm:$0x1]
    %v477 = vld [vmem:[%s0 + $0x144] sm:$0xf]
    %v478 = vld [vmem:[%s0 + $0x148] sm:$0xf]
    %v479 = vld [vmem:[%s0 + $0x14c] sm:$0x1]
    %v480 = vld [vmem:[%s0 + $0x150] sm:$0xf]
    %v481 = vld [vmem:[%s0 + $0x154] sm:$0xf]
    %v482 = vld [vmem:[%s0 + $0x158] sm:$0x1]
    %v483 = vld [vmem:[%s0 + $0x15c] sm:$0xf]
    %v484 = vld [vmem:[%s0 + $0x160] sm:$0xf]
    %v485 = vld [vmem:[%s0 + $0x164] sm:$0x1]
    %v486 = vld [vmem:[%s0 + $0x168] sm:$0xf]
    %v487 = vld [vmem:[%s0 + $0x16c] sm:$0xf]
    %v488 = vld [vmem:[%s0 + $0x170] sm:$0x1]
    %v489 = vld [vmem:[%s0 + $0x174] sm:$0xf]
    %v490 = vld [vmem:[%s0 + $0x178] sm:$0xf]
    %v491 = vld [vmem:[%s0 + $0x17c] sm:$0x1]
    %v492 = vld [vmem:[%s0 + $0x180] sm:$0xf]
    %v493 = vld [vmem:[%s0 + $0x184] sm:$0xf]
    %v494 = vld [vmem:[%s0 + $0x188] sm:$0x1]
    %v495 = vld [vmem:[%s0 + $0x18c] sm:$0xf]
    %v496 = vld [vmem:[%s0 + $0x190] sm:$0xf]
    %v497 = vld [vmem:[%s0 + $0x194] sm:$0x1]
    %v498 = vld [vmem:[%s0 + $0x1b0] sm:$0xf]
    %v499 = vld [vmem:[%s0 + $0x1b4] sm:$0xf]
    %v500 = vld [vmem:[%s0 + $0x1b8] sm:$0x1]
    %v501 = vld [vmem:[%s0 + $0x1bc] sm:$0xf]
    %v502 = vld [vmem:[%s0 + $0x1c0] sm:$0xf]
    %v503 = vld [vmem:[%s0 + $0x1c4] sm:$0x1]
    %v504 = vld [vmem:[%s0 + $0x1c8] sm:$0xf]
    %v505 = vld [vmem:[%s0 + $0x1cc] sm:$0xf]
    %v506 = vld [vmem:[%s0 + $0x1d0] sm:$0x1]
    %v507 = vld [vmem:[%s0 + $0x1d4] sm:$0xf]
    %v508 = vld [vmem:[%s0 + $0x1d8] sm:$0xf]
    %v509 = vld [vmem:[%s0 + $0x1dc] sm:$0x1]
    %v510 = vld [vmem:[%s0 + $0x1e0] sm:$0xf]
    %v511 = vld [vmem:[%s0 + $0x1e4] sm:$0xf]
    %v512 = vld [vmem:[%s0 + $0x1e8] sm:$0x1]
    %v513 = vld [vmem:[%s0 + $0x1ec] sm:$0xf]
    %v514 = vld [vmem:[%s0 + $0x1f0] sm:$0xf]
    %v515 = vld [vmem:[%s0 + $0x1f4] sm:$0x1]
    %v516 = vld [vmem:[%s0 + $0x1f8] sm:$0xf]
    %v517 = vld [vmem:[%s0 + $0x1fc] sm:$0xf]
    %v518 = vld [vmem:[%s0 + $0x200] sm:$0x1]
    %v519 = vld [vmem:[%s0 + $0x204] sm:$0xf]
    %v520 = vld [vmem:[%s0 + $0x208] sm:$0xf]
    %v521 = vld [vmem:[%s0 + $0x20c] sm:$0x1]
    %v522 = vld [vmem:[%s0 + $0x210] sm:$0xf]
    %v523 = vld [vmem:[%s0 + $0x214] sm:$0xf]
    %v524 = vld [vmem:[%s0 + $0x218] sm:$0x1]
    %v525 = vld [vmem:[%s0 + $0x21c] sm:$0xf]
    %v526 = vld [vmem:[%s0 + $0x220] sm:$0xf]
    %v527 = vld [vmem:[%s0 + $0x224] sm:$0x1]
    %v528 = vld [vmem:[%s0 + $0x228] sm:$0xf]
    %v529 = vld [vmem:[%s0 + $0x22c] sm:$0xf]
    %v530 = vld [vmem:[%s0 + $0x230] sm:$0x1]
    %v531 = vld [vmem:[%s0 + $0x234] sm:$0xf]
    %v532 = vld [vmem:[%s0 + $0x238] sm:$0xf]
    %v533 = vld [vmem:[%s0 + $0x23c] sm:$0x1]
    %v534 = vld [vmem:[%s0 + $0x240] sm:$0xf]
    %v535 = vld [vmem:[%s0 + $0x244] sm:$0xf]
    %v536 = vld [vmem:[%s0 + $0x248] sm:$0x1]
    %v537 = vld [vmem:[%s0 + $0x24c] sm:$0xf]
    %v538 = vld [vmem:[%s0 + $0x250] sm:$0xf]
    %v539 = vld [vmem:[%s0 + $0x254] sm:$0x1]
    %v540 = vld [vmem:[%s0 + $0x258] sm:$0xf]
    %v541 = vld [vmem:[%s0 + $0x25c] sm:$0xf]
    %v542 = vld [vmem:[%s0 + $0x260] sm:$0x1]
    %v543 = vld [vmem:[%s0 + $0x264] sm:$0xf]
    %v544 = vld [vmem:[%s0 + $0x268] sm:$0xf]
    %v545 = vld [vmem:[%s0 + $0x26c] sm:$0x1]
    %v546 = vld [vmem:[%s0 + $0x288] sm:$0xf]
    %v547 = vld [vmem:[%s0 + $0x28c] sm:$0xf]
    %v548 = vld [vmem:[%s0 + $0x290] sm:$0x1]
    %v549 = vld [vmem:[%s0 + $0x294] sm:$0xf]
    %v550 = vld [vmem:[%s0 + $0x298] sm:$0xf]
    %v551 = vld [vmem:[%s0 + $0x29c] sm:$0x1]
    %v552 = vld [vmem:[%s0 + $0x2a0] sm:$0xf]
    %v553 = vld [vmem:[%s0 + $0x2a4] sm:$0xf]
    %v554 = vld [vmem:[%s0 + $0x2a8] sm:$0x1]
    %v555 = vld [vmem:[%s0 + $0x2ac] sm:$0xf]
    %v556 = vld [vmem:[%s0 + $0x2b0] sm:$0xf]
    %v557 = vld [vmem:[%s0 + $0x2b4] sm:$0x1]
    %v558 = vld [vmem:[%s0 + $0x2b8] sm:$0xf]
    %v559 = vld [vmem:[%s0 + $0x2bc] sm:$0xf]
    %v560 = vld [vmem:[%s0 + $0x2c0] sm:$0x1]
    %v561 = vld [vmem:[%s0 + $0x2c4] sm:$0xf]
    %v562 = vld [vmem:[%s0 + $0x2c8] sm:$0xf]
    %v563 = vld [vmem:[%s0 + $0x2cc] sm:$0x1]
    %v564 = vld [vmem:[%s0 + $0x2d0] sm:$0xf]
    %v565 = vld [vmem:[%s0 + $0x2d4] sm:$0xf]
    %v566 = vld [vmem:[%s0 + $0x2d8] sm:$0x1]
    %v567 = vld [vmem:[%s0 + $0x2dc] sm:$0xf]
    %v568 = vld [vmem:[%s0 + $0x2e0] sm:$0xf]
    %v569 = vld [vmem:[%s0 + $0x2e4] sm:$0x1]
    %v570 = vld [vmem:[%s0 + $0x2e8] sm:$0xf]
    %v571 = vld [vmem:[%s0 + $0x2ec] sm:$0xf]
    %v572 = vld [vmem:[%s0 + $0x2f0] sm:$0x1]
    %v573 = vld [vmem:[%s0 + $0x2f4] sm:$0xf]
    %v574 = vld [vmem:[%s0 + $0x2f8] sm:$0xf]
    %v575 = vld [vmem:[%s0 + $0x2fc] sm:$0x1]
    %v576 = vld [vmem:[%s0 + $0x300] sm:$0xf]
    %v577 = vld [vmem:[%s0 + $0x304] sm:$0xf]
    %v578 = vld [vmem:[%s0 + $0x308] sm:$0x1]
    %v579 = vld [vmem:[%s0 + $0x30c] sm:$0xf]
    %v580 = vld [vmem:[%s0 + $0x310] sm:$0xf]
    %v581 = vld [vmem:[%s0 + $0x314] sm:$0x1]
    %v582 = vld [vmem:[%s0 + $0x318] sm:$0xf]
    %v583 = vld [vmem:[%s0 + $0x31c] sm:$0xf]
    %v584 = vld [vmem:[%s0 + $0x320] sm:$0x1]
    %v585 = vld [vmem:[%s0 + $0x324] sm:$0xf]
    %v586 = vld [vmem:[%s0 + $0x328] sm:$0xf]
    %v587 = vld [vmem:[%s0 + $0x32c] sm:$0x1]
    %v588 = vld [vmem:[%s0 + $0x330] sm:$0xf]
    %v589 = vld [vmem:[%s0 + $0x334] sm:$0xf]
    %v590 = vld [vmem:[%s0 + $0x338] sm:$0x1]
    %v591 = vld [vmem:[%s0 + $0x33c] sm:$0xf]
    %v592 = vld [vmem:[%s0 + $0x340] sm:$0xf]
    %v593 = vld [vmem:[%s0 + $0x344] sm:$0x1]
    %vm594 = vsmask.f32 3328
    %vm595 = vsmask.f32 7440
    %vm596 = vmor %vm594, %vm595
    %v598 = vshrl.u32 %v402, 16
    %v600 = vrot.slane %v598, 4
    %v601 = vshll.u32 %v402, 16
    %v603 = vrot.slane %v601, 5
    %v604 = vor.u32 %v600, %v603
    %v605 = vrot.slane %v604, 4
    %v607 = vshll.u32 %v403, 16
    %v609 = vrot.slane %v607, 5
    %v610 = vsel %vm596, %v605, %v609
    %v611 = vshrl.u32 %v403, 16
    %v613 = vrot.slane %v611, 4
    %v614 = vor.u32 %v613, %v609
    %v615 = vrot.slane %v614, 4
    %v617 = vshll.u32 %v404, 16
    %v619 = vrot.slane %v617, 5
    %v620 = vsel %vm596, %v615, %v619
    %v622 = vshrl.u32 %v405, 16
    %v624 = vrot.slane %v622, 4
    %v625 = vshll.u32 %v405, 16
    %v627 = vrot.slane %v625, 5
    %v628 = vor.u32 %v624, %v627
    %v629 = vrot.slane %v628, 4
    %v631 = vshll.u32 %v406, 16
    %v633 = vrot.slane %v631, 5
    %v634 = vsel %vm596, %v629, %v633
    %v635 = vshrl.u32 %v406, 16
    %v637 = vrot.slane %v635, 4
    %v638 = vor.u32 %v637, %v633
    %v639 = vrot.slane %v638, 4
    %v641 = vshll.u32 %v407, 16
    %v643 = vrot.slane %v641, 5
    %v644 = vsel %vm596, %v639, %v643
    %v646 = vshrl.u32 %v408, 16
    %v648 = vrot.slane %v646, 4
    %v649 = vshll.u32 %v408, 16
    %v651 = vrot.slane %v649, 5
    %v652 = vor.u32 %v648, %v651
    %v653 = vrot.slane %v652, 4
    %v655 = vshll.u32 %v409, 16
    %v657 = vrot.slane %v655, 5
    %v658 = vsel %vm596, %v653, %v657
    %v659 = vshrl.u32 %v409, 16
    %v661 = vrot.slane %v659, 4
    %v662 = vor.u32 %v661, %v657
    %v663 = vrot.slane %v662, 4
    %v665 = vshll.u32 %v410, 16
    %v667 = vrot.slane %v665, 5
    %v668 = vsel %vm596, %v663, %v667
    %v670 = vshrl.u32 %v411, 16
    %v672 = vrot.slane %v670, 4
    %v673 = vshll.u32 %v411, 16
    %v675 = vrot.slane %v673, 5
    %v676 = vor.u32 %v672, %v675
    %v677 = vrot.slane %v676, 4
    %v679 = vshll.u32 %v412, 16
    %v681 = vrot.slane %v679, 5
    %v682 = vsel %vm596, %v677, %v681
    %v683 = vshrl.u32 %v412, 16
    %v685 = vrot.slane %v683, 4
    %v686 = vor.u32 %v685, %v681
    %v687 = vrot.slane %v686, 4
    %v689 = vshll.u32 %v413, 16
    %v691 = vrot.slane %v689, 5
    %v692 = vsel %vm596, %v687, %v691
    %v694 = vshrl.u32 %v414, 16
    %v696 = vrot.slane %v694, 4
    %v697 = vshll.u32 %v414, 16
    %v699 = vrot.slane %v697, 5
    %v700 = vor.u32 %v696, %v699
    %v701 = vrot.slane %v700, 4
    %v703 = vshll.u32 %v415, 16
    %v705 = vrot.slane %v703, 5
    %v706 = vsel %vm596, %v701, %v705
    %v707 = vshrl.u32 %v415, 16
    %v709 = vrot.slane %v707, 4
    %v710 = vor.u32 %v709, %v705
    %v711 = vrot.slane %v710, 4
    %v713 = vshll.u32 %v416, 16
    %v715 = vrot.slane %v713, 5
    %v716 = vsel %vm596, %v711, %v715
    %v718 = vshrl.u32 %v417, 16
    %v720 = vrot.slane %v718, 4
    %v721 = vshll.u32 %v417, 16
    %v723 = vrot.slane %v721, 5
    %v724 = vor.u32 %v720, %v723
    %v725 = vrot.slane %v724, 4
    %v727 = vshll.u32 %v418, 16
    %v729 = vrot.slane %v727, 5
    %v730 = vsel %vm596, %v725, %v729
    %v731 = vshrl.u32 %v418, 16
    %v733 = vrot.slane %v731, 4
    %v734 = vor.u32 %v733, %v729
    %v735 = vrot.slane %v734, 4
    %v737 = vshll.u32 %v419, 16
    %v739 = vrot.slane %v737, 5
    %v740 = vsel %vm596, %v735, %v739
    %v742 = vshrl.u32 %v420, 16
    %v744 = vrot.slane %v742, 4
    %v745 = vshll.u32 %v420, 16
    %v747 = vrot.slane %v745, 5
    %v748 = vor.u32 %v744, %v747
    %v749 = vrot.slane %v748, 4
    %v751 = vshll.u32 %v421, 16
    %v753 = vrot.slane %v751, 5
    %v754 = vsel %vm596, %v749, %v753
    %v755 = vshrl.u32 %v421, 16
    %v757 = vrot.slane %v755, 4
    %v758 = vor.u32 %v757, %v753
    %v759 = vrot.slane %v758, 4
    %v761 = vshll.u32 %v422, 16
    %v763 = vrot.slane %v761, 5
    %v764 = vsel %vm596, %v759, %v763
    %v766 = vshrl.u32 %v423, 16
    %v768 = vrot.slane %v766, 4
    %v769 = vshll.u32 %v423, 16
    %v771 = vrot.slane %v769, 5
    %v772 = vor.u32 %v768, %v771
    %v773 = vrot.slane %v772, 4
    %v775 = vshll.u32 %v424, 16
    %v777 = vrot.slane %v775, 5
    %v778 = vsel %vm596, %v773, %v777
    %v779 = vshrl.u32 %v424, 16
    %v781 = vrot.slane %v779, 4
    %v782 = vor.u32 %v781, %v777
    %v783 = vrot.slane %v782, 4
    %v785 = vshll.u32 %v425, 16
    %v787 = vrot.slane %v785, 5
    %v788 = vsel %vm596, %v783, %v787
    %v790 = vshrl.u32 %v426, 16
    %v792 = vrot.slane %v790, 4
    %v793 = vshll.u32 %v426, 16
    %v795 = vrot.slane %v793, 5
    %v796 = vor.u32 %v792, %v795
    %v797 = vrot.slane %v796, 4
    %v799 = vshll.u32 %v427, 16
    %v801 = vrot.slane %v799, 5
    %v802 = vsel %vm596, %v797, %v801
    %v803 = vshrl.u32 %v427, 16
    %v805 = vrot.slane %v803, 4
    %v806 = vor.u32 %v805, %v801
    %v807 = vrot.slane %v806, 4
    %v809 = vshll.u32 %v428, 16
    %v811 = vrot.slane %v809, 5
    %v812 = vsel %vm596, %v807, %v811
    %v814 = vshrl.u32 %v429, 16
    %v816 = vrot.slane %v814, 4
    %v817 = vshll.u32 %v429, 16
    %v819 = vrot.slane %v817, 5
    %v820 = vor.u32 %v816, %v819
    %v821 = vrot.slane %v820, 4
    %v823 = vshll.u32 %v430, 16
    %v825 = vrot.slane %v823, 5
    %v826 = vsel %vm596, %v821, %v825
    %v827 = vshrl.u32 %v430, 16
    %v829 = vrot.slane %v827, 4
    %v830 = vor.u32 %v829, %v825
    %v831 = vrot.slane %v830, 4
    %v833 = vshll.u32 %v431, 16
    %v835 = vrot.slane %v833, 5
    %v836 = vsel %vm596, %v831, %v835
    %v838 = vshrl.u32 %v432, 16
    %v840 = vrot.slane %v838, 4
    %v841 = vshll.u32 %v432, 16
    %v843 = vrot.slane %v841, 5
    %v844 = vor.u32 %v840, %v843
    %v845 = vrot.slane %v844, 4
    %v847 = vshll.u32 %v433, 16
    %v849 = vrot.slane %v847, 5
    %v850 = vsel %vm596, %v845, %v849
    %v851 = vshrl.u32 %v433, 16
    %v853 = vrot.slane %v851, 4
    %v854 = vor.u32 %v853, %v849
    %v855 = vrot.slane %v854, 4
    %v857 = vshll.u32 %v434, 16
    %v859 = vrot.slane %v857, 5
    %v860 = vsel %vm596, %v855, %v859
    %v862 = vshrl.u32 %v435, 16
    %v864 = vrot.slane %v862, 4
    %v865 = vshll.u32 %v435, 16
    %v867 = vrot.slane %v865, 5
    %v868 = vor.u32 %v864, %v867
    %v869 = vrot.slane %v868, 4
    %v871 = vshll.u32 %v436, 16
    %v873 = vrot.slane %v871, 5
    %v874 = vsel %vm596, %v869, %v873
    %v875 = vshrl.u32 %v436, 16
    %v877 = vrot.slane %v875, 4
    %v878 = vor.u32 %v877, %v873
    %v879 = vrot.slane %v878, 4
    %v881 = vshll.u32 %v437, 16
    %v883 = vrot.slane %v881, 5
    %v884 = vsel %vm596, %v879, %v883
    %v886 = vshrl.u32 %v438, 16
    %v888 = vrot.slane %v886, 4
    %v889 = vshll.u32 %v438, 16
    %v891 = vrot.slane %v889, 5
    %v892 = vor.u32 %v888, %v891
    %v893 = vrot.slane %v892, 4
    %v895 = vshll.u32 %v439, 16
    %v897 = vrot.slane %v895, 5
    %v898 = vsel %vm596, %v893, %v897
    %v899 = vshrl.u32 %v439, 16
    %v901 = vrot.slane %v899, 4
    %v902 = vor.u32 %v901, %v897
    %v903 = vrot.slane %v902, 4
    %v905 = vshll.u32 %v440, 16
    %v907 = vrot.slane %v905, 5
    %v908 = vsel %vm596, %v903, %v907
    %v910 = vshrl.u32 %v441, 16
    %v912 = vrot.slane %v910, 4
    %v913 = vshll.u32 %v441, 16
    %v915 = vrot.slane %v913, 5
    %v916 = vor.u32 %v912, %v915
    %v917 = vrot.slane %v916, 4
    %v919 = vshll.u32 %v442, 16
    %v921 = vrot.slane %v919, 5
    %v922 = vsel %vm596, %v917, %v921
    %v923 = vshrl.u32 %v442, 16
    %v925 = vrot.slane %v923, 4
    %v926 = vor.u32 %v925, %v921
    %v927 = vrot.slane %v926, 4
    %v929 = vshll.u32 %v443, 16
    %v931 = vrot.slane %v929, 5
    %v932 = vsel %vm596, %v927, %v931
    %v934 = vshrl.u32 %v444, 16
    %v936 = vrot.slane %v934, 4
    %v937 = vshll.u32 %v444, 16
    %v939 = vrot.slane %v937, 5
    %v940 = vor.u32 %v936, %v939
    %v941 = vrot.slane %v940, 4
    %v943 = vshll.u32 %v445, 16
    %v945 = vrot.slane %v943, 5
    %v946 = vsel %vm596, %v941, %v945
    %v947 = vshrl.u32 %v445, 16
    %v949 = vrot.slane %v947, 4
    %v950 = vor.u32 %v949, %v945
    %v951 = vrot.slane %v950, 4
    %v953 = vshll.u32 %v446, 16
    %v955 = vrot.slane %v953, 5
    %v956 = vsel %vm596, %v951, %v955
    %v958 = vshrl.u32 %v447, 16
    %v960 = vrot.slane %v958, 4
    %v961 = vshll.u32 %v447, 16
    %v963 = vrot.slane %v961, 5
    %v964 = vor.u32 %v960, %v963
    %v965 = vrot.slane %v964, 4
    %v967 = vshll.u32 %v448, 16
    %v969 = vrot.slane %v967, 5
    %v970 = vsel %vm596, %v965, %v969
    %v971 = vshrl.u32 %v448, 16
    %v973 = vrot.slane %v971, 4
    %v974 = vor.u32 %v973, %v969
    %v975 = vrot.slane %v974, 4
    %v977 = vshll.u32 %v449, 16
    %v979 = vrot.slane %v977, 5
    %v980 = vsel %vm596, %v975, %v979
    %v982 = vshrl.u32 %v450, 16
    %v984 = vrot.slane %v982, 4
    %v985 = vshll.u32 %v450, 16
    %v987 = vrot.slane %v985, 5
    %v988 = vor.u32 %v984, %v987
    %v989 = vrot.slane %v988, 4
    %v991 = vshll.u32 %v451, 16
    %v993 = vrot.slane %v991, 5
    %v994 = vsel %vm596, %v989, %v993
    %v995 = vshrl.u32 %v451, 16
    %v997 = vrot.slane %v995, 4
    %v998 = vor.u32 %v997, %v993
    %v999 = vrot.slane %v998, 4
    %v1001 = vshll.u32 %v452, 16
    %v1003 = vrot.slane %v1001, 5
    %v1004 = vsel %vm596, %v999, %v1003
    %v1006 = vshrl.u32 %v453, 16
    %v1008 = vrot.slane %v1006, 4
    %v1009 = vshll.u32 %v453, 16
    %v1011 = vrot.slane %v1009, 5
    %v1012 = vor.u32 %v1008, %v1011
    %v1013 = vrot.slane %v1012, 4
    %v1015 = vshll.u32 %v454, 16
    %v1017 = vrot.slane %v1015, 5
    %v1018 = vsel %vm596, %v1013, %v1017
    %v1019 = vshrl.u32 %v454, 16
    %v1021 = vrot.slane %v1019, 4
    %v1022 = vor.u32 %v1021, %v1017
    %v1023 = vrot.slane %v1022, 4
    %v1025 = vshll.u32 %v455, 16
    %v1027 = vrot.slane %v1025, 5
    %v1028 = vsel %vm596, %v1023, %v1027
    %v1030 = vshrl.u32 %v456, 16
    %v1032 = vrot.slane %v1030, 4
    %v1033 = vshll.u32 %v456, 16
    %v1035 = vrot.slane %v1033, 5
    %v1036 = vor.u32 %v1032, %v1035
    %v1037 = vrot.slane %v1036, 4
    %v1039 = vshll.u32 %v457, 16
    %v1041 = vrot.slane %v1039, 5
    %v1042 = vsel %vm596, %v1037, %v1041
    %v1043 = vshrl.u32 %v457, 16
    %v1045 = vrot.slane %v1043, 4
    %v1046 = vor.u32 %v1045, %v1041
    %v1047 = vrot.slane %v1046, 4
    %v1049 = vshll.u32 %v458, 16
    %v1051 = vrot.slane %v1049, 5
    %v1052 = vsel %vm596, %v1047, %v1051
    %v1054 = vshrl.u32 %v459, 16
    %v1056 = vrot.slane %v1054, 4
    %v1057 = vshll.u32 %v459, 16
    %v1059 = vrot.slane %v1057, 5
    %v1060 = vor.u32 %v1056, %v1059
    %v1061 = vrot.slane %v1060, 4
    %v1063 = vshll.u32 %v460, 16
    %v1065 = vrot.slane %v1063, 5
    %v1066 = vsel %vm596, %v1061, %v1065
    %v1067 = vshrl.u32 %v460, 16
    %v1069 = vrot.slane %v1067, 4
    %v1070 = vor.u32 %v1069, %v1065
    %v1071 = vrot.slane %v1070, 4
    %v1073 = vshll.u32 %v461, 16
    %v1075 = vrot.slane %v1073, 5
    %v1076 = vsel %vm596, %v1071, %v1075
    %v1078 = vshrl.u32 %v462, 16
    %v1080 = vrot.slane %v1078, 4
    %v1081 = vshll.u32 %v462, 16
    %v1083 = vrot.slane %v1081, 5
    %v1084 = vor.u32 %v1080, %v1083
    %v1085 = vrot.slane %v1084, 4
    %v1087 = vshll.u32 %v463, 16
    %v1089 = vrot.slane %v1087, 5
    %v1090 = vsel %vm596, %v1085, %v1089
    %v1091 = vshrl.u32 %v463, 16
    %v1093 = vrot.slane %v1091, 4
    %v1094 = vor.u32 %v1093, %v1089
    %v1095 = vrot.slane %v1094, 4
    %v1097 = vshll.u32 %v464, 16
    %v1099 = vrot.slane %v1097, 5
    %v1100 = vsel %vm596, %v1095, %v1099
    %v1102 = vshrl.u32 %v465, 16
    %v1104 = vrot.slane %v1102, 4
    %v1105 = vshll.u32 %v465, 16
    %v1107 = vrot.slane %v1105, 5
    %v1108 = vor.u32 %v1104, %v1107
    %v1109 = vrot.slane %v1108, 4
    %v1111 = vshll.u32 %v466, 16
    %v1113 = vrot.slane %v1111, 5
    %v1114 = vsel %vm596, %v1109, %v1113
    %v1115 = vshrl.u32 %v466, 16
    %v1117 = vrot.slane %v1115, 4
    %v1118 = vor.u32 %v1117, %v1113
    %v1119 = vrot.slane %v1118, 4
    %v1121 = vshll.u32 %v467, 16
    %v1123 = vrot.slane %v1121, 5
    %v1124 = vsel %vm596, %v1119, %v1123
    %v1126 = vshrl.u32 %v468, 16
    %v1128 = vrot.slane %v1126, 4
    %v1129 = vshll.u32 %v468, 16
    %v1131 = vrot.slane %v1129, 5
    %v1132 = vor.u32 %v1128, %v1131
    %v1133 = vrot.slane %v1132, 4
    %v1135 = vshll.u32 %v469, 16
    %v1137 = vrot.slane %v1135, 5
    %v1138 = vsel %vm596, %v1133, %v1137
    %v1139 = vshrl.u32 %v469, 16
    %v1141 = vrot.slane %v1139, 4
    %v1142 = vor.u32 %v1141, %v1137
    %v1143 = vrot.slane %v1142, 4
    %v1145 = vshll.u32 %v470, 16
    %v1147 = vrot.slane %v1145, 5
    %v1148 = vsel %vm596, %v1143, %v1147
    %v1150 = vshrl.u32 %v471, 16
    %v1152 = vrot.slane %v1150, 4
    %v1153 = vshll.u32 %v471, 16
    %v1155 = vrot.slane %v1153, 5
    %v1156 = vor.u32 %v1152, %v1155
    %v1157 = vrot.slane %v1156, 4
    %v1159 = vshll.u32 %v472, 16
    %v1161 = vrot.slane %v1159, 5
    %v1162 = vsel %vm596, %v1157, %v1161
    %v1163 = vshrl.u32 %v472, 16
    %v1165 = vrot.slane %v1163, 4
    %v1166 = vor.u32 %v1165, %v1161
    %v1167 = vrot.slane %v1166, 4
    %v1169 = vshll.u32 %v473, 16
    %v1171 = vrot.slane %v1169, 5
    %v1172 = vsel %vm596, %v1167, %v1171
    %v1174 = vshrl.u32 %v474, 16
    %v1176 = vrot.slane %v1174, 4
    %v1177 = vshll.u32 %v474, 16
    %v1179 = vrot.slane %v1177, 5
    %v1180 = vor.u32 %v1176, %v1179
    %v1181 = vrot.slane %v1180, 4
    %v1183 = vshll.u32 %v475, 16
    %v1185 = vrot.slane %v1183, 5
    %v1186 = vsel %vm596, %v1181, %v1185
    %v1187 = vshrl.u32 %v475, 16
    %v1189 = vrot.slane %v1187, 4
    %v1190 = vor.u32 %v1189, %v1185
    %v1191 = vrot.slane %v1190, 4
    %v1193 = vshll.u32 %v476, 16
    %v1195 = vrot.slane %v1193, 5
    %v1196 = vsel %vm596, %v1191, %v1195
    %v1198 = vshrl.u32 %v477, 16
    %v1200 = vrot.slane %v1198, 4
    %v1201 = vshll.u32 %v477, 16
    %v1203 = vrot.slane %v1201, 5
    %v1204 = vor.u32 %v1200, %v1203
    %v1205 = vrot.slane %v1204, 4
    %v1207 = vshll.u32 %v478, 16
    %v1209 = vrot.slane %v1207, 5
    %v1210 = vsel %vm596, %v1205, %v1209
    %v1211 = vshrl.u32 %v478, 16
    %v1213 = vrot.slane %v1211, 4
    %v1214 = vor.u32 %v1213, %v1209
    %v1215 = vrot.slane %v1214, 4
    %v1217 = vshll.u32 %v479, 16
    %v1219 = vrot.slane %v1217, 5
    %v1220 = vsel %vm596, %v1215, %v1219
    %v1222 = vshrl.u32 %v480, 16
    %v1224 = vrot.slane %v1222, 4
    %v1225 = vshll.u32 %v480, 16
    %v1227 = vrot.slane %v1225, 5
    %v1228 = vor.u32 %v1224, %v1227
    %v1229 = vrot.slane %v1228, 4
    %v1231 = vshll.u32 %v481, 16
    %v1233 = vrot.slane %v1231, 5
    %v1234 = vsel %vm596, %v1229, %v1233
    %v1235 = vshrl.u32 %v481, 16
    %v1237 = vrot.slane %v1235, 4
    %v1238 = vor.u32 %v1237, %v1233
    %v1239 = vrot.slane %v1238, 4
    %v1241 = vshll.u32 %v482, 16
    %v1243 = vrot.slane %v1241, 5
    %v1244 = vsel %vm596, %v1239, %v1243
    %v1246 = vshrl.u32 %v483, 16
    %v1248 = vrot.slane %v1246, 4
    %v1249 = vshll.u32 %v483, 16
    %v1251 = vrot.slane %v1249, 5
    %v1252 = vor.u32 %v1248, %v1251
    %v1253 = vrot.slane %v1252, 4
    %v1255 = vshll.u32 %v484, 16
    %v1257 = vrot.slane %v1255, 5
    %v1258 = vsel %vm596, %v1253, %v1257
    %v1259 = vshrl.u32 %v484, 16
    %v1261 = vrot.slane %v1259, 4
    %v1262 = vor.u32 %v1261, %v1257
    %v1263 = vrot.slane %v1262, 4
    %v1265 = vshll.u32 %v485, 16
    %v1267 = vrot.slane %v1265, 5
    %v1268 = vsel %vm596, %v1263, %v1267
    %v1270 = vshrl.u32 %v486, 16
    %v1272 = vrot.slane %v1270, 4
    %v1273 = vshll.u32 %v486, 16
    %v1275 = vrot.slane %v1273, 5
    %v1276 = vor.u32 %v1272, %v1275
    %v1277 = vrot.slane %v1276, 4
    %v1279 = vshll.u32 %v487, 16
    %v1281 = vrot.slane %v1279, 5
    %v1282 = vsel %vm596, %v1277, %v1281
    %v1283 = vshrl.u32 %v487, 16
    %v1285 = vrot.slane %v1283, 4
    %v1286 = vor.u32 %v1285, %v1281
    %v1287 = vrot.slane %v1286, 4
    %v1289 = vshll.u32 %v488, 16
    %v1291 = vrot.slane %v1289, 5
    %v1292 = vsel %vm596, %v1287, %v1291
    %v1294 = vshrl.u32 %v489, 16
    %v1296 = vrot.slane %v1294, 4
    %v1297 = vshll.u32 %v489, 16
    %v1299 = vrot.slane %v1297, 5
    %v1300 = vor.u32 %v1296, %v1299
    %v1301 = vrot.slane %v1300, 4
    %v1303 = vshll.u32 %v490, 16
    %v1305 = vrot.slane %v1303, 5
    %v1306 = vsel %vm596, %v1301, %v1305
    %v1307 = vshrl.u32 %v490, 16
    %v1309 = vrot.slane %v1307, 4
    %v1310 = vor.u32 %v1309, %v1305
    %v1311 = vrot.slane %v1310, 4
    %v1313 = vshll.u32 %v491, 16
    %v1315 = vrot.slane %v1313, 5
    %v1316 = vsel %vm596, %v1311, %v1315
    %v1318 = vshrl.u32 %v492, 16
    %v1320 = vrot.slane %v1318, 4
    %v1321 = vshll.u32 %v492, 16
    %v1323 = vrot.slane %v1321, 5
    %v1324 = vor.u32 %v1320, %v1323
    %v1325 = vrot.slane %v1324, 4
    %v1327 = vshll.u32 %v493, 16
    %v1329 = vrot.slane %v1327, 5
    %v1330 = vsel %vm596, %v1325, %v1329
    %v1331 = vshrl.u32 %v493, 16
    %v1333 = vrot.slane %v1331, 4
    %v1334 = vor.u32 %v1333, %v1329
    %v1335 = vrot.slane %v1334, 4
    %v1337 = vshll.u32 %v494, 16
    %v1339 = vrot.slane %v1337, 5
    %v1340 = vsel %vm596, %v1335, %v1339
    %v1342 = vshrl.u32 %v495, 16
    %v1344 = vrot.slane %v1342, 4
    %v1345 = vshll.u32 %v495, 16
    %v1347 = vrot.slane %v1345, 5
    %v1348 = vor.u32 %v1344, %v1347
    %v1349 = vrot.slane %v1348, 4
    %v1351 = vshll.u32 %v496, 16
    %v1353 = vrot.slane %v1351, 5
    %v1354 = vsel %vm596, %v1349, %v1353
    %v1355 = vshrl.u32 %v496, 16
    %v1357 = vrot.slane %v1355, 4
    %v1358 = vor.u32 %v1357, %v1353
    %v1359 = vrot.slane %v1358, 4
    %v1361 = vshll.u32 %v497, 16
    %v1363 = vrot.slane %v1361, 5
    %v1364 = vsel %vm596, %v1359, %v1363
    %v1366 = vshrl.u32 %v498, 16
    %v1368 = vrot.slane %v1366, 4
    %v1369 = vshll.u32 %v498, 16
    %v1371 = vrot.slane %v1369, 5
    %v1372 = vor.u32 %v1368, %v1371
    %v1373 = vrot.slane %v1372, 4
    %v1375 = vshll.u32 %v499, 16
    %v1377 = vrot.slane %v1375, 5
    %v1378 = vsel %vm596, %v1373, %v1377
    %v1379 = vshrl.u32 %v499, 16
    %v1381 = vrot.slane %v1379, 4
    %v1382 = vor.u32 %v1381, %v1377
    %v1383 = vrot.slane %v1382, 4
    %v1385 = vshll.u32 %v500, 16
    %v1387 = vrot.slane %v1385, 5
    %v1388 = vsel %vm596, %v1383, %v1387
    %v1390 = vshrl.u32 %v501, 16
    %v1392 = vrot.slane %v1390, 4
    %v1393 = vshll.u32 %v501, 16
    %v1395 = vrot.slane %v1393, 5
    %v1396 = vor.u32 %v1392, %v1395
    %v1397 = vrot.slane %v1396, 4
    %v1399 = vshll.u32 %v502, 16
    %v1401 = vrot.slane %v1399, 5
    %v1402 = vsel %vm596, %v1397, %v1401
    %v1403 = vshrl.u32 %v502, 16
    %v1405 = vrot.slane %v1403, 4
    %v1406 = vor.u32 %v1405, %v1401
    %v1407 = vrot.slane %v1406, 4
    %v1409 = vshll.u32 %v503, 16
    %v1411 = vrot.slane %v1409, 5
    %v1412 = vsel %vm596, %v1407, %v1411
    %v1414 = vshrl.u32 %v504, 16
    %v1416 = vrot.slane %v1414, 4
    %v1417 = vshll.u32 %v504, 16
    %v1419 = vrot.slane %v1417, 5
    %v1420 = vor.u32 %v1416, %v1419
    %v1421 = vrot.slane %v1420, 4
    %v1423 = vshll.u32 %v505, 16
    %v1425 = vrot.slane %v1423, 5
    %v1426 = vsel %vm596, %v1421, %v1425
    %v1427 = vshrl.u32 %v505, 16
    %v1429 = vrot.slane %v1427, 4
    %v1430 = vor.u32 %v1429, %v1425
    %v1431 = vrot.slane %v1430, 4
    %v1433 = vshll.u32 %v506, 16
    %v1435 = vrot.slane %v1433, 5
    %v1436 = vsel %vm596, %v1431, %v1435
    %v1438 = vshrl.u32 %v507, 16
    %v1440 = vrot.slane %v1438, 4
    %v1441 = vshll.u32 %v507, 16
    %v1443 = vrot.slane %v1441, 5
    %v1444 = vor.u32 %v1440, %v1443
    %v1445 = vrot.slane %v1444, 4
    %v1447 = vshll.u32 %v508, 16
    %v1449 = vrot.slane %v1447, 5
    %v1450 = vsel %vm596, %v1445, %v1449
    %v1451 = vshrl.u32 %v508, 16
    %v1453 = vrot.slane %v1451, 4
    %v1454 = vor.u32 %v1453, %v1449
    %v1455 = vrot.slane %v1454, 4
    %v1457 = vshll.u32 %v509, 16
    %v1459 = vrot.slane %v1457, 5
    %v1460 = vsel %vm596, %v1455, %v1459
    %v1462 = vshrl.u32 %v510, 16
    %v1464 = vrot.slane %v1462, 4
    %v1465 = vshll.u32 %v510, 16
    %v1467 = vrot.slane %v1465, 5
    %v1468 = vor.u32 %v1464, %v1467
    %v1469 = vrot.slane %v1468, 4
    %v1471 = vshll.u32 %v511, 16
    %v1473 = vrot.slane %v1471, 5
    %v1474 = vsel %vm596, %v1469, %v1473
    %v1475 = vshrl.u32 %v511, 16
    %v1477 = vrot.slane %v1475, 4
    %v1478 = vor.u32 %v1477, %v1473
    %v1479 = vrot.slane %v1478, 4
    %v1481 = vshll.u32 %v512, 16
    %v1483 = vrot.slane %v1481, 5
    %v1484 = vsel %vm596, %v1479, %v1483
    %v1486 = vshrl.u32 %v513, 16
    %v1488 = vrot.slane %v1486, 4
    %v1489 = vshll.u32 %v513, 16
    %v1491 = vrot.slane %v1489, 5
    %v1492 = vor.u32 %v1488, %v1491
    %v1493 = vrot.slane %v1492, 4
    %v1495 = vshll.u32 %v514, 16
    %v1497 = vrot.slane %v1495, 5
    %v1498 = vsel %vm596, %v1493, %v1497
    %v1499 = vshrl.u32 %v514, 16
    %v1501 = vrot.slane %v1499, 4
    %v1502 = vor.u32 %v1501, %v1497
    %v1503 = vrot.slane %v1502, 4
    %v1505 = vshll.u32 %v515, 16
    %v1507 = vrot.slane %v1505, 5
    %v1508 = vsel %vm596, %v1503, %v1507
    %v1510 = vshrl.u32 %v516, 16
    %v1512 = vrot.slane %v1510, 4
    %v1513 = vshll.u32 %v516, 16
    %v1515 = vrot.slane %v1513, 5
    %v1516 = vor.u32 %v1512, %v1515
    %v1517 = vrot.slane %v1516, 4
    %v1519 = vshll.u32 %v517, 16
    %v1521 = vrot.slane %v1519, 5
    %v1522 = vsel %vm596, %v1517, %v1521
    %v1523 = vshrl.u32 %v517, 16
    %v1525 = vrot.slane %v1523, 4
    %v1526 = vor.u32 %v1525, %v1521
    %v1527 = vrot.slane %v1526, 4
    %v1529 = vshll.u32 %v518, 16
    %v1531 = vrot.slane %v1529, 5
    %v1532 = vsel %vm596, %v1527, %v1531
    %v1534 = vshrl.u32 %v519, 16
    %v1536 = vrot.slane %v1534, 4
    %v1537 = vshll.u32 %v519, 16
    %v1539 = vrot.slane %v1537, 5
    %v1540 = vor.u32 %v1536, %v1539
    %v1541 = vrot.slane %v1540, 4
    %v1543 = vshll.u32 %v520, 16
    %v1545 = vrot.slane %v1543, 5
    %v1546 = vsel %vm596, %v1541, %v1545
    %v1547 = vshrl.u32 %v520, 16
    %v1549 = vrot.slane %v1547, 4
    %v1550 = vor.u32 %v1549, %v1545
    %v1551 = vrot.slane %v1550, 4
    %v1553 = vshll.u32 %v521, 16
    %v1555 = vrot.slane %v1553, 5
    %v1556 = vsel %vm596, %v1551, %v1555
    %v1558 = vshrl.u32 %v522, 16
    %v1560 = vrot.slane %v1558, 4
    %v1561 = vshll.u32 %v522, 16
    %v1563 = vrot.slane %v1561, 5
    %v1564 = vor.u32 %v1560, %v1563
    %v1565 = vrot.slane %v1564, 4
    %v1567 = vshll.u32 %v523, 16
    %v1569 = vrot.slane %v1567, 5
    %v1570 = vsel %vm596, %v1565, %v1569
    %v1571 = vshrl.u32 %v523, 16
    %v1573 = vrot.slane %v1571, 4
    %v1574 = vor.u32 %v1573, %v1569
    %v1575 = vrot.slane %v1574, 4
    %v1577 = vshll.u32 %v524, 16
    %v1579 = vrot.slane %v1577, 5
    %v1580 = vsel %vm596, %v1575, %v1579
    %v1582 = vshrl.u32 %v525, 16
    %v1584 = vrot.slane %v1582, 4
    %v1585 = vshll.u32 %v525, 16
    %v1587 = vrot.slane %v1585, 5
    %v1588 = vor.u32 %v1584, %v1587
    %v1589 = vrot.slane %v1588, 4
    %v1591 = vshll.u32 %v526, 16
    %v1593 = vrot.slane %v1591, 5
    %v1594 = vsel %vm596, %v1589, %v1593
    %v1595 = vshrl.u32 %v526, 16
    %v1597 = vrot.slane %v1595, 4
    %v1598 = vor.u32 %v1597, %v1593
    %v1599 = vrot.slane %v1598, 4
    %v1601 = vshll.u32 %v527, 16
    %v1603 = vrot.slane %v1601, 5
    %v1604 = vsel %vm596, %v1599, %v1603
    %v1606 = vshrl.u32 %v528, 16
    %v1608 = vrot.slane %v1606, 4
    %v1609 = vshll.u32 %v528, 16
    %v1611 = vrot.slane %v1609, 5
    %v1612 = vor.u32 %v1608, %v1611
    %v1613 = vrot.slane %v1612, 4
    %v1615 = vshll.u32 %v529, 16
    %v1617 = vrot.slane %v1615, 5
    %v1618 = vsel %vm596, %v1613, %v1617
    %v1619 = vshrl.u32 %v529, 16
    %v1621 = vrot.slane %v1619, 4
    %v1622 = vor.u32 %v1621, %v1617
    %v1623 = vrot.slane %v1622, 4
    %v1625 = vshll.u32 %v530, 16
    %v1627 = vrot.slane %v1625, 5
    %v1628 = vsel %vm596, %v1623, %v1627
    %v1630 = vshrl.u32 %v531, 16
    %v1632 = vrot.slane %v1630, 4
    %v1633 = vshll.u32 %v531, 16
    %v1635 = vrot.slane %v1633, 5
    %v1636 = vor.u32 %v1632, %v1635
    %v1637 = vrot.slane %v1636, 4
    %v1639 = vshll.u32 %v532, 16
    %v1641 = vrot.slane %v1639, 5
    %v1642 = vsel %vm596, %v1637, %v1641
    %v1643 = vshrl.u32 %v532, 16
    %v1645 = vrot.slane %v1643, 4
    %v1646 = vor.u32 %v1645, %v1641
    %v1647 = vrot.slane %v1646, 4
    %v1649 = vshll.u32 %v533, 16
    %v1651 = vrot.slane %v1649, 5
    %v1652 = vsel %vm596, %v1647, %v1651
    %v1654 = vshrl.u32 %v534, 16
    %v1656 = vrot.slane %v1654, 4
    %v1657 = vshll.u32 %v534, 16
    %v1659 = vrot.slane %v1657, 5
    %v1660 = vor.u32 %v1656, %v1659
    %v1661 = vrot.slane %v1660, 4
    %v1663 = vshll.u32 %v535, 16
    %v1665 = vrot.slane %v1663, 5
    %v1666 = vsel %vm596, %v1661, %v1665
    %v1667 = vshrl.u32 %v535, 16
    %v1669 = vrot.slane %v1667, 4
    %v1670 = vor.u32 %v1669, %v1665
    %v1671 = vrot.slane %v1670, 4
    %v1673 = vshll.u32 %v536, 16
    %v1675 = vrot.slane %v1673, 5
    %v1676 = vsel %vm596, %v1671, %v1675
    %v1678 = vshrl.u32 %v537, 16
    %v1680 = vrot.slane %v1678, 4
    %v1681 = vshll.u32 %v537, 16
    %v1683 = vrot.slane %v1681, 5
    %v1684 = vor.u32 %v1680, %v1683
    %v1685 = vrot.slane %v1684, 4
    %v1687 = vshll.u32 %v538, 16
    %v1689 = vrot.slane %v1687, 5
    %v1690 = vsel %vm596, %v1685, %v1689
    %v1691 = vshrl.u32 %v538, 16
    %v1693 = vrot.slane %v1691, 4
    %v1694 = vor.u32 %v1693, %v1689
    %v1695 = vrot.slane %v1694, 4
    %v1697 = vshll.u32 %v539, 16
    %v1699 = vrot.slane %v1697, 5
    %v1700 = vsel %vm596, %v1695, %v1699
    %v1702 = vshrl.u32 %v540, 16
    %v1704 = vrot.slane %v1702, 4
    %v1705 = vshll.u32 %v540, 16
    %v1707 = vrot.slane %v1705, 5
    %v1708 = vor.u32 %v1704, %v1707
    %v1709 = vrot.slane %v1708, 4
    %v1711 = vshll.u32 %v541, 16
    %v1713 = vrot.slane %v1711, 5
    %v1714 = vsel %vm596, %v1709, %v1713
    %v1715 = vshrl.u32 %v541, 16
    %v1717 = vrot.slane %v1715, 4
    %v1718 = vor.u32 %v1717, %v1713
    %v1719 = vrot.slane %v1718, 4
    %v1721 = vshll.u32 %v542, 16
    %v1723 = vrot.slane %v1721, 5
    %v1724 = vsel %vm596, %v1719, %v1723
    %v1726 = vshrl.u32 %v543, 16
    %v1728 = vrot.slane %v1726, 4
    %v1729 = vshll.u32 %v543, 16
    %v1731 = vrot.slane %v1729, 5
    %v1732 = vor.u32 %v1728, %v1731
    %v1733 = vrot.slane %v1732, 4
    %v1735 = vshll.u32 %v544, 16
    %v1737 = vrot.slane %v1735, 5
    %v1738 = vsel %vm596, %v1733, %v1737
    %v1739 = vshrl.u32 %v544, 16
    %v1741 = vrot.slane %v1739, 4
    %v1742 = vor.u32 %v1741, %v1737
    %v1743 = vrot.slane %v1742, 4
    %v1745 = vshll.u32 %v545, 16
    %v1747 = vrot.slane %v1745, 5
    %v1748 = vsel %vm596, %v1743, %v1747
    %v1750 = vshrl.u32 %v546, 16
    %v1752 = vrot.slane %v1750, 4
    %v1753 = vshll.u32 %v546, 16
    %v1755 = vrot.slane %v1753, 5
    %v1756 = vor.u32 %v1752, %v1755
    %v1757 = vrot.slane %v1756, 4
    %v1759 = vshll.u32 %v547, 16
    %v1761 = vrot.slane %v1759, 5
    %v1762 = vsel %vm596, %v1757, %v1761
    %v1763 = vshrl.u32 %v547, 16
    %v1765 = vrot.slane %v1763, 4
    %v1766 = vor.u32 %v1765, %v1761
    %v1767 = vrot.slane %v1766, 4
    %v1769 = vshll.u32 %v548, 16
    %v1771 = vrot.slane %v1769, 5
    %v1772 = vsel %vm596, %v1767, %v1771
    %v1774 = vshrl.u32 %v549, 16
    %v1776 = vrot.slane %v1774, 4
    %v1777 = vshll.u32 %v549, 16
    %v1779 = vrot.slane %v1777, 5
    %v1780 = vor.u32 %v1776, %v1779
    %v1781 = vrot.slane %v1780, 4
    %v1783 = vshll.u32 %v550, 16
    %v1785 = vrot.slane %v1783, 5
    %v1786 = vsel %vm596, %v1781, %v1785
    %v1787 = vshrl.u32 %v550, 16
    %v1789 = vrot.slane %v1787, 4
    %v1790 = vor.u32 %v1789, %v1785
    %v1791 = vrot.slane %v1790, 4
    %v1793 = vshll.u32 %v551, 16
    %v1795 = vrot.slane %v1793, 5
    %v1796 = vsel %vm596, %v1791, %v1795
    %v1798 = vshrl.u32 %v552, 16
    %v1800 = vrot.slane %v1798, 4
    %v1801 = vshll.u32 %v552, 16
    %v1803 = vrot.slane %v1801, 5
    %v1804 = vor.u32 %v1800, %v1803
    %v1805 = vrot.slane %v1804, 4
    %v1807 = vshll.u32 %v553, 16
    %v1809 = vrot.slane %v1807, 5
    %v1810 = vsel %vm596, %v1805, %v1809
    %v1811 = vshrl.u32 %v553, 16
    %v1813 = vrot.slane %v1811, 4
    %v1814 = vor.u32 %v1813, %v1809
    %v1815 = vrot.slane %v1814, 4
    %v1817 = vshll.u32 %v554, 16
    %v1819 = vrot.slane %v1817, 5
    %v1820 = vsel %vm596, %v1815, %v1819
    %v1822 = vshrl.u32 %v555, 16
    %v1824 = vrot.slane %v1822, 4
    %v1825 = vshll.u32 %v555, 16
    %v1827 = vrot.slane %v1825, 5
    %v1828 = vor.u32 %v1824, %v1827
    %v1829 = vrot.slane %v1828, 4
    %v1831 = vshll.u32 %v556, 16
    %v1833 = vrot.slane %v1831, 5
    %v1834 = vsel %vm596, %v1829, %v1833
    %v1835 = vshrl.u32 %v556, 16
    %v1837 = vrot.slane %v1835, 4
    %v1838 = vor.u32 %v1837, %v1833
    %v1839 = vrot.slane %v1838, 4
    %v1841 = vshll.u32 %v557, 16
    %v1843 = vrot.slane %v1841, 5
    %v1844 = vsel %vm596, %v1839, %v1843
    %v1846 = vshrl.u32 %v558, 16
    %v1848 = vrot.slane %v1846, 4
    %v1849 = vshll.u32 %v558, 16
    %v1851 = vrot.slane %v1849, 5
    %v1852 = vor.u32 %v1848, %v1851
    %v1853 = vrot.slane %v1852, 4
    %v1855 = vshll.u32 %v559, 16
    %v1857 = vrot.slane %v1855, 5
    %v1858 = vsel %vm596, %v1853, %v1857
    %v1859 = vshrl.u32 %v559, 16
    %v1861 = vrot.slane %v1859, 4
    %v1862 = vor.u32 %v1861, %v1857
    %v1863 = vrot.slane %v1862, 4
    %v1865 = vshll.u32 %v560, 16
    %v1867 = vrot.slane %v1865, 5
    %v1868 = vsel %vm596, %v1863, %v1867
    %v1870 = vshrl.u32 %v561, 16
    %v1872 = vrot.slane %v1870, 4
    %v1873 = vshll.u32 %v561, 16
    %v1875 = vrot.slane %v1873, 5
    %v1876 = vor.u32 %v1872, %v1875
    %v1877 = vrot.slane %v1876, 4
    %v1879 = vshll.u32 %v562, 16
    %v1881 = vrot.slane %v1879, 5
    %v1882 = vsel %vm596, %v1877, %v1881
    %v1883 = vshrl.u32 %v562, 16
    %v1885 = vrot.slane %v1883, 4
    %v1886 = vor.u32 %v1885, %v1881
    %v1887 = vrot.slane %v1886, 4
    %v1889 = vshll.u32 %v563, 16
    %v1891 = vrot.slane %v1889, 5
    %v1892 = vsel %vm596, %v1887, %v1891
    %v1894 = vshrl.u32 %v564, 16
    %v1896 = vrot.slane %v1894, 4
    %v1897 = vshll.u32 %v564, 16
    %v1899 = vrot.slane %v1897, 5
    %v1900 = vor.u32 %v1896, %v1899
    %v1901 = vrot.slane %v1900, 4
    %v1903 = vshll.u32 %v565, 16
    %v1905 = vrot.slane %v1903, 5
    %v1906 = vsel %vm596, %v1901, %v1905
    %v1907 = vshrl.u32 %v565, 16
    %v1909 = vrot.slane %v1907, 4
    %v1910 = vor.u32 %v1909, %v1905
    %v1911 = vrot.slane %v1910, 4
    %v1913 = vshll.u32 %v566, 16
    %v1915 = vrot.slane %v1913, 5
    %v1916 = vsel %vm596, %v1911, %v1915
    %v1918 = vshrl.u32 %v567, 16
    %v1920 = vrot.slane %v1918, 4
    %v1921 = vshll.u32 %v567, 16
    %v1923 = vrot.slane %v1921, 5
    %v1924 = vor.u32 %v1920, %v1923
    %v1925 = vrot.slane %v1924, 4
    %v1927 = vshll.u32 %v568, 16
    %v1929 = vrot.slane %v1927, 5
    %v1930 = vsel %vm596, %v1925, %v1929
    %v1931 = vshrl.u32 %v568, 16
    %v1933 = vrot.slane %v1931, 4
    %v1934 = vor.u32 %v1933, %v1929
    %v1935 = vrot.slane %v1934, 4
    %v1937 = vshll.u32 %v569, 16
    %v1939 = vrot.slane %v1937, 5
    %v1940 = vsel %vm596, %v1935, %v1939
    %v1942 = vshrl.u32 %v570, 16
    %v1944 = vrot.slane %v1942, 4
    %v1945 = vshll.u32 %v570, 16
    %v1947 = vrot.slane %v1945, 5
    %v1948 = vor.u32 %v1944, %v1947
    %v1949 = vrot.slane %v1948, 4
    %v1951 = vshll.u32 %v571, 16
    %v1953 = vrot.slane %v1951, 5
    %v1954 = vsel %vm596, %v1949, %v1953
    %v1955 = vshrl.u32 %v571, 16
    %v1957 = vrot.slane %v1955, 4
    %v1958 = vor.u32 %v1957, %v1953
    %v1959 = vrot.slane %v1958, 4
    %v1961 = vshll.u32 %v572, 16
    %v1963 = vrot.slane %v1961, 5
    %v1964 = vsel %vm596, %v1959, %v1963
    %v1966 = vshrl.u32 %v573, 16
    %v1968 = vrot.slane %v1966, 4
    %v1969 = vshll.u32 %v573, 16
    %v1971 = vrot.slane %v1969, 5
    %v1972 = vor.u32 %v1968, %v1971
    %v1973 = vrot.slane %v1972, 4
    %v1975 = vshll.u32 %v574, 16
    %v1977 = vrot.slane %v1975, 5
    %v1978 = vsel %vm596, %v1973, %v1977
    %v1979 = vshrl.u32 %v574, 16
    %v1981 = vrot.slane %v1979, 4
    %v1982 = vor.u32 %v1981, %v1977
    %v1983 = vrot.slane %v1982, 4
    %v1985 = vshll.u32 %v575, 16
    %v1987 = vrot.slane %v1985, 5
    %v1988 = vsel %vm596, %v1983, %v1987
    %v1990 = vshrl.u32 %v576, 16
    %v1992 = vrot.slane %v1990, 4
    %v1993 = vshll.u32 %v576, 16
    %v1995 = vrot.slane %v1993, 5
    %v1996 = vor.u32 %v1992, %v1995
    %v1997 = vrot.slane %v1996, 4
    %v1999 = vshll.u32 %v577, 16
    %v2001 = vrot.slane %v1999, 5
    %v2002 = vsel %vm596, %v1997, %v2001
    %v2003 = vshrl.u32 %v577, 16
    %v2005 = vrot.slane %v2003, 4
    %v2006 = vor.u32 %v2005, %v2001
    %v2007 = vrot.slane %v2006, 4
    %v2009 = vshll.u32 %v578, 16
    %v2011 = vrot.slane %v2009, 5
    %v2012 = vsel %vm596, %v2007, %v2011
    %v2014 = vshrl.u32 %v579, 16
    %v2016 = vrot.slane %v2014, 4
    %v2017 = vshll.u32 %v579, 16
    %v2019 = vrot.slane %v2017, 5
    %v2020 = vor.u32 %v2016, %v2019
    %v2021 = vrot.slane %v2020, 4
    %v2023 = vshll.u32 %v580, 16
    %v2025 = vrot.slane %v2023, 5
    %v2026 = vsel %vm596, %v2021, %v2025
    %v2027 = vshrl.u32 %v580, 16
    %v2029 = vrot.slane %v2027, 4
    %v2030 = vor.u32 %v2029, %v2025
    %v2031 = vrot.slane %v2030, 4
    %v2033 = vshll.u32 %v581, 16
    %v2035 = vrot.slane %v2033, 5
    %v2036 = vsel %vm596, %v2031, %v2035
    %v2038 = vshrl.u32 %v582, 16
    %v2040 = vrot.slane %v2038, 4
    %v2041 = vshll.u32 %v582, 16
    %v2043 = vrot.slane %v2041, 5
    %v2044 = vor.u32 %v2040, %v2043
    %v2045 = vrot.slane %v2044, 4
    %v2047 = vshll.u32 %v583, 16
    %v2049 = vrot.slane %v2047, 5
    %v2050 = vsel %vm596, %v2045, %v2049
    %v2051 = vshrl.u32 %v583, 16
    %v2053 = vrot.slane %v2051, 4
    %v2054 = vor.u32 %v2053, %v2049
    %v2055 = vrot.slane %v2054, 4
    %v2057 = vshll.u32 %v584, 16
    %v2059 = vrot.slane %v2057, 5
    %v2060 = vsel %vm596, %v2055, %v2059
    %v2062 = vshrl.u32 %v585, 16
    %v2064 = vrot.slane %v2062, 4
    %v2065 = vshll.u32 %v585, 16
    %v2067 = vrot.slane %v2065, 5
    %v2068 = vor.u32 %v2064, %v2067
    %v2069 = vrot.slane %v2068, 4
    %v2071 = vshll.u32 %v586, 16
    %v2073 = vrot.slane %v2071, 5
    %v2074 = vsel %vm596, %v2069, %v2073
    %v2075 = vshrl.u32 %v586, 16
    %v2077 = vrot.slane %v2075, 4
    %v2078 = vor.u32 %v2077, %v2073
    %v2079 = vrot.slane %v2078, 4
    %v2081 = vshll.u32 %v587, 16
    %v2083 = vrot.slane %v2081, 5
    %v2084 = vsel %vm596, %v2079, %v2083
    %v2086 = vshrl.u32 %v588, 16
    %v2088 = vrot.slane %v2086, 4
    %v2089 = vshll.u32 %v588, 16
    %v2091 = vrot.slane %v2089, 5
    %v2092 = vor.u32 %v2088, %v2091
    %v2093 = vrot.slane %v2092, 4
    %v2095 = vshll.u32 %v589, 16
    %v2097 = vrot.slane %v2095, 5
    %v2098 = vsel %vm596, %v2093, %v2097
    %v2099 = vshrl.u32 %v589, 16
    %v2101 = vrot.slane %v2099, 4
    %v2102 = vor.u32 %v2101, %v2097
    %v2103 = vrot.slane %v2102, 4
    %v2105 = vshll.u32 %v590, 16
    %v2107 = vrot.slane %v2105, 5
    %v2108 = vsel %vm596, %v2103, %v2107
    %v2110 = vshrl.u32 %v591, 16
    %v2112 = vrot.slane %v2110, 4
    %v2113 = vshll.u32 %v591, 16
    %v2115 = vrot.slane %v2113, 5
    %v2116 = vor.u32 %v2112, %v2115
    %v2117 = vrot.slane %v2116, 4
    %v2119 = vshll.u32 %v592, 16
    %v2121 = vrot.slane %v2119, 5
    %v2122 = vsel %vm596, %v2117, %v2121
    %v2123 = vshrl.u32 %v592, 16
    %v2125 = vrot.slane %v2123, 4
    %v2126 = vor.u32 %v2125, %v2121
    %v2127 = vrot.slane %v2126, 4
    %v2129 = vshll.u32 %v593, 16
    %v2131 = vrot.slane %v2129, 5
    %v2132 = vsel %vm596, %v2127, %v2131
    %2133 = vrot.lane.b32.xlu0 %v610, 16
    %v2134 = vpop.permute.xlu0 %2133
    %2135 = vrot.lane.b32.xlu0 %v620, 16
    %v2136 = vpop.permute.xlu0 %2135
    %2137 = vrot.lane.b32.xlu0 %v634, 16
    %v2138 = vpop.permute.xlu0 %2137
    %2139 = vrot.lane.b32.xlu0 %v644, 16
    %v2140 = vpop.permute.xlu0 %2139
    %2141 = vrot.lane.b32.xlu0 %v658, 16
    %v2142 = vpop.permute.xlu0 %2141
    %2143 = vrot.lane.b32.xlu0 %v668, 16
    %v2144 = vpop.permute.xlu0 %2143
    %2145 = vrot.lane.b32.xlu0 %v682, 16
    %v2146 = vpop.permute.xlu0 %2145
    %2147 = vrot.lane.b32.xlu0 %v692, 16
    %v2148 = vpop.permute.xlu0 %2147
    %2149 = vrot.lane.b32.xlu0 %v706, 16
    %v2150 = vpop.permute.xlu0 %2149
    %2151 = vrot.lane.b32.xlu0 %v716, 16
    %v2152 = vpop.permute.xlu0 %2151
    %2153 = vrot.lane.b32.xlu0 %v730, 16
    %v2154 = vpop.permute.xlu0 %2153
    %2155 = vrot.lane.b32.xlu0 %v740, 16
    %v2156 = vpop.permute.xlu0 %2155
    %2157 = vrot.lane.b32.xlu0 %v754, 16
    %v2158 = vpop.permute.xlu0 %2157
    %2159 = vrot.lane.b32.xlu0 %v764, 16
    %v2160 = vpop.permute.xlu0 %2159
    %2161 = vrot.lane.b32.xlu0 %v778, 16
    %v2162 = vpop.permute.xlu0 %2161
    %2163 = vrot.lane.b32.xlu0 %v788, 16
    %v2164 = vpop.permute.xlu0 %2163
    %2165 = vrot.lane.b32.xlu0 %v802, 16
    %v2166 = vpop.permute.xlu0 %2165
    %2167 = vrot.lane.b32.xlu0 %v812, 16
    %v2168 = vpop.permute.xlu0 %2167
    %2169 = vrot.lane.b32.xlu0 %v826, 16
    %v2170 = vpop.permute.xlu0 %2169
    %2171 = vrot.lane.b32.xlu0 %v836, 16
    %v2172 = vpop.permute.xlu0 %2171
    %2173 = vrot.lane.b32.xlu0 %v850, 16
    %v2174 = vpop.permute.xlu0 %2173
    %2175 = vrot.lane.b32.xlu0 %v860, 16
    %v2176 = vpop.permute.xlu0 %2175
    %2177 = vrot.lane.b32.xlu0 %v874, 16
    %v2178 = vpop.permute.xlu0 %2177
    %2179 = vrot.lane.b32.xlu0 %v884, 16
    %v2180 = vpop.permute.xlu0 %2179
    %2181 = vrot.lane.b32.xlu0 %v898, 16
    %v2182 = vpop.permute.xlu0 %2181
    %2183 = vrot.lane.b32.xlu0 %v908, 16
    %v2184 = vpop.permute.xlu0 %2183
    %2185 = vrot.lane.b32.xlu0 %v922, 16
    %v2186 = vpop.permute.xlu0 %2185
    %2187 = vrot.lane.b32.xlu0 %v932, 16
    %v2188 = vpop.permute.xlu0 %2187
    %2189 = vrot.lane.b32.xlu0 %v946, 16
    %v2190 = vpop.permute.xlu0 %2189
    %2191 = vrot.lane.b32.xlu0 %v956, 16
    %v2192 = vpop.permute.xlu0 %2191
    %2193 = vrot.lane.b32.xlu0 %v970, 16
    %v2194 = vpop.permute.xlu0 %2193
    %2195 = vrot.lane.b32.xlu0 %v980, 16
    %v2196 = vpop.permute.xlu0 %2195
    %2197 = vrot.lane.b32.xlu0 %v994, 16
    %v2198 = vpop.permute.xlu0 %2197
    %2199 = vrot.lane.b32.xlu0 %v1004, 16
    %v2200 = vpop.permute.xlu0 %2199
    %2201 = vrot.lane.b32.xlu0 %v1018, 16
    %v2202 = vpop.permute.xlu0 %2201
    %2203 = vrot.lane.b32.xlu0 %v1028, 16
    %v2204 = vpop.permute.xlu0 %2203
    %2205 = vrot.lane.b32.xlu0 %v1042, 16
    %v2206 = vpop.permute.xlu0 %2205
    %2207 = vrot.lane.b32.xlu0 %v1052, 16
    %v2208 = vpop.permute.xlu0 %2207
    %2209 = vrot.lane.b32.xlu0 %v1066, 16
    %v2210 = vpop.permute.xlu0 %2209
    %2211 = vrot.lane.b32.xlu0 %v1076, 16
    %v2212 = vpop.permute.xlu0 %2211
    %2213 = vrot.lane.b32.xlu0 %v1090, 16
    %v2214 = vpop.permute.xlu0 %2213
    %2215 = vrot.lane.b32.xlu0 %v1100, 16
    %v2216 = vpop.permute.xlu0 %2215
    %2217 = vrot.lane.b32.xlu0 %v1114, 16
    %v2218 = vpop.permute.xlu0 %2217
    %2219 = vrot.lane.b32.xlu0 %v1124, 16
    %v2220 = vpop.permute.xlu0 %2219
    %2221 = vrot.lane.b32.xlu0 %v1138, 16
    %v2222 = vpop.permute.xlu0 %2221
    %2223 = vrot.lane.b32.xlu0 %v1148, 16
    %v2224 = vpop.permute.xlu0 %2223
    %2225 = vrot.lane.b32.xlu0 %v1162, 16
    %v2226 = vpop.permute.xlu0 %2225
    %2227 = vrot.lane.b32.xlu0 %v1172, 16
    %v2228 = vpop.permute.xlu0 %2227
    %2229 = vrot.lane.b32.xlu0 %v1186, 16
    %v2230 = vpop.permute.xlu0 %2229
    %2231 = vrot.lane.b32.xlu0 %v1196, 16
    %v2232 = vpop.permute.xlu0 %2231
    %2233 = vrot.lane.b32.xlu0 %v1210, 16
    %v2234 = vpop.permute.xlu0 %2233
    %2235 = vrot.lane.b32.xlu0 %v1220, 16
    %v2236 = vpop.permute.xlu0 %2235
    %2237 = vrot.lane.b32.xlu0 %v1234, 16
    %v2238 = vpop.permute.xlu0 %2237
    %2239 = vrot.lane.b32.xlu0 %v1244, 16
    %v2240 = vpop.permute.xlu0 %2239
    %2241 = vrot.lane.b32.xlu0 %v1258, 16
    %v2242 = vpop.permute.xlu0 %2241
    %2243 = vrot.lane.b32.xlu0 %v1268, 16
    %v2244 = vpop.permute.xlu0 %2243
    %2245 = vrot.lane.b32.xlu0 %v1282, 16
    %v2246 = vpop.permute.xlu0 %2245
    %2247 = vrot.lane.b32.xlu0 %v1292, 16
    %v2248 = vpop.permute.xlu0 %2247
    %2249 = vrot.lane.b32.xlu0 %v1306, 16
    %v2250 = vpop.permute.xlu0 %2249
    %2251 = vrot.lane.b32.xlu0 %v1316, 16
    %v2252 = vpop.permute.xlu0 %2251
    %2253 = vrot.lane.b32.xlu0 %v1330, 16
    %v2254 = vpop.permute.xlu0 %2253
    %2255 = vrot.lane.b32.xlu0 %v1340, 16
    %v2256 = vpop.permute.xlu0 %2255
    %2257 = vrot.lane.b32.xlu0 %v1354, 16
    %v2258 = vpop.permute.xlu0 %2257
    %2259 = vrot.lane.b32.xlu0 %v1364, 16
    %v2260 = vpop.permute.xlu0 %2259
    %2261 = vrot.lane.b32.xlu0 %v1378, 16
    %v2262 = vpop.permute.xlu0 %2261
    %2263 = vrot.lane.b32.xlu0 %v1388, 16
    %v2264 = vpop.permute.xlu0 %2263
    %2265 = vrot.lane.b32.xlu0 %v1402, 16
    %v2266 = vpop.permute.xlu0 %2265
    %2267 = vrot.lane.b32.xlu0 %v1412, 16
    %v2268 = vpop.permute.xlu0 %2267
    %2269 = vrot.lane.b32.xlu0 %v1426, 16
    %v2270 = vpop.permute.xlu0 %2269
    %2271 = vrot.lane.b32.xlu0 %v1436, 16
    %v2272 = vpop.permute.xlu0 %2271
    %2273 = vrot.lane.b32.xlu0 %v1450, 16
    %v2274 = vpop.permute.xlu0 %2273
    %2275 = vrot.lane.b32.xlu0 %v1460, 16
    %v2276 = vpop.permute.xlu0 %2275
    %2277 = vrot.lane.b32.xlu0 %v1474, 16
    %v2278 = vpop.permute.xlu0 %2277
    %2279 = vrot.lane.b32.xlu0 %v1484, 16
    %v2280 = vpop.permute.xlu0 %2279
    %2281 = vrot.lane.b32.xlu0 %v1498, 16
    %v2282 = vpop.permute.xlu0 %2281
    %2283 = vrot.lane.b32.xlu0 %v1508, 16
    %v2284 = vpop.permute.xlu0 %2283
    %2285 = vrot.lane.b32.xlu0 %v1522, 16
    %v2286 = vpop.permute.xlu0 %2285
    %2287 = vrot.lane.b32.xlu0 %v1532, 16
    %v2288 = vpop.permute.xlu0 %2287
    %2289 = vrot.lane.b32.xlu0 %v1546, 16
    %v2290 = vpop.permute.xlu0 %2289
    %2291 = vrot.lane.b32.xlu0 %v1556, 16
    %v2292 = vpop.permute.xlu0 %2291
    %2293 = vrot.lane.b32.xlu0 %v1570, 16
    %v2294 = vpop.permute.xlu0 %2293
    %2295 = vrot.lane.b32.xlu0 %v1580, 16
    %v2296 = vpop.permute.xlu0 %2295
    %2297 = vrot.lane.b32.xlu0 %v1594, 16
    %v2298 = vpop.permute.xlu0 %2297
    %2299 = vrot.lane.b32.xlu0 %v1604, 16
    %v2300 = vpop.permute.xlu0 %2299
    %2301 = vrot.lane.b32.xlu0 %v1618, 16
    %v2302 = vpop.permute.xlu0 %2301
    %2303 = vrot.lane.b32.xlu0 %v1628, 16
    %v2304 = vpop.permute.xlu0 %2303
    %2305 = vrot.lane.b32.xlu0 %v1642, 16
    %v2306 = vpop.permute.xlu0 %2305
    %2307 = vrot.lane.b32.xlu0 %v1652, 16
    %v2308 = vpop.permute.xlu0 %2307
    %2309 = vrot.lane.b32.xlu0 %v1666, 16
    %v2310 = vpop.permute.xlu0 %2309
    %2311 = vrot.lane.b32.xlu0 %v1676, 16
    %v2312 = vpop.permute.xlu0 %2311
    %2313 = vrot.lane.b32.xlu0 %v1690, 16
    %v2314 = vpop.permute.xlu0 %2313
    %2315 = vrot.lane.b32.xlu0 %v1700, 16
    %v2316 = vpop.permute.xlu0 %2315
    %2317 = vrot.lane.b32.xlu0 %v1714, 16
    %v2318 = vpop.permute.xlu0 %2317
    %2319 = vrot.lane.b32.xlu0 %v1724, 16
    %v2320 = vpop.permute.xlu0 %2319
    %2321 = vrot.lane.b32.xlu0 %v1738, 16
    %v2322 = vpop.permute.xlu0 %2321
    %2323 = vrot.lane.b32.xlu0 %v1748, 16
    %v2324 = vpop.permute.xlu0 %2323
    %2325 = vrot.lane.b32.xlu0 %v1762, 16
    %v2326 = vpop.permute.xlu0 %2325
    %2327 = vrot.lane.b32.xlu0 %v1772, 16
    %v2328 = vpop.permute.xlu0 %2327
    %2329 = vrot.lane.b32.xlu0 %v1786, 16
    %v2330 = vpop.permute.xlu0 %2329
    %2331 = vrot.lane.b32.xlu0 %v1796, 16
    %v2332 = vpop.permute.xlu0 %2331
    %2333 = vrot.lane.b32.xlu0 %v1810, 16
    %v2334 = vpop.permute.xlu0 %2333
    %2335 = vrot.lane.b32.xlu0 %v1820, 16
    %v2336 = vpop.permute.xlu0 %2335
    %2337 = vrot.lane.b32.xlu0 %v1834, 16
    %v2338 = vpop.permute.xlu0 %2337
    %2339 = vrot.lane.b32.xlu0 %v1844, 16
    %v2340 = vpop.permute.xlu0 %2339
    %2341 = vrot.lane.b32.xlu0 %v1858, 16
    %v2342 = vpop.permute.xlu0 %2341
    %2343 = vrot.lane.b32.xlu0 %v1868, 16
    %v2344 = vpop.permute.xlu0 %2343
    %2345 = vrot.lane.b32.xlu0 %v1882, 16
    %v2346 = vpop.permute.xlu0 %2345
    %2347 = vrot.lane.b32.xlu0 %v1892, 16
    %v2348 = vpop.permute.xlu0 %2347
    %2349 = vrot.lane.b32.xlu0 %v1906, 16
    %v2350 = vpop.permute.xlu0 %2349
    %2351 = vrot.lane.b32.xlu0 %v1916, 16
    %v2352 = vpop.permute.xlu0 %2351
    %2353 = vrot.lane.b32.xlu0 %v1930, 16
    %v2354 = vpop.permute.xlu0 %2353
    %2355 = vrot.lane.b32.xlu0 %v1940, 16
    %v2356 = vpop.permute.xlu0 %2355
    %2357 = vrot.lane.b32.xlu0 %v1954, 16
    %v2358 = vpop.permute.xlu0 %2357
    %2359 = vrot.lane.b32.xlu0 %v1964, 16
    %v2360 = vpop.permute.xlu0 %2359
    %2361 = vrot.lane.b32.xlu0 %v1978, 16
    %v2362 = vpop.permute.xlu0 %2361
    %2363 = vrot.lane.b32.xlu0 %v1988, 16
    %v2364 = vpop.permute.xlu0 %2363
    %2365 = vrot.lane.b32.xlu0 %v2002, 16
    %v2366 = vpop.permute.xlu0 %2365
    %2367 = vrot.lane.b32.xlu0 %v2012, 16
    %v2368 = vpop.permute.xlu0 %2367
    %2369 = vrot.lane.b32.xlu0 %v2026, 16
    %v2370 = vpop.permute.xlu0 %2369
    %2371 = vrot.lane.b32.xlu0 %v2036, 16
    %v2372 = vpop.permute.xlu0 %2371
    %2373 = vrot.lane.b32.xlu0 %v2050, 16
    %v2374 = vpop.permute.xlu0 %2373
    %2375 = vrot.lane.b32.xlu0 %v2060, 16
    %v2376 = vpop.permute.xlu0 %2375
    %2377 = vrot.lane.b32.xlu0 %v2074, 16
    %v2378 = vpop.permute.xlu0 %2377
    %2379 = vrot.lane.b32.xlu0 %v2084, 16
    %v2380 = vpop.permute.xlu0 %2379
    %2381 = vrot.lane.b32.xlu0 %v2098, 16
    %v2382 = vpop.permute.xlu0 %2381
    %2383 = vrot.lane.b32.xlu0 %v2108, 16
    %v2384 = vpop.permute.xlu0 %2383
    %2385 = vrot.lane.b32.xlu0 %v2122, 16
    %v2386 = vpop.permute.xlu0 %2385
    %2387 = vrot.lane.b32.xlu0 %v2132, 16
    %v2388 = vpop.permute.xlu0 %2387
    %vm2517 = vcmask 257152
    %2518 = vst.msk [vmem:[#allocation2] sm:$0xf] %vm2517, %v2134
    %2519 = vst.msk [vmem:[#allocation2 + $0x8] sm:$0xf] %vm2517, %v2136
    %2520 = vst.msk [vmem:[#allocation2 + $0x10] sm:$0xf] %vm2517, %v2138
    %2521 = vst.msk [vmem:[#allocation2 + $0x18] sm:$0xf] %vm2517, %v2140
    %2522 = vst.msk [vmem:[#allocation2 + $0x20] sm:$0xf] %vm2517, %v2142
    %2523 = vst.msk [vmem:[#allocation2 + $0x28] sm:$0xf] %vm2517, %v2144
    %2524 = vst.msk [vmem:[#allocation2 + $0x30] sm:$0xf] %vm2517, %v2146
    %2525 = vst.msk [vmem:[#allocation2 + $0x38] sm:$0xf] %vm2517, %v2148
    %2526 = vst.msk [vmem:[#allocation2 + $0x40] sm:$0xf] %vm2517, %v2150
    %2527 = vst.msk [vmem:[#allocation2 + $0x48] sm:$0xf] %vm2517, %v2152
    %2528 = vst.msk [vmem:[#allocation2 + $0x50] sm:$0xf] %vm2517, %v2154
    %2529 = vst.msk [vmem:[#allocation2 + $0x58] sm:$0xf] %vm2517, %v2156
    %2530 = vst.msk [vmem:[#allocation2 + $0x60] sm:$0xf] %vm2517, %v2158
    %2531 = vst.msk [vmem:[#allocation2 + $0x68] sm:$0xf] %vm2517, %v2160
    %2532 = vst.msk [vmem:[#allocation2 + $0x70] sm:$0xf] %vm2517, %v2162
    %2533 = vst.msk [vmem:[#allocation2 + $0x78] sm:$0xf] %vm2517, %v2164
    %2534 = vst.msk [vmem:[#allocation2 + $0x80] sm:$0xf] %vm2517, %v2166
    %2535 = vst.msk [vmem:[#allocation2 + $0x88] sm:$0xf] %vm2517, %v2168
    %2536 = vst.msk [vmem:[#allocation2 + $0x90] sm:$0xf] %vm2517, %v2170
    %2537 = vst.msk [vmem:[#allocation2 + $0x98] sm:$0xf] %vm2517, %v2172
    %2538 = vst.msk [vmem:[#allocation2 + $0xa0] sm:$0xf] %vm2517, %v2174
    %2539 = vst.msk [vmem:[#allocation2 + $0xa8] sm:$0xf] %vm2517, %v2176
    %2540 = vst.msk [vmem:[#allocation2 + $0xb0] sm:$0xf] %vm2517, %v2178
    %2541 = vst.msk [vmem:[#allocation2 + $0xb8] sm:$0xf] %vm2517, %v2180
    %2542 = vst.msk [vmem:[#allocation2 + $0xc0] sm:$0xf] %vm2517, %v2182
    %2543 = vst.msk [vmem:[#allocation2 + $0xc8] sm:$0xf] %vm2517, %v2184
    %2544 = vst.msk [vmem:[#allocation2 + $0xd0] sm:$0xf] %vm2517, %v2186
    %2545 = vst.msk [vmem:[#allocation2 + $0xd8] sm:$0xf] %vm2517, %v2188
    %2546 = vst.msk [vmem:[#allocation2 + $0xe0] sm:$0xf] %vm2517, %v2190
    %2547 = vst.msk [vmem:[#allocation2 + $0xe8] sm:$0xf] %vm2517, %v2192
    %2548 = vst.msk [vmem:[#allocation2 + $0xf0] sm:$0xf] %vm2517, %v2194
    %2549 = vst.msk [vmem:[#allocation2 + $0xf8] sm:$0xf] %vm2517, %v2196
    %2550 = vst.msk [vmem:[#allocation2 + $0x100] sm:$0xf] %vm2517, %v2198
    %2551 = vst.msk [vmem:[#allocation2 + $0x108] sm:$0xf] %vm2517, %v2200
    %2552 = vst.msk [vmem:[#allocation2 + $0x110] sm:$0xf] %vm2517, %v2202
    %2553 = vst.msk [vmem:[#allocation2 + $0x118] sm:$0xf] %vm2517, %v2204
    %2554 = vst.msk [vmem:[#allocation2 + $0x120] sm:$0xf] %vm2517, %v2206
    %2555 = vst.msk [vmem:[#allocation2 + $0x128] sm:$0xf] %vm2517, %v2208
    %2556 = vst.msk [vmem:[#allocation2 + $0x130] sm:$0xf] %vm2517, %v2210
    %2557 = vst.msk [vmem:[#allocation2 + $0x138] sm:$0xf] %vm2517, %v2212
    %2558 = vst.msk [vmem:[#allocation2 + $0x140] sm:$0xf] %vm2517, %v2214
    %2559 = vst.msk [vmem:[#allocation2 + $0x148] sm:$0xf] %vm2517, %v2216
    %2560 = vst.msk [vmem:[#allocation2 + $0x150] sm:$0xf] %vm2517, %v2218
    %2561 = vst.msk [vmem:[#allocation2 + $0x158] sm:$0xf] %vm2517, %v2220
    %2562 = vst.msk [vmem:[#allocation2 + $0x160] sm:$0xf] %vm2517, %v2222
    %2563 = vst.msk [vmem:[#allocation2 + $0x168] sm:$0xf] %vm2517, %v2224
    %2564 = vst.msk [vmem:[#allocation2 + $0x170] sm:$0xf] %vm2517, %v2226
    %2565 = vst.msk [vmem:[#allocation2 + $0x178] sm:$0xf] %vm2517, %v2228
    %2566 = vst.msk [vmem:[#allocation2 + $0x180] sm:$0xf] %vm2517, %v2230
    %2567 = vst.msk [vmem:[#allocation2 + $0x188] sm:$0xf] %vm2517, %v2232
    %2568 = vst.msk [vmem:[#allocation2 + $0x190] sm:$0xf] %vm2517, %v2234
    %2569 = vst.msk [vmem:[#allocation2 + $0x198] sm:$0xf] %vm2517, %v2236
    %2570 = vst.msk [vmem:[#allocation2 + $0x1a0] sm:$0xf] %vm2517, %v2238
    %2571 = vst.msk [vmem:[#allocation2 + $0x1a8] sm:$0xf] %vm2517, %v2240
    %2572 = vst.msk [vmem:[#allocation2 + $0x1b0] sm:$0xf] %vm2517, %v2242
    %2573 = vst.msk [vmem:[#allocation2 + $0x1b8] sm:$0xf] %vm2517, %v2244
    %2574 = vst.msk [vmem:[#allocation2 + $0x1c0] sm:$0xf] %vm2517, %v2246
    %2575 = vst.msk [vmem:[#allocation2 + $0x1c8] sm:$0xf] %vm2517, %v2248
    %2576 = vst.msk [vmem:[#allocation2 + $0x1d0] sm:$0xf] %vm2517, %v2250
    %2577 = vst.msk [vmem:[#allocation2 + $0x1d8] sm:$0xf] %vm2517, %v2252
    %2578 = vst.msk [vmem:[#allocation2 + $0x1e0] sm:$0xf] %vm2517, %v2254
    %2579 = vst.msk [vmem:[#allocation2 + $0x1e8] sm:$0xf] %vm2517, %v2256
    %2580 = vst.msk [vmem:[#allocation2 + $0x1f0] sm:$0xf] %vm2517, %v2258
    %2581 = vst.msk [vmem:[#allocation2 + $0x1f8] sm:$0xf] %vm2517, %v2260
    %2582 = vst.msk [vmem:[#allocation2 + $0x200] sm:$0xf] %vm2517, %v2262
    %2583 = vst.msk [vmem:[#allocation2 + $0x208] sm:$0xf] %vm2517, %v2264
    %2584 = vst.msk [vmem:[#allocation2 + $0x210] sm:$0xf] %vm2517, %v2266
    %2585 = vst.msk [vmem:[#allocation2 + $0x218] sm:$0xf] %vm2517, %v2268
    %2586 = vst.msk [vmem:[#allocation2 + $0x220] sm:$0xf] %vm2517, %v2270
    %2587 = vst.msk [vmem:[#allocation2 + $0x228] sm:$0xf] %vm2517, %v2272
    %2588 = vst.msk [vmem:[#allocation2 + $0x230] sm:$0xf] %vm2517, %v2274
    %2589 = vst.msk [vmem:[#allocation2 + $0x238] sm:$0xf] %vm2517, %v2276
    %2590 = vst.msk [vmem:[#allocation2 + $0x240] sm:$0xf] %vm2517, %v2278
    %2591 = vst.msk [vmem:[#allocation2 + $0x248] sm:$0xf] %vm2517, %v2280
    %2592 = vst.msk [vmem:[#allocation2 + $0x250] sm:$0xf] %vm2517, %v2282
    %2593 = vst.msk [vmem:[#allocation2 + $0x258] sm:$0xf] %vm2517, %v2284
    %2594 = vst.msk [vmem:[#allocation2 + $0x260] sm:$0xf] %vm2517, %v2286
    %2595 = vst.msk [vmem:[#allocation2 + $0x268] sm:$0xf] %vm2517, %v2288
    %2596 = vst.msk [vmem:[#allocation2 + $0x270] sm:$0xf] %vm2517, %v2290
    %2597 = vst.msk [vmem:[#allocation2 + $0x278] sm:$0xf] %vm2517, %v2292
    %2598 = vst.msk [vmem:[#allocation2 + $0x280] sm:$0xf] %vm2517, %v2294
    %2599 = vst.msk [vmem:[#allocation2 + $0x288] sm:$0xf] %vm2517, %v2296
    %2600 = vst.msk [vmem:[#allocation2 + $0x290] sm:$0xf] %vm2517, %v2298
    %2601 = vst.msk [vmem:[#allocation2 + $0x298] sm:$0xf] %vm2517, %v2300
    %2602 = vst.msk [vmem:[#allocation2 + $0x2a0] sm:$0xf] %vm2517, %v2302
    %2603 = vst.msk [vmem:[#allocation2 + $0x2a8] sm:$0xf] %vm2517, %v2304
    %2604 = vst.msk [vmem:[#allocation2 + $0x2b0] sm:$0xf] %vm2517, %v2306
    %2605 = vst.msk [vmem:[#allocation2 + $0x2b8] sm:$0xf] %vm2517, %v2308
    %2606 = vst.msk [vmem:[#allocation2 + $0x2c0] sm:$0xf] %vm2517, %v2310
    %2607 = vst.msk [vmem:[#allocation2 + $0x2c8] sm:$0xf] %vm2517, %v2312
    %2608 = vst.msk [vmem:[#allocation2 + $0x2d0] sm:$0xf] %vm2517, %v2314
    %2609 = vst.msk [vmem:[#allocation2 + $0x2d8] sm:$0xf] %vm2517, %v2316
    %2610 = vst.msk [vmem:[#allocation2 + $0x2e0] sm:$0xf] %vm2517, %v2318
    %2611 = vst.msk [vmem:[#allocation2 + $0x2e8] sm:$0xf] %vm2517, %v2320
    %2612 = vst.msk [vmem:[#allocation2 + $0x2f0] sm:$0xf] %vm2517, %v2322
    %2613 = vst.msk [vmem:[#allocation2 + $0x2f8] sm:$0xf] %vm2517, %v2324
    %2614 = vst.msk [vmem:[#allocation2 + $0x300] sm:$0xf] %vm2517, %v2326
    %2615 = vst.msk [vmem:[#allocation2 + $0x308] sm:$0xf] %vm2517, %v2328
    %2616 = vst.msk [vmem:[#allocation2 + $0x310] sm:$0xf] %vm2517, %v2330
    %2617 = vst.msk [vmem:[#allocation2 + $0x318] sm:$0xf] %vm2517, %v2332
    %2618 = vst.msk [vmem:[#allocation2 + $0x320] sm:$0xf] %vm2517, %v2334
    %2619 = vst.msk [vmem:[#allocation2 + $0x328] sm:$0xf] %vm2517, %v2336
    %2620 = vst.msk [vmem:[#allocation2 + $0x330] sm:$0xf] %vm2517, %v2338
    %2621 = vst.msk [vmem:[#allocation2 + $0x338] sm:$0xf] %vm2517, %v2340
    %2622 = vst.msk [vmem:[#allocation2 + $0x340] sm:$0xf] %vm2517, %v2342
    %2623 = vst.msk [vmem:[#allocation2 + $0x348] sm:$0xf] %vm2517, %v2344
    %2624 = vst.msk [vmem:[#allocation2 + $0x350] sm:$0xf] %vm2517, %v2346
    %2625 = vst.msk [vmem:[#allocation2 + $0x358] sm:$0xf] %vm2517, %v2348
    %2626 = vst.msk [vmem:[#allocation2 + $0x360] sm:$0xf] %vm2517, %v2350
    %2627 = vst.msk [vmem:[#allocation2 + $0x368] sm:$0xf] %vm2517, %v2352
    %2628 = vst.msk [vmem:[#allocation2 + $0x370] sm:$0xf] %vm2517, %v2354
    %2629 = vst.msk [vmem:[#allocation2 + $0x378] sm:$0xf] %vm2517, %v2356
    %2630 = vst.msk [vmem:[#allocation2 + $0x380] sm:$0xf] %vm2517, %v2358
    %2631 = vst.msk [vmem:[#allocation2 + $0x388] sm:$0xf] %vm2517, %v2360
    %2632 = vst.msk [vmem:[#allocation2 + $0x390] sm:$0xf] %vm2517, %v2362
    %2633 = vst.msk [vmem:[#allocation2 + $0x398] sm:$0xf] %vm2517, %v2364
    %2634 = vst.msk [vmem:[#allocation2 + $0x3a0] sm:$0xf] %vm2517, %v2366
    %2635 = vst.msk [vmem:[#allocation2 + $0x3a8] sm:$0xf] %vm2517, %v2368
    %2636 = vst.msk [vmem:[#allocation2 + $0x3b0] sm:$0xf] %vm2517, %v2370
    %2637 = vst.msk [vmem:[#allocation2 + $0x3b8] sm:$0xf] %vm2517, %v2372
    %2638 = vst.msk [vmem:[#allocation2 + $0x3c0] sm:$0xf] %vm2517, %v2374
    %2639 = vst.msk [vmem:[#allocation2 + $0x3c8] sm:$0xf] %vm2517, %v2376
    %2640 = vst.msk [vmem:[#allocation2 + $0x3d0] sm:$0xf] %vm2517, %v2378
    %2641 = vst.msk [vmem:[#allocation2 + $0x3d8] sm:$0xf] %vm2517, %v2380
    %2642 = vst.msk [vmem:[#allocation2 + $0x3e0] sm:$0xf] %vm2517, %v2382
    %2643 = vst.msk [vmem:[#allocation2 + $0x3e8] sm:$0xf] %vm2517, %v2384
    %2644 = vst.msk [vmem:[#allocation2 + $0x3f0] sm:$0xf] %vm2517, %v2386
    %2645 = vst.msk [vmem:[#allocation2 + $0x3f8] sm:$0xf] %vm2517, %v2388
    %v2646 = vld [vmem:[%s0] sm:$0xe]
    %v2647 = vld [vmem:[%s0 + $0x4] sm:$0xf]
    %v2648 = vld [vmem:[%s0 + $0x8] sm:$0x1]
    %v2649 = vld [vmem:[%s0 + $0xc] sm:$0xe]
    %v2650 = vld [vmem:[%s0 + $0x10] sm:$0xf]
    %v2651 = vld [vmem:[%s0 + $0x14] sm:$0x1]
    %v2652 = vld [vmem:[%s0 + $0x18] sm:$0xe]
    %v2653 = vld [vmem:[%s0 + $0x1c] sm:$0xf]
    %v2654 = vld [vmem:[%s0 + $0x20] sm:$0x1]
    %v2655 = vld [vmem:[%s0 + $0x24] sm:$0xe]
    %v2656 = vld [vmem:[%s0 + $0x28] sm:$0xf]
    %v2657 = vld [vmem:[%s0 + $0x2c] sm:$0x1]
    %v2658 = vld [vmem:[%s0 + $0x30] sm:$0xe]
    %v2659 = vld [vmem:[%s0 + $0x34] sm:$0xf]
    %v2660 = vld [vmem:[%s0 + $0x38] sm:$0x1]
    %v2661 = vld [vmem:[%s0 + $0x3c] sm:$0xe]
    %v2662 = vld [vmem:[%s0 + $0x40] sm:$0xf]
    %v2663 = vld [vmem:[%s0 + $0x44] sm:$0x1]
    %v2664 = vld [vmem:[%s0 + $0x48] sm:$0xe]
    %v2665 = vld [vmem:[%s0 + $0x4c] sm:$0xf]
    %v2666 = vld [vmem:[%s0 + $0x50] sm:$0x1]
    %v2667 = vld [vmem:[%s0 + $0x54] sm:$0xe]
    %v2668 = vld [vmem:[%s0 + $0x58] sm:$0xf]
    %v2669 = vld [vmem:[%s0 + $0x5c] sm:$0x1]
    %v2670 = vld [vmem:[%s0 + $0x60] sm:$0xe]
    %v2671 = vld [vmem:[%s0 + $0x64] sm:$0xf]
    %v2672 = vld [vmem:[%s0 + $0x68] sm:$0x1]
    %v2673 = vld [vmem:[%s0 + $0x6c] sm:$0xe]
    %v2674 = vld [vmem:[%s0 + $0x70] sm:$0xf]
    %v2675 = vld [vmem:[%s0 + $0x74] sm:$0x1]
    %v2676 = vld [vmem:[%s0 + $0x78] sm:$0xe]
    %v2677 = vld [vmem:[%s0 + $0x7c] sm:$0xf]
    %v2678 = vld [vmem:[%s0 + $0x80] sm:$0x1]
    %v2679 = vld [vmem:[%s0 + $0x84] sm:$0xe]
    %v2680 = vld [vmem:[%s0 + $0x88] sm:$0xf]
    %v2681 = vld [vmem:[%s0 + $0x8c] sm:$0x1]
    %v2682 = vld [vmem:[%s0 + $0x90] sm:$0xe]
    %v2683 = vld [vmem:[%s0 + $0x94] sm:$0xf]
    %v2684 = vld [vmem:[%s0 + $0x98] sm:$0x1]
    %v2685 = vld [vmem:[%s0 + $0x9c] sm:$0xe]
    %v2686 = vld [vmem:[%s0 + $0xa0] sm:$0xf]
    %v2687 = vld [vmem:[%s0 + $0xa4] sm:$0x1]
    %v2688 = vld [vmem:[%s0 + $0xa8] sm:$0xe]
    %v2689 = vld [vmem:[%s0 + $0xac] sm:$0xf]
    %v2690 = vld [vmem:[%s0 + $0xb0] sm:$0x1]
    %v2691 = vld [vmem:[%s0 + $0xb4] sm:$0xe]
    %v2692 = vld [vmem:[%s0 + $0xb8] sm:$0xf]
    %v2693 = vld [vmem:[%s0 + $0xbc] sm:$0x1]
    %v2694 = vld [vmem:[%s0 + $0xd8] sm:$0xe]
    %v2695 = vld [vmem:[%s0 + $0xdc] sm:$0xf]
    %v2696 = vld [vmem:[%s0 + $0xe0] sm:$0x1]
    %v2697 = vld [vmem:[%s0 + $0xe4] sm:$0xe]
    %v2698 = vld [vmem:[%s0 + $0xe8] sm:$0xf]
    %v2699 = vld [vmem:[%s0 + $0xec] sm:$0x1]
    %v2700 = vld [vmem:[%s0 + $0xf0] sm:$0xe]
    %v2701 = vld [vmem:[%s0 + $0xf4] sm:$0xf]
    %v2702 = vld [vmem:[%s0 + $0xf8] sm:$0x1]
    %v2703 = vld [vmem:[%s0 + $0xfc] sm:$0xe]
    %v2704 = vld [vmem:[%s0 + $0x100] sm:$0xf]
    %v2705 = vld [vmem:[%s0 + $0x104] sm:$0x1]
    %v2706 = vld [vmem:[%s0 + $0x108] sm:$0xe]
    %v2707 = vld [vmem:[%s0 + $0x10c] sm:$0xf]
    %v2708 = vld [vmem:[%s0 + $0x110] sm:$0x1]
    %v2709 = vld [vmem:[%s0 + $0x114] sm:$0xe]
    %v2710 = vld [vmem:[%s0 + $0x118] sm:$0xf]
    %v2711 = vld [vmem:[%s0 + $0x11c] sm:$0x1]
    %v2712 = vld [vmem:[%s0 + $0x120] sm:$0xe]
    %v2713 = vld [vmem:[%s0 + $0x124] sm:$0xf]
    %v2714 = vld [vmem:[%s0 + $0x128] sm:$0x1]
    %v2715 = vld [vmem:[%s0 + $0x12c] sm:$0xe]
    %v2716 = vld [vmem:[%s0 + $0x130] sm:$0xf]
    %v2717 = vld [vmem:[%s0 + $0x134] sm:$0x1]
    %v2718 = vld [vmem:[%s0 + $0x138] sm:$0xe]
    %v2719 = vld [vmem:[%s0 + $0x13c] sm:$0xf]
    %v2720 = vld [vmem:[%s0 + $0x140] sm:$0x1]
    %v2721 = vld [vmem:[%s0 + $0x144] sm:$0xe]
    %v2722 = vld [vmem:[%s0 + $0x148] sm:$0xf]
    %v2723 = vld [vmem:[%s0 + $0x14c] sm:$0x1]
    %v2724 = vld [vmem:[%s0 + $0x150] sm:$0xe]
    %v2725 = vld [vmem:[%s0 + $0x154] sm:$0xf]
    %v2726 = vld [vmem:[%s0 + $0x158] sm:$0x1]
    %v2727 = vld [vmem:[%s0 + $0x15c] sm:$0xe]
    %v2728 = vld [vmem:[%s0 + $0x160] sm:$0xf]
    %v2729 = vld [vmem:[%s0 + $0x164] sm:$0x1]
    %v2730 = vld [vmem:[%s0 + $0x168] sm:$0xe]
    %v2731 = vld [vmem:[%s0 + $0x16c] sm:$0xf]
    %v2732 = vld [vmem:[%s0 + $0x170] sm:$0x1]
    %v2733 = vld [vmem:[%s0 + $0x174] sm:$0xe]
    %v2734 = vld [vmem:[%s0 + $0x178] sm:$0xf]
    %v2735 = vld [vmem:[%s0 + $0x17c] sm:$0x1]
    %v2736 = vld [vmem:[%s0 + $0x180] sm:$0xe]
    %v2737 = vld [vmem:[%s0 + $0x184] sm:$0xf]
    %v2738 = vld [vmem:[%s0 + $0x188] sm:$0x1]
    %v2739 = vld [vmem:[%s0 + $0x18c] sm:$0xe]
    %v2740 = vld [vmem:[%s0 + $0x190] sm:$0xf]
    %v2741 = vld [vmem:[%s0 + $0x194] sm:$0x1]
    %v2742 = vld [vmem:[%s0 + $0x1b0] sm:$0xe]
    %v2743 = vld [vmem:[%s0 + $0x1b4] sm:$0xf]
    %v2744 = vld [vmem:[%s0 + $0x1b8] sm:$0x1]
    %v2745 = vld [vmem:[%s0 + $0x1bc] sm:$0xe]
    %v2746 = vld [vmem:[%s0 + $0x1c0] sm:$0xf]
    %v2747 = vld [vmem:[%s0 + $0x1c4] sm:$0x1]
    %v2748 = vld [vmem:[%s0 + $0x1c8] sm:$0xe]
    %v2749 = vld [vmem:[%s0 + $0x1cc] sm:$0xf]
    %v2750 = vld [vmem:[%s0 + $0x1d0] sm:$0x1]
    %v2751 = vld [vmem:[%s0 + $0x1d4] sm:$0xe]
    %v2752 = vld [vmem:[%s0 + $0x1d8] sm:$0xf]
    %v2753 = vld [vmem:[%s0 + $0x1dc] sm:$0x1]
    %v2754 = vld [vmem:[%s0 + $0x1e0] sm:$0xe]
    %v2755 = vld [vmem:[%s0 + $0x1e4] sm:$0xf]
    %v2756 = vld [vmem:[%s0 + $0x1e8] sm:$0x1]
    %v2757 = vld [vmem:[%s0 + $0x1ec] sm:$0xe]
    %v2758 = vld [vmem:[%s0 + $0x1f0] sm:$0xf]
    %v2759 = vld [vmem:[%s0 + $0x1f4] sm:$0x1]
    %v2760 = vld [vmem:[%s0 + $0x1f8] sm:$0xe]
    %v2761 = vld [vmem:[%s0 + $0x1fc] sm:$0xf]
    %v2762 = vld [vmem:[%s0 + $0x200] sm:$0x1]
    %v2763 = vld [vmem:[%s0 + $0x204] sm:$0xe]
    %v2764 = vld [vmem:[%s0 + $0x208] sm:$0xf]
    %v2765 = vld [vmem:[%s0 + $0x20c] sm:$0x1]
    %v2766 = vld [vmem:[%s0 + $0x210] sm:$0xe]
    %v2767 = vld [vmem:[%s0 + $0x214] sm:$0xf]
    %v2768 = vld [vmem:[%s0 + $0x218] sm:$0x1]
    %v2769 = vld [vmem:[%s0 + $0x21c] sm:$0xe]
    %v2770 = vld [vmem:[%s0 + $0x220] sm:$0xf]
    %v2771 = vld [vmem:[%s0 + $0x224] sm:$0x1]
    %v2772 = vld [vmem:[%s0 + $0x228] sm:$0xe]
    %v2773 = vld [vmem:[%s0 + $0x22c] sm:$0xf]
    %v2774 = vld [vmem:[%s0 + $0x230] sm:$0x1]
    %v2775 = vld [vmem:[%s0 + $0x234] sm:$0xe]
    %v2776 = vld [vmem:[%s0 + $0x238] sm:$0xf]
    %v2777 = vld [vmem:[%s0 + $0x23c] sm:$0x1]
    %v2778 = vld [vmem:[%s0 + $0x240] sm:$0xe]
    %v2779 = vld [vmem:[%s0 + $0x244] sm:$0xf]
    %v2780 = vld [vmem:[%s0 + $0x248] sm:$0x1]
    %v2781 = vld [vmem:[%s0 + $0x24c] sm:$0xe]
    %v2782 = vld [vmem:[%s0 + $0x250] sm:$0xf]
    %v2783 = vld [vmem:[%s0 + $0x254] sm:$0x1]
    %v2784 = vld [vmem:[%s0 + $0x258] sm:$0xe]
    %v2785 = vld [vmem:[%s0 + $0x25c] sm:$0xf]
    %v2786 = vld [vmem:[%s0 + $0x260] sm:$0x1]
    %v2787 = vld [vmem:[%s0 + $0x264] sm:$0xe]
    %v2788 = vld [vmem:[%s0 + $0x268] sm:$0xf]
    %v2789 = vld [vmem:[%s0 + $0x26c] sm:$0x1]
    %v2790 = vld [vmem:[%s0 + $0x288] sm:$0xe]
    %v2791 = vld [vmem:[%s0 + $0x28c] sm:$0xf]
    %v2792 = vld [vmem:[%s0 + $0x290] sm:$0x1]
    %v2793 = vld [vmem:[%s0 + $0x294] sm:$0xe]
    %v2794 = vld [vmem:[%s0 + $0x298] sm:$0xf]
    %v2795 = vld [vmem:[%s0 + $0x29c] sm:$0x1]
    %v2796 = vld [vmem:[%s0 + $0x2a0] sm:$0xe]
    %v2797 = vld [vmem:[%s0 + $0x2a4] sm:$0xf]
    %v2798 = vld [vmem:[%s0 + $0x2a8] sm:$0x1]
    %v2799 = vld [vmem:[%s0 + $0x2ac] sm:$0xe]
    %v2800 = vld [vmem:[%s0 + $0x2b0] sm:$0xf]
    %v2801 = vld [vmem:[%s0 + $0x2b4] sm:$0x1]
    %v2802 = vld [vmem:[%s0 + $0x2b8] sm:$0xe]
    %v2803 = vld [vmem:[%s0 + $0x2bc] sm:$0xf]
    %v2804 = vld [vmem:[%s0 + $0x2c0] sm:$0x1]
    %v2805 = vld [vmem:[%s0 + $0x2c4] sm:$0xe]
    %v2806 = vld [vmem:[%s0 + $0x2c8] sm:$0xf]
    %v2807 = vld [vmem:[%s0 + $0x2cc] sm:$0x1]
    %v2808 = vld [vmem:[%s0 + $0x2d0] sm:$0xe]
    %v2809 = vld [vmem:[%s0 + $0x2d4] sm:$0xf]
    %v2810 = vld [vmem:[%s0 + $0x2d8] sm:$0x1]
    %v2811 = vld [vmem:[%s0 + $0x2dc] sm:$0xe]
    %v2812 = vld [vmem:[%s0 + $0x2e0] sm:$0xf]
    %v2813 = vld [vmem:[%s0 + $0x2e4] sm:$0x1]
    %v2814 = vld [vmem:[%s0 + $0x2e8] sm:$0xe]
    %v2815 = vld [vmem:[%s0 + $0x2ec] sm:$0xf]
    %v2816 = vld [vmem:[%s0 + $0x2f0] sm:$0x1]
    %v2817 = vld [vmem:[%s0 + $0x2f4] sm:$0xe]
    %v2818 = vld [vmem:[%s0 + $0x2f8] sm:$0xf]
    %v2819 = vld [vmem:[%s0 + $0x2fc] sm:$0x1]
    %v2820 = vld [vmem:[%s0 + $0x300] sm:$0xe]
    %v2821 = vld [vmem:[%s0 + $0x304] sm:$0xf]
    %v2822 = vld [vmem:[%s0 + $0x308] sm:$0x1]
    %v2823 = vld [vmem:[%s0 + $0x30c] sm:$0xe]
    %v2824 = vld [vmem:[%s0 + $0x310] sm:$0xf]
    %v2825 = vld [vmem:[%s0 + $0x314] sm:$0x1]
    %v2826 = vld [vmem:[%s0 + $0x318] sm:$0xe]
    %v2827 = vld [vmem:[%s0 + $0x31c] sm:$0xf]
    %v2828 = vld [vmem:[%s0 + $0x320] sm:$0x1]
    %v2829 = vld [vmem:[%s0 + $0x324] sm:$0xe]
    %v2830 = vld [vmem:[%s0 + $0x328] sm:$0xf]
    %v2831 = vld [vmem:[%s0 + $0x32c] sm:$0x1]
    %v2832 = vld [vmem:[%s0 + $0x330] sm:$0xe]
    %v2833 = vld [vmem:[%s0 + $0x334] sm:$0xf]
    %v2834 = vld [vmem:[%s0 + $0x338] sm:$0x1]
    %v2835 = vld [vmem:[%s0 + $0x33c] sm:$0xe]
    %v2836 = vld [vmem:[%s0 + $0x340] sm:$0xf]
    %v2837 = vld [vmem:[%s0 + $0x344] sm:$0x1]
    %vm3030 = vcmask 1042432
    %vm3031 = vcmask 1046532
    %vm3032 = vmor %vm3030, %vm3031
    %v3033 = vrot.slane %v2646, 5
    %v3034 = vrot.slane %v3033, 4
    %v3035 = vrot.slane %v2647, 5
    %v3036 = vsel %vm3032, %v3034, %v3035
    %v3037 = vrot.slane %v3035, 4
    %v3038 = vrot.slane %v2648, 5
    %v3039 = vsel %vm3032, %v3037, %v3038
    %v3040 = vrot.slane %v2649, 5
    %v3041 = vrot.slane %v3040, 4
    %v3042 = vrot.slane %v2650, 5
    %v3043 = vsel %vm3032, %v3041, %v3042
    %v3044 = vrot.slane %v3042, 4
    %v3045 = vrot.slane %v2651, 5
    %v3046 = vsel %vm3032, %v3044, %v3045
    %v3047 = vrot.slane %v2652, 5
    %v3048 = vrot.slane %v3047, 4
    %v3049 = vrot.slane %v2653, 5
    %v3050 = vsel %vm3032, %v3048, %v3049
    %v3051 = vrot.slane %v3049, 4
    %v3052 = vrot.slane %v2654, 5
    %v3053 = vsel %vm3032, %v3051, %v3052
    %v3054 = vrot.slane %v2655, 5
    %v3055 = vrot.slane %v3054, 4
    %v3056 = vrot.slane %v2656, 5
    %v3057 = vsel %vm3032, %v3055, %v3056
    %v3058 = vrot.slane %v3056, 4
    %v3059 = vrot.slane %v2657, 5
    %v3060 = vsel %vm3032, %v3058, %v3059
    %v3061 = vrot.slane %v2658, 5
    %v3062 = vrot.slane %v3061, 4
    %v3063 = vrot.slane %v2659, 5
    %v3064 = vsel %vm3032, %v3062, %v3063
    %v3065 = vrot.slane %v3063, 4
    %v3066 = vrot.slane %v2660, 5
    %v3067 = vsel %vm3032, %v3065, %v3066
    %v3068 = vrot.slane %v2661, 5
    %v3069 = vrot.slane %v3068, 4
    %v3070 = vrot.slane %v2662, 5
    %v3071 = vsel %vm3032, %v3069, %v3070
    %v3072 = vrot.slane %v3070, 4
    %v3073 = vrot.slane %v2663, 5
    %v3074 = vsel %vm3032, %v3072, %v3073
    %v3075 = vrot.slane %v2664, 5
    %v3076 = vrot.slane %v3075, 4
    %v3077 = vrot.slane %v2665, 5
    %v3078 = vsel %vm3032, %v3076, %v3077
    %v3079 = vrot.slane %v3077, 4
    %v3080 = vrot.slane %v2666, 5
    %v3081 = vsel %vm3032, %v3079, %v3080
    %v3082 = vrot.slane %v2667, 5
    %v3083 = vrot.slane %v3082, 4
    %v3084 = vrot.slane %v2668, 5
    %v3085 = vsel %vm3032, %v3083, %v3084
    %v3086 = vrot.slane %v3084, 4
    %v3087 = vrot.slane %v2669, 5
    %v3088 = vsel %vm3032, %v3086, %v3087
    %v3089 = vrot.slane %v2670, 5
    %v3090 = vrot.slane %v3089, 4
    %v3091 = vrot.slane %v2671, 5
    %v3092 = vsel %vm3032, %v3090, %v3091
    %v3093 = vrot.slane %v3091, 4
    %v3094 = vrot.slane %v2672, 5
    %v3095 = vsel %vm3032, %v3093, %v3094
    %v3096 = vrot.slane %v2673, 5
    %v3097 = vrot.slane %v3096, 4
    %v3098 = vrot.slane %v2674, 5
    %v3099 = vsel %vm3032, %v3097, %v3098
    %v3100 = vrot.slane %v3098, 4
    %v3101 = vrot.slane %v2675, 5
    %v3102 = vsel %vm3032, %v3100, %v3101
    %v3103 = vrot.slane %v2676, 5
    %v3104 = vrot.slane %v3103, 4
    %v3105 = vrot.slane %v2677, 5
    %v3106 = vsel %vm3032, %v3104, %v3105
    %v3107 = vrot.slane %v3105, 4
    %v3108 = vrot.slane %v2678, 5
    %v3109 = vsel %vm3032, %v3107, %v3108
    %v3110 = vrot.slane %v2679, 5
    %v3111 = vrot.slane %v3110, 4
    %v3112 = vrot.slane %v2680, 5
    %v3113 = vsel %vm3032, %v3111, %v3112
    %v3114 = vrot.slane %v3112, 4
    %v3115 = vrot.slane %v2681, 5
    %v3116 = vsel %vm3032, %v3114, %v3115
    %v3117 = vrot.slane %v2682, 5
    %v3118 = vrot.slane %v3117, 4
    %v3119 = vrot.slane %v2683, 5
    %v3120 = vsel %vm3032, %v3118, %v3119
    %v3121 = vrot.slane %v3119, 4
    %v3122 = vrot.slane %v2684, 5
    %v3123 = vsel %vm3032, %v3121, %v3122
    %v3124 = vrot.slane %v2685, 5
    %v3125 = vrot.slane %v3124, 4
    %v3126 = vrot.slane %v2686, 5
    %v3127 = vsel %vm3032, %v3125, %v3126
    %v3128 = vrot.slane %v3126, 4
    %v3129 = vrot.slane %v2687, 5
    %v3130 = vsel %vm3032, %v3128, %v3129
    %v3131 = vrot.slane %v2688, 5
    %v3132 = vrot.slane %v3131, 4
    %v3133 = vrot.slane %v2689, 5
    %v3134 = vsel %vm3032, %v3132, %v3133
    %v3135 = vrot.slane %v3133, 4
    %v3136 = vrot.slane %v2690, 5
    %v3137 = vsel %vm3032, %v3135, %v3136
    %v3138 = vrot.slane %v2691, 5
    %v3139 = vrot.slane %v3138, 4
    %v3140 = vrot.slane %v2692, 5
    %v3141 = vsel %vm3032, %v3139, %v3140
    %v3142 = vrot.slane %v3140, 4
    %v3143 = vrot.slane %v2693, 5
    %v3144 = vsel %vm3032, %v3142, %v3143
    %v3145 = vrot.slane %v2694, 5
    %v3146 = vrot.slane %v3145, 4
    %v3147 = vrot.slane %v2695, 5
    %v3148 = vsel %vm3032, %v3146, %v3147
    %v3149 = vrot.slane %v3147, 4
    %v3150 = vrot.slane %v2696, 5
    %v3151 = vsel %vm3032, %v3149, %v3150
    %v3152 = vrot.slane %v2697, 5
    %v3153 = vrot.slane %v3152, 4
    %v3154 = vrot.slane %v2698, 5
    %v3155 = vsel %vm3032, %v3153, %v3154
    %v3156 = vrot.slane %v3154, 4
    %v3157 = vrot.slane %v2699, 5
    %v3158 = vsel %vm3032, %v3156, %v3157
    %v3159 = vrot.slane %v2700, 5
    %v3160 = vrot.slane %v3159, 4
    %v3161 = vrot.slane %v2701, 5
    %v3162 = vsel %vm3032, %v3160, %v3161
    %v3163 = vrot.slane %v3161, 4
    %v3164 = vrot.slane %v2702, 5
    %v3165 = vsel %vm3032, %v3163, %v3164
    %v3166 = vrot.slane %v2703, 5
    %v3167 = vrot.slane %v3166, 4
    %v3168 = vrot.slane %v2704, 5
    %v3169 = vsel %vm3032, %v3167, %v3168
    %v3170 = vrot.slane %v3168, 4
    %v3171 = vrot.slane %v2705, 5
    %v3172 = vsel %vm3032, %v3170, %v3171
    %v3173 = vrot.slane %v2706, 5
    %v3174 = vrot.slane %v3173, 4
    %v3175 = vrot.slane %v2707, 5
    %v3176 = vsel %vm3032, %v3174, %v3175
    %v3177 = vrot.slane %v3175, 4
    %v3178 = vrot.slane %v2708, 5
    %v3179 = vsel %vm3032, %v3177, %v3178
    %v3180 = vrot.slane %v2709, 5
    %v3181 = vrot.slane %v3180, 4
    %v3182 = vrot.slane %v2710, 5
    %v3183 = vsel %vm3032, %v3181, %v3182
    %v3184 = vrot.slane %v3182, 4
    %v3185 = vrot.slane %v2711, 5
    %v3186 = vsel %vm3032, %v3184, %v3185
    %v3187 = vrot.slane %v2712, 5
    %v3188 = vrot.slane %v3187, 4
    %v3189 = vrot.slane %v2713, 5
    %v3190 = vsel %vm3032, %v3188, %v3189
    %v3191 = vrot.slane %v3189, 4
    %v3192 = vrot.slane %v2714, 5
    %v3193 = vsel %vm3032, %v3191, %v3192
    %v3194 = vrot.slane %v2715, 5
    %v3195 = vrot.slane %v3194, 4
    %v3196 = vrot.slane %v2716, 5
    %v3197 = vsel %vm3032, %v3195, %v3196
    %v3198 = vrot.slane %v3196, 4
    %v3199 = vrot.slane %v2717, 5
    %v3200 = vsel %vm3032, %v3198, %v3199
    %v3201 = vrot.slane %v2718, 5
    %v3202 = vrot.slane %v3201, 4
    %v3203 = vrot.slane %v2719, 5
    %v3204 = vsel %vm3032, %v3202, %v3203
    %v3205 = vrot.slane %v3203, 4
    %v3206 = vrot.slane %v2720, 5
    %v3207 = vsel %vm3032, %v3205, %v3206
    %v3208 = vrot.slane %v2721, 5
    %v3209 = vrot.slane %v3208, 4
    %v3210 = vrot.slane %v2722, 5
    %v3211 = vsel %vm3032, %v3209, %v3210
    %v3212 = vrot.slane %v3210, 4
    %v3213 = vrot.slane %v2723, 5
    %v3214 = vsel %vm3032, %v3212, %v3213
    %v3215 = vrot.slane %v2724, 5
    %v3216 = vrot.slane %v3215, 4
    %v3217 = vrot.slane %v2725, 5
    %v3218 = vsel %vm3032, %v3216, %v3217
    %v3219 = vrot.slane %v3217, 4
    %v3220 = vrot.slane %v2726, 5
    %v3221 = vsel %vm3032, %v3219, %v3220
    %v3222 = vrot.slane %v2727, 5
    %v3223 = vrot.slane %v3222, 4
    %v3224 = vrot.slane %v2728, 5
    %v3225 = vsel %vm3032, %v3223, %v3224
    %v3226 = vrot.slane %v3224, 4
    %v3227 = vrot.slane %v2729, 5
    %v3228 = vsel %vm3032, %v3226, %v3227
    %v3229 = vrot.slane %v2730, 5
    %v3230 = vrot.slane %v3229, 4
    %v3231 = vrot.slane %v2731, 5
    %v3232 = vsel %vm3032, %v3230, %v3231
    %v3233 = vrot.slane %v3231, 4
    %v3234 = vrot.slane %v2732, 5
    %v3235 = vsel %vm3032, %v3233, %v3234
    %v3236 = vrot.slane %v2733, 5
    %v3237 = vrot.slane %v3236, 4
    %v3238 = vrot.slane %v2734, 5
    %v3239 = vsel %vm3032, %v3237, %v3238
    %v3240 = vrot.slane %v3238, 4
    %v3241 = vrot.slane %v2735, 5
    %v3242 = vsel %vm3032, %v3240, %v3241
    %v3243 = vrot.slane %v2736, 5
    %v3244 = vrot.slane %v3243, 4
    %v3245 = vrot.slane %v2737, 5
    %v3246 = vsel %vm3032, %v3244, %v3245
    %v3247 = vrot.slane %v3245, 4
    %v3248 = vrot.slane %v2738, 5
    %v3249 = vsel %vm3032, %v3247, %v3248
    %v3250 = vrot.slane %v2739, 5
    %v3251 = vrot.slane %v3250, 4
    %v3252 = vrot.slane %v2740, 5
    %v3253 = vsel %vm3032, %v3251, %v3252
    %v3254 = vrot.slane %v3252, 4
    %v3255 = vrot.slane %v2741, 5
    %v3256 = vsel %vm3032, %v3254, %v3255
    %v3257 = vrot.slane %v2742, 5
    %v3258 = vrot.slane %v3257, 4
    %v3259 = vrot.slane %v2743, 5
    %v3260 = vsel %vm3032, %v3258, %v3259
    %v3261 = vrot.slane %v3259, 4
    %v3262 = vrot.slane %v2744, 5
    %v3263 = vsel %vm3032, %v3261, %v3262
    %v3264 = vrot.slane %v2745, 5
    %v3265 = vrot.slane %v3264, 4
    %v3266 = vrot.slane %v2746, 5
    %v3267 = vsel %vm3032, %v3265, %v3266
    %v3268 = vrot.slane %v3266, 4
    %v3269 = vrot.slane %v2747, 5
    %v3270 = vsel %vm3032, %v3268, %v3269
    %v3271 = vrot.slane %v2748, 5
    %v3272 = vrot.slane %v3271, 4
    %v3273 = vrot.slane %v2749, 5
    %v3274 = vsel %vm3032, %v3272, %v3273
    %v3275 = vrot.slane %v3273, 4
    %v3276 = vrot.slane %v2750, 5
    %v3277 = vsel %vm3032, %v3275, %v3276
    %v3278 = vrot.slane %v2751, 5
    %v3279 = vrot.slane %v3278, 4
    %v3280 = vrot.slane %v2752, 5
    %v3281 = vsel %vm3032, %v3279, %v3280
    %v3282 = vrot.slane %v3280, 4
    %v3283 = vrot.slane %v2753, 5
    %v3284 = vsel %vm3032, %v3282, %v3283
    %v3285 = vrot.slane %v2754, 5
    %v3286 = vrot.slane %v3285, 4
    %v3287 = vrot.slane %v2755, 5
    %v3288 = vsel %vm3032, %v3286, %v3287
    %v3289 = vrot.slane %v3287, 4
    %v3290 = vrot.slane %v2756, 5
    %v3291 = vsel %vm3032, %v3289, %v3290
    %v3292 = vrot.slane %v2757, 5
    %v3293 = vrot.slane %v3292, 4
    %v3294 = vrot.slane %v2758, 5
    %v3295 = vsel %vm3032, %v3293, %v3294
    %v3296 = vrot.slane %v3294, 4
    %v3297 = vrot.slane %v2759, 5
    %v3298 = vsel %vm3032, %v3296, %v3297
    %v3299 = vrot.slane %v2760, 5
    %v3300 = vrot.slane %v3299, 4
    %v3301 = vrot.slane %v2761, 5
    %v3302 = vsel %vm3032, %v3300, %v3301
    %v3303 = vrot.slane %v3301, 4
    %v3304 = vrot.slane %v2762, 5
    %v3305 = vsel %vm3032, %v3303, %v3304
    %v3306 = vrot.slane %v2763, 5
    %v3307 = vrot.slane %v3306, 4
    %v3308 = vrot.slane %v2764, 5
    %v3309 = vsel %vm3032, %v3307, %v3308
    %v3310 = vrot.slane %v3308, 4
    %v3311 = vrot.slane %v2765, 5
    %v3312 = vsel %vm3032, %v3310, %v3311
    %v3313 = vrot.slane %v2766, 5
    %v3314 = vrot.slane %v3313, 4
    %v3315 = vrot.slane %v2767, 5
    %v3316 = vsel %vm3032, %v3314, %v3315
    %v3317 = vrot.slane %v3315, 4
    %v3318 = vrot.slane %v2768, 5
    %v3319 = vsel %vm3032, %v3317, %v3318
    %v3320 = vrot.slane %v2769, 5
    %v3321 = vrot.slane %v3320, 4
    %v3322 = vrot.slane %v2770, 5
    %v3323 = vsel %vm3032, %v3321, %v3322
    %v3324 = vrot.slane %v3322, 4
    %v3325 = vrot.slane %v2771, 5
    %v3326 = vsel %vm3032, %v3324, %v3325
    %v3327 = vrot.slane %v2772, 5
    %v3328 = vrot.slane %v3327, 4
    %v3329 = vrot.slane %v2773, 5
    %v3330 = vsel %vm3032, %v3328, %v3329
    %v3331 = vrot.slane %v3329, 4
    %v3332 = vrot.slane %v2774, 5
    %v3333 = vsel %vm3032, %v3331, %v3332
    %v3334 = vrot.slane %v2775, 5
    %v3335 = vrot.slane %v3334, 4
    %v3336 = vrot.slane %v2776, 5
    %v3337 = vsel %vm3032, %v3335, %v3336
    %v3338 = vrot.slane %v3336, 4
    %v3339 = vrot.slane %v2777, 5
    %v3340 = vsel %vm3032, %v3338, %v3339
    %v3341 = vrot.slane %v2778, 5
    %v3342 = vrot.slane %v3341, 4
    %v3343 = vrot.slane %v2779, 5
    %v3344 = vsel %vm3032, %v3342, %v3343
    %v3345 = vrot.slane %v3343, 4
    %v3346 = vrot.slane %v2780, 5
    %v3347 = vsel %vm3032, %v3345, %v3346
    %v3348 = vrot.slane %v2781, 5
    %v3349 = vrot.slane %v3348, 4
    %v3350 = vrot.slane %v2782, 5
    %v3351 = vsel %vm3032, %v3349, %v3350
    %v3352 = vrot.slane %v3350, 4
    %v3353 = vrot.slane %v2783, 5
    %v3354 = vsel %vm3032, %v3352, %v3353
    %v3355 = vrot.slane %v2784, 5
    %v3356 = vrot.slane %v3355, 4
    %v3357 = vrot.slane %v2785, 5
    %v3358 = vsel %vm3032, %v3356, %v3357
    %v3359 = vrot.slane %v3357, 4
    %v3360 = vrot.slane %v2786, 5
    %v3361 = vsel %vm3032, %v3359, %v3360
    %v3362 = vrot.slane %v2787, 5
    %v3363 = vrot.slane %v3362, 4
    %v3364 = vrot.slane %v2788, 5
    %v3365 = vsel %vm3032, %v3363, %v3364
    %v3366 = vrot.slane %v3364, 4
    %v3367 = vrot.slane %v2789, 5
    %v3368 = vsel %vm3032, %v3366, %v3367
    %v3369 = vrot.slane %v2790, 5
    %v3370 = vrot.slane %v3369, 4
    %v3371 = vrot.slane %v2791, 5
    %v3372 = vsel %vm3032, %v3370, %v3371
    %v3373 = vrot.slane %v3371, 4
    %v3374 = vrot.slane %v2792, 5
    %v3375 = vsel %vm3032, %v3373, %v3374
    %v3376 = vrot.slane %v2793, 5
    %v3377 = vrot.slane %v3376, 4
    %v3378 = vrot.slane %v2794, 5
    %v3379 = vsel %vm3032, %v3377, %v3378
    %v3380 = vrot.slane %v3378, 4
    %v3381 = vrot.slane %v2795, 5
    %v3382 = vsel %vm3032, %v3380, %v3381
    %v3383 = vrot.slane %v2796, 5
    %v3384 = vrot.slane %v3383, 4
    %v3385 = vrot.slane %v2797, 5
    %v3386 = vsel %vm3032, %v3384, %v3385
    %v3387 = vrot.slane %v3385, 4
    %v3388 = vrot.slane %v2798, 5
    %v3389 = vsel %vm3032, %v3387, %v3388
    %v3390 = vrot.slane %v2799, 5
    %v3391 = vrot.slane %v3390, 4
    %v3392 = vrot.slane %v2800, 5
    %v3393 = vsel %vm3032, %v3391, %v3392
    %v3394 = vrot.slane %v3392, 4
    %v3395 = vrot.slane %v2801, 5
    %v3396 = vsel %vm3032, %v3394, %v3395
    %v3397 = vrot.slane %v2802, 5
    %v3398 = vrot.slane %v3397, 4
    %v3399 = vrot.slane %v2803, 5
    %v3400 = vsel %vm3032, %v3398, %v3399
    %v3401 = vrot.slane %v3399, 4
    %v3402 = vrot.slane %v2804, 5
    %v3403 = vsel %vm3032, %v3401, %v3402
    %v3404 = vrot.slane %v2805, 5
    %v3405 = vrot.slane %v3404, 4
    %v3406 = vrot.slane %v2806, 5
    %v3407 = vsel %vm3032, %v3405, %v3406
    %v3408 = vrot.slane %v3406, 4
    %v3409 = vrot.slane %v2807, 5
    %v3410 = vsel %vm3032, %v3408, %v3409
    %v3411 = vrot.slane %v2808, 5
    %v3412 = vrot.slane %v3411, 4
    %v3413 = vrot.slane %v2809, 5
    %v3414 = vsel %vm3032, %v3412, %v3413
    %v3415 = vrot.slane %v3413, 4
    %v3416 = vrot.slane %v2810, 5
    %v3417 = vsel %vm3032, %v3415, %v3416
    %v3418 = vrot.slane %v2811, 5
    %v3419 = vrot.slane %v3418, 4
    %v3420 = vrot.slane %v2812, 5
    %v3421 = vsel %vm3032, %v3419, %v3420
    %v3422 = vrot.slane %v3420, 4
    %v3423 = vrot.slane %v2813, 5
    %v3424 = vsel %vm3032, %v3422, %v3423
    %v3425 = vrot.slane %v2814, 5
    %v3426 = vrot.slane %v3425, 4
    %v3427 = vrot.slane %v2815, 5
    %v3428 = vsel %vm3032, %v3426, %v3427
    %v3429 = vrot.slane %v3427, 4
    %v3430 = vrot.slane %v2816, 5
    %v3431 = vsel %vm3032, %v3429, %v3430
    %v3432 = vrot.slane %v2817, 5
    %v3433 = vrot.slane %v3432, 4
    %v3434 = vrot.slane %v2818, 5
    %v3435 = vsel %vm3032, %v3433, %v3434
    %v3436 = vrot.slane %v3434, 4
    %v3437 = vrot.slane %v2819, 5
    %v3438 = vsel %vm3032, %v3436, %v3437
    %v3439 = vrot.slane %v2820, 5
    %v3440 = vrot.slane %v3439, 4
    %v3441 = vrot.slane %v2821, 5
    %v3442 = vsel %vm3032, %v3440, %v3441
    %v3443 = vrot.slane %v3441, 4
    %v3444 = vrot.slane %v2822, 5
    %v3445 = vsel %vm3032, %v3443, %v3444
    %v3446 = vrot.slane %v2823, 5
    %v3447 = vrot.slane %v3446, 4
    %v3448 = vrot.slane %v2824, 5
    %v3449 = vsel %vm3032, %v3447, %v3448
    %v3450 = vrot.slane %v3448, 4
    %v3451 = vrot.slane %v2825, 5
    %v3452 = vsel %vm3032, %v3450, %v3451
    %v3453 = vrot.slane %v2826, 5
    %v3454 = vrot.slane %v3453, 4
    %v3455 = vrot.slane %v2827, 5
    %v3456 = vsel %vm3032, %v3454, %v3455
    %v3457 = vrot.slane %v3455, 4
    %v3458 = vrot.slane %v2828, 5
    %v3459 = vsel %vm3032, %v3457, %v3458
    %v3460 = vrot.slane %v2829, 5
    %v3461 = vrot.slane %v3460, 4
    %v3462 = vrot.slane %v2830, 5
    %v3463 = vsel %vm3032, %v3461, %v3462
    %v3464 = vrot.slane %v3462, 4
    %v3465 = vrot.slane %v2831, 5
    %v3466 = vsel %vm3032, %v3464, %v3465
    %v3467 = vrot.slane %v2832, 5
    %v3468 = vrot.slane %v3467, 4
    %v3469 = vrot.slane %v2833, 5
    %v3470 = vsel %vm3032, %v3468, %v3469
    %v3471 = vrot.slane %v3469, 4
    %v3472 = vrot.slane %v2834, 5
    %v3473 = vsel %vm3032, %v3471, %v3472
    %v3474 = vrot.slane %v2835, 5
    %v3475 = vrot.slane %v3474, 4
    %v3476 = vrot.slane %v2836, 5
    %v3477 = vsel %vm3032, %v3475, %v3476
    %v3478 = vrot.slane %v3476, 4
    %v3479 = vrot.slane %v2837, 5
    %v3480 = vsel %vm3032, %v3478, %v3479
    %3481 = vrot.lane.b32.xlu0 %v3036, 32
    %v3482 = vpop.permute.xlu0 %3481
    %3483 = vrot.lane.b32.xlu0 %v3039, 32
    %v3484 = vpop.permute.xlu0 %3483
    %3485 = vrot.lane.b32.xlu0 %v3043, 32
    %v3486 = vpop.permute.xlu0 %3485
    %3487 = vrot.lane.b32.xlu0 %v3046, 32
    %v3488 = vpop.permute.xlu0 %3487
    %3489 = vrot.lane.b32.xlu0 %v3050, 32
    %v3490 = vpop.permute.xlu0 %3489
    %3491 = vrot.lane.b32.xlu0 %v3053, 32
    %v3492 = vpop.permute.xlu0 %3491
    %3493 = vrot.lane.b32.xlu0 %v3057, 32
    %v3494 = vpop.permute.xlu0 %3493
    %3495 = vrot.lane.b32.xlu0 %v3060, 32
    %v3496 = vpop.permute.xlu0 %3495
    %3497 = vrot.lane.b32.xlu0 %v3064, 32
    %v3498 = vpop.permute.xlu0 %3497
    %3499 = vrot.lane.b32.xlu0 %v3067, 32
    %v3500 = vpop.permute.xlu0 %3499
    %3501 = vrot.lane.b32.xlu0 %v3071, 32
    %v3502 = vpop.permute.xlu0 %3501
    %3503 = vrot.lane.b32.xlu0 %v3074, 32
    %v3504 = vpop.permute.xlu0 %3503
    %3505 = vrot.lane.b32.xlu0 %v3078, 32
    %v3506 = vpop.permute.xlu0 %3505
    %3507 = vrot.lane.b32.xlu0 %v3081, 32
    %v3508 = vpop.permute.xlu0 %3507
    %3509 = vrot.lane.b32.xlu0 %v3085, 32
    %v3510 = vpop.permute.xlu0 %3509
    %3511 = vrot.lane.b32.xlu0 %v3088, 32
    %v3512 = vpop.permute.xlu0 %3511
    %3513 = vrot.lane.b32.xlu0 %v3092, 32
    %v3514 = vpop.permute.xlu0 %3513
    %3515 = vrot.lane.b32.xlu0 %v3095, 32
    %v3516 = vpop.permute.xlu0 %3515
    %3517 = vrot.lane.b32.xlu0 %v3099, 32
    %v3518 = vpop.permute.xlu0 %3517
    %3519 = vrot.lane.b32.xlu0 %v3102, 32
    %v3520 = vpop.permute.xlu0 %3519
    %3521 = vrot.lane.b32.xlu0 %v3106, 32
    %v3522 = vpop.permute.xlu0 %3521
    %3523 = vrot.lane.b32.xlu0 %v3109, 32
    %v3524 = vpop.permute.xlu0 %3523
    %3525 = vrot.lane.b32.xlu0 %v3113, 32
    %v3526 = vpop.permute.xlu0 %3525
    %3527 = vrot.lane.b32.xlu0 %v3116, 32
    %v3528 = vpop.permute.xlu0 %3527
    %3529 = vrot.lane.b32.xlu0 %v3120, 32
    %v3530 = vpop.permute.xlu0 %3529
    %3531 = vrot.lane.b32.xlu0 %v3123, 32
    %v3532 = vpop.permute.xlu0 %3531
    %3533 = vrot.lane.b32.xlu0 %v3127, 32
    %v3534 = vpop.permute.xlu0 %3533
    %3535 = vrot.lane.b32.xlu0 %v3130, 32
    %v3536 = vpop.permute.xlu0 %3535
    %3537 = vrot.lane.b32.xlu0 %v3134, 32
    %v3538 = vpop.permute.xlu0 %3537
    %3539 = vrot.lane.b32.xlu0 %v3137, 32
    %v3540 = vpop.permute.xlu0 %3539
    %3541 = vrot.lane.b32.xlu0 %v3141, 32
    %v3542 = vpop.permute.xlu0 %3541
    %3543 = vrot.lane.b32.xlu0 %v3144, 32
    %v3544 = vpop.permute.xlu0 %3543
    %3545 = vrot.lane.b32.xlu0 %v3148, 32
    %v3546 = vpop.permute.xlu0 %3545
    %3547 = vrot.lane.b32.xlu0 %v3151, 32
    %v3548 = vpop.permute.xlu0 %3547
    %3549 = vrot.lane.b32.xlu0 %v3155, 32
    %v3550 = vpop.permute.xlu0 %3549
    %3551 = vrot.lane.b32.xlu0 %v3158, 32
    %v3552 = vpop.permute.xlu0 %3551
    %3553 = vrot.lane.b32.xlu0 %v3162, 32
    %v3554 = vpop.permute.xlu0 %3553
    %3555 = vrot.lane.b32.xlu0 %v3165, 32
    %v3556 = vpop.permute.xlu0 %3555
    %3557 = vrot.lane.b32.xlu0 %v3169, 32
    %v3558 = vpop.permute.xlu0 %3557
    %3559 = vrot.lane.b32.xlu0 %v3172, 32
    %v3560 = vpop.permute.xlu0 %3559
    %3561 = vrot.lane.b32.xlu0 %v3176, 32
    %v3562 = vpop.permute.xlu0 %3561
    %3563 = vrot.lane.b32.xlu0 %v3179, 32
    %v3564 = vpop.permute.xlu0 %3563
    %3565 = vrot.lane.b32.xlu0 %v3183, 32
    %v3566 = vpop.permute.xlu0 %3565
    %3567 = vrot.lane.b32.xlu0 %v3186, 32
    %v3568 = vpop.permute.xlu0 %3567
    %3569 = vrot.lane.b32.xlu0 %v3190, 32
    %v3570 = vpop.permute.xlu0 %3569
    %3571 = vrot.lane.b32.xlu0 %v3193, 32
    %v3572 = vpop.permute.xlu0 %3571
    %3573 = vrot.lane.b32.xlu0 %v3197, 32
    %v3574 = vpop.permute.xlu0 %3573
    %3575 = vrot.lane.b32.xlu0 %v3200, 32
    %v3576 = vpop.permute.xlu0 %3575
    %3577 = vrot.lane.b32.xlu0 %v3204, 32
    %v3578 = vpop.permute.xlu0 %3577
    %3579 = vrot.lane.b32.xlu0 %v3207, 32
    %v3580 = vpop.permute.xlu0 %3579
    %3581 = vrot.lane.b32.xlu0 %v3211, 32
    %v3582 = vpop.permute.xlu0 %3581
    %3583 = vrot.lane.b32.xlu0 %v3214, 32
    %v3584 = vpop.permute.xlu0 %3583
    %3585 = vrot.lane.b32.xlu0 %v3218, 32
    %v3586 = vpop.permute.xlu0 %3585
    %3587 = vrot.lane.b32.xlu0 %v3221, 32
    %v3588 = vpop.permute.xlu0 %3587
    %3589 = vrot.lane.b32.xlu0 %v3225, 32
    %v3590 = vpop.permute.xlu0 %3589
    %3591 = vrot.lane.b32.xlu0 %v3228, 32
    %v3592 = vpop.permute.xlu0 %3591
    %3593 = vrot.lane.b32.xlu0 %v3232, 32
    %v3594 = vpop.permute.xlu0 %3593
    %3595 = vrot.lane.b32.xlu0 %v3235, 32
    %v3596 = vpop.permute.xlu0 %3595
    %3597 = vrot.lane.b32.xlu0 %v3239, 32
    %v3598 = vpop.permute.xlu0 %3597
    %3599 = vrot.lane.b32.xlu0 %v3242, 32
    %v3600 = vpop.permute.xlu0 %3599
    %3601 = vrot.lane.b32.xlu0 %v3246, 32
    %v3602 = vpop.permute.xlu0 %3601
    %3603 = vrot.lane.b32.xlu0 %v3249, 32
    %v3604 = vpop.permute.xlu0 %3603
    %3605 = vrot.lane.b32.xlu0 %v3253, 32
    %v3606 = vpop.permute.xlu0 %3605
    %3607 = vrot.lane.b32.xlu0 %v3256, 32
    %v3608 = vpop.permute.xlu0 %3607
    %3609 = vrot.lane.b32.xlu0 %v3260, 32
    %v3610 = vpop.permute.xlu0 %3609
    %3611 = vrot.lane.b32.xlu0 %v3263, 32
    %v3612 = vpop.permute.xlu0 %3611
    %3613 = vrot.lane.b32.xlu0 %v3267, 32
    %v3614 = vpop.permute.xlu0 %3613
    %3615 = vrot.lane.b32.xlu0 %v3270, 32
    %v3616 = vpop.permute.xlu0 %3615
    %3617 = vrot.lane.b32.xlu0 %v3274, 32
    %v3618 = vpop.permute.xlu0 %3617
    %3619 = vrot.lane.b32.xlu0 %v3277, 32
    %v3620 = vpop.permute.xlu0 %3619
    %3621 = vrot.lane.b32.xlu0 %v3281, 32
    %v3622 = vpop.permute.xlu0 %3621
    %3623 = vrot.lane.b32.xlu0 %v3284, 32
    %v3624 = vpop.permute.xlu0 %3623
    %3625 = vrot.lane.b32.xlu0 %v3288, 32
    %v3626 = vpop.permute.xlu0 %3625
    %3627 = vrot.lane.b32.xlu0 %v3291, 32
    %v3628 = vpop.permute.xlu0 %3627
    %3629 = vrot.lane.b32.xlu0 %v3295, 32
    %v3630 = vpop.permute.xlu0 %3629
    %3631 = vrot.lane.b32.xlu0 %v3298, 32
    %v3632 = vpop.permute.xlu0 %3631
    %3633 = vrot.lane.b32.xlu0 %v3302, 32
    %v3634 = vpop.permute.xlu0 %3633
    %3635 = vrot.lane.b32.xlu0 %v3305, 32
    %v3636 = vpop.permute.xlu0 %3635
    %3637 = vrot.lane.b32.xlu0 %v3309, 32
    %v3638 = vpop.permute.xlu0 %3637
    %3639 = vrot.lane.b32.xlu0 %v3312, 32
    %v3640 = vpop.permute.xlu0 %3639
    %3641 = vrot.lane.b32.xlu0 %v3316, 32
    %v3642 = vpop.permute.xlu0 %3641
    %3643 = vrot.lane.b32.xlu0 %v3319, 32
    %v3644 = vpop.permute.xlu0 %3643
    %3645 = vrot.lane.b32.xlu0 %v3323, 32
    %v3646 = vpop.permute.xlu0 %3645
    %3647 = vrot.lane.b32.xlu0 %v3326, 32
    %v3648 = vpop.permute.xlu0 %3647
    %3649 = vrot.lane.b32.xlu0 %v3330, 32
    %v3650 = vpop.permute.xlu0 %3649
    %3651 = vrot.lane.b32.xlu0 %v3333, 32
    %v3652 = vpop.permute.xlu0 %3651
    %3653 = vrot.lane.b32.xlu0 %v3337, 32
    %v3654 = vpop.permute.xlu0 %3653
    %3655 = vrot.lane.b32.xlu0 %v3340, 32
    %v3656 = vpop.permute.xlu0 %3655
    %3657 = vrot.lane.b32.xlu0 %v3344, 32
    %v3658 = vpop.permute.xlu0 %3657
    %3659 = vrot.lane.b32.xlu0 %v3347, 32
    %v3660 = vpop.permute.xlu0 %3659
    %3661 = vrot.lane.b32.xlu0 %v3351, 32
    %v3662 = vpop.permute.xlu0 %3661
    %3663 = vrot.lane.b32.xlu0 %v3354, 32
    %v3664 = vpop.permute.xlu0 %3663
    %3665 = vrot.lane.b32.xlu0 %v3358, 32
    %v3666 = vpop.permute.xlu0 %3665
    %3667 = vrot.lane.b32.xlu0 %v3361, 32
    %v3668 = vpop.permute.xlu0 %3667
    %3669 = vrot.lane.b32.xlu0 %v3365, 32
    %v3670 = vpop.permute.xlu0 %3669
    %3671 = vrot.lane.b32.xlu0 %v3368, 32
    %v3672 = vpop.permute.xlu0 %3671
    %3673 = vrot.lane.b32.xlu0 %v3372, 32
    %v3674 = vpop.permute.xlu0 %3673
    %3675 = vrot.lane.b32.xlu0 %v3375, 32
    %v3676 = vpop.permute.xlu0 %3675
    %3677 = vrot.lane.b32.xlu0 %v3379, 32
    %v3678 = vpop.permute.xlu0 %3677
    %3679 = vrot.lane.b32.xlu0 %v3382, 32
    %v3680 = vpop.permute.xlu0 %3679
    %3681 = vrot.lane.b32.xlu0 %v3386, 32
    %v3682 = vpop.permute.xlu0 %3681
    %3683 = vrot.lane.b32.xlu0 %v3389, 32
    %v3684 = vpop.permute.xlu0 %3683
    %3685 = vrot.lane.b32.xlu0 %v3393, 32
    %v3686 = vpop.permute.xlu0 %3685
    %3687 = vrot.lane.b32.xlu0 %v3396, 32
    %v3688 = vpop.permute.xlu0 %3687
    %3689 = vrot.lane.b32.xlu0 %v3400, 32
    %v3690 = vpop.permute.xlu0 %3689
    %3691 = vrot.lane.b32.xlu0 %v3403, 32
    %v3692 = vpop.permute.xlu0 %3691
    %3693 = vrot.lane.b32.xlu0 %v3407, 32
    %v3694 = vpop.permute.xlu0 %3693
    %3695 = vrot.lane.b32.xlu0 %v3410, 32
    %v3696 = vpop.permute.xlu0 %3695
    %3697 = vrot.lane.b32.xlu0 %v3414, 32
    %v3698 = vpop.permute.xlu0 %3697
    %3699 = vrot.lane.b32.xlu0 %v3417, 32
    %v3700 = vpop.permute.xlu0 %3699
    %3701 = vrot.lane.b32.xlu0 %v3421, 32
    %v3702 = vpop.permute.xlu0 %3701
    %3703 = vrot.lane.b32.xlu0 %v3424, 32
    %v3704 = vpop.permute.xlu0 %3703
    %3705 = vrot.lane.b32.xlu0 %v3428, 32
    %v3706 = vpop.permute.xlu0 %3705
    %3707 = vrot.lane.b32.xlu0 %v3431, 32
    %v3708 = vpop.permute.xlu0 %3707
    %3709 = vrot.lane.b32.xlu0 %v3435, 32
    %v3710 = vpop.permute.xlu0 %3709
    %3711 = vrot.lane.b32.xlu0 %v3438, 32
    %v3712 = vpop.permute.xlu0 %3711
    %3713 = vrot.lane.b32.xlu0 %v3442, 32
    %v3714 = vpop.permute.xlu0 %3713
    %3715 = vrot.lane.b32.xlu0 %v3445, 32
    %v3716 = vpop.permute.xlu0 %3715
    %3717 = vrot.lane.b32.xlu0 %v3449, 32
    %v3718 = vpop.permute.xlu0 %3717
    %3719 = vrot.lane.b32.xlu0 %v3452, 32
    %v3720 = vpop.permute.xlu0 %3719
    %3721 = vrot.lane.b32.xlu0 %v3456, 32
    %v3722 = vpop.permute.xlu0 %3721
    %3723 = vrot.lane.b32.xlu0 %v3459, 32
    %v3724 = vpop.permute.xlu0 %3723
    %3725 = vrot.lane.b32.xlu0 %v3463, 32
    %v3726 = vpop.permute.xlu0 %3725
    %3727 = vrot.lane.b32.xlu0 %v3466, 32
    %v3728 = vpop.permute.xlu0 %3727
    %3729 = vrot.lane.b32.xlu0 %v3470, 32
    %v3730 = vpop.permute.xlu0 %3729
    %3731 = vrot.lane.b32.xlu0 %v3473, 32
    %v3732 = vpop.permute.xlu0 %3731
    %3733 = vrot.lane.b32.xlu0 %v3477, 32
    %v3734 = vpop.permute.xlu0 %3733
    %3735 = vrot.lane.b32.xlu0 %v3480, 32
    %v3736 = vpop.permute.xlu0 %3735
    %vm3865 = vcmask 388352
    %3866 = vst.msk [vmem:[#allocation2] sm:$0xf] %vm3865, %v3482
    %3867 = vst.msk [vmem:[#allocation2 + $0x8] sm:$0xf] %vm3865, %v3484
    %3868 = vst.msk [vmem:[#allocation2 + $0x10] sm:$0xf] %vm3865, %v3486
    %3869 = vst.msk [vmem:[#allocation2 + $0x18] sm:$0xf] %vm3865, %v3488
    %3870 = vst.msk [vmem:[#allocation2 + $0x20] sm:$0xf] %vm3865, %v3490
    %3871 = vst.msk [vmem:[#allocation2 + $0x28] sm:$0xf] %vm3865, %v3492
    %3872 = vst.msk [vmem:[#allocation2 + $0x30] sm:$0xf] %vm3865, %v3494
    %3873 = vst.msk [vmem:[#allocation2 + $0x38] sm:$0xf] %vm3865, %v3496
    %3874 = vst.msk [vmem:[#allocation2 + $0x40] sm:$0xf] %vm3865, %v3498
    %3875 = vst.msk [vmem:[#allocation2 + $0x48] sm:$0xf] %vm3865, %v3500
    %3876 = vst.msk [vmem:[#allocation2 + $0x50] sm:$0xf] %vm3865, %v3502
    %3877 = vst.msk [vmem:[#allocation2 + $0x58] sm:$0xf] %vm3865, %v3504
    %3878 = vst.msk [vmem:[#allocation2 + $0x60] sm:$0xf] %vm3865, %v3506
    %3879 = vst.msk [vmem:[#allocation2 + $0x68] sm:$0xf] %vm3865, %v3508
    %3880 = vst.msk [vmem:[#allocation2 + $0x70] sm:$0xf] %vm3865, %v3510
    %3881 = vst.msk [vmem:[#allocation2 + $0x78] sm:$0xf] %vm3865, %v3512
    %3882 = vst.msk [vmem:[#allocation2 + $0x80] sm:$0xf] %vm3865, %v3514
    %3883 = vst.msk [vmem:[#allocation2 + $0x88] sm:$0xf] %vm3865, %v3516
    %3884 = vst.msk [vmem:[#allocation2 + $0x90] sm:$0xf] %vm3865, %v3518
    %3885 = vst.msk [vmem:[#allocation2 + $0x98] sm:$0xf] %vm3865, %v3520
    %3886 = vst.msk [vmem:[#allocation2 + $0xa0] sm:$0xf] %vm3865, %v3522
    %3887 = vst.msk [vmem:[#allocation2 + $0xa8] sm:$0xf] %vm3865, %v3524
    %3888 = vst.msk [vmem:[#allocation2 + $0xb0] sm:$0xf] %vm3865, %v3526
    %3889 = vst.msk [vmem:[#allocation2 + $0xb8] sm:$0xf] %vm3865, %v3528
    %3890 = vst.msk [vmem:[#allocation2 + $0xc0] sm:$0xf] %vm3865, %v3530
    %3891 = vst.msk [vmem:[#allocation2 + $0xc8] sm:$0xf] %vm3865, %v3532
    %3892 = vst.msk [vmem:[#allocation2 + $0xd0] sm:$0xf] %vm3865, %v3534
    %3893 = vst.msk [vmem:[#allocation2 + $0xd8] sm:$0xf] %vm3865, %v3536
    %3894 = vst.msk [vmem:[#allocation2 + $0xe0] sm:$0xf] %vm3865, %v3538
    %3895 = vst.msk [vmem:[#allocation2 + $0xe8] sm:$0xf] %vm3865, %v3540
    %3896 = vst.msk [vmem:[#allocation2 + $0xf0] sm:$0xf] %vm3865, %v3542
    %3897 = vst.msk [vmem:[#allocation2 + $0xf8] sm:$0xf] %vm3865, %v3544
    %3898 = vst.msk [vmem:[#allocation2 + $0x100] sm:$0xf] %vm3865, %v3546
    %3899 = vst.msk [vmem:[#allocation2 + $0x108] sm:$0xf] %vm3865, %v3548
    %3900 = vst.msk [vmem:[#allocation2 + $0x110] sm:$0xf] %vm3865, %v3550
    %3901 = vst.msk [vmem:[#allocation2 + $0x118] sm:$0xf] %vm3865, %v3552
    %3902 = vst.msk [vmem:[#allocation2 + $0x120] sm:$0xf] %vm3865, %v3554
    %3903 = vst.msk [vmem:[#allocation2 + $0x128] sm:$0xf] %vm3865, %v3556
    %3904 = vst.msk [vmem:[#allocation2 + $0x130] sm:$0xf] %vm3865, %v3558
    %3905 = vst.msk [vmem:[#allocation2 + $0x138] sm:$0xf] %vm3865, %v3560
    %3906 = vst.msk [vmem:[#allocation2 + $0x140] sm:$0xf] %vm3865, %v3562
    %3907 = vst.msk [vmem:[#allocation2 + $0x148] sm:$0xf] %vm3865, %v3564
    %3908 = vst.msk [vmem:[#allocation2 + $0x150] sm:$0xf] %vm3865, %v3566
    %3909 = vst.msk [vmem:[#allocation2 + $0x158] sm:$0xf] %vm3865, %v3568
    %3910 = vst.msk [vmem:[#allocation2 + $0x160] sm:$0xf] %vm3865, %v3570
    %3911 = vst.msk [vmem:[#allocation2 + $0x168] sm:$0xf] %vm3865, %v3572
    %3912 = vst.msk [vmem:[#allocation2 + $0x170] sm:$0xf] %vm3865, %v3574
    %3913 = vst.msk [vmem:[#allocation2 + $0x178] sm:$0xf] %vm3865, %v3576
    %3914 = vst.msk [vmem:[#allocation2 + $0x180] sm:$0xf] %vm3865, %v3578
    %3915 = vst.msk [vmem:[#allocation2 + $0x188] sm:$0xf] %vm3865, %v3580
    %3916 = vst.msk [vmem:[#allocation2 + $0x190] sm:$0xf] %vm3865, %v3582
    %3917 = vst.msk [vmem:[#allocation2 + $0x198] sm:$0xf] %vm3865, %v3584
    %3918 = vst.msk [vmem:[#allocation2 + $0x1a0] sm:$0xf] %vm3865, %v3586
    %3919 = vst.msk [vmem:[#allocation2 + $0x1a8] sm:$0xf] %vm3865, %v3588
    %3920 = vst.msk [vmem:[#allocation2 + $0x1b0] sm:$0xf] %vm3865, %v3590
    %3921 = vst.msk [vmem:[#allocation2 + $0x1b8] sm:$0xf] %vm3865, %v3592
    %3922 = vst.msk [vmem:[#allocation2 + $0x1c0] sm:$0xf] %vm3865, %v3594
    %3923 = vst.msk [vmem:[#allocation2 + $0x1c8] sm:$0xf] %vm3865, %v3596
    %3924 = vst.msk [vmem:[#allocation2 + $0x1d0] sm:$0xf] %vm3865, %v3598
    %3925 = vst.msk [vmem:[#allocation2 + $0x1d8] sm:$0xf] %vm3865, %v3600
    %3926 = vst.msk [vmem:[#allocation2 + $0x1e0] sm:$0xf] %vm3865, %v3602
    %3927 = vst.msk [vmem:[#allocation2 + $0x1e8] sm:$0xf] %vm3865, %v3604
    %3928 = vst.msk [vmem:[#allocation2 + $0x1f0] sm:$0xf] %vm3865, %v3606
    %3929 = vst.msk [vmem:[#allocation2 + $0x1f8] sm:$0xf] %vm3865, %v3608
    %3930 = vst.msk [vmem:[#allocation2 + $0x200] sm:$0xf] %vm3865, %v3610
    %3931 = vst.msk [vmem:[#allocation2 + $0x208] sm:$0xf] %vm3865, %v3612
    %3932 = vst.msk [vmem:[#allocation2 + $0x210] sm:$0xf] %vm3865, %v3614
    %3933 = vst.msk [vmem:[#allocation2 + $0x218] sm:$0xf] %vm3865, %v3616
    %3934 = vst.msk [vmem:[#allocation2 + $0x220] sm:$0xf] %vm3865, %v3618
    %3935 = vst.msk [vmem:[#allocation2 + $0x228] sm:$0xf] %vm3865, %v3620
    %3936 = vst.msk [vmem:[#allocation2 + $0x230] sm:$0xf] %vm3865, %v3622
    %3937 = vst.msk [vmem:[#allocation2 + $0x238] sm:$0xf] %vm3865, %v3624
    %3938 = vst.msk [vmem:[#allocation2 + $0x240] sm:$0xf] %vm3865, %v3626
    %3939 = vst.msk [vmem:[#allocation2 + $0x248] sm:$0xf] %vm3865, %v3628
    %3940 = vst.msk [vmem:[#allocation2 + $0x250] sm:$0xf] %vm3865, %v3630
    %3941 = vst.msk [vmem:[#allocation2 + $0x258] sm:$0xf] %vm3865, %v3632
    %3942 = vst.msk [vmem:[#allocation2 + $0x260] sm:$0xf] %vm3865, %v3634
    %3943 = vst.msk [vmem:[#allocation2 + $0x268] sm:$0xf] %vm3865, %v3636
    %3944 = vst.msk [vmem:[#allocation2 + $0x270] sm:$0xf] %vm3865, %v3638
    %3945 = vst.msk [vmem:[#allocation2 + $0x278] sm:$0xf] %vm3865, %v3640
    %3946 = vst.msk [vmem:[#allocation2 + $0x280] sm:$0xf] %vm3865, %v3642
    %3947 = vst.msk [vmem:[#allocation2 + $0x288] sm:$0xf] %vm3865, %v3644
    %3948 = vst.msk [vmem:[#allocation2 + $0x290] sm:$0xf] %vm3865, %v3646
    %3949 = vst.msk [vmem:[#allocation2 + $0x298] sm:$0xf] %vm3865, %v3648
    %3950 = vst.msk [vmem:[#allocation2 + $0x2a0] sm:$0xf] %vm3865, %v3650
    %3951 = vst.msk [vmem:[#allocation2 + $0x2a8] sm:$0xf] %vm3865, %v3652
    %3952 = vst.msk [vmem:[#allocation2 + $0x2b0] sm:$0xf] %vm3865, %v3654
    %3953 = vst.msk [vmem:[#allocation2 + $0x2b8] sm:$0xf] %vm3865, %v3656
    %3954 = vst.msk [vmem:[#allocation2 + $0x2c0] sm:$0xf] %vm3865, %v3658
    %3955 = vst.msk [vmem:[#allocation2 + $0x2c8] sm:$0xf] %vm3865, %v3660
    %3956 = vst.msk [vmem:[#allocation2 + $0x2d0] sm:$0xf] %vm3865, %v3662
    %3957 = vst.msk [vmem:[#allocation2 + $0x2d8] sm:$0xf] %vm3865, %v3664
    %3958 = vst.msk [vmem:[#allocation2 + $0x2e0] sm:$0xf] %vm3865, %v3666
    %3959 = vst.msk [vmem:[#allocation2 + $0x2e8] sm:$0xf] %vm3865, %v3668
    %3960 = vst.msk [vmem:[#allocation2 + $0x2f0] sm:$0xf] %vm3865, %v3670
    %3961 = vst.msk [vmem:[#allocation2 + $0x2f8] sm:$0xf] %vm3865, %v3672
    %3962 = vst.msk [vmem:[#allocation2 + $0x300] sm:$0xf] %vm3865, %v3674
    %3963 = vst.msk [vmem:[#allocation2 + $0x308] sm:$0xf] %vm3865, %v3676
    %3964 = vst.msk [vmem:[#allocation2 + $0x310] sm:$0xf] %vm3865, %v3678
    %3965 = vst.msk [vmem:[#allocation2 + $0x318] sm:$0xf] %vm3865, %v3680
    %3966 = vst.msk [vmem:[#allocation2 + $0x320] sm:$0xf] %vm3865, %v3682
    %3967 = vst.msk [vmem:[#allocation2 + $0x328] sm:$0xf] %vm3865, %v3684
    %3968 = vst.msk [vmem:[#allocation2 + $0x330] sm:$0xf] %vm3865, %v3686
    %3969 = vst.msk [vmem:[#allocation2 + $0x338] sm:$0xf] %vm3865, %v3688
    %3970 = vst.msk [vmem:[#allocation2 + $0x340] sm:$0xf] %vm3865, %v3690
    %3971 = vst.msk [vmem:[#allocation2 + $0x348] sm:$0xf] %vm3865, %v3692
    %3972 = vst.msk [vmem:[#allocation2 + $0x350] sm:$0xf] %vm3865, %v3694
    %3973 = vst.msk [vmem:[#allocation2 + $0x358] sm:$0xf] %vm3865, %v3696
    %3974 = vst.msk [vmem:[#allocation2 + $0x360] sm:$0xf] %vm3865, %v3698
    %3975 = vst.msk [vmem:[#allocation2 + $0x368] sm:$0xf] %vm3865, %v3700
    %3976 = vst.msk [vmem:[#allocation2 + $0x370] sm:$0xf] %vm3865, %v3702
    %3977 = vst.msk [vmem:[#allocation2 + $0x378] sm:$0xf] %vm3865, %v3704
    %3978 = vst.msk [vmem:[#allocation2 + $0x380] sm:$0xf] %vm3865, %v3706
    %3979 = vst.msk [vmem:[#allocation2 + $0x388] sm:$0xf] %vm3865, %v3708
    %3980 = vst.msk [vmem:[#allocation2 + $0x390] sm:$0xf] %vm3865, %v3710
    %3981 = vst.msk [vmem:[#allocation2 + $0x398] sm:$0xf] %vm3865, %v3712
    %3982 = vst.msk [vmem:[#allocation2 + $0x3a0] sm:$0xf] %vm3865, %v3714
    %3983 = vst.msk [vmem:[#allocation2 + $0x3a8] sm:$0xf] %vm3865, %v3716
    %3984 = vst.msk [vmem:[#allocation2 + $0x3b0] sm:$0xf] %vm3865, %v3718
    %3985 = vst.msk [vmem:[#allocation2 + $0x3b8] sm:$0xf] %vm3865, %v3720
    %3986 = vst.msk [vmem:[#allocation2 + $0x3c0] sm:$0xf] %vm3865, %v3722
    %3987 = vst.msk [vmem:[#allocation2 + $0x3c8] sm:$0xf] %vm3865, %v3724
    %3988 = vst.msk [vmem:[#allocation2 + $0x3d0] sm:$0xf] %vm3865, %v3726
    %3989 = vst.msk [vmem:[#allocation2 + $0x3d8] sm:$0xf] %vm3865, %v3728
    %3990 = vst.msk [vmem:[#allocation2 + $0x3e0] sm:$0xf] %vm3865, %v3730
    %3991 = vst.msk [vmem:[#allocation2 + $0x3e8] sm:$0xf] %vm3865, %v3732
    %3992 = vst.msk [vmem:[#allocation2 + $0x3f0] sm:$0xf] %vm3865, %v3734
    %3993 = vst.msk [vmem:[#allocation2 + $0x3f8] sm:$0xf] %vm3865, %v3736
    %s3994 = scalar_lea.vmem %s0, 12
    %v3995 = vld [vmem:[%s3994] sm:$0xf]
    %v3996 = vld [vmem:[%s3994 + $0x4] sm:$0xf]
    %v3997 = vld [vmem:[%s3994 + $0xc] sm:$0xf]
    %v3998 = vld [vmem:[%s3994 + $0x10] sm:$0xf]
    %v3999 = vld [vmem:[%s3994 + $0x18] sm:$0xf]
    %v4000 = vld [vmem:[%s3994 + $0x1c] sm:$0xf]
    %v4001 = vld [vmem:[%s3994 + $0x24] sm:$0xf]
    %v4002 = vld [vmem:[%s3994 + $0x28] sm:$0xf]
    %v4003 = vld [vmem:[%s3994 + $0x30] sm:$0xf]
    %v4004 = vld [vmem:[%s3994 + $0x34] sm:$0xf]
    %v4005 = vld [vmem:[%s3994 + $0x3c] sm:$0xf]
    %v4006 = vld [vmem:[%s3994 + $0x40] sm:$0xf]
    %v4007 = vld [vmem:[%s3994 + $0x48] sm:$0xf]
    %v4008 = vld [vmem:[%s3994 + $0x4c] sm:$0xf]
    %v4009 = vld [vmem:[%s3994 + $0x54] sm:$0xf]
    %v4010 = vld [vmem:[%s3994 + $0x58] sm:$0xf]
    %v4011 = vld [vmem:[%s3994 + $0x60] sm:$0xf]
    %v4012 = vld [vmem:[%s3994 + $0x64] sm:$0xf]
    %v4013 = vld [vmem:[%s3994 + $0x6c] sm:$0xf]
    %v4014 = vld [vmem:[%s3994 + $0x70] sm:$0xf]
    %v4015 = vld [vmem:[%s3994 + $0x78] sm:$0xf]
    %v4016 = vld [vmem:[%s3994 + $0x7c] sm:$0xf]
    %v4017 = vld [vmem:[%s3994 + $0x84] sm:$0xf]
    %v4018 = vld [vmem:[%s3994 + $0x88] sm:$0xf]
    %v4019 = vld [vmem:[%s3994 + $0x90] sm:$0xf]
    %v4020 = vld [vmem:[%s3994 + $0x94] sm:$0xf]
    %v4021 = vld [vmem:[%s3994 + $0x9c] sm:$0xf]
    %v4022 = vld [vmem:[%s3994 + $0xa0] sm:$0xf]
    %v4023 = vld [vmem:[%s3994 + $0xa8] sm:$0xf]
    %v4024 = vld [vmem:[%s3994 + $0xac] sm:$0xf]
    %v4025 = vld [vmem:[%s3994 + $0xb4] sm:$0xf]
    %v4026 = vld [vmem:[%s3994 + $0xb8] sm:$0xf]
    %v4027 = vld [vmem:[%s3994 + $0xd8] sm:$0xf]
    %v4028 = vld [vmem:[%s3994 + $0xdc] sm:$0xf]
    %v4029 = vld [vmem:[%s3994 + $0xe4] sm:$0xf]
    %v4030 = vld [vmem:[%s3994 + $0xe8] sm:$0xf]
    %v4031 = vld [vmem:[%s3994 + $0xf0] sm:$0xf]
    %v4032 = vld [vmem:[%s3994 + $0xf4] sm:$0xf]
    %v4033 = vld [vmem:[%s3994 + $0xfc] sm:$0xf]
    %v4034 = vld [vmem:[%s3994 + $0x100] sm:$0xf]
    %v4035 = vld [vmem:[%s3994 + $0x108] sm:$0xf]
    %v4036 = vld [vmem:[%s3994 + $0x10c] sm:$0xf]
    %v4037 = vld [vmem:[%s3994 + $0x114] sm:$0xf]
    %v4038 = vld [vmem:[%s3994 + $0x118] sm:$0xf]
    %v4039 = vld [vmem:[%s3994 + $0x120] sm:$0xf]
    %v4040 = vld [vmem:[%s3994 + $0x124] sm:$0xf]
    %v4041 = vld [vmem:[%s3994 + $0x12c] sm:$0xf]
    %v4042 = vld [vmem:[%s3994 + $0x130] sm:$0xf]
    %v4043 = vld [vmem:[%s3994 + $0x138] sm:$0xf]
    %v4044 = vld [vmem:[%s3994 + $0x13c] sm:$0xf]
    %v4045 = vld [vmem:[%s3994 + $0x144] sm:$0xf]
    %v4046 = vld [vmem:[%s3994 + $0x148] sm:$0xf]
    %v4047 = vld [vmem:[%s3994 + $0x150] sm:$0xf]
    %v4048 = vld [vmem:[%s3994 + $0x154] sm:$0xf]
    %v4049 = vld [vmem:[%s3994 + $0x15c] sm:$0xf]
    %v4050 = vld [vmem:[%s3994 + $0x160] sm:$0xf]
    %v4051 = vld [vmem:[%s3994 + $0x168] sm:$0xf]
    %v4052 = vld [vmem:[%s3994 + $0x16c] sm:$0xf]
    %v4053 = vld [vmem:[%s3994 + $0x174] sm:$0xf]
    %v4054 = vld [vmem:[%s3994 + $0x178] sm:$0xf]
    %v4055 = vld [vmem:[%s3994 + $0x180] sm:$0xf]
    %v4056 = vld [vmem:[%s3994 + $0x184] sm:$0xf]
    %v4057 = vld [vmem:[%s3994 + $0x18c] sm:$0xf]
    %v4058 = vld [vmem:[%s3994 + $0x190] sm:$0xf]
    %v4059 = vld [vmem:[%s3994 + $0x1b0] sm:$0xf]
    %v4060 = vld [vmem:[%s3994 + $0x1b4] sm:$0xf]
    %v4061 = vld [vmem:[%s3994 + $0x1bc] sm:$0xf]
    %v4062 = vld [vmem:[%s3994 + $0x1c0] sm:$0xf]
    %v4063 = vld [vmem:[%s3994 + $0x1c8] sm:$0xf]
    %v4064 = vld [vmem:[%s3994 + $0x1cc] sm:$0xf]
    %v4065 = vld [vmem:[%s3994 + $0x1d4] sm:$0xf]
    %v4066 = vld [vmem:[%s3994 + $0x1d8] sm:$0xf]
    %v4067 = vld [vmem:[%s3994 + $0x1e0] sm:$0xf]
    %v4068 = vld [vmem:[%s3994 + $0x1e4] sm:$0xf]
    %v4069 = vld [vmem:[%s3994 + $0x1ec] sm:$0xf]
    %v4070 = vld [vmem:[%s3994 + $0x1f0] sm:$0xf]
    %v4071 = vld [vmem:[%s3994 + $0x1f8] sm:$0xf]
    %v4072 = vld [vmem:[%s3994 + $0x1fc] sm:$0xf]
    %v4073 = vld [vmem:[%s3994 + $0x204] sm:$0xf]
    %v4074 = vld [vmem:[%s3994 + $0x208] sm:$0xf]
    %v4075 = vld [vmem:[%s3994 + $0x210] sm:$0xf]
    %v4076 = vld [vmem:[%s3994 + $0x214] sm:$0xf]
    %v4077 = vld [vmem:[%s3994 + $0x21c] sm:$0xf]
    %v4078 = vld [vmem:[%s3994 + $0x220] sm:$0xf]
    %v4079 = vld [vmem:[%s3994 + $0x228] sm:$0xf]
    %v4080 = vld [vmem:[%s3994 + $0x22c] sm:$0xf]
    %v4081 = vld [vmem:[%s3994 + $0x234] sm:$0xf]
    %v4082 = vld [vmem:[%s3994 + $0x238] sm:$0xf]
    %v4083 = vld [vmem:[%s3994 + $0x240] sm:$0xf]
    %v4084 = vld [vmem:[%s3994 + $0x244] sm:$0xf]
    %v4085 = vld [vmem:[%s3994 + $0x24c] sm:$0xf]
    %v4086 = vld [vmem:[%s3994 + $0x250] sm:$0xf]
    %v4087 = vld [vmem:[%s3994 + $0x258] sm:$0xf]
    %v4088 = vld [vmem:[%s3994 + $0x25c] sm:$0xf]
    %v4089 = vld [vmem:[%s3994 + $0x264] sm:$0xf]
    %v4090 = vld [vmem:[%s3994 + $0x268] sm:$0xf]
    %v4091 = vld [vmem:[%s3994 + $0x288] sm:$0xf]
    %v4092 = vld [vmem:[%s3994 + $0x28c] sm:$0xf]
    %v4093 = vld [vmem:[%s3994 + $0x294] sm:$0xf]
    %v4094 = vld [vmem:[%s3994 + $0x298] sm:$0xf]
    %v4095 = vld [vmem:[%s3994 + $0x2a0] sm:$0xf]
    %v4096 = vld [vmem:[%s3994 + $0x2a4] sm:$0xf]
    %v4097 = vld [vmem:[%s3994 + $0x2ac] sm:$0xf]
    %v4098 = vld [vmem:[%s3994 + $0x2b0] sm:$0xf]
    %v4099 = vld [vmem:[%s3994 + $0x2b8] sm:$0xf]
    %v4100 = vld [vmem:[%s3994 + $0x2bc] sm:$0xf]
    %v4101 = vld [vmem:[%s3994 + $0x2c4] sm:$0xf]
    %v4102 = vld [vmem:[%s3994 + $0x2c8] sm:$0xf]
    %v4103 = vld [vmem:[%s3994 + $0x2d0] sm:$0xf]
    %v4104 = vld [vmem:[%s3994 + $0x2d4] sm:$0xf]
    %v4105 = vld [vmem:[%s3994 + $0x2dc] sm:$0xf]
    %v4106 = vld [vmem:[%s3994 + $0x2e0] sm:$0xf]
    %v4107 = vld [vmem:[%s3994 + $0x2e8] sm:$0xf]
    %v4108 = vld [vmem:[%s3994 + $0x2ec] sm:$0xf]
    %v4109 = vld [vmem:[%s3994 + $0x2f4] sm:$0xf]
    %v4110 = vld [vmem:[%s3994 + $0x2f8] sm:$0xf]
    %v4111 = vld [vmem:[%s3994 + $0x300] sm:$0xf]
    %v4112 = vld [vmem:[%s3994 + $0x304] sm:$0xf]
    %v4113 = vld [vmem:[%s3994 + $0x30c] sm:$0xf]
    %v4114 = vld [vmem:[%s3994 + $0x310] sm:$0xf]
    %v4115 = vld [vmem:[%s3994 + $0x318] sm:$0xf]
    %v4116 = vld [vmem:[%s3994 + $0x31c] sm:$0xf]
    %v4117 = vld [vmem:[%s3994 + $0x324] sm:$0xf]
    %v4118 = vld [vmem:[%s3994 + $0x328] sm:$0xf]
    %v4119 = vld [vmem:[%s3994 + $0x330] sm:$0xf]
    %v4120 = vld [vmem:[%s3994 + $0x334] sm:$0xf]
    %v4121 = vld [vmem:[%s3994 + $0x33c] sm:$0xf]
    %v4122 = vld [vmem:[%s3994 + $0x340] sm:$0xf]
    %4251 = vrot.lane.b32.xlu0 %v3995, 48
    %v4252 = vpop.permute.xlu0 %4251
    %4253 = vrot.lane.b32.xlu0 %v3996, 48
    %v4254 = vpop.permute.xlu0 %4253
    %4255 = vrot.lane.b32.xlu0 %v3997, 48
    %v4256 = vpop.permute.xlu0 %4255
    %4257 = vrot.lane.b32.xlu0 %v3998, 48
    %v4258 = vpop.permute.xlu0 %4257
    %4259 = vrot.lane.b32.xlu0 %v3999, 48
    %v4260 = vpop.permute.xlu0 %4259
    %4261 = vrot.lane.b32.xlu0 %v4000, 48
    %v4262 = vpop.permute.xlu0 %4261
    %4263 = vrot.lane.b32.xlu0 %v4001, 48
    %v4264 = vpop.permute.xlu0 %4263
    %4265 = vrot.lane.b32.xlu0 %v4002, 48
    %v4266 = vpop.permute.xlu0 %4265
    %4267 = vrot.lane.b32.xlu0 %v4003, 48
    %v4268 = vpop.permute.xlu0 %4267
    %4269 = vrot.lane.b32.xlu0 %v4004, 48
    %v4270 = vpop.permute.xlu0 %4269
    %4271 = vrot.lane.b32.xlu0 %v4005, 48
    %v4272 = vpop.permute.xlu0 %4271
    %4273 = vrot.lane.b32.xlu0 %v4006, 48
    %v4274 = vpop.permute.xlu0 %4273
    %4275 = vrot.lane.b32.xlu0 %v4007, 48
    %v4276 = vpop.permute.xlu0 %4275
    %4277 = vrot.lane.b32.xlu0 %v4008, 48
    %v4278 = vpop.permute.xlu0 %4277
    %4279 = vrot.lane.b32.xlu0 %v4009, 48
    %v4280 = vpop.permute.xlu0 %4279
    %4281 = vrot.lane.b32.xlu0 %v4010, 48
    %v4282 = vpop.permute.xlu0 %4281
    %4283 = vrot.lane.b32.xlu0 %v4011, 48
    %v4284 = vpop.permute.xlu0 %4283
    %4285 = vrot.lane.b32.xlu0 %v4012, 48
    %v4286 = vpop.permute.xlu0 %4285
    %4287 = vrot.lane.b32.xlu0 %v4013, 48
    %v4288 = vpop.permute.xlu0 %4287
    %4289 = vrot.lane.b32.xlu0 %v4014, 48
    %v4290 = vpop.permute.xlu0 %4289
    %4291 = vrot.lane.b32.xlu0 %v4015, 48
    %v4292 = vpop.permute.xlu0 %4291
    %4293 = vrot.lane.b32.xlu0 %v4016, 48
    %v4294 = vpop.permute.xlu0 %4293
    %4295 = vrot.lane.b32.xlu0 %v4017, 48
    %v4296 = vpop.permute.xlu0 %4295
    %4297 = vrot.lane.b32.xlu0 %v4018, 48
    %v4298 = vpop.permute.xlu0 %4297
    %4299 = vrot.lane.b32.xlu0 %v4019, 48
    %v4300 = vpop.permute.xlu0 %4299
    %4301 = vrot.lane.b32.xlu0 %v4020, 48
    %v4302 = vpop.permute.xlu0 %4301
    %4303 = vrot.lane.b32.xlu0 %v4021, 48
    %v4304 = vpop.permute.xlu0 %4303
    %4305 = vrot.lane.b32.xlu0 %v4022, 48
    %v4306 = vpop.permute.xlu0 %4305
    %4307 = vrot.lane.b32.xlu0 %v4023, 48
    %v4308 = vpop.permute.xlu0 %4307
    %4309 = vrot.lane.b32.xlu0 %v4024, 48
    %v4310 = vpop.permute.xlu0 %4309
    %4311 = vrot.lane.b32.xlu0 %v4025, 48
    %v4312 = vpop.permute.xlu0 %4311
    %4313 = vrot.lane.b32.xlu0 %v4026, 48
    %v4314 = vpop.permute.xlu0 %4313
    %4315 = vrot.lane.b32.xlu0 %v4027, 48
    %v4316 = vpop.permute.xlu0 %4315
    %4317 = vrot.lane.b32.xlu0 %v4028, 48
    %v4318 = vpop.permute.xlu0 %4317
    %4319 = vrot.lane.b32.xlu0 %v4029, 48
    %v4320 = vpop.permute.xlu0 %4319
    %4321 = vrot.lane.b32.xlu0 %v4030, 48
    %v4322 = vpop.permute.xlu0 %4321
    %4323 = vrot.lane.b32.xlu0 %v4031, 48
    %v4324 = vpop.permute.xlu0 %4323
    %4325 = vrot.lane.b32.xlu0 %v4032, 48
    %v4326 = vpop.permute.xlu0 %4325
    %4327 = vrot.lane.b32.xlu0 %v4033, 48
    %v4328 = vpop.permute.xlu0 %4327
    %4329 = vrot.lane.b32.xlu0 %v4034, 48
    %v4330 = vpop.permute.xlu0 %4329
    %4331 = vrot.lane.b32.xlu0 %v4035, 48
    %v4332 = vpop.permute.xlu0 %4331
    %4333 = vrot.lane.b32.xlu0 %v4036, 48
    %v4334 = vpop.permute.xlu0 %4333
    %4335 = vrot.lane.b32.xlu0 %v4037, 48
    %v4336 = vpop.permute.xlu0 %4335
    %4337 = vrot.lane.b32.xlu0 %v4038, 48
    %v4338 = vpop.permute.xlu0 %4337
    %4339 = vrot.lane.b32.xlu0 %v4039, 48
    %v4340 = vpop.permute.xlu0 %4339
    %4341 = vrot.lane.b32.xlu0 %v4040, 48
    %v4342 = vpop.permute.xlu0 %4341
    %4343 = vrot.lane.b32.xlu0 %v4041, 48
    %v4344 = vpop.permute.xlu0 %4343
    %4345 = vrot.lane.b32.xlu0 %v4042, 48
    %v4346 = vpop.permute.xlu0 %4345
    %4347 = vrot.lane.b32.xlu0 %v4043, 48
    %v4348 = vpop.permute.xlu0 %4347
    %4349 = vrot.lane.b32.xlu0 %v4044, 48
    %v4350 = vpop.permute.xlu0 %4349
    %4351 = vrot.lane.b32.xlu0 %v4045, 48
    %v4352 = vpop.permute.xlu0 %4351
    %4353 = vrot.lane.b32.xlu0 %v4046, 48
    %v4354 = vpop.permute.xlu0 %4353
    %4355 = vrot.lane.b32.xlu0 %v4047, 48
    %v4356 = vpop.permute.xlu0 %4355
    %4357 = vrot.lane.b32.xlu0 %v4048, 48
    %v4358 = vpop.permute.xlu0 %4357
    %4359 = vrot.lane.b32.xlu0 %v4049, 48
    %v4360 = vpop.permute.xlu0 %4359
    %4361 = vrot.lane.b32.xlu0 %v4050, 48
    %v4362 = vpop.permute.xlu0 %4361
    %4363 = vrot.lane.b32.xlu0 %v4051, 48
    %v4364 = vpop.permute.xlu0 %4363
    %4365 = vrot.lane.b32.xlu0 %v4052, 48
    %v4366 = vpop.permute.xlu0 %4365
    %4367 = vrot.lane.b32.xlu0 %v4053, 48
    %v4368 = vpop.permute.xlu0 %4367
    %4369 = vrot.lane.b32.xlu0 %v4054, 48
    %v4370 = vpop.permute.xlu0 %4369
    %4371 = vrot.lane.b32.xlu0 %v4055, 48
    %v4372 = vpop.permute.xlu0 %4371
    %4373 = vrot.lane.b32.xlu0 %v4056, 48
    %v4374 = vpop.permute.xlu0 %4373
    %4375 = vrot.lane.b32.xlu0 %v4057, 48
    %v4376 = vpop.permute.xlu0 %4375
    %4377 = vrot.lane.b32.xlu0 %v4058, 48
    %v4378 = vpop.permute.xlu0 %4377
    %4379 = vrot.lane.b32.xlu0 %v4059, 48
    %v4380 = vpop.permute.xlu0 %4379
    %4381 = vrot.lane.b32.xlu0 %v4060, 48
    %v4382 = vpop.permute.xlu0 %4381
    %4383 = vrot.lane.b32.xlu0 %v4061, 48
    %v4384 = vpop.permute.xlu0 %4383
    %4385 = vrot.lane.b32.xlu0 %v4062, 48
    %v4386 = vpop.permute.xlu0 %4385
    %4387 = vrot.lane.b32.xlu0 %v4063, 48
    %v4388 = vpop.permute.xlu0 %4387
    %4389 = vrot.lane.b32.xlu0 %v4064, 48
    %v4390 = vpop.permute.xlu0 %4389
    %4391 = vrot.lane.b32.xlu0 %v4065, 48
    %v4392 = vpop.permute.xlu0 %4391
    %4393 = vrot.lane.b32.xlu0 %v4066, 48
    %v4394 = vpop.permute.xlu0 %4393
    %4395 = vrot.lane.b32.xlu0 %v4067, 48
    %v4396 = vpop.permute.xlu0 %4395
    %4397 = vrot.lane.b32.xlu0 %v4068, 48
    %v4398 = vpop.permute.xlu0 %4397
    %4399 = vrot.lane.b32.xlu0 %v4069, 48
    %v4400 = vpop.permute.xlu0 %4399
    %4401 = vrot.lane.b32.xlu0 %v4070, 48
    %v4402 = vpop.permute.xlu0 %4401
    %4403 = vrot.lane.b32.xlu0 %v4071, 48
    %v4404 = vpop.permute.xlu0 %4403
    %4405 = vrot.lane.b32.xlu0 %v4072, 48
    %v4406 = vpop.permute.xlu0 %4405
    %4407 = vrot.lane.b32.xlu0 %v4073, 48
    %v4408 = vpop.permute.xlu0 %4407
    %4409 = vrot.lane.b32.xlu0 %v4074, 48
    %v4410 = vpop.permute.xlu0 %4409
    %4411 = vrot.lane.b32.xlu0 %v4075, 48
    %v4412 = vpop.permute.xlu0 %4411
    %4413 = vrot.lane.b32.xlu0 %v4076, 48
    %v4414 = vpop.permute.xlu0 %4413
    %4415 = vrot.lane.b32.xlu0 %v4077, 48
    %v4416 = vpop.permute.xlu0 %4415
    %4417 = vrot.lane.b32.xlu0 %v4078, 48
    %v4418 = vpop.permute.xlu0 %4417
    %4419 = vrot.lane.b32.xlu0 %v4079, 48
    %v4420 = vpop.permute.xlu0 %4419
    %4421 = vrot.lane.b32.xlu0 %v4080, 48
    %v4422 = vpop.permute.xlu0 %4421
    %4423 = vrot.lane.b32.xlu0 %v4081, 48
    %v4424 = vpop.permute.xlu0 %4423
    %4425 = vrot.lane.b32.xlu0 %v4082, 48
    %v4426 = vpop.permute.xlu0 %4425
    %4427 = vrot.lane.b32.xlu0 %v4083, 48
    %v4428 = vpop.permute.xlu0 %4427
    %4429 = vrot.lane.b32.xlu0 %v4084, 48
    %v4430 = vpop.permute.xlu0 %4429
    %4431 = vrot.lane.b32.xlu0 %v4085, 48
    %v4432 = vpop.permute.xlu0 %4431
    %4433 = vrot.lane.b32.xlu0 %v4086, 48
    %v4434 = vpop.permute.xlu0 %4433
    %4435 = vrot.lane.b32.xlu0 %v4087, 48
    %v4436 = vpop.permute.xlu0 %4435
    %4437 = vrot.lane.b32.xlu0 %v4088, 48
    %v4438 = vpop.permute.xlu0 %4437
    %4439 = vrot.lane.b32.xlu0 %v4089, 48
    %v4440 = vpop.permute.xlu0 %4439
    %4441 = vrot.lane.b32.xlu0 %v4090, 48
    %v4442 = vpop.permute.xlu0 %4441
    %4443 = vrot.lane.b32.xlu0 %v4091, 48
    %v4444 = vpop.permute.xlu0 %4443
    %4445 = vrot.lane.b32.xlu0 %v4092, 48
    %v4446 = vpop.permute.xlu0 %4445
    %4447 = vrot.lane.b32.xlu0 %v4093, 48
    %v4448 = vpop.permute.xlu0 %4447
    %4449 = vrot.lane.b32.xlu0 %v4094, 48
    %v4450 = vpop.permute.xlu0 %4449
    %4451 = vrot.lane.b32.xlu0 %v4095, 48
    %v4452 = vpop.permute.xlu0 %4451
    %4453 = vrot.lane.b32.xlu0 %v4096, 48
    %v4454 = vpop.permute.xlu0 %4453
    %4455 = vrot.lane.b32.xlu0 %v4097, 48
    %v4456 = vpop.permute.xlu0 %4455
    %4457 = vrot.lane.b32.xlu0 %v4098, 48
    %v4458 = vpop.permute.xlu0 %4457
    %4459 = vrot.lane.b32.xlu0 %v4099, 48
    %v4460 = vpop.permute.xlu0 %4459
    %4461 = vrot.lane.b32.xlu0 %v4100, 48
    %v4462 = vpop.permute.xlu0 %4461
    %4463 = vrot.lane.b32.xlu0 %v4101, 48
    %v4464 = vpop.permute.xlu0 %4463
    %4465 = vrot.lane.b32.xlu0 %v4102, 48
    %v4466 = vpop.permute.xlu0 %4465
    %4467 = vrot.lane.b32.xlu0 %v4103, 48
    %v4468 = vpop.permute.xlu0 %4467
    %4469 = vrot.lane.b32.xlu0 %v4104, 48
    %v4470 = vpop.permute.xlu0 %4469
    %4471 = vrot.lane.b32.xlu0 %v4105, 48
    %v4472 = vpop.permute.xlu0 %4471
    %4473 = vrot.lane.b32.xlu0 %v4106, 48
    %v4474 = vpop.permute.xlu0 %4473
    %4475 = vrot.lane.b32.xlu0 %v4107, 48
    %v4476 = vpop.permute.xlu0 %4475
    %4477 = vrot.lane.b32.xlu0 %v4108, 48
    %v4478 = vpop.permute.xlu0 %4477
    %4479 = vrot.lane.b32.xlu0 %v4109, 48
    %v4480 = vpop.permute.xlu0 %4479
    %4481 = vrot.lane.b32.xlu0 %v4110, 48
    %v4482 = vpop.permute.xlu0 %4481
    %4483 = vrot.lane.b32.xlu0 %v4111, 48
    %v4484 = vpop.permute.xlu0 %4483
    %4485 = vrot.lane.b32.xlu0 %v4112, 48
    %v4486 = vpop.permute.xlu0 %4485
    %4487 = vrot.lane.b32.xlu0 %v4113, 48
    %v4488 = vpop.permute.xlu0 %4487
    %4489 = vrot.lane.b32.xlu0 %v4114, 48
    %v4490 = vpop.permute.xlu0 %4489
    %4491 = vrot.lane.b32.xlu0 %v4115, 48
    %v4492 = vpop.permute.xlu0 %4491
    %4493 = vrot.lane.b32.xlu0 %v4116, 48
    %v4494 = vpop.permute.xlu0 %4493
    %4495 = vrot.lane.b32.xlu0 %v4117, 48
    %v4496 = vpop.permute.xlu0 %4495
    %4497 = vrot.lane.b32.xlu0 %v4118, 48
    %v4498 = vpop.permute.xlu0 %4497
    %4499 = vrot.lane.b32.xlu0 %v4119, 48
    %v4500 = vpop.permute.xlu0 %4499
    %4501 = vrot.lane.b32.xlu0 %v4120, 48
    %v4502 = vpop.permute.xlu0 %4501
    %4503 = vrot.lane.b32.xlu0 %v4121, 48
    %v4504 = vpop.permute.xlu0 %4503
    %4505 = vrot.lane.b32.xlu0 %v4122, 48
    %v4506 = vpop.permute.xlu0 %4505
    %vm4635 = vcmask 519552
    %4636 = vst.msk [vmem:[#allocation2] sm:$0xf] %vm4635, %v4252
    %4637 = vst.msk [vmem:[#allocation2 + $0x8] sm:$0xf] %vm4635, %v4254
    %4638 = vst.msk [vmem:[#allocation2 + $0x10] sm:$0xf] %vm4635, %v4256
    %4639 = vst.msk [vmem:[#allocation2 + $0x18] sm:$0xf] %vm4635, %v4258
    %4640 = vst.msk [vmem:[#allocation2 + $0x20] sm:$0xf] %vm4635, %v4260
    %4641 = vst.msk [vmem:[#allocation2 + $0x28] sm:$0xf] %vm4635, %v4262
    %4642 = vst.msk [vmem:[#allocation2 + $0x30] sm:$0xf] %vm4635, %v4264
    %4643 = vst.msk [vmem:[#allocation2 + $0x38] sm:$0xf] %vm4635, %v4266
    %4644 = vst.msk [vmem:[#allocation2 + $0x40] sm:$0xf] %vm4635, %v4268
    %4645 = vst.msk [vmem:[#allocation2 + $0x48] sm:$0xf] %vm4635, %v4270
    %4646 = vst.msk [vmem:[#allocation2 + $0x50] sm:$0xf] %vm4635, %v4272
    %4647 = vst.msk [vmem:[#allocation2 + $0x58] sm:$0xf] %vm4635, %v4274
    %4648 = vst.msk [vmem:[#allocation2 + $0x60] sm:$0xf] %vm4635, %v4276
    %4649 = vst.msk [vmem:[#allocation2 + $0x68] sm:$0xf] %vm4635, %v4278
    %4650 = vst.msk [vmem:[#allocation2 + $0x70] sm:$0xf] %vm4635, %v4280
    %4651 = vst.msk [vmem:[#allocation2 + $0x78] sm:$0xf] %vm4635, %v4282
    %4652 = vst.msk [vmem:[#allocation2 + $0x80] sm:$0xf] %vm4635, %v4284
    %4653 = vst.msk [vmem:[#allocation2 + $0x88] sm:$0xf] %vm4635, %v4286
    %4654 = vst.msk [vmem:[#allocation2 + $0x90] sm:$0xf] %vm4635, %v4288
    %4655 = vst.msk [vmem:[#allocation2 + $0x98] sm:$0xf] %vm4635, %v4290
    %4656 = vst.msk [vmem:[#allocation2 + $0xa0] sm:$0xf] %vm4635, %v4292
    %4657 = vst.msk [vmem:[#allocation2 + $0xa8] sm:$0xf] %vm4635, %v4294
    %4658 = vst.msk [vmem:[#allocation2 + $0xb0] sm:$0xf] %vm4635, %v4296
    %4659 = vst.msk [vmem:[#allocation2 + $0xb8] sm:$0xf] %vm4635, %v4298
    %4660 = vst.msk [vmem:[#allocation2 + $0xc0] sm:$0xf] %vm4635, %v4300
    %4661 = vst.msk [vmem:[#allocation2 + $0xc8] sm:$0xf] %vm4635, %v4302
    %4662 = vst.msk [vmem:[#allocation2 + $0xd0] sm:$0xf] %vm4635, %v4304
    %4663 = vst.msk [vmem:[#allocation2 + $0xd8] sm:$0xf] %vm4635, %v4306
    %4664 = vst.msk [vmem:[#allocation2 + $0xe0] sm:$0xf] %vm4635, %v4308
    %4665 = vst.msk [vmem:[#allocation2 + $0xe8] sm:$0xf] %vm4635, %v4310
    %4666 = vst.msk [vmem:[#allocation2 + $0xf0] sm:$0xf] %vm4635, %v4312
    %4667 = vst.msk [vmem:[#allocation2 + $0xf8] sm:$0xf] %vm4635, %v4314
    %4668 = vst.msk [vmem:[#allocation2 + $0x100] sm:$0xf] %vm4635, %v4316
    %4669 = vst.msk [vmem:[#allocation2 + $0x108] sm:$0xf] %vm4635, %v4318
    %4670 = vst.msk [vmem:[#allocation2 + $0x110] sm:$0xf] %vm4635, %v4320
    %4671 = vst.msk [vmem:[#allocation2 + $0x118] sm:$0xf] %vm4635, %v4322
    %4672 = vst.msk [vmem:[#allocation2 + $0x120] sm:$0xf] %vm4635, %v4324
    %4673 = vst.msk [vmem:[#allocation2 + $0x128] sm:$0xf] %vm4635, %v4326
    %4674 = vst.msk [vmem:[#allocation2 + $0x130] sm:$0xf] %vm4635, %v4328
    %4675 = vst.msk [vmem:[#allocation2 + $0x138] sm:$0xf] %vm4635, %v4330
    %4676 = vst.msk [vmem:[#allocation2 + $0x140] sm:$0xf] %vm4635, %v4332
    %4677 = vst.msk [vmem:[#allocation2 + $0x148] sm:$0xf] %vm4635, %v4334
    %4678 = vst.msk [vmem:[#allocation2 + $0x150] sm:$0xf] %vm4635, %v4336
    %4679 = vst.msk [vmem:[#allocation2 + $0x158] sm:$0xf] %vm4635, %v4338
    %4680 = vst.msk [vmem:[#allocation2 + $0x160] sm:$0xf] %vm4635, %v4340
    %4681 = vst.msk [vmem:[#allocation2 + $0x168] sm:$0xf] %vm4635, %v4342
    %4682 = vst.msk [vmem:[#allocation2 + $0x170] sm:$0xf] %vm4635, %v4344
    %4683 = vst.msk [vmem:[#allocation2 + $0x178] sm:$0xf] %vm4635, %v4346
    %4684 = vst.msk [vmem:[#allocation2 + $0x180] sm:$0xf] %vm4635, %v4348
    %4685 = vst.msk [vmem:[#allocation2 + $0x188] sm:$0xf] %vm4635, %v4350
    %4686 = vst.msk [vmem:[#allocation2 + $0x190] sm:$0xf] %vm4635, %v4352
    %4687 = vst.msk [vmem:[#allocation2 + $0x198] sm:$0xf] %vm4635, %v4354
    %4688 = vst.msk [vmem:[#allocation2 + $0x1a0] sm:$0xf] %vm4635, %v4356
    %4689 = vst.msk [vmem:[#allocation2 + $0x1a8] sm:$0xf] %vm4635, %v4358
    %4690 = vst.msk [vmem:[#allocation2 + $0x1b0] sm:$0xf] %vm4635, %v4360
    %4691 = vst.msk [vmem:[#allocation2 + $0x1b8] sm:$0xf] %vm4635, %v4362
    %4692 = vst.msk [vmem:[#allocation2 + $0x1c0] sm:$0xf] %vm4635, %v4364
    %4693 = vst.msk [vmem:[#allocation2 + $0x1c8] sm:$0xf] %vm4635, %v4366
    %4694 = vst.msk [vmem:[#allocation2 + $0x1d0] sm:$0xf] %vm4635, %v4368
    %4695 = vst.msk [vmem:[#allocation2 + $0x1d8] sm:$0xf] %vm4635, %v4370
    %4696 = vst.msk [vmem:[#allocation2 + $0x1e0] sm:$0xf] %vm4635, %v4372
    %4697 = vst.msk [vmem:[#allocation2 + $0x1e8] sm:$0xf] %vm4635, %v4374
    %4698 = vst.msk [vmem:[#allocation2 + $0x1f0] sm:$0xf] %vm4635, %v4376
    %4699 = vst.msk [vmem:[#allocation2 + $0x1f8] sm:$0xf] %vm4635, %v4378
    %4700 = vst.msk [vmem:[#allocation2 + $0x200] sm:$0xf] %vm4635, %v4380
    %4701 = vst.msk [vmem:[#allocation2 + $0x208] sm:$0xf] %vm4635, %v4382
    %4702 = vst.msk [vmem:[#allocation2 + $0x210] sm:$0xf] %vm4635, %v4384
    %4703 = vst.msk [vmem:[#allocation2 + $0x218] sm:$0xf] %vm4635, %v4386
    %4704 = vst.msk [vmem:[#allocation2 + $0x220] sm:$0xf] %vm4635, %v4388
    %4705 = vst.msk [vmem:[#allocation2 + $0x228] sm:$0xf] %vm4635, %v4390
    %4706 = vst.msk [vmem:[#allocation2 + $0x230] sm:$0xf] %vm4635, %v4392
    %4707 = vst.msk [vmem:[#allocation2 + $0x238] sm:$0xf] %vm4635, %v4394
    %4708 = vst.msk [vmem:[#allocation2 + $0x240] sm:$0xf] %vm4635, %v4396
    %4709 = vst.msk [vmem:[#allocation2 + $0x248] sm:$0xf] %vm4635, %v4398
    %4710 = vst.msk [vmem:[#allocation2 + $0x250] sm:$0xf] %vm4635, %v4400
    %4711 = vst.msk [vmem:[#allocation2 + $0x258] sm:$0xf] %vm4635, %v4402
    %4712 = vst.msk [vmem:[#allocation2 + $0x260] sm:$0xf] %vm4635, %v4404
    %4713 = vst.msk [vmem:[#allocation2 + $0x268] sm:$0xf] %vm4635, %v4406
    %4714 = vst.msk [vmem:[#allocation2 + $0x270] sm:$0xf] %vm4635, %v4408
    %4715 = vst.msk [vmem:[#allocation2 + $0x278] sm:$0xf] %vm4635, %v4410
    %4716 = vst.msk [vmem:[#allocation2 + $0x280] sm:$0xf] %vm4635, %v4412
    %4717 = vst.msk [vmem:[#allocation2 + $0x288] sm:$0xf] %vm4635, %v4414
    %4718 = vst.msk [vmem:[#allocation2 + $0x290] sm:$0xf] %vm4635, %v4416
    %4719 = vst.msk [vmem:[#allocation2 + $0x298] sm:$0xf] %vm4635, %v4418
    %4720 = vst.msk [vmem:[#allocation2 + $0x2a0] sm:$0xf] %vm4635, %v4420
    %4721 = vst.msk [vmem:[#allocation2 + $0x2a8] sm:$0xf] %vm4635, %v4422
    %4722 = vst.msk [vmem:[#allocation2 + $0x2b0] sm:$0xf] %vm4635, %v4424
    %4723 = vst.msk [vmem:[#allocation2 + $0x2b8] sm:$0xf] %vm4635, %v4426
    %4724 = vst.msk [vmem:[#allocation2 + $0x2c0] sm:$0xf] %vm4635, %v4428
    %4725 = vst.msk [vmem:[#allocation2 + $0x2c8] sm:$0xf] %vm4635, %v4430
    %4726 = vst.msk [vmem:[#allocation2 + $0x2d0] sm:$0xf] %vm4635, %v4432
    %4727 = vst.msk [vmem:[#allocation2 + $0x2d8] sm:$0xf] %vm4635, %v4434
    %4728 = vst.msk [vmem:[#allocation2 + $0x2e0] sm:$0xf] %vm4635, %v4436
    %4729 = vst.msk [vmem:[#allocation2 + $0x2e8] sm:$0xf] %vm4635, %v4438
    %4730 = vst.msk [vmem:[#allocation2 + $0x2f0] sm:$0xf] %vm4635, %v4440
    %4731 = vst.msk [vmem:[#allocation2 + $0x2f8] sm:$0xf] %vm4635, %v4442
    %4732 = vst.msk [vmem:[#allocation2 + $0x300] sm:$0xf] %vm4635, %v4444
    %4733 = vst.msk [vmem:[#allocation2 + $0x308] sm:$0xf] %vm4635, %v4446
    %4734 = vst.msk [vmem:[#allocation2 + $0x310] sm:$0xf] %vm4635, %v4448
    %4735 = vst.msk [vmem:[#allocation2 + $0x318] sm:$0xf] %vm4635, %v4450
    %4736 = vst.msk [vmem:[#allocation2 + $0x320] sm:$0xf] %vm4635, %v4452
    %4737 = vst.msk [vmem:[#allocation2 + $0x328] sm:$0xf] %vm4635, %v4454
    %4738 = vst.msk [vmem:[#allocation2 + $0x330] sm:$0xf] %vm4635, %v4456
    %4739 = vst.msk [vmem:[#allocation2 + $0x338] sm:$0xf] %vm4635, %v4458
    %4740 = vst.msk [vmem:[#allocation2 + $0x340] sm:$0xf] %vm4635, %v4460
    %4741 = vst.msk [vmem:[#allocation2 + $0x348] sm:$0xf] %vm4635, %v4462
    %4742 = vst.msk [vmem:[#allocation2 + $0x350] sm:$0xf] %vm4635, %v4464
    %4743 = vst.msk [vmem:[#allocation2 + $0x358] sm:$0xf] %vm4635, %v4466
    %4744 = vst.msk [vmem:[#allocation2 + $0x360] sm:$0xf] %vm4635, %v4468
    %4745 = vst.msk [vmem:[#allocation2 + $0x368] sm:$0xf] %vm4635, %v4470
    %4746 = vst.msk [vmem:[#allocation2 + $0x370] sm:$0xf] %vm4635, %v4472
    %4747 = vst.msk [vmem:[#allocation2 + $0x378] sm:$0xf] %vm4635, %v4474
    %4748 = vst.msk [vmem:[#allocation2 + $0x380] sm:$0xf] %vm4635, %v4476
    %4749 = vst.msk [vmem:[#allocation2 + $0x388] sm:$0xf] %vm4635, %v4478
    %4750 = vst.msk [vmem:[#allocation2 + $0x390] sm:$0xf] %vm4635, %v4480
    %4751 = vst.msk [vmem:[#allocation2 + $0x398] sm:$0xf] %vm4635, %v4482
    %4752 = vst.msk [vmem:[#allocation2 + $0x3a0] sm:$0xf] %vm4635, %v4484
    %4753 = vst.msk [vmem:[#allocation2 + $0x3a8] sm:$0xf] %vm4635, %v4486
    %4754 = vst.msk [vmem:[#allocation2 + $0x3b0] sm:$0xf] %vm4635, %v4488
    %4755 = vst.msk [vmem:[#allocation2 + $0x3b8] sm:$0xf] %vm4635, %v4490
    %4756 = vst.msk [vmem:[#allocation2 + $0x3c0] sm:$0xf] %vm4635, %v4492
    %4757 = vst.msk [vmem:[#allocation2 + $0x3c8] sm:$0xf] %vm4635, %v4494
    %4758 = vst.msk [vmem:[#allocation2 + $0x3d0] sm:$0xf] %vm4635, %v4496
    %4759 = vst.msk [vmem:[#allocation2 + $0x3d8] sm:$0xf] %vm4635, %v4498
    %4760 = vst.msk [vmem:[#allocation2 + $0x3e0] sm:$0xf] %vm4635, %v4500
    %4761 = vst.msk [vmem:[#allocation2 + $0x3e8] sm:$0xf] %vm4635, %v4502
    %4762 = vst.msk [vmem:[#allocation2 + $0x3f0] sm:$0xf] %vm4635, %v4504
    %4763 = vst.msk [vmem:[#allocation2 + $0x3f8] sm:$0xf] %vm4635, %v4506
    %v4764 = vld [vmem:[%s3994] sm:$0xf]
    %v4765 = vld [vmem:[%s3994 + $0x4] sm:$0xf]
    %v4766 = vld [vmem:[%s3994 + $0x8] sm:$0x1]
    %v4767 = vld [vmem:[%s3994 + $0xc] sm:$0xf]
    %v4768 = vld [vmem:[%s3994 + $0x10] sm:$0xf]
    %v4769 = vld [vmem:[%s3994 + $0x14] sm:$0x1]
    %v4770 = vld [vmem:[%s3994 + $0x18] sm:$0xf]
    %v4771 = vld [vmem:[%s3994 + $0x1c] sm:$0xf]
    %v4772 = vld [vmem:[%s3994 + $0x20] sm:$0x1]
    %v4773 = vld [vmem:[%s3994 + $0x24] sm:$0xf]
    %v4774 = vld [vmem:[%s3994 + $0x28] sm:$0xf]
    %v4775 = vld [vmem:[%s3994 + $0x2c] sm:$0x1]
    %v4776 = vld [vmem:[%s3994 + $0x30] sm:$0xf]
    %v4777 = vld [vmem:[%s3994 + $0x34] sm:$0xf]
    %v4778 = vld [vmem:[%s3994 + $0x38] sm:$0x1]
    %v4779 = vld [vmem:[%s3994 + $0x3c] sm:$0xf]
    %v4780 = vld [vmem:[%s3994 + $0x40] sm:$0xf]
    %v4781 = vld [vmem:[%s3994 + $0x44] sm:$0x1]
    %v4782 = vld [vmem:[%s3994 + $0x48] sm:$0xf]
    %v4783 = vld [vmem:[%s3994 + $0x4c] sm:$0xf]
    %v4784 = vld [vmem:[%s3994 + $0x50] sm:$0x1]
    %v4785 = vld [vmem:[%s3994 + $0x54] sm:$0xf]
    %v4786 = vld [vmem:[%s3994 + $0x58] sm:$0xf]
    %v4787 = vld [vmem:[%s3994 + $0x5c] sm:$0x1]
    %v4788 = vld [vmem:[%s3994 + $0x60] sm:$0xf]
    %v4789 = vld [vmem:[%s3994 + $0x64] sm:$0xf]
    %v4790 = vld [vmem:[%s3994 + $0x68] sm:$0x1]
    %v4791 = vld [vmem:[%s3994 + $0x6c] sm:$0xf]
    %v4792 = vld [vmem:[%s3994 + $0x70] sm:$0xf]
    %v4793 = vld [vmem:[%s3994 + $0x74] sm:$0x1]
    %v4794 = vld [vmem:[%s3994 + $0x78] sm:$0xf]
    %v4795 = vld [vmem:[%s3994 + $0x7c] sm:$0xf]
    %v4796 = vld [vmem:[%s3994 + $0x80] sm:$0x1]
    %v4797 = vld [vmem:[%s3994 + $0x84] sm:$0xf]
    %v4798 = vld [vmem:[%s3994 + $0x88] sm:$0xf]
    %v4799 = vld [vmem:[%s3994 + $0x8c] sm:$0x1]
    %v4800 = vld [vmem:[%s3994 + $0x90] sm:$0xf]
    %v4801 = vld [vmem:[%s3994 + $0x94] sm:$0xf]
    %v4802 = vld [vmem:[%s3994 + $0x98] sm:$0x1]
    %v4803 = vld [vmem:[%s3994 + $0x9c] sm:$0xf]
    %v4804 = vld [vmem:[%s3994 + $0xa0] sm:$0xf]
    %v4805 = vld [vmem:[%s3994 + $0xa4] sm:$0x1]
    %v4806 = vld [vmem:[%s3994 + $0xa8] sm:$0xf]
    %v4807 = vld [vmem:[%s3994 + $0xac] sm:$0xf]
    %v4808 = vld [vmem:[%s3994 + $0xb0] sm:$0x1]
    %v4809 = vld [vmem:[%s3994 + $0xb4] sm:$0xf]
    %v4810 = vld [vmem:[%s3994 + $0xb8] sm:$0xf]
    %v4811 = vld [vmem:[%s3994 + $0xbc] sm:$0x1]
    %v4812 = vld [vmem:[%s3994 + $0xd8] sm:$0xf]
    %v4813 = vld [vmem:[%s3994 + $0xdc] sm:$0xf]
    %v4814 = vld [vmem:[%s3994 + $0xe0] sm:$0x1]
    %v4815 = vld [vmem:[%s3994 + $0xe4] sm:$0xf]
    %v4816 = vld [vmem:[%s3994 + $0xe8] sm:$0xf]
    %v4817 = vld [vmem:[%s3994 + $0xec] sm:$0x1]
    %v4818 = vld [vmem:[%s3994 + $0xf0] sm:$0xf]
    %v4819 = vld [vmem:[%s3994 + $0xf4] sm:$0xf]
    %v4820 = vld [vmem:[%s3994 + $0xf8] sm:$0x1]
    %v4821 = vld [vmem:[%s3994 + $0xfc] sm:$0xf]
    %v4822 = vld [vmem:[%s3994 + $0x100] sm:$0xf]
    %v4823 = vld [vmem:[%s3994 + $0x104] sm:$0x1]
    %v4824 = vld [vmem:[%s3994 + $0x108] sm:$0xf]
    %v4825 = vld [vmem:[%s3994 + $0x10c] sm:$0xf]
    %v4826 = vld [vmem:[%s3994 + $0x110] sm:$0x1]
    %v4827 = vld [vmem:[%s3994 + $0x114] sm:$0xf]
    %v4828 = vld [vmem:[%s3994 + $0x118] sm:$0xf]
    %v4829 = vld [vmem:[%s3994 + $0x11c] sm:$0x1]
    %v4830 = vld [vmem:[%s3994 + $0x120] sm:$0xf]
    %v4831 = vld [vmem:[%s3994 + $0x124] sm:$0xf]
    %v4832 = vld [vmem:[%s3994 + $0x128] sm:$0x1]
    %v4833 = vld [vmem:[%s3994 + $0x12c] sm:$0xf]
    %v4834 = vld [vmem:[%s3994 + $0x130] sm:$0xf]
    %v4835 = vld [vmem:[%s3994 + $0x134] sm:$0x1]
    %v4836 = vld [vmem:[%s3994 + $0x138] sm:$0xf]
    %v4837 = vld [vmem:[%s3994 + $0x13c] sm:$0xf]
    %v4838 = vld [vmem:[%s3994 + $0x140] sm:$0x1]
    %v4839 = vld [vmem:[%s3994 + $0x144] sm:$0xf]
    %v4840 = vld [vmem:[%s3994 + $0x148] sm:$0xf]
    %v4841 = vld [vmem:[%s3994 + $0x14c] sm:$0x1]
    %v4842 = vld [vmem:[%s3994 + $0x150] sm:$0xf]
    %v4843 = vld [vmem:[%s3994 + $0x154] sm:$0xf]
    %v4844 = vld [vmem:[%s3994 + $0x158] sm:$0x1]
    %v4845 = vld [vmem:[%s3994 + $0x15c] sm:$0xf]
    %v4846 = vld [vmem:[%s3994 + $0x160] sm:$0xf]
    %v4847 = vld [vmem:[%s3994 + $0x164] sm:$0x1]
    %v4848 = vld [vmem:[%s3994 + $0x168] sm:$0xf]
    %v4849 = vld [vmem:[%s3994 + $0x16c] sm:$0xf]
    %v4850 = vld [vmem:[%s3994 + $0x170] sm:$0x1]
    %v4851 = vld [vmem:[%s3994 + $0x174] sm:$0xf]
    %v4852 = vld [vmem:[%s3994 + $0x178] sm:$0xf]
    %v4853 = vld [vmem:[%s3994 + $0x17c] sm:$0x1]
    %v4854 = vld [vmem:[%s3994 + $0x180] sm:$0xf]
    %v4855 = vld [vmem:[%s3994 + $0x184] sm:$0xf]
    %v4856 = vld [vmem:[%s3994 + $0x188] sm:$0x1]
    %v4857 = vld [vmem:[%s3994 + $0x18c] sm:$0xf]
    %v4858 = vld [vmem:[%s3994 + $0x190] sm:$0xf]
    %v4859 = vld [vmem:[%s3994 + $0x194] sm:$0x1]
    %v4860 = vld [vmem:[%s3994 + $0x1b0] sm:$0xf]
    %v4861 = vld [vmem:[%s3994 + $0x1b4] sm:$0xf]
    %v4862 = vld [vmem:[%s3994 + $0x1b8] sm:$0x1]
    %v4863 = vld [vmem:[%s3994 + $0x1bc] sm:$0xf]
    %v4864 = vld [vmem:[%s3994 + $0x1c0] sm:$0xf]
    %v4865 = vld [vmem:[%s3994 + $0x1c4] sm:$0x1]
    %v4866 = vld [vmem:[%s3994 + $0x1c8] sm:$0xf]
    %v4867 = vld [vmem:[%s3994 + $0x1cc] sm:$0xf]
    %v4868 = vld [vmem:[%s3994 + $0x1d0] sm:$0x1]
    %v4869 = vld [vmem:[%s3994 + $0x1d4] sm:$0xf]
    %v4870 = vld [vmem:[%s3994 + $0x1d8] sm:$0xf]
    %v4871 = vld [vmem:[%s3994 + $0x1dc] sm:$0x1]
    %v4872 = vld [vmem:[%s3994 + $0x1e0] sm:$0xf]
    %v4873 = vld [vmem:[%s3994 + $0x1e4] sm:$0xf]
    %v4874 = vld [vmem:[%s3994 + $0x1e8] sm:$0x1]
    %v4875 = vld [vmem:[%s3994 + $0x1ec] sm:$0xf]
    %v4876 = vld [vmem:[%s3994 + $0x1f0] sm:$0xf]
    %v4877 = vld [vmem:[%s3994 + $0x1f4] sm:$0x1]
    %v4878 = vld [vmem:[%s3994 + $0x1f8] sm:$0xf]
    %v4879 = vld [vmem:[%s3994 + $0x1fc] sm:$0xf]
    %v4880 = vld [vmem:[%s3994 + $0x200] sm:$0x1]
    %v4881 = vld [vmem:[%s3994 + $0x204] sm:$0xf]
    %v4882 = vld [vmem:[%s3994 + $0x208] sm:$0xf]
    %v4883 = vld [vmem:[%s3994 + $0x20c] sm:$0x1]
    %v4884 = vld [vmem:[%s3994 + $0x210] sm:$0xf]
    %v4885 = vld [vmem:[%s3994 + $0x214] sm:$0xf]
    %v4886 = vld [vmem:[%s3994 + $0x218] sm:$0x1]
    %v4887 = vld [vmem:[%s3994 + $0x21c] sm:$0xf]
    %v4888 = vld [vmem:[%s3994 + $0x220] sm:$0xf]
    %v4889 = vld [vmem:[%s3994 + $0x224] sm:$0x1]
    %v4890 = vld [vmem:[%s3994 + $0x228] sm:$0xf]
    %v4891 = vld [vmem:[%s3994 + $0x22c] sm:$0xf]
    %v4892 = vld [vmem:[%s3994 + $0x230] sm:$0x1]
    %v4893 = vld [vmem:[%s3994 + $0x234] sm:$0xf]
    %v4894 = vld [vmem:[%s3994 + $0x238] sm:$0xf]
    %v4895 = vld [vmem:[%s3994 + $0x23c] sm:$0x1]
    %v4896 = vld [vmem:[%s3994 + $0x240] sm:$0xf]
    %v4897 = vld [vmem:[%s3994 + $0x244] sm:$0xf]
    %v4898 = vld [vmem:[%s3994 + $0x248] sm:$0x1]
    %v4899 = vld [vmem:[%s3994 + $0x24c] sm:$0xf]
    %v4900 = vld [vmem:[%s3994 + $0x250] sm:$0xf]
    %v4901 = vld [vmem:[%s3994 + $0x254] sm:$0x1]
    %v4902 = vld [vmem:[%s3994 + $0x258] sm:$0xf]
    %v4903 = vld [vmem:[%s3994 + $0x25c] sm:$0xf]
    %v4904 = vld [vmem:[%s3994 + $0x260] sm:$0x1]
    %v4905 = vld [vmem:[%s3994 + $0x264] sm:$0xf]
    %v4906 = vld [vmem:[%s3994 + $0x268] sm:$0xf]
    %v4907 = vld [vmem:[%s3994 + $0x26c] sm:$0x1]
    %v4908 = vld [vmem:[%s3994 + $0x288] sm:$0xf]
    %v4909 = vld [vmem:[%s3994 + $0x28c] sm:$0xf]
    %v4910 = vld [vmem:[%s3994 + $0x290] sm:$0x1]
    %v4911 = vld [vmem:[%s3994 + $0x294] sm:$0xf]
    %v4912 = vld [vmem:[%s3994 + $0x298] sm:$0xf]
    %v4913 = vld [vmem:[%s3994 + $0x29c] sm:$0x1]
    %v4914 = vld [vmem:[%s3994 + $0x2a0] sm:$0xf]
    %v4915 = vld [vmem:[%s3994 + $0x2a4] sm:$0xf]
    %v4916 = vld [vmem:[%s3994 + $0x2a8] sm:$0x1]
    %v4917 = vld [vmem:[%s3994 + $0x2ac] sm:$0xf]
    %v4918 = vld [vmem:[%s3994 + $0x2b0] sm:$0xf]
    %v4919 = vld [vmem:[%s3994 + $0x2b4] sm:$0x1]
    %v4920 = vld [vmem:[%s3994 + $0x2b8] sm:$0xf]
    %v4921 = vld [vmem:[%s3994 + $0x2bc] sm:$0xf]
    %v4922 = vld [vmem:[%s3994 + $0x2c0] sm:$0x1]
    %v4923 = vld [vmem:[%s3994 + $0x2c4] sm:$0xf]
    %v4924 = vld [vmem:[%s3994 + $0x2c8] sm:$0xf]
    %v4925 = vld [vmem:[%s3994 + $0x2cc] sm:$0x1]
    %v4926 = vld [vmem:[%s3994 + $0x2d0] sm:$0xf]
    %v4927 = vld [vmem:[%s3994 + $0x2d4] sm:$0xf]
    %v4928 = vld [vmem:[%s3994 + $0x2d8] sm:$0x1]
    %v4929 = vld [vmem:[%s3994 + $0x2dc] sm:$0xf]
    %v4930 = vld [vmem:[%s3994 + $0x2e0] sm:$0xf]
    %v4931 = vld [vmem:[%s3994 + $0x2e4] sm:$0x1]
    %v4932 = vld [vmem:[%s3994 + $0x2e8] sm:$0xf]
    %v4933 = vld [vmem:[%s3994 + $0x2ec] sm:$0xf]
    %v4934 = vld [vmem:[%s3994 + $0x2f0] sm:$0x1]
    %v4935 = vld [vmem:[%s3994 + $0x2f4] sm:$0xf]
    %v4936 = vld [vmem:[%s3994 + $0x2f8] sm:$0xf]
    %v4937 = vld [vmem:[%s3994 + $0x2fc] sm:$0x1]
    %v4938 = vld [vmem:[%s3994 + $0x300] sm:$0xf]
    %v4939 = vld [vmem:[%s3994 + $0x304] sm:$0xf]
    %v4940 = vld [vmem:[%s3994 + $0x308] sm:$0x1]
    %v4941 = vld [vmem:[%s3994 + $0x30c] sm:$0xf]
    %v4942 = vld [vmem:[%s3994 + $0x310] sm:$0xf]
    %v4943 = vld [vmem:[%s3994 + $0x314] sm:$0x1]
    %v4944 = vld [vmem:[%s3994 + $0x318] sm:$0xf]
    %v4945 = vld [vmem:[%s3994 + $0x31c] sm:$0xf]
    %v4946 = vld [vmem:[%s3994 + $0x320] sm:$0x1]
    %v4947 = vld [vmem:[%s3994 + $0x324] sm:$0xf]
    %v4948 = vld [vmem:[%s3994 + $0x328] sm:$0xf]
    %v4949 = vld [vmem:[%s3994 + $0x32c] sm:$0x1]
    %v4950 = vld [vmem:[%s3994 + $0x330] sm:$0xf]
    %v4951 = vld [vmem:[%s3994 + $0x334] sm:$0xf]
    %v4952 = vld [vmem:[%s3994 + $0x338] sm:$0x1]
    %v4953 = vld [vmem:[%s3994 + $0x33c] sm:$0xf]
    %v4954 = vld [vmem:[%s3994 + $0x340] sm:$0xf]
    %v4955 = vld [vmem:[%s3994 + $0x344] sm:$0x1]
    %v4957 = vshrl.u32 %v4764, 16
    %v4959 = vrot.slane %v4957, 4
    %v4960 = vshll.u32 %v4764, 16
    %v4962 = vrot.slane %v4960, 5
    %v4963 = vor.u32 %v4959, %v4962
    %v4964 = vrot.slane %v4963, 4
    %v4966 = vshll.u32 %v4765, 16
    %v4968 = vrot.slane %v4966, 5
    %v4969 = vsel %vm596, %v4964, %v4968
    %v4970 = vshrl.u32 %v4765, 16
    %v4972 = vrot.slane %v4970, 4
    %v4973 = vor.u32 %v4972, %v4968
    %v4974 = vrot.slane %v4973, 4
    %v4976 = vshll.u32 %v4766, 16
    %v4978 = vrot.slane %v4976, 5
    %v4979 = vsel %vm596, %v4974, %v4978
    %v4981 = vshrl.u32 %v4767, 16
    %v4983 = vrot.slane %v4981, 4
    %v4984 = vshll.u32 %v4767, 16
    %v4986 = vrot.slane %v4984, 5
    %v4987 = vor.u32 %v4983, %v4986
    %v4988 = vrot.slane %v4987, 4
    %v4990 = vshll.u32 %v4768, 16
    %v4992 = vrot.slane %v4990, 5
    %v4993 = vsel %vm596, %v4988, %v4992
    %v4994 = vshrl.u32 %v4768, 16
    %v4996 = vrot.slane %v4994, 4
    %v4997 = vor.u32 %v4996, %v4992
    %v4998 = vrot.slane %v4997, 4
    %v5000 = vshll.u32 %v4769, 16
    %v5002 = vrot.slane %v5000, 5
    %v5003 = vsel %vm596, %v4998, %v5002
    %v5005 = vshrl.u32 %v4770, 16
    %v5007 = vrot.slane %v5005, 4
    %v5008 = vshll.u32 %v4770, 16
    %v5010 = vrot.slane %v5008, 5
    %v5011 = vor.u32 %v5007, %v5010
    %v5012 = vrot.slane %v5011, 4
    %v5014 = vshll.u32 %v4771, 16
    %v5016 = vrot.slane %v5014, 5
    %v5017 = vsel %vm596, %v5012, %v5016
    %v5018 = vshrl.u32 %v4771, 16
    %v5020 = vrot.slane %v5018, 4
    %v5021 = vor.u32 %v5020, %v5016
    %v5022 = vrot.slane %v5021, 4
    %v5024 = vshll.u32 %v4772, 16
    %v5026 = vrot.slane %v5024, 5
    %v5027 = vsel %vm596, %v5022, %v5026
    %v5029 = vshrl.u32 %v4773, 16
    %v5031 = vrot.slane %v5029, 4
    %v5032 = vshll.u32 %v4773, 16
    %v5034 = vrot.slane %v5032, 5
    %v5035 = vor.u32 %v5031, %v5034
    %v5036 = vrot.slane %v5035, 4
    %v5038 = vshll.u32 %v4774, 16
    %v5040 = vrot.slane %v5038, 5
    %v5041 = vsel %vm596, %v5036, %v5040
    %v5042 = vshrl.u32 %v4774, 16
    %v5044 = vrot.slane %v5042, 4
    %v5045 = vor.u32 %v5044, %v5040
    %v5046 = vrot.slane %v5045, 4
    %v5048 = vshll.u32 %v4775, 16
    %v5050 = vrot.slane %v5048, 5
    %v5051 = vsel %vm596, %v5046, %v5050
    %v5053 = vshrl.u32 %v4776, 16
    %v5055 = vrot.slane %v5053, 4
    %v5056 = vshll.u32 %v4776, 16
    %v5058 = vrot.slane %v5056, 5
    %v5059 = vor.u32 %v5055, %v5058
    %v5060 = vrot.slane %v5059, 4
    %v5062 = vshll.u32 %v4777, 16
    %v5064 = vrot.slane %v5062, 5
    %v5065 = vsel %vm596, %v5060, %v5064
    %v5066 = vshrl.u32 %v4777, 16
    %v5068 = vrot.slane %v5066, 4
    %v5069 = vor.u32 %v5068, %v5064
    %v5070 = vrot.slane %v5069, 4
    %v5072 = vshll.u32 %v4778, 16
    %v5074 = vrot.slane %v5072, 5
    %v5075 = vsel %vm596, %v5070, %v5074
    %v5077 = vshrl.u32 %v4779, 16
    %v5079 = vrot.slane %v5077, 4
    %v5080 = vshll.u32 %v4779, 16
    %v5082 = vrot.slane %v5080, 5
    %v5083 = vor.u32 %v5079, %v5082
    %v5084 = vrot.slane %v5083, 4
    %v5086 = vshll.u32 %v4780, 16
    %v5088 = vrot.slane %v5086, 5
    %v5089 = vsel %vm596, %v5084, %v5088
    %v5090 = vshrl.u32 %v4780, 16
    %v5092 = vrot.slane %v5090, 4
    %v5093 = vor.u32 %v5092, %v5088
    %v5094 = vrot.slane %v5093, 4
    %v5096 = vshll.u32 %v4781, 16
    %v5098 = vrot.slane %v5096, 5
    %v5099 = vsel %vm596, %v5094, %v5098
    %v5101 = vshrl.u32 %v4782, 16
    %v5103 = vrot.slane %v5101, 4
    %v5104 = vshll.u32 %v4782, 16
    %v5106 = vrot.slane %v5104, 5
    %v5107 = vor.u32 %v5103, %v5106
    %v5108 = vrot.slane %v5107, 4
    %v5110 = vshll.u32 %v4783, 16
    %v5112 = vrot.slane %v5110, 5
    %v5113 = vsel %vm596, %v5108, %v5112
    %v5114 = vshrl.u32 %v4783, 16
    %v5116 = vrot.slane %v5114, 4
    %v5117 = vor.u32 %v5116, %v5112
    %v5118 = vrot.slane %v5117, 4
    %v5120 = vshll.u32 %v4784, 16
    %v5122 = vrot.slane %v5120, 5
    %v5123 = vsel %vm596, %v5118, %v5122
    %v5125 = vshrl.u32 %v4785, 16
    %v5127 = vrot.slane %v5125, 4
    %v5128 = vshll.u32 %v4785, 16
    %v5130 = vrot.slane %v5128, 5
    %v5131 = vor.u32 %v5127, %v5130
    %v5132 = vrot.slane %v5131, 4
    %v5134 = vshll.u32 %v4786, 16
    %v5136 = vrot.slane %v5134, 5
    %v5137 = vsel %vm596, %v5132, %v5136
    %v5138 = vshrl.u32 %v4786, 16
    %v5140 = vrot.slane %v5138, 4
    %v5141 = vor.u32 %v5140, %v5136
    %v5142 = vrot.slane %v5141, 4
    %v5144 = vshll.u32 %v4787, 16
    %v5146 = vrot.slane %v5144, 5
    %v5147 = vsel %vm596, %v5142, %v5146
    %v5149 = vshrl.u32 %v4788, 16
    %v5151 = vrot.slane %v5149, 4
    %v5152 = vshll.u32 %v4788, 16
    %v5154 = vrot.slane %v5152, 5
    %v5155 = vor.u32 %v5151, %v5154
    %v5156 = vrot.slane %v5155, 4
    %v5158 = vshll.u32 %v4789, 16
    %v5160 = vrot.slane %v5158, 5
    %v5161 = vsel %vm596, %v5156, %v5160
    %v5162 = vshrl.u32 %v4789, 16
    %v5164 = vrot.slane %v5162, 4
    %v5165 = vor.u32 %v5164, %v5160
    %v5166 = vrot.slane %v5165, 4
    %v5168 = vshll.u32 %v4790, 16
    %v5170 = vrot.slane %v5168, 5
    %v5171 = vsel %vm596, %v5166, %v5170
    %v5173 = vshrl.u32 %v4791, 16
    %v5175 = vrot.slane %v5173, 4
    %v5176 = vshll.u32 %v4791, 16
    %v5178 = vrot.slane %v5176, 5
    %v5179 = vor.u32 %v5175, %v5178
    %v5180 = vrot.slane %v5179, 4
    %v5182 = vshll.u32 %v4792, 16
    %v5184 = vrot.slane %v5182, 5
    %v5185 = vsel %vm596, %v5180, %v5184
    %v5186 = vshrl.u32 %v4792, 16
    %v5188 = vrot.slane %v5186, 4
    %v5189 = vor.u32 %v5188, %v5184
    %v5190 = vrot.slane %v5189, 4
    %v5192 = vshll.u32 %v4793, 16
    %v5194 = vrot.slane %v5192, 5
    %v5195 = vsel %vm596, %v5190, %v5194
    %v5197 = vshrl.u32 %v4794, 16
    %v5199 = vrot.slane %v5197, 4
    %v5200 = vshll.u32 %v4794, 16
    %v5202 = vrot.slane %v5200, 5
    %v5203 = vor.u32 %v5199, %v5202
    %v5204 = vrot.slane %v5203, 4
    %v5206 = vshll.u32 %v4795, 16
    %v5208 = vrot.slane %v5206, 5
    %v5209 = vsel %vm596, %v5204, %v5208
    %v5210 = vshrl.u32 %v4795, 16
    %v5212 = vrot.slane %v5210, 4
    %v5213 = vor.u32 %v5212, %v5208
    %v5214 = vrot.slane %v5213, 4
    %v5216 = vshll.u32 %v4796, 16
    %v5218 = vrot.slane %v5216, 5
    %v5219 = vsel %vm596, %v5214, %v5218
    %v5221 = vshrl.u32 %v4797, 16
    %v5223 = vrot.slane %v5221, 4
    %v5224 = vshll.u32 %v4797, 16
    %v5226 = vrot.slane %v5224, 5
    %v5227 = vor.u32 %v5223, %v5226
    %v5228 = vrot.slane %v5227, 4
    %v5230 = vshll.u32 %v4798, 16
    %v5232 = vrot.slane %v5230, 5
    %v5233 = vsel %vm596, %v5228, %v5232
    %v5234 = vshrl.u32 %v4798, 16
    %v5236 = vrot.slane %v5234, 4
    %v5237 = vor.u32 %v5236, %v5232
    %v5238 = vrot.slane %v5237, 4
    %v5240 = vshll.u32 %v4799, 16
    %v5242 = vrot.slane %v5240, 5
    %v5243 = vsel %vm596, %v5238, %v5242
    %v5245 = vshrl.u32 %v4800, 16
    %v5247 = vrot.slane %v5245, 4
    %v5248 = vshll.u32 %v4800, 16
    %v5250 = vrot.slane %v5248, 5
    %v5251 = vor.u32 %v5247, %v5250
    %v5252 = vrot.slane %v5251, 4
    %v5254 = vshll.u32 %v4801, 16
    %v5256 = vrot.slane %v5254, 5
    %v5257 = vsel %vm596, %v5252, %v5256
    %v5258 = vshrl.u32 %v4801, 16
    %v5260 = vrot.slane %v5258, 4
    %v5261 = vor.u32 %v5260, %v5256
    %v5262 = vrot.slane %v5261, 4
    %v5264 = vshll.u32 %v4802, 16
    %v5266 = vrot.slane %v5264, 5
    %v5267 = vsel %vm596, %v5262, %v5266
    %v5269 = vshrl.u32 %v4803, 16
    %v5271 = vrot.slane %v5269, 4
    %v5272 = vshll.u32 %v4803, 16
    %v5274 = vrot.slane %v5272, 5
    %v5275 = vor.u32 %v5271, %v5274
    %v5276 = vrot.slane %v5275, 4
    %v5278 = vshll.u32 %v4804, 16
    %v5280 = vrot.slane %v5278, 5
    %v5281 = vsel %vm596, %v5276, %v5280
    %v5282 = vshrl.u32 %v4804, 16
    %v5284 = vrot.slane %v5282, 4
    %v5285 = vor.u32 %v5284, %v5280
    %v5286 = vrot.slane %v5285, 4
    %v5288 = vshll.u32 %v4805, 16
    %v5290 = vrot.slane %v5288, 5
    %v5291 = vsel %vm596, %v5286, %v5290
    %v5293 = vshrl.u32 %v4806, 16
    %v5295 = vrot.slane %v5293, 4
    %v5296 = vshll.u32 %v4806, 16
    %v5298 = vrot.slane %v5296, 5
    %v5299 = vor.u32 %v5295, %v5298
    %v5300 = vrot.slane %v5299, 4
    %v5302 = vshll.u32 %v4807, 16
    %v5304 = vrot.slane %v5302, 5
    %v5305 = vsel %vm596, %v5300, %v5304
    %v5306 = vshrl.u32 %v4807, 16
    %v5308 = vrot.slane %v5306, 4
    %v5309 = vor.u32 %v5308, %v5304
    %v5310 = vrot.slane %v5309, 4
    %v5312 = vshll.u32 %v4808, 16
    %v5314 = vrot.slane %v5312, 5
    %v5315 = vsel %vm596, %v5310, %v5314
    %v5317 = vshrl.u32 %v4809, 16
    %v5319 = vrot.slane %v5317, 4
    %v5320 = vshll.u32 %v4809, 16
    %v5322 = vrot.slane %v5320, 5
    %v5323 = vor.u32 %v5319, %v5322
    %v5324 = vrot.slane %v5323, 4
    %v5326 = vshll.u32 %v4810, 16
    %v5328 = vrot.slane %v5326, 5
    %v5329 = vsel %vm596, %v5324, %v5328
    %v5330 = vshrl.u32 %v4810, 16
    %v5332 = vrot.slane %v5330, 4
    %v5333 = vor.u32 %v5332, %v5328
    %v5334 = vrot.slane %v5333, 4
    %v5336 = vshll.u32 %v4811, 16
    %v5338 = vrot.slane %v5336, 5
    %v5339 = vsel %vm596, %v5334, %v5338
    %v5341 = vshrl.u32 %v4812, 16
    %v5343 = vrot.slane %v5341, 4
    %v5344 = vshll.u32 %v4812, 16
    %v5346 = vrot.slane %v5344, 5
    %v5347 = vor.u32 %v5343, %v5346
    %v5348 = vrot.slane %v5347, 4
    %v5350 = vshll.u32 %v4813, 16
    %v5352 = vrot.slane %v5350, 5
    %v5353 = vsel %vm596, %v5348, %v5352
    %v5354 = vshrl.u32 %v4813, 16
    %v5356 = vrot.slane %v5354, 4
    %v5357 = vor.u32 %v5356, %v5352
    %v5358 = vrot.slane %v5357, 4
    %v5360 = vshll.u32 %v4814, 16
    %v5362 = vrot.slane %v5360, 5
    %v5363 = vsel %vm596, %v5358, %v5362
    %v5365 = vshrl.u32 %v4815, 16
    %v5367 = vrot.slane %v5365, 4
    %v5368 = vshll.u32 %v4815, 16
    %v5370 = vrot.slane %v5368, 5
    %v5371 = vor.u32 %v5367, %v5370
    %v5372 = vrot.slane %v5371, 4
    %v5374 = vshll.u32 %v4816, 16
    %v5376 = vrot.slane %v5374, 5
    %v5377 = vsel %vm596, %v5372, %v5376
    %v5378 = vshrl.u32 %v4816, 16
    %v5380 = vrot.slane %v5378, 4
    %v5381 = vor.u32 %v5380, %v5376
    %v5382 = vrot.slane %v5381, 4
    %v5384 = vshll.u32 %v4817, 16
    %v5386 = vrot.slane %v5384, 5
    %v5387 = vsel %vm596, %v5382, %v5386
    %v5389 = vshrl.u32 %v4818, 16
    %v5391 = vrot.slane %v5389, 4
    %v5392 = vshll.u32 %v4818, 16
    %v5394 = vrot.slane %v5392, 5
    %v5395 = vor.u32 %v5391, %v5394
    %v5396 = vrot.slane %v5395, 4
    %v5398 = vshll.u32 %v4819, 16
    %v5400 = vrot.slane %v5398, 5
    %v5401 = vsel %vm596, %v5396, %v5400
    %v5402 = vshrl.u32 %v4819, 16
    %v5404 = vrot.slane %v5402, 4
    %v5405 = vor.u32 %v5404, %v5400
    %v5406 = vrot.slane %v5405, 4
    %v5408 = vshll.u32 %v4820, 16
    %v5410 = vrot.slane %v5408, 5
    %v5411 = vsel %vm596, %v5406, %v5410
    %v5413 = vshrl.u32 %v4821, 16
    %v5415 = vrot.slane %v5413, 4
    %v5416 = vshll.u32 %v4821, 16
    %v5418 = vrot.slane %v5416, 5
    %v5419 = vor.u32 %v5415, %v5418
    %v5420 = vrot.slane %v5419, 4
    %v5422 = vshll.u32 %v4822, 16
    %v5424 = vrot.slane %v5422, 5
    %v5425 = vsel %vm596, %v5420, %v5424
    %v5426 = vshrl.u32 %v4822, 16
    %v5428 = vrot.slane %v5426, 4
    %v5429 = vor.u32 %v5428, %v5424
    %v5430 = vrot.slane %v5429, 4
    %v5432 = vshll.u32 %v4823, 16
    %v5434 = vrot.slane %v5432, 5
    %v5435 = vsel %vm596, %v5430, %v5434
    %v5437 = vshrl.u32 %v4824, 16
    %v5439 = vrot.slane %v5437, 4
    %v5440 = vshll.u32 %v4824, 16
    %v5442 = vrot.slane %v5440, 5
    %v5443 = vor.u32 %v5439, %v5442
    %v5444 = vrot.slane %v5443, 4
    %v5446 = vshll.u32 %v4825, 16
    %v5448 = vrot.slane %v5446, 5
    %v5449 = vsel %vm596, %v5444, %v5448
    %v5450 = vshrl.u32 %v4825, 16
    %v5452 = vrot.slane %v5450, 4
    %v5453 = vor.u32 %v5452, %v5448
    %v5454 = vrot.slane %v5453, 4
    %v5456 = vshll.u32 %v4826, 16
    %v5458 = vrot.slane %v5456, 5
    %v5459 = vsel %vm596, %v5454, %v5458
    %v5461 = vshrl.u32 %v4827, 16
    %v5463 = vrot.slane %v5461, 4
    %v5464 = vshll.u32 %v4827, 16
    %v5466 = vrot.slane %v5464, 5
    %v5467 = vor.u32 %v5463, %v5466
    %v5468 = vrot.slane %v5467, 4
    %v5470 = vshll.u32 %v4828, 16
    %v5472 = vrot.slane %v5470, 5
    %v5473 = vsel %vm596, %v5468, %v5472
    %v5474 = vshrl.u32 %v4828, 16
    %v5476 = vrot.slane %v5474, 4
    %v5477 = vor.u32 %v5476, %v5472
    %v5478 = vrot.slane %v5477, 4
    %v5480 = vshll.u32 %v4829, 16
    %v5482 = vrot.slane %v5480, 5
    %v5483 = vsel %vm596, %v5478, %v5482
    %v5485 = vshrl.u32 %v4830, 16
    %v5487 = vrot.slane %v5485, 4
    %v5488 = vshll.u32 %v4830, 16
    %v5490 = vrot.slane %v5488, 5
    %v5491 = vor.u32 %v5487, %v5490
    %v5492 = vrot.slane %v5491, 4
    %v5494 = vshll.u32 %v4831, 16
    %v5496 = vrot.slane %v5494, 5
    %v5497 = vsel %vm596, %v5492, %v5496
    %v5498 = vshrl.u32 %v4831, 16
    %v5500 = vrot.slane %v5498, 4
    %v5501 = vor.u32 %v5500, %v5496
    %v5502 = vrot.slane %v5501, 4
    %v5504 = vshll.u32 %v4832, 16
    %v5506 = vrot.slane %v5504, 5
    %v5507 = vsel %vm596, %v5502, %v5506
    %v5509 = vshrl.u32 %v4833, 16
    %v5511 = vrot.slane %v5509, 4
    %v5512 = vshll.u32 %v4833, 16
    %v5514 = vrot.slane %v5512, 5
    %v5515 = vor.u32 %v5511, %v5514
    %v5516 = vrot.slane %v5515, 4
    %v5518 = vshll.u32 %v4834, 16
    %v5520 = vrot.slane %v5518, 5
    %v5521 = vsel %vm596, %v5516, %v5520
    %v5522 = vshrl.u32 %v4834, 16
    %v5524 = vrot.slane %v5522, 4
    %v5525 = vor.u32 %v5524, %v5520
    %v5526 = vrot.slane %v5525, 4
    %v5528 = vshll.u32 %v4835, 16
    %v5530 = vrot.slane %v5528, 5
    %v5531 = vsel %vm596, %v5526, %v5530
    %v5533 = vshrl.u32 %v4836, 16
    %v5535 = vrot.slane %v5533, 4
    %v5536 = vshll.u32 %v4836, 16
    %v5538 = vrot.slane %v5536, 5
    %v5539 = vor.u32 %v5535, %v5538
    %v5540 = vrot.slane %v5539, 4
    %v5542 = vshll.u32 %v4837, 16
    %v5544 = vrot.slane %v5542, 5
    %v5545 = vsel %vm596, %v5540, %v5544
    %v5546 = vshrl.u32 %v4837, 16
    %v5548 = vrot.slane %v5546, 4
    %v5549 = vor.u32 %v5548, %v5544
    %v5550 = vrot.slane %v5549, 4
    %v5552 = vshll.u32 %v4838, 16
    %v5554 = vrot.slane %v5552, 5
    %v5555 = vsel %vm596, %v5550, %v5554
    %v5557 = vshrl.u32 %v4839, 16
    %v5559 = vrot.slane %v5557, 4
    %v5560 = vshll.u32 %v4839, 16
    %v5562 = vrot.slane %v5560, 5
    %v5563 = vor.u32 %v5559, %v5562
    %v5564 = vrot.slane %v5563, 4
    %v5566 = vshll.u32 %v4840, 16
    %v5568 = vrot.slane %v5566, 5
    %v5569 = vsel %vm596, %v5564, %v5568
    %v5570 = vshrl.u32 %v4840, 16
    %v5572 = vrot.slane %v5570, 4
    %v5573 = vor.u32 %v5572, %v5568
    %v5574 = vrot.slane %v5573, 4
    %v5576 = vshll.u32 %v4841, 16
    %v5578 = vrot.slane %v5576, 5
    %v5579 = vsel %vm596, %v5574, %v5578
    %v5581 = vshrl.u32 %v4842, 16
    %v5583 = vrot.slane %v5581, 4
    %v5584 = vshll.u32 %v4842, 16
    %v5586 = vrot.slane %v5584, 5
    %v5587 = vor.u32 %v5583, %v5586
    %v5588 = vrot.slane %v5587, 4
    %v5590 = vshll.u32 %v4843, 16
    %v5592 = vrot.slane %v5590, 5
    %v5593 = vsel %vm596, %v5588, %v5592
    %v5594 = vshrl.u32 %v4843, 16
    %v5596 = vrot.slane %v5594, 4
    %v5597 = vor.u32 %v5596, %v5592
    %v5598 = vrot.slane %v5597, 4
    %v5600 = vshll.u32 %v4844, 16
    %v5602 = vrot.slane %v5600, 5
    %v5603 = vsel %vm596, %v5598, %v5602
    %v5605 = vshrl.u32 %v4845, 16
    %v5607 = vrot.slane %v5605, 4
    %v5608 = vshll.u32 %v4845, 16
    %v5610 = vrot.slane %v5608, 5
    %v5611 = vor.u32 %v5607, %v5610
    %v5612 = vrot.slane %v5611, 4
    %v5614 = vshll.u32 %v4846, 16
    %v5616 = vrot.slane %v5614, 5
    %v5617 = vsel %vm596, %v5612, %v5616
    %v5618 = vshrl.u32 %v4846, 16
    %v5620 = vrot.slane %v5618, 4
    %v5621 = vor.u32 %v5620, %v5616
    %v5622 = vrot.slane %v5621, 4
    %v5624 = vshll.u32 %v4847, 16
    %v5626 = vrot.slane %v5624, 5
    %v5627 = vsel %vm596, %v5622, %v5626
    %v5629 = vshrl.u32 %v4848, 16
    %v5631 = vrot.slane %v5629, 4
    %v5632 = vshll.u32 %v4848, 16
    %v5634 = vrot.slane %v5632, 5
    %v5635 = vor.u32 %v5631, %v5634
    %v5636 = vrot.slane %v5635, 4
    %v5638 = vshll.u32 %v4849, 16
    %v5640 = vrot.slane %v5638, 5
    %v5641 = vsel %vm596, %v5636, %v5640
    %v5642 = vshrl.u32 %v4849, 16
    %v5644 = vrot.slane %v5642, 4
    %v5645 = vor.u32 %v5644, %v5640
    %v5646 = vrot.slane %v5645, 4
    %v5648 = vshll.u32 %v4850, 16
    %v5650 = vrot.slane %v5648, 5
    %v5651 = vsel %vm596, %v5646, %v5650
    %v5653 = vshrl.u32 %v4851, 16
    %v5655 = vrot.slane %v5653, 4
    %v5656 = vshll.u32 %v4851, 16
    %v5658 = vrot.slane %v5656, 5
    %v5659 = vor.u32 %v5655, %v5658
    %v5660 = vrot.slane %v5659, 4
    %v5662 = vshll.u32 %v4852, 16
    %v5664 = vrot.slane %v5662, 5
    %v5665 = vsel %vm596, %v5660, %v5664
    %v5666 = vshrl.u32 %v4852, 16
    %v5668 = vrot.slane %v5666, 4
    %v5669 = vor.u32 %v5668, %v5664
    %v5670 = vrot.slane %v5669, 4
    %v5672 = vshll.u32 %v4853, 16
    %v5674 = vrot.slane %v5672, 5
    %v5675 = vsel %vm596, %v5670, %v5674
    %v5677 = vshrl.u32 %v4854, 16
    %v5679 = vrot.slane %v5677, 4
    %v5680 = vshll.u32 %v4854, 16
    %v5682 = vrot.slane %v5680, 5
    %v5683 = vor.u32 %v5679, %v5682
    %v5684 = vrot.slane %v5683, 4
    %v5686 = vshll.u32 %v4855, 16
    %v5688 = vrot.slane %v5686, 5
    %v5689 = vsel %vm596, %v5684, %v5688
    %v5690 = vshrl.u32 %v4855, 16
    %v5692 = vrot.slane %v5690, 4
    %v5693 = vor.u32 %v5692, %v5688
    %v5694 = vrot.slane %v5693, 4
    %v5696 = vshll.u32 %v4856, 16
    %v5698 = vrot.slane %v5696, 5
    %v5699 = vsel %vm596, %v5694, %v5698
    %v5701 = vshrl.u32 %v4857, 16
    %v5703 = vrot.slane %v5701, 4
    %v5704 = vshll.u32 %v4857, 16
    %v5706 = vrot.slane %v5704, 5
    %v5707 = vor.u32 %v5703, %v5706
    %v5708 = vrot.slane %v5707, 4
    %v5710 = vshll.u32 %v4858, 16
    %v5712 = vrot.slane %v5710, 5
    %v5713 = vsel %vm596, %v5708, %v5712
    %v5714 = vshrl.u32 %v4858, 16
    %v5716 = vrot.slane %v5714, 4
    %v5717 = vor.u32 %v5716, %v5712
    %v5718 = vrot.slane %v5717, 4
    %v5720 = vshll.u32 %v4859, 16
    %v5722 = vrot.slane %v5720, 5
    %v5723 = vsel %vm596, %v5718, %v5722
    %v5725 = vshrl.u32 %v4860, 16
    %v5727 = vrot.slane %v5725, 4
    %v5728 = vshll.u32 %v4860, 16
    %v5730 = vrot.slane %v5728, 5
    %v5731 = vor.u32 %v5727, %v5730
    %v5732 = vrot.slane %v5731, 4
    %v5734 = vshll.u32 %v4861, 16
    %v5736 = vrot.slane %v5734, 5
    %v5737 = vsel %vm596, %v5732, %v5736
    %v5738 = vshrl.u32 %v4861, 16
    %v5740 = vrot.slane %v5738, 4
    %v5741 = vor.u32 %v5740, %v5736
    %v5742 = vrot.slane %v5741, 4
    %v5744 = vshll.u32 %v4862, 16
    %v5746 = vrot.slane %v5744, 5
    %v5747 = vsel %vm596, %v5742, %v5746
    %v5749 = vshrl.u32 %v4863, 16
    %v5751 = vrot.slane %v5749, 4
    %v5752 = vshll.u32 %v4863, 16
    %v5754 = vrot.slane %v5752, 5
    %v5755 = vor.u32 %v5751, %v5754
    %v5756 = vrot.slane %v5755, 4
    %v5758 = vshll.u32 %v4864, 16
    %v5760 = vrot.slane %v5758, 5
    %v5761 = vsel %vm596, %v5756, %v5760
    %v5762 = vshrl.u32 %v4864, 16
    %v5764 = vrot.slane %v5762, 4
    %v5765 = vor.u32 %v5764, %v5760
    %v5766 = vrot.slane %v5765, 4
    %v5768 = vshll.u32 %v4865, 16
    %v5770 = vrot.slane %v5768, 5
    %v5771 = vsel %vm596, %v5766, %v5770
    %v5773 = vshrl.u32 %v4866, 16
    %v5775 = vrot.slane %v5773, 4
    %v5776 = vshll.u32 %v4866, 16
    %v5778 = vrot.slane %v5776, 5
    %v5779 = vor.u32 %v5775, %v5778
    %v5780 = vrot.slane %v5779, 4
    %v5782 = vshll.u32 %v4867, 16
    %v5784 = vrot.slane %v5782, 5
    %v5785 = vsel %vm596, %v5780, %v5784
    %v5786 = vshrl.u32 %v4867, 16
    %v5788 = vrot.slane %v5786, 4
    %v5789 = vor.u32 %v5788, %v5784
    %v5790 = vrot.slane %v5789, 4
    %v5792 = vshll.u32 %v4868, 16
    %v5794 = vrot.slane %v5792, 5
    %v5795 = vsel %vm596, %v5790, %v5794
    %v5797 = vshrl.u32 %v4869, 16
    %v5799 = vrot.slane %v5797, 4
    %v5800 = vshll.u32 %v4869, 16
    %v5802 = vrot.slane %v5800, 5
    %v5803 = vor.u32 %v5799, %v5802
    %v5804 = vrot.slane %v5803, 4
    %v5806 = vshll.u32 %v4870, 16
    %v5808 = vrot.slane %v5806, 5
    %v5809 = vsel %vm596, %v5804, %v5808
    %v5810 = vshrl.u32 %v4870, 16
    %v5812 = vrot.slane %v5810, 4
    %v5813 = vor.u32 %v5812, %v5808
    %v5814 = vrot.slane %v5813, 4
    %v5816 = vshll.u32 %v4871, 16
    %v5818 = vrot.slane %v5816, 5
    %v5819 = vsel %vm596, %v5814, %v5818
    %v5821 = vshrl.u32 %v4872, 16
    %v5823 = vrot.slane %v5821, 4
    %v5824 = vshll.u32 %v4872, 16
    %v5826 = vrot.slane %v5824, 5
    %v5827 = vor.u32 %v5823, %v5826
    %v5828 = vrot.slane %v5827, 4
    %v5830 = vshll.u32 %v4873, 16
    %v5832 = vrot.slane %v5830, 5
    %v5833 = vsel %vm596, %v5828, %v5832
    %v5834 = vshrl.u32 %v4873, 16
    %v5836 = vrot.slane %v5834, 4
    %v5837 = vor.u32 %v5836, %v5832
    %v5838 = vrot.slane %v5837, 4
    %v5840 = vshll.u32 %v4874, 16
    %v5842 = vrot.slane %v5840, 5
    %v5843 = vsel %vm596, %v5838, %v5842
    %v5845 = vshrl.u32 %v4875, 16
    %v5847 = vrot.slane %v5845, 4
    %v5848 = vshll.u32 %v4875, 16
    %v5850 = vrot.slane %v5848, 5
    %v5851 = vor.u32 %v5847, %v5850
    %v5852 = vrot.slane %v5851, 4
    %v5854 = vshll.u32 %v4876, 16
    %v5856 = vrot.slane %v5854, 5
    %v5857 = vsel %vm596, %v5852, %v5856
    %v5858 = vshrl.u32 %v4876, 16
    %v5860 = vrot.slane %v5858, 4
    %v5861 = vor.u32 %v5860, %v5856
    %v5862 = vrot.slane %v5861, 4
    %v5864 = vshll.u32 %v4877, 16
    %v5866 = vrot.slane %v5864, 5
    %v5867 = vsel %vm596, %v5862, %v5866
    %v5869 = vshrl.u32 %v4878, 16
    %v5871 = vrot.slane %v5869, 4
    %v5872 = vshll.u32 %v4878, 16
    %v5874 = vrot.slane %v5872, 5
    %v5875 = vor.u32 %v5871, %v5874
    %v5876 = vrot.slane %v5875, 4
    %v5878 = vshll.u32 %v4879, 16
    %v5880 = vrot.slane %v5878, 5
    %v5881 = vsel %vm596, %v5876, %v5880
    %v5882 = vshrl.u32 %v4879, 16
    %v5884 = vrot.slane %v5882, 4
    %v5885 = vor.u32 %v5884, %v5880
    %v5886 = vrot.slane %v5885, 4
    %v5888 = vshll.u32 %v4880, 16
    %v5890 = vrot.slane %v5888, 5
    %v5891 = vsel %vm596, %v5886, %v5890
    %v5893 = vshrl.u32 %v4881, 16
    %v5895 = vrot.slane %v5893, 4
    %v5896 = vshll.u32 %v4881, 16
    %v5898 = vrot.slane %v5896, 5
    %v5899 = vor.u32 %v5895, %v5898
    %v5900 = vrot.slane %v5899, 4
    %v5902 = vshll.u32 %v4882, 16
    %v5904 = vrot.slane %v5902, 5
    %v5905 = vsel %vm596, %v5900, %v5904
    %v5906 = vshrl.u32 %v4882, 16
    %v5908 = vrot.slane %v5906, 4
    %v5909 = vor.u32 %v5908, %v5904
    %v5910 = vrot.slane %v5909, 4
    %v5912 = vshll.u32 %v4883, 16
    %v5914 = vrot.slane %v5912, 5
    %v5915 = vsel %vm596, %v5910, %v5914
    %v5917 = vshrl.u32 %v4884, 16
    %v5919 = vrot.slane %v5917, 4
    %v5920 = vshll.u32 %v4884, 16
    %v5922 = vrot.slane %v5920, 5
    %v5923 = vor.u32 %v5919, %v5922
    %v5924 = vrot.slane %v5923, 4
    %v5926 = vshll.u32 %v4885, 16
    %v5928 = vrot.slane %v5926, 5
    %v5929 = vsel %vm596, %v5924, %v5928
    %v5930 = vshrl.u32 %v4885, 16
    %v5932 = vrot.slane %v5930, 4
    %v5933 = vor.u32 %v5932, %v5928
    %v5934 = vrot.slane %v5933, 4
    %v5936 = vshll.u32 %v4886, 16
    %v5938 = vrot.slane %v5936, 5
    %v5939 = vsel %vm596, %v5934, %v5938
    %v5941 = vshrl.u32 %v4887, 16
    %v5943 = vrot.slane %v5941, 4
    %v5944 = vshll.u32 %v4887, 16
    %v5946 = vrot.slane %v5944, 5
    %v5947 = vor.u32 %v5943, %v5946
    %v5948 = vrot.slane %v5947, 4
    %v5950 = vshll.u32 %v4888, 16
    %v5952 = vrot.slane %v5950, 5
    %v5953 = vsel %vm596, %v5948, %v5952
    %v5954 = vshrl.u32 %v4888, 16
    %v5956 = vrot.slane %v5954, 4
    %v5957 = vor.u32 %v5956, %v5952
    %v5958 = vrot.slane %v5957, 4
    %v5960 = vshll.u32 %v4889, 16
    %v5962 = vrot.slane %v5960, 5
    %v5963 = vsel %vm596, %v5958, %v5962
    %v5965 = vshrl.u32 %v4890, 16
    %v5967 = vrot.slane %v5965, 4
    %v5968 = vshll.u32 %v4890, 16
    %v5970 = vrot.slane %v5968, 5
    %v5971 = vor.u32 %v5967, %v5970
    %v5972 = vrot.slane %v5971, 4
    %v5974 = vshll.u32 %v4891, 16
    %v5976 = vrot.slane %v5974, 5
    %v5977 = vsel %vm596, %v5972, %v5976
    %v5978 = vshrl.u32 %v4891, 16
    %v5980 = vrot.slane %v5978, 4
    %v5981 = vor.u32 %v5980, %v5976
    %v5982 = vrot.slane %v5981, 4
    %v5984 = vshll.u32 %v4892, 16
    %v5986 = vrot.slane %v5984, 5
    %v5987 = vsel %vm596, %v5982, %v5986
    %v5989 = vshrl.u32 %v4893, 16
    %v5991 = vrot.slane %v5989, 4
    %v5992 = vshll.u32 %v4893, 16
    %v5994 = vrot.slane %v5992, 5
    %v5995 = vor.u32 %v5991, %v5994
    %v5996 = vrot.slane %v5995, 4
    %v5998 = vshll.u32 %v4894, 16
    %v6000 = vrot.slane %v5998, 5
    %v6001 = vsel %vm596, %v5996, %v6000
    %v6002 = vshrl.u32 %v4894, 16
    %v6004 = vrot.slane %v6002, 4
    %v6005 = vor.u32 %v6004, %v6000
    %v6006 = vrot.slane %v6005, 4
    %v6008 = vshll.u32 %v4895, 16
    %v6010 = vrot.slane %v6008, 5
    %v6011 = vsel %vm596, %v6006, %v6010
    %v6013 = vshrl.u32 %v4896, 16
    %v6015 = vrot.slane %v6013, 4
    %v6016 = vshll.u32 %v4896, 16
    %v6018 = vrot.slane %v6016, 5
    %v6019 = vor.u32 %v6015, %v6018
    %v6020 = vrot.slane %v6019, 4
    %v6022 = vshll.u32 %v4897, 16
    %v6024 = vrot.slane %v6022, 5
    %v6025 = vsel %vm596, %v6020, %v6024
    %v6026 = vshrl.u32 %v4897, 16
    %v6028 = vrot.slane %v6026, 4
    %v6029 = vor.u32 %v6028, %v6024
    %v6030 = vrot.slane %v6029, 4
    %v6032 = vshll.u32 %v4898, 16
    %v6034 = vrot.slane %v6032, 5
    %v6035 = vsel %vm596, %v6030, %v6034
    %v6037 = vshrl.u32 %v4899, 16
    %v6039 = vrot.slane %v6037, 4
    %v6040 = vshll.u32 %v4899, 16
    %v6042 = vrot.slane %v6040, 5
    %v6043 = vor.u32 %v6039, %v6042
    %v6044 = vrot.slane %v6043, 4
    %v6046 = vshll.u32 %v4900, 16
    %v6048 = vrot.slane %v6046, 5
    %v6049 = vsel %vm596, %v6044, %v6048
    %v6050 = vshrl.u32 %v4900, 16
    %v6052 = vrot.slane %v6050, 4
    %v6053 = vor.u32 %v6052, %v6048
    %v6054 = vrot.slane %v6053, 4
    %v6056 = vshll.u32 %v4901, 16
    %v6058 = vrot.slane %v6056, 5
    %v6059 = vsel %vm596, %v6054, %v6058
    %v6061 = vshrl.u32 %v4902, 16
    %v6063 = vrot.slane %v6061, 4
    %v6064 = vshll.u32 %v4902, 16
    %v6066 = vrot.slane %v6064, 5
    %v6067 = vor.u32 %v6063, %v6066
    %v6068 = vrot.slane %v6067, 4
    %v6070 = vshll.u32 %v4903, 16
    %v6072 = vrot.slane %v6070, 5
    %v6073 = vsel %vm596, %v6068, %v6072
    %v6074 = vshrl.u32 %v4903, 16
    %v6076 = vrot.slane %v6074, 4
    %v6077 = vor.u32 %v6076, %v6072
    %v6078 = vrot.slane %v6077, 4
    %v6080 = vshll.u32 %v4904, 16
    %v6082 = vrot.slane %v6080, 5
    %v6083 = vsel %vm596, %v6078, %v6082
    %v6085 = vshrl.u32 %v4905, 16
    %v6087 = vrot.slane %v6085, 4
    %v6088 = vshll.u32 %v4905, 16
    %v6090 = vrot.slane %v6088, 5
    %v6091 = vor.u32 %v6087, %v6090
    %v6092 = vrot.slane %v6091, 4
    %v6094 = vshll.u32 %v4906, 16
    %v6096 = vrot.slane %v6094, 5
    %v6097 = vsel %vm596, %v6092, %v6096
    %v6098 = vshrl.u32 %v4906, 16
    %v6100 = vrot.slane %v6098, 4
    %v6101 = vor.u32 %v6100, %v6096
    %v6102 = vrot.slane %v6101, 4
    %v6104 = vshll.u32 %v4907, 16
    %v6106 = vrot.slane %v6104, 5
    %v6107 = vsel %vm596, %v6102, %v6106
    %v6109 = vshrl.u32 %v4908, 16
    %v6111 = vrot.slane %v6109, 4
    %v6112 = vshll.u32 %v4908, 16
    %v6114 = vrot.slane %v6112, 5
    %v6115 = vor.u32 %v6111, %v6114
    %v6116 = vrot.slane %v6115, 4
    %v6118 = vshll.u32 %v4909, 16
    %v6120 = vrot.slane %v6118, 5
    %v6121 = vsel %vm596, %v6116, %v6120
    %v6122 = vshrl.u32 %v4909, 16
    %v6124 = vrot.slane %v6122, 4
    %v6125 = vor.u32 %v6124, %v6120
    %v6126 = vrot.slane %v6125, 4
    %v6128 = vshll.u32 %v4910, 16
    %v6130 = vrot.slane %v6128, 5
    %v6131 = vsel %vm596, %v6126, %v6130
    %v6133 = vshrl.u32 %v4911, 16
    %v6135 = vrot.slane %v6133, 4
    %v6136 = vshll.u32 %v4911, 16
    %v6138 = vrot.slane %v6136, 5
    %v6139 = vor.u32 %v6135, %v6138
    %v6140 = vrot.slane %v6139, 4
    %v6142 = vshll.u32 %v4912, 16
    %v6144 = vrot.slane %v6142, 5
    %v6145 = vsel %vm596, %v6140, %v6144
    %v6146 = vshrl.u32 %v4912, 16
    %v6148 = vrot.slane %v6146, 4
    %v6149 = vor.u32 %v6148, %v6144
    %v6150 = vrot.slane %v6149, 4
    %v6152 = vshll.u32 %v4913, 16
    %v6154 = vrot.slane %v6152, 5
    %v6155 = vsel %vm596, %v6150, %v6154
    %v6157 = vshrl.u32 %v4914, 16
    %v6159 = vrot.slane %v6157, 4
    %v6160 = vshll.u32 %v4914, 16
    %v6162 = vrot.slane %v6160, 5
    %v6163 = vor.u32 %v6159, %v6162
    %v6164 = vrot.slane %v6163, 4
    %v6166 = vshll.u32 %v4915, 16
    %v6168 = vrot.slane %v6166, 5
    %v6169 = vsel %vm596, %v6164, %v6168
    %v6170 = vshrl.u32 %v4915, 16
    %v6172 = vrot.slane %v6170, 4
    %v6173 = vor.u32 %v6172, %v6168
    %v6174 = vrot.slane %v6173, 4
    %v6176 = vshll.u32 %v4916, 16
    %v6178 = vrot.slane %v6176, 5
    %v6179 = vsel %vm596, %v6174, %v6178
    %v6181 = vshrl.u32 %v4917, 16
    %v6183 = vrot.slane %v6181, 4
    %v6184 = vshll.u32 %v4917, 16
    %v6186 = vrot.slane %v6184, 5
    %v6187 = vor.u32 %v6183, %v6186
    %v6188 = vrot.slane %v6187, 4
    %v6190 = vshll.u32 %v4918, 16
    %v6192 = vrot.slane %v6190, 5
    %v6193 = vsel %vm596, %v6188, %v6192
    %v6194 = vshrl.u32 %v4918, 16
    %v6196 = vrot.slane %v6194, 4
    %v6197 = vor.u32 %v6196, %v6192
    %v6198 = vrot.slane %v6197, 4
    %v6200 = vshll.u32 %v4919, 16
    %v6202 = vrot.slane %v6200, 5
    %v6203 = vsel %vm596, %v6198, %v6202
    %v6205 = vshrl.u32 %v4920, 16
    %v6207 = vrot.slane %v6205, 4
    %v6208 = vshll.u32 %v4920, 16
    %v6210 = vrot.slane %v6208, 5
    %v6211 = vor.u32 %v6207, %v6210
    %v6212 = vrot.slane %v6211, 4
    %v6214 = vshll.u32 %v4921, 16
    %v6216 = vrot.slane %v6214, 5
    %v6217 = vsel %vm596, %v6212, %v6216
    %v6218 = vshrl.u32 %v4921, 16
    %v6220 = vrot.slane %v6218, 4
    %v6221 = vor.u32 %v6220, %v6216
    %v6222 = vrot.slane %v6221, 4
    %v6224 = vshll.u32 %v4922, 16
    %v6226 = vrot.slane %v6224, 5
    %v6227 = vsel %vm596, %v6222, %v6226
    %v6229 = vshrl.u32 %v4923, 16
    %v6231 = vrot.slane %v6229, 4
    %v6232 = vshll.u32 %v4923, 16
    %v6234 = vrot.slane %v6232, 5
    %v6235 = vor.u32 %v6231, %v6234
    %v6236 = vrot.slane %v6235, 4
    %v6238 = vshll.u32 %v4924, 16
    %v6240 = vrot.slane %v6238, 5
    %v6241 = vsel %vm596, %v6236, %v6240
    %v6242 = vshrl.u32 %v4924, 16
    %v6244 = vrot.slane %v6242, 4
    %v6245 = vor.u32 %v6244, %v6240
    %v6246 = vrot.slane %v6245, 4
    %v6248 = vshll.u32 %v4925, 16
    %v6250 = vrot.slane %v6248, 5
    %v6251 = vsel %vm596, %v6246, %v6250
    %v6253 = vshrl.u32 %v4926, 16
    %v6255 = vrot.slane %v6253, 4
    %v6256 = vshll.u32 %v4926, 16
    %v6258 = vrot.slane %v6256, 5
    %v6259 = vor.u32 %v6255, %v6258
    %v6260 = vrot.slane %v6259, 4
    %v6262 = vshll.u32 %v4927, 16
    %v6264 = vrot.slane %v6262, 5
    %v6265 = vsel %vm596, %v6260, %v6264
    %v6266 = vshrl.u32 %v4927, 16
    %v6268 = vrot.slane %v6266, 4
    %v6269 = vor.u32 %v6268, %v6264
    %v6270 = vrot.slane %v6269, 4
    %v6272 = vshll.u32 %v4928, 16
    %v6274 = vrot.slane %v6272, 5
    %v6275 = vsel %vm596, %v6270, %v6274
    %v6277 = vshrl.u32 %v4929, 16
    %v6279 = vrot.slane %v6277, 4
    %v6280 = vshll.u32 %v4929, 16
    %v6282 = vrot.slane %v6280, 5
    %v6283 = vor.u32 %v6279, %v6282
    %v6284 = vrot.slane %v6283, 4
    %v6286 = vshll.u32 %v4930, 16
    %v6288 = vrot.slane %v6286, 5
    %v6289 = vsel %vm596, %v6284, %v6288
    %v6290 = vshrl.u32 %v4930, 16
    %v6292 = vrot.slane %v6290, 4
    %v6293 = vor.u32 %v6292, %v6288
    %v6294 = vrot.slane %v6293, 4
    %v6296 = vshll.u32 %v4931, 16
    %v6298 = vrot.slane %v6296, 5
    %v6299 = vsel %vm596, %v6294, %v6298
    %v6301 = vshrl.u32 %v4932, 16
    %v6303 = vrot.slane %v6301, 4
    %v6304 = vshll.u32 %v4932, 16
    %v6306 = vrot.slane %v6304, 5
    %v6307 = vor.u32 %v6303, %v6306
    %v6308 = vrot.slane %v6307, 4
    %v6310 = vshll.u32 %v4933, 16
    %v6312 = vrot.slane %v6310, 5
    %v6313 = vsel %vm596, %v6308, %v6312
    %v6314 = vshrl.u32 %v4933, 16
    %v6316 = vrot.slane %v6314, 4
    %v6317 = vor.u32 %v6316, %v6312
    %v6318 = vrot.slane %v6317, 4
    %v6320 = vshll.u32 %v4934, 16
    %v6322 = vrot.slane %v6320, 5
    %v6323 = vsel %vm596, %v6318, %v6322
    %v6325 = vshrl.u32 %v4935, 16
    %v6327 = vrot.slane %v6325, 4
    %v6328 = vshll.u32 %v4935, 16
    %v6330 = vrot.slane %v6328, 5
    %v6331 = vor.u32 %v6327, %v6330
    %v6332 = vrot.slane %v6331, 4
    %v6334 = vshll.u32 %v4936, 16
    %v6336 = vrot.slane %v6334, 5
    %v6337 = vsel %vm596, %v6332, %v6336
    %v6338 = vshrl.u32 %v4936, 16
    %v6340 = vrot.slane %v6338, 4
    %v6341 = vor.u32 %v6340, %v6336
    %v6342 = vrot.slane %v6341, 4
    %v6344 = vshll.u32 %v4937, 16
    %v6346 = vrot.slane %v6344, 5
    %v6347 = vsel %vm596, %v6342, %v6346
    %v6349 = vshrl.u32 %v4938, 16
    %v6351 = vrot.slane %v6349, 4
    %v6352 = vshll.u32 %v4938, 16
    %v6354 = vrot.slane %v6352, 5
    %v6355 = vor.u32 %v6351, %v6354
    %v6356 = vrot.slane %v6355, 4
    %v6358 = vshll.u32 %v4939, 16
    %v6360 = vrot.slane %v6358, 5
    %v6361 = vsel %vm596, %v6356, %v6360
    %v6362 = vshrl.u32 %v4939, 16
    %v6364 = vrot.slane %v6362, 4
    %v6365 = vor.u32 %v6364, %v6360
    %v6366 = vrot.slane %v6365, 4
    %v6368 = vshll.u32 %v4940, 16
    %v6370 = vrot.slane %v6368, 5
    %v6371 = vsel %vm596, %v6366, %v6370
    %v6373 = vshrl.u32 %v4941, 16
    %v6375 = vrot.slane %v6373, 4
    %v6376 = vshll.u32 %v4941, 16
    %v6378 = vrot.slane %v6376, 5
    %v6379 = vor.u32 %v6375, %v6378
    %v6380 = vrot.slane %v6379, 4
    %v6382 = vshll.u32 %v4942, 16
    %v6384 = vrot.slane %v6382, 5
    %v6385 = vsel %vm596, %v6380, %v6384
    %v6386 = vshrl.u32 %v4942, 16
    %v6388 = vrot.slane %v6386, 4
    %v6389 = vor.u32 %v6388, %v6384
    %v6390 = vrot.slane %v6389, 4
    %v6392 = vshll.u32 %v4943, 16
    %v6394 = vrot.slane %v6392, 5
    %v6395 = vsel %vm596, %v6390, %v6394
    %v6397 = vshrl.u32 %v4944, 16
    %v6399 = vrot.slane %v6397, 4
    %v6400 = vshll.u32 %v4944, 16
    %v6402 = vrot.slane %v6400, 5
    %v6403 = vor.u32 %v6399, %v6402
    %v6404 = vrot.slane %v6403, 4
    %v6406 = vshll.u32 %v4945, 16
    %v6408 = vrot.slane %v6406, 5
    %v6409 = vsel %vm596, %v6404, %v6408
    %v6410 = vshrl.u32 %v4945, 16
    %v6412 = vrot.slane %v6410, 4
    %v6413 = vor.u32 %v6412, %v6408
    %v6414 = vrot.slane %v6413, 4
    %v6416 = vshll.u32 %v4946, 16
    %v6418 = vrot.slane %v6416, 5
    %v6419 = vsel %vm596, %v6414, %v6418
    %v6421 = vshrl.u32 %v4947, 16
    %v6423 = vrot.slane %v6421, 4
    %v6424 = vshll.u32 %v4947, 16
    %v6426 = vrot.slane %v6424, 5
    %v6427 = vor.u32 %v6423, %v6426
    %v6428 = vrot.slane %v6427, 4
    %v6430 = vshll.u32 %v4948, 16
    %v6432 = vrot.slane %v6430, 5
    %v6433 = vsel %vm596, %v6428, %v6432
    %v6434 = vshrl.u32 %v4948, 16
    %v6436 = vrot.slane %v6434, 4
    %v6437 = vor.u32 %v6436, %v6432
    %v6438 = vrot.slane %v6437, 4
    %v6440 = vshll.u32 %v4949, 16
    %v6442 = vrot.slane %v6440, 5
    %v6443 = vsel %vm596, %v6438, %v6442
    %v6445 = vshrl.u32 %v4950, 16
    %v6447 = vrot.slane %v6445, 4
    %v6448 = vshll.u32 %v4950, 16
    %v6450 = vrot.slane %v6448, 5
    %v6451 = vor.u32 %v6447, %v6450
    %v6452 = vrot.slane %v6451, 4
    %v6454 = vshll.u32 %v4951, 16
    %v6456 = vrot.slane %v6454, 5
    %v6457 = vsel %vm596, %v6452, %v6456
    %v6458 = vshrl.u32 %v4951, 16
    %v6460 = vrot.slane %v6458, 4
    %v6461 = vor.u32 %v6460, %v6456
    %v6462 = vrot.slane %v6461, 4
    %v6464 = vshll.u32 %v4952, 16
    %v6466 = vrot.slane %v6464, 5
    %v6467 = vsel %vm596, %v6462, %v6466
    %v6469 = vshrl.u32 %v4953, 16
    %v6471 = vrot.slane %v6469, 4
    %v6472 = vshll.u32 %v4953, 16
    %v6474 = vrot.slane %v6472, 5
    %v6475 = vor.u32 %v6471, %v6474
    %v6476 = vrot.slane %v6475, 4
    %v6478 = vshll.u32 %v4954, 16
    %v6480 = vrot.slane %v6478, 5
    %v6481 = vsel %vm596, %v6476, %v6480
    %v6482 = vshrl.u32 %v4954, 16
    %v6484 = vrot.slane %v6482, 4
    %v6485 = vor.u32 %v6484, %v6480
    %v6486 = vrot.slane %v6485, 4
    %v6488 = vshll.u32 %v4955, 16
    %v6490 = vrot.slane %v6488, 5
    %v6491 = vsel %vm596, %v6486, %v6490
    %6492 = vrot.lane.b32.xlu0 %v4969, 64
    %v6493 = vpop.permute.xlu0 %6492
    %6494 = vrot.lane.b32.xlu0 %v4979, 64
    %v6495 = vpop.permute.xlu0 %6494
    %6496 = vrot.lane.b32.xlu0 %v4993, 64
    %v6497 = vpop.permute.xlu0 %6496
    %6498 = vrot.lane.b32.xlu0 %v5003, 64
    %v6499 = vpop.permute.xlu0 %6498
    %6500 = vrot.lane.b32.xlu0 %v5017, 64
    %v6501 = vpop.permute.xlu0 %6500
    %6502 = vrot.lane.b32.xlu0 %v5027, 64
    %v6503 = vpop.permute.xlu0 %6502
    %6504 = vrot.lane.b32.xlu0 %v5041, 64
    %v6505 = vpop.permute.xlu0 %6504
    %6506 = vrot.lane.b32.xlu0 %v5051, 64
    %v6507 = vpop.permute.xlu0 %6506
    %6508 = vrot.lane.b32.xlu0 %v5065, 64
    %v6509 = vpop.permute.xlu0 %6508
    %6510 = vrot.lane.b32.xlu0 %v5075, 64
    %v6511 = vpop.permute.xlu0 %6510
    %6512 = vrot.lane.b32.xlu0 %v5089, 64
    %v6513 = vpop.permute.xlu0 %6512
    %6514 = vrot.lane.b32.xlu0 %v5099, 64
    %v6515 = vpop.permute.xlu0 %6514
    %6516 = vrot.lane.b32.xlu0 %v5113, 64
    %v6517 = vpop.permute.xlu0 %6516
    %6518 = vrot.lane.b32.xlu0 %v5123, 64
    %v6519 = vpop.permute.xlu0 %6518
    %6520 = vrot.lane.b32.xlu0 %v5137, 64
    %v6521 = vpop.permute.xlu0 %6520
    %6522 = vrot.lane.b32.xlu0 %v5147, 64
    %v6523 = vpop.permute.xlu0 %6522
    %6524 = vrot.lane.b32.xlu0 %v5161, 64
    %v6525 = vpop.permute.xlu0 %6524
    %6526 = vrot.lane.b32.xlu0 %v5171, 64
    %v6527 = vpop.permute.xlu0 %6526
    %6528 = vrot.lane.b32.xlu0 %v5185, 64
    %v6529 = vpop.permute.xlu0 %6528
    %6530 = vrot.lane.b32.xlu0 %v5195, 64
    %v6531 = vpop.permute.xlu0 %6530
    %6532 = vrot.lane.b32.xlu0 %v5209, 64
    %v6533 = vpop.permute.xlu0 %6532
    %6534 = vrot.lane.b32.xlu0 %v5219, 64
    %v6535 = vpop.permute.xlu0 %6534
    %6536 = vrot.lane.b32.xlu0 %v5233, 64
    %v6537 = vpop.permute.xlu0 %6536
    %6538 = vrot.lane.b32.xlu0 %v5243, 64
    %v6539 = vpop.permute.xlu0 %6538
    %6540 = vrot.lane.b32.xlu0 %v5257, 64
    %v6541 = vpop.permute.xlu0 %6540
    %6542 = vrot.lane.b32.xlu0 %v5267, 64
    %v6543 = vpop.permute.xlu0 %6542
    %6544 = vrot.lane.b32.xlu0 %v5281, 64
    %v6545 = vpop.permute.xlu0 %6544
    %6546 = vrot.lane.b32.xlu0 %v5291, 64
    %v6547 = vpop.permute.xlu0 %6546
    %6548 = vrot.lane.b32.xlu0 %v5305, 64
    %v6549 = vpop.permute.xlu0 %6548
    %6550 = vrot.lane.b32.xlu0 %v5315, 64
    %v6551 = vpop.permute.xlu0 %6550
    %6552 = vrot.lane.b32.xlu0 %v5329, 64
    %v6553 = vpop.permute.xlu0 %6552
    %6554 = vrot.lane.b32.xlu0 %v5339, 64
    %v6555 = vpop.permute.xlu0 %6554
    %6556 = vrot.lane.b32.xlu0 %v5353, 64
    %v6557 = vpop.permute.xlu0 %6556
    %6558 = vrot.lane.b32.xlu0 %v5363, 64
    %v6559 = vpop.permute.xlu0 %6558
    %6560 = vrot.lane.b32.xlu0 %v5377, 64
    %v6561 = vpop.permute.xlu0 %6560
    %6562 = vrot.lane.b32.xlu0 %v5387, 64
    %v6563 = vpop.permute.xlu0 %6562
    %6564 = vrot.lane.b32.xlu0 %v5401, 64
    %v6565 = vpop.permute.xlu0 %6564
    %6566 = vrot.lane.b32.xlu0 %v5411, 64
    %v6567 = vpop.permute.xlu0 %6566
    %6568 = vrot.lane.b32.xlu0 %v5425, 64
    %v6569 = vpop.permute.xlu0 %6568
    %6570 = vrot.lane.b32.xlu0 %v5435, 64
    %v6571 = vpop.permute.xlu0 %6570
    %6572 = vrot.lane.b32.xlu0 %v5449, 64
    %v6573 = vpop.permute.xlu0 %6572
    %6574 = vrot.lane.b32.xlu0 %v5459, 64
    %v6575 = vpop.permute.xlu0 %6574
    %6576 = vrot.lane.b32.xlu0 %v5473, 64
    %v6577 = vpop.permute.xlu0 %6576
    %6578 = vrot.lane.b32.xlu0 %v5483, 64
    %v6579 = vpop.permute.xlu0 %6578
    %6580 = vrot.lane.b32.xlu0 %v5497, 64
    %v6581 = vpop.permute.xlu0 %6580
    %6582 = vrot.lane.b32.xlu0 %v5507, 64
    %v6583 = vpop.permute.xlu0 %6582
    %6584 = vrot.lane.b32.xlu0 %v5521, 64
    %v6585 = vpop.permute.xlu0 %6584
    %6586 = vrot.lane.b32.xlu0 %v5531, 64
    %v6587 = vpop.permute.xlu0 %6586
    %6588 = vrot.lane.b32.xlu0 %v5545, 64
    %v6589 = vpop.permute.xlu0 %6588
    %6590 = vrot.lane.b32.xlu0 %v5555, 64
    %v6591 = vpop.permute.xlu0 %6590
    %6592 = vrot.lane.b32.xlu0 %v5569, 64
    %v6593 = vpop.permute.xlu0 %6592
    %6594 = vrot.lane.b32.xlu0 %v5579, 64
    %v6595 = vpop.permute.xlu0 %6594
    %6596 = vrot.lane.b32.xlu0 %v5593, 64
    %v6597 = vpop.permute.xlu0 %6596
    %6598 = vrot.lane.b32.xlu0 %v5603, 64
    %v6599 = vpop.permute.xlu0 %6598
    %6600 = vrot.lane.b32.xlu0 %v5617, 64
    %v6601 = vpop.permute.xlu0 %6600
    %6602 = vrot.lane.b32.xlu0 %v5627, 64
    %v6603 = vpop.permute.xlu0 %6602
    %6604 = vrot.lane.b32.xlu0 %v5641, 64
    %v6605 = vpop.permute.xlu0 %6604
    %6606 = vrot.lane.b32.xlu0 %v5651, 64
    %v6607 = vpop.permute.xlu0 %6606
    %6608 = vrot.lane.b32.xlu0 %v5665, 64
    %v6609 = vpop.permute.xlu0 %6608
    %6610 = vrot.lane.b32.xlu0 %v5675, 64
    %v6611 = vpop.permute.xlu0 %6610
    %6612 = vrot.lane.b32.xlu0 %v5689, 64
    %v6613 = vpop.permute.xlu0 %6612
    %6614 = vrot.lane.b32.xlu0 %v5699, 64
    %v6615 = vpop.permute.xlu0 %6614
    %6616 = vrot.lane.b32.xlu0 %v5713, 64
    %v6617 = vpop.permute.xlu0 %6616
    %6618 = vrot.lane.b32.xlu0 %v5723, 64
    %v6619 = vpop.permute.xlu0 %6618
    %6620 = vrot.lane.b32.xlu0 %v5737, 64
    %v6621 = vpop.permute.xlu0 %6620
    %6622 = vrot.lane.b32.xlu0 %v5747, 64
    %v6623 = vpop.permute.xlu0 %6622
    %6624 = vrot.lane.b32.xlu0 %v5761, 64
    %v6625 = vpop.permute.xlu0 %6624
    %6626 = vrot.lane.b32.xlu0 %v5771, 64
    %v6627 = vpop.permute.xlu0 %6626
    %6628 = vrot.lane.b32.xlu0 %v5785, 64
    %v6629 = vpop.permute.xlu0 %6628
    %6630 = vrot.lane.b32.xlu0 %v5795, 64
    %v6631 = vpop.permute.xlu0 %6630
    %6632 = vrot.lane.b32.xlu0 %v5809, 64
    %v6633 = vpop.permute.xlu0 %6632
    %6634 = vrot.lane.b32.xlu0 %v5819, 64
    %v6635 = vpop.permute.xlu0 %6634
    %6636 = vrot.lane.b32.xlu0 %v5833, 64
    %v6637 = vpop.permute.xlu0 %6636
    %6638 = vrot.lane.b32.xlu0 %v5843, 64
    %v6639 = vpop.permute.xlu0 %6638
    %6640 = vrot.lane.b32.xlu0 %v5857, 64
    %v6641 = vpop.permute.xlu0 %6640
    %6642 = vrot.lane.b32.xlu0 %v5867, 64
    %v6643 = vpop.permute.xlu0 %6642
    %6644 = vrot.lane.b32.xlu0 %v5881, 64
    %v6645 = vpop.permute.xlu0 %6644
    %6646 = vrot.lane.b32.xlu0 %v5891, 64
    %v6647 = vpop.permute.xlu0 %6646
    %6648 = vrot.lane.b32.xlu0 %v5905, 64
    %v6649 = vpop.permute.xlu0 %6648
    %6650 = vrot.lane.b32.xlu0 %v5915, 64
    %v6651 = vpop.permute.xlu0 %6650
    %6652 = vrot.lane.b32.xlu0 %v5929, 64
    %v6653 = vpop.permute.xlu0 %6652
    %6654 = vrot.lane.b32.xlu0 %v5939, 64
    %v6655 = vpop.permute.xlu0 %6654
    %6656 = vrot.lane.b32.xlu0 %v5953, 64
    %v6657 = vpop.permute.xlu0 %6656
    %6658 = vrot.lane.b32.xlu0 %v5963, 64
    %v6659 = vpop.permute.xlu0 %6658
    %6660 = vrot.lane.b32.xlu0 %v5977, 64
    %v6661 = vpop.permute.xlu0 %6660
    %6662 = vrot.lane.b32.xlu0 %v5987, 64
    %v6663 = vpop.permute.xlu0 %6662
    %6664 = vrot.lane.b32.xlu0 %v6001, 64
    %v6665 = vpop.permute.xlu0 %6664
    %6666 = vrot.lane.b32.xlu0 %v6011, 64
    %v6667 = vpop.permute.xlu0 %6666
    %6668 = vrot.lane.b32.xlu0 %v6025, 64
    %v6669 = vpop.permute.xlu0 %6668
    %6670 = vrot.lane.b32.xlu0 %v6035, 64
    %v6671 = vpop.permute.xlu0 %6670
    %6672 = vrot.lane.b32.xlu0 %v6049, 64
    %v6673 = vpop.permute.xlu0 %6672
    %6674 = vrot.lane.b32.xlu0 %v6059, 64
    %v6675 = vpop.permute.xlu0 %6674
    %6676 = vrot.lane.b32.xlu0 %v6073, 64
    %v6677 = vpop.permute.xlu0 %6676
    %6678 = vrot.lane.b32.xlu0 %v6083, 64
    %v6679 = vpop.permute.xlu0 %6678
    %6680 = vrot.lane.b32.xlu0 %v6097, 64
    %v6681 = vpop.permute.xlu0 %6680
    %6682 = vrot.lane.b32.xlu0 %v6107, 64
    %v6683 = vpop.permute.xlu0 %6682
    %6684 = vrot.lane.b32.xlu0 %v6121, 64
    %v6685 = vpop.permute.xlu0 %6684
    %6686 = vrot.lane.b32.xlu0 %v6131, 64
    %v6687 = vpop.permute.xlu0 %6686
    %6688 = vrot.lane.b32.xlu0 %v6145, 64
    %v6689 = vpop.permute.xlu0 %6688
    %6690 = vrot.lane.b32.xlu0 %v6155, 64
    %v6691 = vpop.permute.xlu0 %6690
    %6692 = vrot.lane.b32.xlu0 %v6169, 64
    %v6693 = vpop.permute.xlu0 %6692
    %6694 = vrot.lane.b32.xlu0 %v6179, 64
    %v6695 = vpop.permute.xlu0 %6694
    %6696 = vrot.lane.b32.xlu0 %v6193, 64
    %v6697 = vpop.permute.xlu0 %6696
    %6698 = vrot.lane.b32.xlu0 %v6203, 64
    %v6699 = vpop.permute.xlu0 %6698
    %6700 = vrot.lane.b32.xlu0 %v6217, 64
    %v6701 = vpop.permute.xlu0 %6700
    %6702 = vrot.lane.b32.xlu0 %v6227, 64
    %v6703 = vpop.permute.xlu0 %6702
    %6704 = vrot.lane.b32.xlu0 %v6241, 64
    %v6705 = vpop.permute.xlu0 %6704
    %6706 = vrot.lane.b32.xlu0 %v6251, 64
    %v6707 = vpop.permute.xlu0 %6706
    %6708 = vrot.lane.b32.xlu0 %v6265, 64
    %v6709 = vpop.permute.xlu0 %6708
    %6710 = vrot.lane.b32.xlu0 %v6275, 64
    %v6711 = vpop.permute.xlu0 %6710
    %6712 = vrot.lane.b32.xlu0 %v6289, 64
    %v6713 = vpop.permute.xlu0 %6712
    %6714 = vrot.lane.b32.xlu0 %v6299, 64
    %v6715 = vpop.permute.xlu0 %6714
    %6716 = vrot.lane.b32.xlu0 %v6313, 64
    %v6717 = vpop.permute.xlu0 %6716
    %6718 = vrot.lane.b32.xlu0 %v6323, 64
    %v6719 = vpop.permute.xlu0 %6718
    %6720 = vrot.lane.b32.xlu0 %v6337, 64
    %v6721 = vpop.permute.xlu0 %6720
    %6722 = vrot.lane.b32.xlu0 %v6347, 64
    %v6723 = vpop.permute.xlu0 %6722
    %6724 = vrot.lane.b32.xlu0 %v6361, 64
    %v6725 = vpop.permute.xlu0 %6724
    %6726 = vrot.lane.b32.xlu0 %v6371, 64
    %v6727 = vpop.permute.xlu0 %6726
    %6728 = vrot.lane.b32.xlu0 %v6385, 64
    %v6729 = vpop.permute.xlu0 %6728
    %6730 = vrot.lane.b32.xlu0 %v6395, 64
    %v6731 = vpop.permute.xlu0 %6730
    %6732 = vrot.lane.b32.xlu0 %v6409, 64
    %v6733 = vpop.permute.xlu0 %6732
    %6734 = vrot.lane.b32.xlu0 %v6419, 64
    %v6735 = vpop.permute.xlu0 %6734
    %6736 = vrot.lane.b32.xlu0 %v6433, 64
    %v6737 = vpop.permute.xlu0 %6736
    %6738 = vrot.lane.b32.xlu0 %v6443, 64
    %v6739 = vpop.permute.xlu0 %6738
    %6740 = vrot.lane.b32.xlu0 %v6457, 64
    %v6741 = vpop.permute.xlu0 %6740
    %6742 = vrot.lane.b32.xlu0 %v6467, 64
    %v6743 = vpop.permute.xlu0 %6742
    %6744 = vrot.lane.b32.xlu0 %v6481, 64
    %v6745 = vpop.permute.xlu0 %6744
    %6746 = vrot.lane.b32.xlu0 %v6491, 64
    %v6747 = vpop.permute.xlu0 %6746
    %vm6876 = vcmask 650752
    %6877 = vst.msk [vmem:[#allocation2] sm:$0xf] %vm6876, %v6493
    %6878 = vst.msk [vmem:[#allocation2 + $0x8] sm:$0xf] %vm6876, %v6495
    %6879 = vst.msk [vmem:[#allocation2 + $0x10] sm:$0xf] %vm6876, %v6497
    %6880 = vst.msk [vmem:[#allocation2 + $0x18] sm:$0xf] %vm6876, %v6499
    %6881 = vst.msk [vmem:[#allocation2 + $0x20] sm:$0xf] %vm6876, %v6501
    %6882 = vst.msk [vmem:[#allocation2 + $0x28] sm:$0xf] %vm6876, %v6503
    %6883 = vst.msk [vmem:[#allocation2 + $0x30] sm:$0xf] %vm6876, %v6505
    %6884 = vst.msk [vmem:[#allocation2 + $0x38] sm:$0xf] %vm6876, %v6507
    %6885 = vst.msk [vmem:[#allocation2 + $0x40] sm:$0xf] %vm6876, %v6509
    %6886 = vst.msk [vmem:[#allocation2 + $0x48] sm:$0xf] %vm6876, %v6511
    %6887 = vst.msk [vmem:[#allocation2 + $0x50] sm:$0xf] %vm6876, %v6513
    %6888 = vst.msk [vmem:[#allocation2 + $0x58] sm:$0xf] %vm6876, %v6515
    %6889 = vst.msk [vmem:[#allocation2 + $0x60] sm:$0xf] %vm6876, %v6517
    %6890 = vst.msk [vmem:[#allocation2 + $0x68] sm:$0xf] %vm6876, %v6519
    %6891 = vst.msk [vmem:[#allocation2 + $0x70] sm:$0xf] %vm6876, %v6521
    %6892 = vst.msk [vmem:[#allocation2 + $0x78] sm:$0xf] %vm6876, %v6523
    %6893 = vst.msk [vmem:[#allocation2 + $0x80] sm:$0xf] %vm6876, %v6525
    %6894 = vst.msk [vmem:[#allocation2 + $0x88] sm:$0xf] %vm6876, %v6527
    %6895 = vst.msk [vmem:[#allocation2 + $0x90] sm:$0xf] %vm6876, %v6529
    %6896 = vst.msk [vmem:[#allocation2 + $0x98] sm:$0xf] %vm6876, %v6531
    %6897 = vst.msk [vmem:[#allocation2 + $0xa0] sm:$0xf] %vm6876, %v6533
    %6898 = vst.msk [vmem:[#allocation2 + $0xa8] sm:$0xf] %vm6876, %v6535
    %6899 = vst.msk [vmem:[#allocation2 + $0xb0] sm:$0xf] %vm6876, %v6537
    %6900 = vst.msk [vmem:[#allocation2 + $0xb8] sm:$0xf] %vm6876, %v6539
    %6901 = vst.msk [vmem:[#allocation2 + $0xc0] sm:$0xf] %vm6876, %v6541
    %6902 = vst.msk [vmem:[#allocation2 + $0xc8] sm:$0xf] %vm6876, %v6543
    %6903 = vst.msk [vmem:[#allocation2 + $0xd0] sm:$0xf] %vm6876, %v6545
    %6904 = vst.msk [vmem:[#allocation2 + $0xd8] sm:$0xf] %vm6876, %v6547
    %6905 = vst.msk [vmem:[#allocation2 + $0xe0] sm:$0xf] %vm6876, %v6549
    %6906 = vst.msk [vmem:[#allocation2 + $0xe8] sm:$0xf] %vm6876, %v6551
    %6907 = vst.msk [vmem:[#allocation2 + $0xf0] sm:$0xf] %vm6876, %v6553
    %6908 = vst.msk [vmem:[#allocation2 + $0xf8] sm:$0xf] %vm6876, %v6555
    %6909 = vst.msk [vmem:[#allocation2 + $0x100] sm:$0xf] %vm6876, %v6557
    %6910 = vst.msk [vmem:[#allocation2 + $0x108] sm:$0xf] %vm6876, %v6559
    %6911 = vst.msk [vmem:[#allocation2 + $0x110] sm:$0xf] %vm6876, %v6561
    %6912 = vst.msk [vmem:[#allocation2 + $0x118] sm:$0xf] %vm6876, %v6563
    %6913 = vst.msk [vmem:[#allocation2 + $0x120] sm:$0xf] %vm6876, %v6565
    %6914 = vst.msk [vmem:[#allocation2 + $0x128] sm:$0xf] %vm6876, %v6567
    %6915 = vst.msk [vmem:[#allocation2 + $0x130] sm:$0xf] %vm6876, %v6569
    %6916 = vst.msk [vmem:[#allocation2 + $0x138] sm:$0xf] %vm6876, %v6571
    %6917 = vst.msk [vmem:[#allocation2 + $0x140] sm:$0xf] %vm6876, %v6573
    %6918 = vst.msk [vmem:[#allocation2 + $0x148] sm:$0xf] %vm6876, %v6575
    %6919 = vst.msk [vmem:[#allocation2 + $0x150] sm:$0xf] %vm6876, %v6577
    %6920 = vst.msk [vmem:[#allocation2 + $0x158] sm:$0xf] %vm6876, %v6579
    %6921 = vst.msk [vmem:[#allocation2 + $0x160] sm:$0xf] %vm6876, %v6581
    %6922 = vst.msk [vmem:[#allocation2 + $0x168] sm:$0xf] %vm6876, %v6583
    %6923 = vst.msk [vmem:[#allocation2 + $0x170] sm:$0xf] %vm6876, %v6585
    %6924 = vst.msk [vmem:[#allocation2 + $0x178] sm:$0xf] %vm6876, %v6587
    %6925 = vst.msk [vmem:[#allocation2 + $0x180] sm:$0xf] %vm6876, %v6589
    %6926 = vst.msk [vmem:[#allocation2 + $0x188] sm:$0xf] %vm6876, %v6591
    %6927 = vst.msk [vmem:[#allocation2 + $0x190] sm:$0xf] %vm6876, %v6593
    %6928 = vst.msk [vmem:[#allocation2 + $0x198] sm:$0xf] %vm6876, %v6595
    %6929 = vst.msk [vmem:[#allocation2 + $0x1a0] sm:$0xf] %vm6876, %v6597
    %6930 = vst.msk [vmem:[#allocation2 + $0x1a8] sm:$0xf] %vm6876, %v6599
    %6931 = vst.msk [vmem:[#allocation2 + $0x1b0] sm:$0xf] %vm6876, %v6601
    %6932 = vst.msk [vmem:[#allocation2 + $0x1b8] sm:$0xf] %vm6876, %v6603
    %6933 = vst.msk [vmem:[#allocation2 + $0x1c0] sm:$0xf] %vm6876, %v6605
    %6934 = vst.msk [vmem:[#allocation2 + $0x1c8] sm:$0xf] %vm6876, %v6607
    %6935 = vst.msk [vmem:[#allocation2 + $0x1d0] sm:$0xf] %vm6876, %v6609
    %6936 = vst.msk [vmem:[#allocation2 + $0x1d8] sm:$0xf] %vm6876, %v6611
    %6937 = vst.msk [vmem:[#allocation2 + $0x1e0] sm:$0xf] %vm6876, %v6613
    %6938 = vst.msk [vmem:[#allocation2 + $0x1e8] sm:$0xf] %vm6876, %v6615
    %6939 = vst.msk [vmem:[#allocation2 + $0x1f0] sm:$0xf] %vm6876, %v6617
    %6940 = vst.msk [vmem:[#allocation2 + $0x1f8] sm:$0xf] %vm6876, %v6619
    %6941 = vst.msk [vmem:[#allocation2 + $0x200] sm:$0xf] %vm6876, %v6621
    %6942 = vst.msk [vmem:[#allocation2 + $0x208] sm:$0xf] %vm6876, %v6623
    %6943 = vst.msk [vmem:[#allocation2 + $0x210] sm:$0xf] %vm6876, %v6625
    %6944 = vst.msk [vmem:[#allocation2 + $0x218] sm:$0xf] %vm6876, %v6627
    %6945 = vst.msk [vmem:[#allocation2 + $0x220] sm:$0xf] %vm6876, %v6629
    %6946 = vst.msk [vmem:[#allocation2 + $0x228] sm:$0xf] %vm6876, %v6631
    %6947 = vst.msk [vmem:[#allocation2 + $0x230] sm:$0xf] %vm6876, %v6633
    %6948 = vst.msk [vmem:[#allocation2 + $0x238] sm:$0xf] %vm6876, %v6635
    %6949 = vst.msk [vmem:[#allocation2 + $0x240] sm:$0xf] %vm6876, %v6637
    %6950 = vst.msk [vmem:[#allocation2 + $0x248] sm:$0xf] %vm6876, %v6639
    %6951 = vst.msk [vmem:[#allocation2 + $0x250] sm:$0xf] %vm6876, %v6641
    %6952 = vst.msk [vmem:[#allocation2 + $0x258] sm:$0xf] %vm6876, %v6643
    %6953 = vst.msk [vmem:[#allocation2 + $0x260] sm:$0xf] %vm6876, %v6645
    %6954 = vst.msk [vmem:[#allocation2 + $0x268] sm:$0xf] %vm6876, %v6647
    %6955 = vst.msk [vmem:[#allocation2 + $0x270] sm:$0xf] %vm6876, %v6649
    %6956 = vst.msk [vmem:[#allocation2 + $0x278] sm:$0xf] %vm6876, %v6651
    %6957 = vst.msk [vmem:[#allocation2 + $0x280] sm:$0xf] %vm6876, %v6653
    %6958 = vst.msk [vmem:[#allocation2 + $0x288] sm:$0xf] %vm6876, %v6655
    %6959 = vst.msk [vmem:[#allocation2 + $0x290] sm:$0xf] %vm6876, %v6657
    %6960 = vst.msk [vmem:[#allocation2 + $0x298] sm:$0xf] %vm6876, %v6659
    %6961 = vst.msk [vmem:[#allocation2 + $0x2a0] sm:$0xf] %vm6876, %v6661
    %6962 = vst.msk [vmem:[#allocation2 + $0x2a8] sm:$0xf] %vm6876, %v6663
    %6963 = vst.msk [vmem:[#allocation2 + $0x2b0] sm:$0xf] %vm6876, %v6665
    %6964 = vst.msk [vmem:[#allocation2 + $0x2b8] sm:$0xf] %vm6876, %v6667
    %6965 = vst.msk [vmem:[#allocation2 + $0x2c0] sm:$0xf] %vm6876, %v6669
    %6966 = vst.msk [vmem:[#allocation2 + $0x2c8] sm:$0xf] %vm6876, %v6671
    %6967 = vst.msk [vmem:[#allocation2 + $0x2d0] sm:$0xf] %vm6876, %v6673
    %6968 = vst.msk [vmem:[#allocation2 + $0x2d8] sm:$0xf] %vm6876, %v6675
    %6969 = vst.msk [vmem:[#allocation2 + $0x2e0] sm:$0xf] %vm6876, %v6677
    %6970 = vst.msk [vmem:[#allocation2 + $0x2e8] sm:$0xf] %vm6876, %v6679
    %6971 = vst.msk [vmem:[#allocation2 + $0x2f0] sm:$0xf] %vm6876, %v6681
    %6972 = vst.msk [vmem:[#allocation2 + $0x2f8] sm:$0xf] %vm6876, %v6683
    %6973 = vst.msk [vmem:[#allocation2 + $0x300] sm:$0xf] %vm6876, %v6685
    %6974 = vst.msk [vmem:[#allocation2 + $0x308] sm:$0xf] %vm6876, %v6687
    %6975 = vst.msk [vmem:[#allocation2 + $0x310] sm:$0xf] %vm6876, %v6689
    %6976 = vst.msk [vmem:[#allocation2 + $0x318] sm:$0xf] %vm6876, %v6691
    %6977 = vst.msk [vmem:[#allocation2 + $0x320] sm:$0xf] %vm6876, %v6693
    %6978 = vst.msk [vmem:[#allocation2 + $0x328] sm:$0xf] %vm6876, %v6695
    %6979 = vst.msk [vmem:[#allocation2 + $0x330] sm:$0xf] %vm6876, %v6697
    %6980 = vst.msk [vmem:[#allocation2 + $0x338] sm:$0xf] %vm6876, %v6699
    %6981 = vst.msk [vmem:[#allocation2 + $0x340] sm:$0xf] %vm6876, %v6701
    %6982 = vst.msk [vmem:[#allocation2 + $0x348] sm:$0xf] %vm6876, %v6703
    %6983 = vst.msk [vmem:[#allocation2 + $0x350] sm:$0xf] %vm6876, %v6705
    %6984 = vst.msk [vmem:[#allocation2 + $0x358] sm:$0xf] %vm6876, %v6707
    %6985 = vst.msk [vmem:[#allocation2 + $0x360] sm:$0xf] %vm6876, %v6709
    %6986 = vst.msk [vmem:[#allocation2 + $0x368] sm:$0xf] %vm6876, %v6711
    %6987 = vst.msk [vmem:[#allocation2 + $0x370] sm:$0xf] %vm6876, %v6713
    %6988 = vst.msk [vmem:[#allocation2 + $0x378] sm:$0xf] %vm6876, %v6715
    %6989 = vst.msk [vmem:[#allocation2 + $0x380] sm:$0xf] %vm6876, %v6717
    %6990 = vst.msk [vmem:[#allocation2 + $0x388] sm:$0xf] %vm6876, %v6719
    %6991 = vst.msk [vmem:[#allocation2 + $0x390] sm:$0xf] %vm6876, %v6721
    %6992 = vst.msk [vmem:[#allocation2 + $0x398] sm:$0xf] %vm6876, %v6723
    %6993 = vst.msk [vmem:[#allocation2 + $0x3a0] sm:$0xf] %vm6876, %v6725
    %6994 = vst.msk [vmem:[#allocation2 + $0x3a8] sm:$0xf] %vm6876, %v6727
    %6995 = vst.msk [vmem:[#allocation2 + $0x3b0] sm:$0xf] %vm6876, %v6729
    %6996 = vst.msk [vmem:[#allocation2 + $0x3b8] sm:$0xf] %vm6876, %v6731
    %6997 = vst.msk [vmem:[#allocation2 + $0x3c0] sm:$0xf] %vm6876, %v6733
    %6998 = vst.msk [vmem:[#allocation2 + $0x3c8] sm:$0xf] %vm6876, %v6735
    %6999 = vst.msk [vmem:[#allocation2 + $0x3d0] sm:$0xf] %vm6876, %v6737
    %7000 = vst.msk [vmem:[#allocation2 + $0x3d8] sm:$0xf] %vm6876, %v6739
    %7001 = vst.msk [vmem:[#allocation2 + $0x3e0] sm:$0xf] %vm6876, %v6741
    %7002 = vst.msk [vmem:[#allocation2 + $0x3e8] sm:$0xf] %vm6876, %v6743
    %7003 = vst.msk [vmem:[#allocation2 + $0x3f0] sm:$0xf] %vm6876, %v6745
    %7004 = vst.msk [vmem:[#allocation2 + $0x3f8] sm:$0xf] %vm6876, %v6747
    %v7005 = vld [vmem:[%s3994] sm:$0xe]
    %v7006 = vld [vmem:[%s3994 + $0x4] sm:$0xf]
    %v7007 = vld [vmem:[%s3994 + $0x8] sm:$0x1]
    %v7008 = vld [vmem:[%s3994 + $0xc] sm:$0xe]
    %v7009 = vld [vmem:[%s3994 + $0x10] sm:$0xf]
    %v7010 = vld [vmem:[%s3994 + $0x14] sm:$0x1]
    %v7011 = vld [vmem:[%s3994 + $0x18] sm:$0xe]
    %v7012 = vld [vmem:[%s3994 + $0x1c] sm:$0xf]
    %v7013 = vld [vmem:[%s3994 + $0x20] sm:$0x1]
    %v7014 = vld [vmem:[%s3994 + $0x24] sm:$0xe]
    %v7015 = vld [vmem:[%s3994 + $0x28] sm:$0xf]
    %v7016 = vld [vmem:[%s3994 + $0x2c] sm:$0x1]
    %v7017 = vld [vmem:[%s3994 + $0x30] sm:$0xe]
    %v7018 = vld [vmem:[%s3994 + $0x34] sm:$0xf]
    %v7019 = vld [vmem:[%s3994 + $0x38] sm:$0x1]
    %v7020 = vld [vmem:[%s3994 + $0x3c] sm:$0xe]
    %v7021 = vld [vmem:[%s3994 + $0x40] sm:$0xf]
    %v7022 = vld [vmem:[%s3994 + $0x44] sm:$0x1]
    %v7023 = vld [vmem:[%s3994 + $0x48] sm:$0xe]
    %v7024 = vld [vmem:[%s3994 + $0x4c] sm:$0xf]
    %v7025 = vld [vmem:[%s3994 + $0x50] sm:$0x1]
    %v7026 = vld [vmem:[%s3994 + $0x54] sm:$0xe]
    %v7027 = vld [vmem:[%s3994 + $0x58] sm:$0xf]
    %v7028 = vld [vmem:[%s3994 + $0x5c] sm:$0x1]
    %v7029 = vld [vmem:[%s3994 + $0x60] sm:$0xe]
    %v7030 = vld [vmem:[%s3994 + $0x64] sm:$0xf]
    %v7031 = vld [vmem:[%s3994 + $0x68] sm:$0x1]
    %v7032 = vld [vmem:[%s3994 + $0x6c] sm:$0xe]
    %v7033 = vld [vmem:[%s3994 + $0x70] sm:$0xf]
    %v7034 = vld [vmem:[%s3994 + $0x74] sm:$0x1]
    %v7035 = vld [vmem:[%s3994 + $0x78] sm:$0xe]
    %v7036 = vld [vmem:[%s3994 + $0x7c] sm:$0xf]
    %v7037 = vld [vmem:[%s3994 + $0x80] sm:$0x1]
    %v7038 = vld [vmem:[%s3994 + $0x84] sm:$0xe]
    %v7039 = vld [vmem:[%s3994 + $0x88] sm:$0xf]
    %v7040 = vld [vmem:[%s3994 + $0x8c] sm:$0x1]
    %v7041 = vld [vmem:[%s3994 + $0x90] sm:$0xe]
    %v7042 = vld [vmem:[%s3994 + $0x94] sm:$0xf]
    %v7043 = vld [vmem:[%s3994 + $0x98] sm:$0x1]
    %v7044 = vld [vmem:[%s3994 + $0x9c] sm:$0xe]
    %v7045 = vld [vmem:[%s3994 + $0xa0] sm:$0xf]
    %v7046 = vld [vmem:[%s3994 + $0xa4] sm:$0x1]
    %v7047 = vld [vmem:[%s3994 + $0xa8] sm:$0xe]
    %v7048 = vld [vmem:[%s3994 + $0xac] sm:$0xf]
    %v7049 = vld [vmem:[%s3994 + $0xb0] sm:$0x1]
    %v7050 = vld [vmem:[%s3994 + $0xb4] sm:$0xe]
    %v7051 = vld [vmem:[%s3994 + $0xb8] sm:$0xf]
    %v7052 = vld [vmem:[%s3994 + $0xbc] sm:$0x1]
    %v7053 = vld [vmem:[%s3994 + $0xd8] sm:$0xe]
    %v7054 = vld [vmem:[%s3994 + $0xdc] sm:$0xf]
    %v7055 = vld [vmem:[%s3994 + $0xe0] sm:$0x1]
    %v7056 = vld [vmem:[%s3994 + $0xe4] sm:$0xe]
    %v7057 = vld [vmem:[%s3994 + $0xe8] sm:$0xf]
    %v7058 = vld [vmem:[%s3994 + $0xec] sm:$0x1]
    %v7059 = vld [vmem:[%s3994 + $0xf0] sm:$0xe]
    %v7060 = vld [vmem:[%s3994 + $0xf4] sm:$0xf]
    %v7061 = vld [vmem:[%s3994 + $0xf8] sm:$0x1]
    %v7062 = vld [vmem:[%s3994 + $0xfc] sm:$0xe]
    %v7063 = vld [vmem:[%s3994 + $0x100] sm:$0xf]
    %v7064 = vld [vmem:[%s3994 + $0x104] sm:$0x1]
    %v7065 = vld [vmem:[%s3994 + $0x108] sm:$0xe]
    %v7066 = vld [vmem:[%s3994 + $0x10c] sm:$0xf]
    %v7067 = vld [vmem:[%s3994 + $0x110] sm:$0x1]
    %v7068 = vld [vmem:[%s3994 + $0x114] sm:$0xe]
    %v7069 = vld [vmem:[%s3994 + $0x118] sm:$0xf]
    %v7070 = vld [vmem:[%s3994 + $0x11c] sm:$0x1]
    %v7071 = vld [vmem:[%s3994 + $0x120] sm:$0xe]
    %v7072 = vld [vmem:[%s3994 + $0x124] sm:$0xf]
    %v7073 = vld [vmem:[%s3994 + $0x128] sm:$0x1]
    %v7074 = vld [vmem:[%s3994 + $0x12c] sm:$0xe]
    %v7075 = vld [vmem:[%s3994 + $0x130] sm:$0xf]
    %v7076 = vld [vmem:[%s3994 + $0x134] sm:$0x1]
    %v7077 = vld [vmem:[%s3994 + $0x138] sm:$0xe]
    %v7078 = vld [vmem:[%s3994 + $0x13c] sm:$0xf]
    %v7079 = vld [vmem:[%s3994 + $0x140] sm:$0x1]
    %v7080 = vld [vmem:[%s3994 + $0x144] sm:$0xe]
    %v7081 = vld [vmem:[%s3994 + $0x148] sm:$0xf]
    %v7082 = vld [vmem:[%s3994 + $0x14c] sm:$0x1]
    %v7083 = vld [vmem:[%s3994 + $0x150] sm:$0xe]
    %v7084 = vld [vmem:[%s3994 + $0x154] sm:$0xf]
    %v7085 = vld [vmem:[%s3994 + $0x158] sm:$0x1]
    %v7086 = vld [vmem:[%s3994 + $0x15c] sm:$0xe]
    %v7087 = vld [vmem:[%s3994 + $0x160] sm:$0xf]
    %v7088 = vld [vmem:[%s3994 + $0x164] sm:$0x1]
    %v7089 = vld [vmem:[%s3994 + $0x168] sm:$0xe]
    %v7090 = vld [vmem:[%s3994 + $0x16c] sm:$0xf]
    %v7091 = vld [vmem:[%s3994 + $0x170] sm:$0x1]
    %v7092 = vld [vmem:[%s3994 + $0x174] sm:$0xe]
    %v7093 = vld [vmem:[%s3994 + $0x178] sm:$0xf]
    %v7094 = vld [vmem:[%s3994 + $0x17c] sm:$0x1]
    %v7095 = vld [vmem:[%s3994 + $0x180] sm:$0xe]
    %v7096 = vld [vmem:[%s3994 + $0x184] sm:$0xf]
    %v7097 = vld [vmem:[%s3994 + $0x188] sm:$0x1]
    %v7098 = vld [vmem:[%s3994 + $0x18c] sm:$0xe]
    %v7099 = vld [vmem:[%s3994 + $0x190] sm:$0xf]
    %v7100 = vld [vmem:[%s3994 + $0x194] sm:$0x1]
    %v7101 = vld [vmem:[%s3994 + $0x1b0] sm:$0xe]
    %v7102 = vld [vmem:[%s3994 + $0x1b4] sm:$0xf]
    %v7103 = vld [vmem:[%s3994 + $0x1b8] sm:$0x1]
    %v7104 = vld [vmem:[%s3994 + $0x1bc] sm:$0xe]
    %v7105 = vld [vmem:[%s3994 + $0x1c0] sm:$0xf]
    %v7106 = vld [vmem:[%s3994 + $0x1c4] sm:$0x1]
    %v7107 = vld [vmem:[%s3994 + $0x1c8] sm:$0xe]
    %v7108 = vld [vmem:[%s3994 + $0x1cc] sm:$0xf]
    %v7109 = vld [vmem:[%s3994 + $0x1d0] sm:$0x1]
    %v7110 = vld [vmem:[%s3994 + $0x1d4] sm:$0xe]
    %v7111 = vld [vmem:[%s3994 + $0x1d8] sm:$0xf]
    %v7112 = vld [vmem:[%s3994 + $0x1dc] sm:$0x1]
    %v7113 = vld [vmem:[%s3994 + $0x1e0] sm:$0xe]
    %v7114 = vld [vmem:[%s3994 + $0x1e4] sm:$0xf]
    %v7115 = vld [vmem:[%s3994 + $0x1e8] sm:$0x1]
    %v7116 = vld [vmem:[%s3994 + $0x1ec] sm:$0xe]
    %v7117 = vld [vmem:[%s3994 + $0x1f0] sm:$0xf]
    %v7118 = vld [vmem:[%s3994 + $0x1f4] sm:$0x1]
    %v7119 = vld [vmem:[%s3994 + $0x1f8] sm:$0xe]
    %v7120 = vld [vmem:[%s3994 + $0x1fc] sm:$0xf]
    %v7121 = vld [vmem:[%s3994 + $0x200] sm:$0x1]
    %v7122 = vld [vmem:[%s3994 + $0x204] sm:$0xe]
    %v7123 = vld [vmem:[%s3994 + $0x208] sm:$0xf]
    %v7124 = vld [vmem:[%s3994 + $0x20c] sm:$0x1]
    %v7125 = vld [vmem:[%s3994 + $0x210] sm:$0xe]
    %v7126 = vld [vmem:[%s3994 + $0x214] sm:$0xf]
    %v7127 = vld [vmem:[%s3994 + $0x218] sm:$0x1]
    %v7128 = vld [vmem:[%s3994 + $0x21c] sm:$0xe]
    %v7129 = vld [vmem:[%s3994 + $0x220] sm:$0xf]
    %v7130 = vld [vmem:[%s3994 + $0x224] sm:$0x1]
    %v7131 = vld [vmem:[%s3994 + $0x228] sm:$0xe]
    %v7132 = vld [vmem:[%s3994 + $0x22c] sm:$0xf]
    %v7133 = vld [vmem:[%s3994 + $0x230] sm:$0x1]
    %v7134 = vld [vmem:[%s3994 + $0x234] sm:$0xe]
    %v7135 = vld [vmem:[%s3994 + $0x238] sm:$0xf]
    %v7136 = vld [vmem:[%s3994 + $0x23c] sm:$0x1]
    %v7137 = vld [vmem:[%s3994 + $0x240] sm:$0xe]
    %v7138 = vld [vmem:[%s3994 + $0x244] sm:$0xf]
    %v7139 = vld [vmem:[%s3994 + $0x248] sm:$0x1]
    %v7140 = vld [vmem:[%s3994 + $0x24c] sm:$0xe]
    %v7141 = vld [vmem:[%s3994 + $0x250] sm:$0xf]
    %v7142 = vld [vmem:[%s3994 + $0x254] sm:$0x1]
    %v7143 = vld [vmem:[%s3994 + $0x258] sm:$0xe]
    %v7144 = vld [vmem:[%s3994 + $0x25c] sm:$0xf]
    %v7145 = vld [vmem:[%s3994 + $0x260] sm:$0x1]
    %v7146 = vld [vmem:[%s3994 + $0x264] sm:$0xe]
    %v7147 = vld [vmem:[%s3994 + $0x268] sm:$0xf]
    %v7148 = vld [vmem:[%s3994 + $0x26c] sm:$0x1]
    %v7149 = vld [vmem:[%s3994 + $0x288] sm:$0xe]
    %v7150 = vld [vmem:[%s3994 + $0x28c] sm:$0xf]
    %v7151 = vld [vmem:[%s3994 + $0x290] sm:$0x1]
    %v7152 = vld [vmem:[%s3994 + $0x294] sm:$0xe]
    %v7153 = vld [vmem:[%s3994 + $0x298] sm:$0xf]
    %v7154 = vld [vmem:[%s3994 + $0x29c] sm:$0x1]
    %v7155 = vld [vmem:[%s3994 + $0x2a0] sm:$0xe]
    %v7156 = vld [vmem:[%s3994 + $0x2a4] sm:$0xf]
    %v7157 = vld [vmem:[%s3994 + $0x2a8] sm:$0x1]
    %v7158 = vld [vmem:[%s3994 + $0x2ac] sm:$0xe]
    %v7159 = vld [vmem:[%s3994 + $0x2b0] sm:$0xf]
    %v7160 = vld [vmem:[%s3994 + $0x2b4] sm:$0x1]
    %v7161 = vld [vmem:[%s3994 + $0x2b8] sm:$0xe]
    %v7162 = vld [vmem:[%s3994 + $0x2bc] sm:$0xf]
    %v7163 = vld [vmem:[%s3994 + $0x2c0] sm:$0x1]
    %v7164 = vld [vmem:[%s3994 + $0x2c4] sm:$0xe]
    %v7165 = vld [vmem:[%s3994 + $0x2c8] sm:$0xf]
    %v7166 = vld [vmem:[%s3994 + $0x2cc] sm:$0x1]
    %v7167 = vld [vmem:[%s3994 + $0x2d0] sm:$0xe]
    %v7168 = vld [vmem:[%s3994 + $0x2d4] sm:$0xf]
    %v7169 = vld [vmem:[%s3994 + $0x2d8] sm:$0x1]
    %v7170 = vld [vmem:[%s3994 + $0x2dc] sm:$0xe]
    %v7171 = vld [vmem:[%s3994 + $0x2e0] sm:$0xf]
    %v7172 = vld [vmem:[%s3994 + $0x2e4] sm:$0x1]
    %v7173 = vld [vmem:[%s3994 + $0x2e8] sm:$0xe]
    %v7174 = vld [vmem:[%s3994 + $0x2ec] sm:$0xf]
    %v7175 = vld [vmem:[%s3994 + $0x2f0] sm:$0x1]
    %v7176 = vld [vmem:[%s3994 + $0x2f4] sm:$0xe]
    %v7177 = vld [vmem:[%s3994 + $0x2f8] sm:$0xf]
    %v7178 = vld [vmem:[%s3994 + $0x2fc] sm:$0x1]
    %v7179 = vld [vmem:[%s3994 + $0x300] sm:$0xe]
    %v7180 = vld [vmem:[%s3994 + $0x304] sm:$0xf]
    %v7181 = vld [vmem:[%s3994 + $0x308] sm:$0x1]
    %v7182 = vld [vmem:[%s3994 + $0x30c] sm:$0xe]
    %v7183 = vld [vmem:[%s3994 + $0x310] sm:$0xf]
    %v7184 = vld [vmem:[%s3994 + $0x314] sm:$0x1]
    %v7185 = vld [vmem:[%s3994 + $0x318] sm:$0xe]
    %v7186 = vld [vmem:[%s3994 + $0x31c] sm:$0xf]
    %v7187 = vld [vmem:[%s3994 + $0x320] sm:$0x1]
    %v7188 = vld [vmem:[%s3994 + $0x324] sm:$0xe]
    %v7189 = vld [vmem:[%s3994 + $0x328] sm:$0xf]
    %v7190 = vld [vmem:[%s3994 + $0x32c] sm:$0x1]
    %v7191 = vld [vmem:[%s3994 + $0x330] sm:$0xe]
    %v7192 = vld [vmem:[%s3994 + $0x334] sm:$0xf]
    %v7193 = vld [vmem:[%s3994 + $0x338] sm:$0x1]
    %v7194 = vld [vmem:[%s3994 + $0x33c] sm:$0xe]
    %v7195 = vld [vmem:[%s3994 + $0x340] sm:$0xf]
    %v7196 = vld [vmem:[%s3994 + $0x344] sm:$0x1]
    %v7389 = vrot.slane %v7005, 5
    %v7390 = vrot.slane %v7389, 4
    %v7391 = vrot.slane %v7006, 5
    %v7392 = vsel %vm3032, %v7390, %v7391
    %v7393 = vrot.slane %v7391, 4
    %v7394 = vrot.slane %v7007, 5
    %v7395 = vsel %vm3032, %v7393, %v7394
    %v7396 = vrot.slane %v7008, 5
    %v7397 = vrot.slane %v7396, 4
    %v7398 = vrot.slane %v7009, 5
    %v7399 = vsel %vm3032, %v7397, %v7398
    %v7400 = vrot.slane %v7398, 4
    %v7401 = vrot.slane %v7010, 5
    %v7402 = vsel %vm3032, %v7400, %v7401
    %v7403 = vrot.slane %v7011, 5
    %v7404 = vrot.slane %v7403, 4
    %v7405 = vrot.slane %v7012, 5
    %v7406 = vsel %vm3032, %v7404, %v7405
    %v7407 = vrot.slane %v7405, 4
    %v7408 = vrot.slane %v7013, 5
    %v7409 = vsel %vm3032, %v7407, %v7408
    %v7410 = vrot.slane %v7014, 5
    %v7411 = vrot.slane %v7410, 4
    %v7412 = vrot.slane %v7015, 5
    %v7413 = vsel %vm3032, %v7411, %v7412
    %v7414 = vrot.slane %v7412, 4
    %v7415 = vrot.slane %v7016, 5
    %v7416 = vsel %vm3032, %v7414, %v7415
    %v7417 = vrot.slane %v7017, 5
    %v7418 = vrot.slane %v7417, 4
    %v7419 = vrot.slane %v7018, 5
    %v7420 = vsel %vm3032, %v7418, %v7419
    %v7421 = vrot.slane %v7419, 4
    %v7422 = vrot.slane %v7019, 5
    %v7423 = vsel %vm3032, %v7421, %v7422
    %v7424 = vrot.slane %v7020, 5
    %v7425 = vrot.slane %v7424, 4
    %v7426 = vrot.slane %v7021, 5
    %v7427 = vsel %vm3032, %v7425, %v7426
    %v7428 = vrot.slane %v7426, 4
    %v7429 = vrot.slane %v7022, 5
    %v7430 = vsel %vm3032, %v7428, %v7429
    %v7431 = vrot.slane %v7023, 5
    %v7432 = vrot.slane %v7431, 4
    %v7433 = vrot.slane %v7024, 5
    %v7434 = vsel %vm3032, %v7432, %v7433
    %v7435 = vrot.slane %v7433, 4
    %v7436 = vrot.slane %v7025, 5
    %v7437 = vsel %vm3032, %v7435, %v7436
    %v7438 = vrot.slane %v7026, 5
    %v7439 = vrot.slane %v7438, 4
    %v7440 = vrot.slane %v7027, 5
    %v7441 = vsel %vm3032, %v7439, %v7440
    %v7442 = vrot.slane %v7440, 4
    %v7443 = vrot.slane %v7028, 5
    %v7444 = vsel %vm3032, %v7442, %v7443
    %v7445 = vrot.slane %v7029, 5
    %v7446 = vrot.slane %v7445, 4
    %v7447 = vrot.slane %v7030, 5
    %v7448 = vsel %vm3032, %v7446, %v7447
    %v7449 = vrot.slane %v7447, 4
    %v7450 = vrot.slane %v7031, 5
    %v7451 = vsel %vm3032, %v7449, %v7450
    %v7452 = vrot.slane %v7032, 5
    %v7453 = vrot.slane %v7452, 4
    %v7454 = vrot.slane %v7033, 5
    %v7455 = vsel %vm3032, %v7453, %v7454
    %v7456 = vrot.slane %v7454, 4
    %v7457 = vrot.slane %v7034, 5
    %v7458 = vsel %vm3032, %v7456, %v7457
    %v7459 = vrot.slane %v7035, 5
    %v7460 = vrot.slane %v7459, 4
    %v7461 = vrot.slane %v7036, 5
    %v7462 = vsel %vm3032, %v7460, %v7461
    %v7463 = vrot.slane %v7461, 4
    %v7464 = vrot.slane %v7037, 5
    %v7465 = vsel %vm3032, %v7463, %v7464
    %v7466 = vrot.slane %v7038, 5
    %v7467 = vrot.slane %v7466, 4
    %v7468 = vrot.slane %v7039, 5
    %v7469 = vsel %vm3032, %v7467, %v7468
    %v7470 = vrot.slane %v7468, 4
    %v7471 = vrot.slane %v7040, 5
    %v7472 = vsel %vm3032, %v7470, %v7471
    %v7473 = vrot.slane %v7041, 5
    %v7474 = vrot.slane %v7473, 4
    %v7475 = vrot.slane %v7042, 5
    %v7476 = vsel %vm3032, %v7474, %v7475
    %v7477 = vrot.slane %v7475, 4
    %v7478 = vrot.slane %v7043, 5
    %v7479 = vsel %vm3032, %v7477, %v7478
    %v7480 = vrot.slane %v7044, 5
    %v7481 = vrot.slane %v7480, 4
    %v7482 = vrot.slane %v7045, 5
    %v7483 = vsel %vm3032, %v7481, %v7482
    %v7484 = vrot.slane %v7482, 4
    %v7485 = vrot.slane %v7046, 5
    %v7486 = vsel %vm3032, %v7484, %v7485
    %v7487 = vrot.slane %v7047, 5
    %v7488 = vrot.slane %v7487, 4
    %v7489 = vrot.slane %v7048, 5
    %v7490 = vsel %vm3032, %v7488, %v7489
    %v7491 = vrot.slane %v7489, 4
    %v7492 = vrot.slane %v7049, 5
    %v7493 = vsel %vm3032, %v7491, %v7492
    %v7494 = vrot.slane %v7050, 5
    %v7495 = vrot.slane %v7494, 4
    %v7496 = vrot.slane %v7051, 5
    %v7497 = vsel %vm3032, %v7495, %v7496
    %v7498 = vrot.slane %v7496, 4
    %v7499 = vrot.slane %v7052, 5
    %v7500 = vsel %vm3032, %v7498, %v7499
    %v7501 = vrot.slane %v7053, 5
    %v7502 = vrot.slane %v7501, 4
    %v7503 = vrot.slane %v7054, 5
    %v7504 = vsel %vm3032, %v7502, %v7503
    %v7505 = vrot.slane %v7503, 4
    %v7506 = vrot.slane %v7055, 5
    %v7507 = vsel %vm3032, %v7505, %v7506
    %v7508 = vrot.slane %v7056, 5
    %v7509 = vrot.slane %v7508, 4
    %v7510 = vrot.slane %v7057, 5
    %v7511 = vsel %vm3032, %v7509, %v7510
    %v7512 = vrot.slane %v7510, 4
    %v7513 = vrot.slane %v7058, 5
    %v7514 = vsel %vm3032, %v7512, %v7513
    %v7515 = vrot.slane %v7059, 5
    %v7516 = vrot.slane %v7515, 4
    %v7517 = vrot.slane %v7060, 5
    %v7518 = vsel %vm3032, %v7516, %v7517
    %v7519 = vrot.slane %v7517, 4
    %v7520 = vrot.slane %v7061, 5
    %v7521 = vsel %vm3032, %v7519, %v7520
    %v7522 = vrot.slane %v7062, 5
    %v7523 = vrot.slane %v7522, 4
    %v7524 = vrot.slane %v7063, 5
    %v7525 = vsel %vm3032, %v7523, %v7524
    %v7526 = vrot.slane %v7524, 4
    %v7527 = vrot.slane %v7064, 5
    %v7528 = vsel %vm3032, %v7526, %v7527
    %v7529 = vrot.slane %v7065, 5
    %v7530 = vrot.slane %v7529, 4
    %v7531 = vrot.slane %v7066, 5
    %v7532 = vsel %vm3032, %v7530, %v7531
    %v7533 = vrot.slane %v7531, 4
    %v7534 = vrot.slane %v7067, 5
    %v7535 = vsel %vm3032, %v7533, %v7534
    %v7536 = vrot.slane %v7068, 5
    %v7537 = vrot.slane %v7536, 4
    %v7538 = vrot.slane %v7069, 5
    %v7539 = vsel %vm3032, %v7537, %v7538
    %v7540 = vrot.slane %v7538, 4
    %v7541 = vrot.slane %v7070, 5
    %v7542 = vsel %vm3032, %v7540, %v7541
    %v7543 = vrot.slane %v7071, 5
    %v7544 = vrot.slane %v7543, 4
    %v7545 = vrot.slane %v7072, 5
    %v7546 = vsel %vm3032, %v7544, %v7545
    %v7547 = vrot.slane %v7545, 4
    %v7548 = vrot.slane %v7073, 5
    %v7549 = vsel %vm3032, %v7547, %v7548
    %v7550 = vrot.slane %v7074, 5
    %v7551 = vrot.slane %v7550, 4
    %v7552 = vrot.slane %v7075, 5
    %v7553 = vsel %vm3032, %v7551, %v7552
    %v7554 = vrot.slane %v7552, 4
    %v7555 = vrot.slane %v7076, 5
    %v7556 = vsel %vm3032, %v7554, %v7555
    %v7557 = vrot.slane %v7077, 5
    %v7558 = vrot.slane %v7557, 4
    %v7559 = vrot.slane %v7078, 5
    %v7560 = vsel %vm3032, %v7558, %v7559
    %v7561 = vrot.slane %v7559, 4
    %v7562 = vrot.slane %v7079, 5
    %v7563 = vsel %vm3032, %v7561, %v7562
    %v7564 = vrot.slane %v7080, 5
    %v7565 = vrot.slane %v7564, 4
    %v7566 = vrot.slane %v7081, 5
    %v7567 = vsel %vm3032, %v7565, %v7566
    %v7568 = vrot.slane %v7566, 4
    %v7569 = vrot.slane %v7082, 5
    %v7570 = vsel %vm3032, %v7568, %v7569
    %v7571 = vrot.slane %v7083, 5
    %v7572 = vrot.slane %v7571, 4
    %v7573 = vrot.slane %v7084, 5
    %v7574 = vsel %vm3032, %v7572, %v7573
    %v7575 = vrot.slane %v7573, 4
    %v7576 = vrot.slane %v7085, 5
    %v7577 = vsel %vm3032, %v7575, %v7576
    %v7578 = vrot.slane %v7086, 5
    %v7579 = vrot.slane %v7578, 4
    %v7580 = vrot.slane %v7087, 5
    %v7581 = vsel %vm3032, %v7579, %v7580
    %v7582 = vrot.slane %v7580, 4
    %v7583 = vrot.slane %v7088, 5
    %v7584 = vsel %vm3032, %v7582, %v7583
    %v7585 = vrot.slane %v7089, 5
    %v7586 = vrot.slane %v7585, 4
    %v7587 = vrot.slane %v7090, 5
    %v7588 = vsel %vm3032, %v7586, %v7587
    %v7589 = vrot.slane %v7587, 4
    %v7590 = vrot.slane %v7091, 5
    %v7591 = vsel %vm3032, %v7589, %v7590
    %v7592 = vrot.slane %v7092, 5
    %v7593 = vrot.slane %v7592, 4
    %v7594 = vrot.slane %v7093, 5
    %v7595 = vsel %vm3032, %v7593, %v7594
    %v7596 = vrot.slane %v7594, 4
    %v7597 = vrot.slane %v7094, 5
    %v7598 = vsel %vm3032, %v7596, %v7597
    %v7599 = vrot.slane %v7095, 5
    %v7600 = vrot.slane %v7599, 4
    %v7601 = vrot.slane %v7096, 5
    %v7602 = vsel %vm3032, %v7600, %v7601
    %v7603 = vrot.slane %v7601, 4
    %v7604 = vrot.slane %v7097, 5
    %v7605 = vsel %vm3032, %v7603, %v7604
    %v7606 = vrot.slane %v7098, 5
    %v7607 = vrot.slane %v7606, 4
    %v7608 = vrot.slane %v7099, 5
    %v7609 = vsel %vm3032, %v7607, %v7608
    %v7610 = vrot.slane %v7608, 4
    %v7611 = vrot.slane %v7100, 5
    %v7612 = vsel %vm3032, %v7610, %v7611
    %v7613 = vrot.slane %v7101, 5
    %v7614 = vrot.slane %v7613, 4
    %v7615 = vrot.slane %v7102, 5
    %v7616 = vsel %vm3032, %v7614, %v7615
    %v7617 = vrot.slane %v7615, 4
    %v7618 = vrot.slane %v7103, 5
    %v7619 = vsel %vm3032, %v7617, %v7618
    %v7620 = vrot.slane %v7104, 5
    %v7621 = vrot.slane %v7620, 4
    %v7622 = vrot.slane %v7105, 5
    %v7623 = vsel %vm3032, %v7621, %v7622
    %v7624 = vrot.slane %v7622, 4
    %v7625 = vrot.slane %v7106, 5
    %v7626 = vsel %vm3032, %v7624, %v7625
    %v7627 = vrot.slane %v7107, 5
    %v7628 = vrot.slane %v7627, 4
    %v7629 = vrot.slane %v7108, 5
    %v7630 = vsel %vm3032, %v7628, %v7629
    %v7631 = vrot.slane %v7629, 4
    %v7632 = vrot.slane %v7109, 5
    %v7633 = vsel %vm3032, %v7631, %v7632
    %v7634 = vrot.slane %v7110, 5
    %v7635 = vrot.slane %v7634, 4
    %v7636 = vrot.slane %v7111, 5
    %v7637 = vsel %vm3032, %v7635, %v7636
    %v7638 = vrot.slane %v7636, 4
    %v7639 = vrot.slane %v7112, 5
    %v7640 = vsel %vm3032, %v7638, %v7639
    %v7641 = vrot.slane %v7113, 5
    %v7642 = vrot.slane %v7641, 4
    %v7643 = vrot.slane %v7114, 5
    %v7644 = vsel %vm3032, %v7642, %v7643
    %v7645 = vrot.slane %v7643, 4
    %v7646 = vrot.slane %v7115, 5
    %v7647 = vsel %vm3032, %v7645, %v7646
    %v7648 = vrot.slane %v7116, 5
    %v7649 = vrot.slane %v7648, 4
    %v7650 = vrot.slane %v7117, 5
    %v7651 = vsel %vm3032, %v7649, %v7650
    %v7652 = vrot.slane %v7650, 4
    %v7653 = vrot.slane %v7118, 5
    %v7654 = vsel %vm3032, %v7652, %v7653
    %v7655 = vrot.slane %v7119, 5
    %v7656 = vrot.slane %v7655, 4
    %v7657 = vrot.slane %v7120, 5
    %v7658 = vsel %vm3032, %v7656, %v7657
    %v7659 = vrot.slane %v7657, 4
    %v7660 = vrot.slane %v7121, 5
    %v7661 = vsel %vm3032, %v7659, %v7660
    %v7662 = vrot.slane %v7122, 5
    %v7663 = vrot.slane %v7662, 4
    %v7664 = vrot.slane %v7123, 5
    %v7665 = vsel %vm3032, %v7663, %v7664
    %v7666 = vrot.slane %v7664, 4
    %v7667 = vrot.slane %v7124, 5
    %v7668 = vsel %vm3032, %v7666, %v7667
    %v7669 = vrot.slane %v7125, 5
    %v7670 = vrot.slane %v7669, 4
    %v7671 = vrot.slane %v7126, 5
    %v7672 = vsel %vm3032, %v7670, %v7671
    %v7673 = vrot.slane %v7671, 4
    %v7674 = vrot.slane %v7127, 5
    %v7675 = vsel %vm3032, %v7673, %v7674
    %v7676 = vrot.slane %v7128, 5
    %v7677 = vrot.slane %v7676, 4
    %v7678 = vrot.slane %v7129, 5
    %v7679 = vsel %vm3032, %v7677, %v7678
    %v7680 = vrot.slane %v7678, 4
    %v7681 = vrot.slane %v7130, 5
    %v7682 = vsel %vm3032, %v7680, %v7681
    %v7683 = vrot.slane %v7131, 5
    %v7684 = vrot.slane %v7683, 4
    %v7685 = vrot.slane %v7132, 5
    %v7686 = vsel %vm3032, %v7684, %v7685
    %v7687 = vrot.slane %v7685, 4
    %v7688 = vrot.slane %v7133, 5
    %v7689 = vsel %vm3032, %v7687, %v7688
    %v7690 = vrot.slane %v7134, 5
    %v7691 = vrot.slane %v7690, 4
    %v7692 = vrot.slane %v7135, 5
    %v7693 = vsel %vm3032, %v7691, %v7692
    %v7694 = vrot.slane %v7692, 4
    %v7695 = vrot.slane %v7136, 5
    %v7696 = vsel %vm3032, %v7694, %v7695
    %v7697 = vrot.slane %v7137, 5
    %v7698 = vrot.slane %v7697, 4
    %v7699 = vrot.slane %v7138, 5
    %v7700 = vsel %vm3032, %v7698, %v7699
    %v7701 = vrot.slane %v7699, 4
    %v7702 = vrot.slane %v7139, 5
    %v7703 = vsel %vm3032, %v7701, %v7702
    %v7704 = vrot.slane %v7140, 5
    %v7705 = vrot.slane %v7704, 4
    %v7706 = vrot.slane %v7141, 5
    %v7707 = vsel %vm3032, %v7705, %v7706
    %v7708 = vrot.slane %v7706, 4
    %v7709 = vrot.slane %v7142, 5
    %v7710 = vsel %vm3032, %v7708, %v7709
    %v7711 = vrot.slane %v7143, 5
    %v7712 = vrot.slane %v7711, 4
    %v7713 = vrot.slane %v7144, 5
    %v7714 = vsel %vm3032, %v7712, %v7713
    %v7715 = vrot.slane %v7713, 4
    %v7716 = vrot.slane %v7145, 5
    %v7717 = vsel %vm3032, %v7715, %v7716
    %v7718 = vrot.slane %v7146, 5
    %v7719 = vrot.slane %v7718, 4
    %v7720 = vrot.slane %v7147, 5
    %v7721 = vsel %vm3032, %v7719, %v7720
    %v7722 = vrot.slane %v7720, 4
    %v7723 = vrot.slane %v7148, 5
    %v7724 = vsel %vm3032, %v7722, %v7723
    %v7725 = vrot.slane %v7149, 5
    %v7726 = vrot.slane %v7725, 4
    %v7727 = vrot.slane %v7150, 5
    %v7728 = vsel %vm3032, %v7726, %v7727
    %v7729 = vrot.slane %v7727, 4
    %v7730 = vrot.slane %v7151, 5
    %v7731 = vsel %vm3032, %v7729, %v7730
    %v7732 = vrot.slane %v7152, 5
    %v7733 = vrot.slane %v7732, 4
    %v7734 = vrot.slane %v7153, 5
    %v7735 = vsel %vm3032, %v7733, %v7734
    %v7736 = vrot.slane %v7734, 4
    %v7737 = vrot.slane %v7154, 5
    %v7738 = vsel %vm3032, %v7736, %v7737
    %v7739 = vrot.slane %v7155, 5
    %v7740 = vrot.slane %v7739, 4
    %v7741 = vrot.slane %v7156, 5
    %v7742 = vsel %vm3032, %v7740, %v7741
    %v7743 = vrot.slane %v7741, 4
    %v7744 = vrot.slane %v7157, 5
    %v7745 = vsel %vm3032, %v7743, %v7744
    %v7746 = vrot.slane %v7158, 5
    %v7747 = vrot.slane %v7746, 4
    %v7748 = vrot.slane %v7159, 5
    %v7749 = vsel %vm3032, %v7747, %v7748
    %v7750 = vrot.slane %v7748, 4
    %v7751 = vrot.slane %v7160, 5
    %v7752 = vsel %vm3032, %v7750, %v7751
    %v7753 = vrot.slane %v7161, 5
    %v7754 = vrot.slane %v7753, 4
    %v7755 = vrot.slane %v7162, 5
    %v7756 = vsel %vm3032, %v7754, %v7755
    %v7757 = vrot.slane %v7755, 4
    %v7758 = vrot.slane %v7163, 5
    %v7759 = vsel %vm3032, %v7757, %v7758
    %v7760 = vrot.slane %v7164, 5
    %v7761 = vrot.slane %v7760, 4
    %v7762 = vrot.slane %v7165, 5
    %v7763 = vsel %vm3032, %v7761, %v7762
    %v7764 = vrot.slane %v7762, 4
    %v7765 = vrot.slane %v7166, 5
    %v7766 = vsel %vm3032, %v7764, %v7765
    %v7767 = vrot.slane %v7167, 5
    %v7768 = vrot.slane %v7767, 4
    %v7769 = vrot.slane %v7168, 5
    %v7770 = vsel %vm3032, %v7768, %v7769
    %v7771 = vrot.slane %v7769, 4
    %v7772 = vrot.slane %v7169, 5
    %v7773 = vsel %vm3032, %v7771, %v7772
    %v7774 = vrot.slane %v7170, 5
    %v7775 = vrot.slane %v7774, 4
    %v7776 = vrot.slane %v7171, 5
    %v7777 = vsel %vm3032, %v7775, %v7776
    %v7778 = vrot.slane %v7776, 4
    %v7779 = vrot.slane %v7172, 5
    %v7780 = vsel %vm3032, %v7778, %v7779
    %v7781 = vrot.slane %v7173, 5
    %v7782 = vrot.slane %v7781, 4
    %v7783 = vrot.slane %v7174, 5
    %v7784 = vsel %vm3032, %v7782, %v7783
    %v7785 = vrot.slane %v7783, 4
    %v7786 = vrot.slane %v7175, 5
    %v7787 = vsel %vm3032, %v7785, %v7786
    %v7788 = vrot.slane %v7176, 5
    %v7789 = vrot.slane %v7788, 4
    %v7790 = vrot.slane %v7177, 5
    %v7791 = vsel %vm3032, %v7789, %v7790
    %v7792 = vrot.slane %v7790, 4
    %v7793 = vrot.slane %v7178, 5
    %v7794 = vsel %vm3032, %v7792, %v7793
    %v7795 = vrot.slane %v7179, 5
    %v7796 = vrot.slane %v7795, 4
    %v7797 = vrot.slane %v7180, 5
    %v7798 = vsel %vm3032, %v7796, %v7797
    %v7799 = vrot.slane %v7797, 4
    %v7800 = vrot.slane %v7181, 5
    %v7801 = vsel %vm3032, %v7799, %v7800
    %v7802 = vrot.slane %v7182, 5
    %v7803 = vrot.slane %v7802, 4
    %v7804 = vrot.slane %v7183, 5
    %v7805 = vsel %vm3032, %v7803, %v7804
    %v7806 = vrot.slane %v7804, 4
    %v7807 = vrot.slane %v7184, 5
    %v7808 = vsel %vm3032, %v7806, %v7807
    %v7809 = vrot.slane %v7185, 5
    %v7810 = vrot.slane %v7809, 4
    %v7811 = vrot.slane %v7186, 5
    %v7812 = vsel %vm3032, %v7810, %v7811
    %v7813 = vrot.slane %v7811, 4
    %v7814 = vrot.slane %v7187, 5
    %v7815 = vsel %vm3032, %v7813, %v7814
    %v7816 = vrot.slane %v7188, 5
    %v7817 = vrot.slane %v7816, 4
    %v7818 = vrot.slane %v7189, 5
    %v7819 = vsel %vm3032, %v7817, %v7818
    %v7820 = vrot.slane %v7818, 4
    %v7821 = vrot.slane %v7190, 5
    %v7822 = vsel %vm3032, %v7820, %v7821
    %v7823 = vrot.slane %v7191, 5
    %v7824 = vrot.slane %v7823, 4
    %v7825 = vrot.slane %v7192, 5
    %v7826 = vsel %vm3032, %v7824, %v7825
    %v7827 = vrot.slane %v7825, 4
    %v7828 = vrot.slane %v7193, 5
    %v7829 = vsel %vm3032, %v7827, %v7828
    %v7830 = vrot.slane %v7194, 5
    %v7831 = vrot.slane %v7830, 4
    %v7832 = vrot.slane %v7195, 5
    %v7833 = vsel %vm3032, %v7831, %v7832
    %v7834 = vrot.slane %v7832, 4
    %v7835 = vrot.slane %v7196, 5
    %v7836 = vsel %vm3032, %v7834, %v7835
    %7837 = vrot.lane.b32.xlu0 %v7392, 80
    %v7838 = vpop.permute.xlu0 %7837
    %7839 = vrot.lane.b32.xlu0 %v7395, 80
    %v7840 = vpop.permute.xlu0 %7839
    %7841 = vrot.lane.b32.xlu0 %v7399, 80
    %v7842 = vpop.permute.xlu0 %7841
    %7843 = vrot.lane.b32.xlu0 %v7402, 80
    %v7844 = vpop.permute.xlu0 %7843
    %7845 = vrot.lane.b32.xlu0 %v7406, 80
    %v7846 = vpop.permute.xlu0 %7845
    %7847 = vrot.lane.b32.xlu0 %v7409, 80
    %v7848 = vpop.permute.xlu0 %7847
    %7849 = vrot.lane.b32.xlu0 %v7413, 80
    %v7850 = vpop.permute.xlu0 %7849
    %7851 = vrot.lane.b32.xlu0 %v7416, 80
    %v7852 = vpop.permute.xlu0 %7851
    %7853 = vrot.lane.b32.xlu0 %v7420, 80
    %v7854 = vpop.permute.xlu0 %7853
    %7855 = vrot.lane.b32.xlu0 %v7423, 80
    %v7856 = vpop.permute.xlu0 %7855
    %7857 = vrot.lane.b32.xlu0 %v7427, 80
    %v7858 = vpop.permute.xlu0 %7857
    %7859 = vrot.lane.b32.xlu0 %v7430, 80
    %v7860 = vpop.permute.xlu0 %7859
    %7861 = vrot.lane.b32.xlu0 %v7434, 80
    %v7862 = vpop.permute.xlu0 %7861
    %7863 = vrot.lane.b32.xlu0 %v7437, 80
    %v7864 = vpop.permute.xlu0 %7863
    %7865 = vrot.lane.b32.xlu0 %v7441, 80
    %v7866 = vpop.permute.xlu0 %7865
    %7867 = vrot.lane.b32.xlu0 %v7444, 80
    %v7868 = vpop.permute.xlu0 %7867
    %7869 = vrot.lane.b32.xlu0 %v7448, 80
    %v7870 = vpop.permute.xlu0 %7869
    %7871 = vrot.lane.b32.xlu0 %v7451, 80
    %v7872 = vpop.permute.xlu0 %7871
    %7873 = vrot.lane.b32.xlu0 %v7455, 80
    %v7874 = vpop.permute.xlu0 %7873
    %7875 = vrot.lane.b32.xlu0 %v7458, 80
    %v7876 = vpop.permute.xlu0 %7875
    %7877 = vrot.lane.b32.xlu0 %v7462, 80
    %v7878 = vpop.permute.xlu0 %7877
    %7879 = vrot.lane.b32.xlu0 %v7465, 80
    %v7880 = vpop.permute.xlu0 %7879
    %7881 = vrot.lane.b32.xlu0 %v7469, 80
    %v7882 = vpop.permute.xlu0 %7881
    %7883 = vrot.lane.b32.xlu0 %v7472, 80
    %v7884 = vpop.permute.xlu0 %7883
    %7885 = vrot.lane.b32.xlu0 %v7476, 80
    %v7886 = vpop.permute.xlu0 %7885
    %7887 = vrot.lane.b32.xlu0 %v7479, 80
    %v7888 = vpop.permute.xlu0 %7887
    %7889 = vrot.lane.b32.xlu0 %v7483, 80
    %v7890 = vpop.permute.xlu0 %7889
    %7891 = vrot.lane.b32.xlu0 %v7486, 80
    %v7892 = vpop.permute.xlu0 %7891
    %7893 = vrot.lane.b32.xlu0 %v7490, 80
    %v7894 = vpop.permute.xlu0 %7893
    %7895 = vrot.lane.b32.xlu0 %v7493, 80
    %v7896 = vpop.permute.xlu0 %7895
    %7897 = vrot.lane.b32.xlu0 %v7497, 80
    %v7898 = vpop.permute.xlu0 %7897
    %7899 = vrot.lane.b32.xlu0 %v7500, 80
    %v7900 = vpop.permute.xlu0 %7899
    %7901 = vrot.lane.b32.xlu0 %v7504, 80
    %v7902 = vpop.permute.xlu0 %7901
    %7903 = vrot.lane.b32.xlu0 %v7507, 80
    %v7904 = vpop.permute.xlu0 %7903
    %7905 = vrot.lane.b32.xlu0 %v7511, 80
    %v7906 = vpop.permute.xlu0 %7905
    %7907 = vrot.lane.b32.xlu0 %v7514, 80
    %v7908 = vpop.permute.xlu0 %7907
    %7909 = vrot.lane.b32.xlu0 %v7518, 80
    %v7910 = vpop.permute.xlu0 %7909
    %7911 = vrot.lane.b32.xlu0 %v7521, 80
    %v7912 = vpop.permute.xlu0 %7911
    %7913 = vrot.lane.b32.xlu0 %v7525, 80
    %v7914 = vpop.permute.xlu0 %7913
    %7915 = vrot.lane.b32.xlu0 %v7528, 80
    %v7916 = vpop.permute.xlu0 %7915
    %7917 = vrot.lane.b32.xlu0 %v7532, 80
    %v7918 = vpop.permute.xlu0 %7917
    %7919 = vrot.lane.b32.xlu0 %v7535, 80
    %v7920 = vpop.permute.xlu0 %7919
    %7921 = vrot.lane.b32.xlu0 %v7539, 80
    %v7922 = vpop.permute.xlu0 %7921
    %7923 = vrot.lane.b32.xlu0 %v7542, 80
    %v7924 = vpop.permute.xlu0 %7923
    %7925 = vrot.lane.b32.xlu0 %v7546, 80
    %v7926 = vpop.permute.xlu0 %7925
    %7927 = vrot.lane.b32.xlu0 %v7549, 80
    %v7928 = vpop.permute.xlu0 %7927
    %7929 = vrot.lane.b32.xlu0 %v7553, 80
    %v7930 = vpop.permute.xlu0 %7929
    %7931 = vrot.lane.b32.xlu0 %v7556, 80
    %v7932 = vpop.permute.xlu0 %7931
    %7933 = vrot.lane.b32.xlu0 %v7560, 80
    %v7934 = vpop.permute.xlu0 %7933
    %7935 = vrot.lane.b32.xlu0 %v7563, 80
    %v7936 = vpop.permute.xlu0 %7935
    %7937 = vrot.lane.b32.xlu0 %v7567, 80
    %v7938 = vpop.permute.xlu0 %7937
    %7939 = vrot.lane.b32.xlu0 %v7570, 80
    %v7940 = vpop.permute.xlu0 %7939
    %7941 = vrot.lane.b32.xlu0 %v7574, 80
    %v7942 = vpop.permute.xlu0 %7941
    %7943 = vrot.lane.b32.xlu0 %v7577, 80
    %v7944 = vpop.permute.xlu0 %7943
    %7945 = vrot.lane.b32.xlu0 %v7581, 80
    %v7946 = vpop.permute.xlu0 %7945
    %7947 = vrot.lane.b32.xlu0 %v7584, 80
    %v7948 = vpop.permute.xlu0 %7947
    %7949 = vrot.lane.b32.xlu0 %v7588, 80
    %v7950 = vpop.permute.xlu0 %7949
    %7951 = vrot.lane.b32.xlu0 %v7591, 80
    %v7952 = vpop.permute.xlu0 %7951
    %7953 = vrot.lane.b32.xlu0 %v7595, 80
    %v7954 = vpop.permute.xlu0 %7953
    %7955 = vrot.lane.b32.xlu0 %v7598, 80
    %v7956 = vpop.permute.xlu0 %7955
    %7957 = vrot.lane.b32.xlu0 %v7602, 80
    %v7958 = vpop.permute.xlu0 %7957
    %7959 = vrot.lane.b32.xlu0 %v7605, 80
    %v7960 = vpop.permute.xlu0 %7959
    %7961 = vrot.lane.b32.xlu0 %v7609, 80
    %v7962 = vpop.permute.xlu0 %7961
    %7963 = vrot.lane.b32.xlu0 %v7612, 80
    %v7964 = vpop.permute.xlu0 %7963
    %7965 = vrot.lane.b32.xlu0 %v7616, 80
    %v7966 = vpop.permute.xlu0 %7965
    %7967 = vrot.lane.b32.xlu0 %v7619, 80
    %v7968 = vpop.permute.xlu0 %7967
    %7969 = vrot.lane.b32.xlu0 %v7623, 80
    %v7970 = vpop.permute.xlu0 %7969
    %7971 = vrot.lane.b32.xlu0 %v7626, 80
    %v7972 = vpop.permute.xlu0 %7971
    %7973 = vrot.lane.b32.xlu0 %v7630, 80
    %v7974 = vpop.permute.xlu0 %7973
    %7975 = vrot.lane.b32.xlu0 %v7633, 80
    %v7976 = vpop.permute.xlu0 %7975
    %7977 = vrot.lane.b32.xlu0 %v7637, 80
    %v7978 = vpop.permute.xlu0 %7977
    %7979 = vrot.lane.b32.xlu0 %v7640, 80
    %v7980 = vpop.permute.xlu0 %7979
    %7981 = vrot.lane.b32.xlu0 %v7644, 80
    %v7982 = vpop.permute.xlu0 %7981
    %7983 = vrot.lane.b32.xlu0 %v7647, 80
    %v7984 = vpop.permute.xlu0 %7983
    %7985 = vrot.lane.b32.xlu0 %v7651, 80
    %v7986 = vpop.permute.xlu0 %7985
    %7987 = vrot.lane.b32.xlu0 %v7654, 80
    %v7988 = vpop.permute.xlu0 %7987
    %7989 = vrot.lane.b32.xlu0 %v7658, 80
    %v7990 = vpop.permute.xlu0 %7989
    %7991 = vrot.lane.b32.xlu0 %v7661, 80
    %v7992 = vpop.permute.xlu0 %7991
    %7993 = vrot.lane.b32.xlu0 %v7665, 80
    %v7994 = vpop.permute.xlu0 %7993
    %7995 = vrot.lane.b32.xlu0 %v7668, 80
    %v7996 = vpop.permute.xlu0 %7995
    %7997 = vrot.lane.b32.xlu0 %v7672, 80
    %v7998 = vpop.permute.xlu0 %7997
    %7999 = vrot.lane.b32.xlu0 %v7675, 80
    %v8000 = vpop.permute.xlu0 %7999
    %8001 = vrot.lane.b32.xlu0 %v7679, 80
    %v8002 = vpop.permute.xlu0 %8001
    %8003 = vrot.lane.b32.xlu0 %v7682, 80
    %v8004 = vpop.permute.xlu0 %8003
    %8005 = vrot.lane.b32.xlu0 %v7686, 80
    %v8006 = vpop.permute.xlu0 %8005
    %8007 = vrot.lane.b32.xlu0 %v7689, 80
    %v8008 = vpop.permute.xlu0 %8007
    %8009 = vrot.lane.b32.xlu0 %v7693, 80
    %v8010 = vpop.permute.xlu0 %8009
    %8011 = vrot.lane.b32.xlu0 %v7696, 80
    %v8012 = vpop.permute.xlu0 %8011
    %8013 = vrot.lane.b32.xlu0 %v7700, 80
    %v8014 = vpop.permute.xlu0 %8013
    %8015 = vrot.lane.b32.xlu0 %v7703, 80
    %v8016 = vpop.permute.xlu0 %8015
    %8017 = vrot.lane.b32.xlu0 %v7707, 80
    %v8018 = vpop.permute.xlu0 %8017
    %8019 = vrot.lane.b32.xlu0 %v7710, 80
    %v8020 = vpop.permute.xlu0 %8019
    %8021 = vrot.lane.b32.xlu0 %v7714, 80
    %v8022 = vpop.permute.xlu0 %8021
    %8023 = vrot.lane.b32.xlu0 %v7717, 80
    %v8024 = vpop.permute.xlu0 %8023
    %8025 = vrot.lane.b32.xlu0 %v7721, 80
    %v8026 = vpop.permute.xlu0 %8025
    %8027 = vrot.lane.b32.xlu0 %v7724, 80
    %v8028 = vpop.permute.xlu0 %8027
    %8029 = vrot.lane.b32.xlu0 %v7728, 80
    %v8030 = vpop.permute.xlu0 %8029
    %8031 = vrot.lane.b32.xlu0 %v7731, 80
    %v8032 = vpop.permute.xlu0 %8031
    %8033 = vrot.lane.b32.xlu0 %v7735, 80
    %v8034 = vpop.permute.xlu0 %8033
    %8035 = vrot.lane.b32.xlu0 %v7738, 80
    %v8036 = vpop.permute.xlu0 %8035
    %8037 = vrot.lane.b32.xlu0 %v7742, 80
    %v8038 = vpop.permute.xlu0 %8037
    %8039 = vrot.lane.b32.xlu0 %v7745, 80
    %v8040 = vpop.permute.xlu0 %8039
    %8041 = vrot.lane.b32.xlu0 %v7749, 80
    %v8042 = vpop.permute.xlu0 %8041
    %8043 = vrot.lane.b32.xlu0 %v7752, 80
    %v8044 = vpop.permute.xlu0 %8043
    %8045 = vrot.lane.b32.xlu0 %v7756, 80
    %v8046 = vpop.permute.xlu0 %8045
    %8047 = vrot.lane.b32.xlu0 %v7759, 80
    %v8048 = vpop.permute.xlu0 %8047
    %8049 = vrot.lane.b32.xlu0 %v7763, 80
    %v8050 = vpop.permute.xlu0 %8049
    %8051 = vrot.lane.b32.xlu0 %v7766, 80
    %v8052 = vpop.permute.xlu0 %8051
    %8053 = vrot.lane.b32.xlu0 %v7770, 80
    %v8054 = vpop.permute.xlu0 %8053
    %8055 = vrot.lane.b32.xlu0 %v7773, 80
    %v8056 = vpop.permute.xlu0 %8055
    %8057 = vrot.lane.b32.xlu0 %v7777, 80
    %v8058 = vpop.permute.xlu0 %8057
    %8059 = vrot.lane.b32.xlu0 %v7780, 80
    %v8060 = vpop.permute.xlu0 %8059
    %8061 = vrot.lane.b32.xlu0 %v7784, 80
    %v8062 = vpop.permute.xlu0 %8061
    %8063 = vrot.lane.b32.xlu0 %v7787, 80
    %v8064 = vpop.permute.xlu0 %8063
    %8065 = vrot.lane.b32.xlu0 %v7791, 80
    %v8066 = vpop.permute.xlu0 %8065
    %8067 = vrot.lane.b32.xlu0 %v7794, 80
    %v8068 = vpop.permute.xlu0 %8067
    %8069 = vrot.lane.b32.xlu0 %v7798, 80
    %v8070 = vpop.permute.xlu0 %8069
    %8071 = vrot.lane.b32.xlu0 %v7801, 80
    %v8072 = vpop.permute.xlu0 %8071
    %8073 = vrot.lane.b32.xlu0 %v7805, 80
    %v8074 = vpop.permute.xlu0 %8073
    %8075 = vrot.lane.b32.xlu0 %v7808, 80
    %v8076 = vpop.permute.xlu0 %8075
    %8077 = vrot.lane.b32.xlu0 %v7812, 80
    %v8078 = vpop.permute.xlu0 %8077
    %8079 = vrot.lane.b32.xlu0 %v7815, 80
    %v8080 = vpop.permute.xlu0 %8079
    %8081 = vrot.lane.b32.xlu0 %v7819, 80
    %v8082 = vpop.permute.xlu0 %8081
    %8083 = vrot.lane.b32.xlu0 %v7822, 80
    %v8084 = vpop.permute.xlu0 %8083
    %8085 = vrot.lane.b32.xlu0 %v7826, 80
    %v8086 = vpop.permute.xlu0 %8085
    %8087 = vrot.lane.b32.xlu0 %v7829, 80
    %v8088 = vpop.permute.xlu0 %8087
    %8089 = vrot.lane.b32.xlu0 %v7833, 80
    %v8090 = vpop.permute.xlu0 %8089
    %8091 = vrot.lane.b32.xlu0 %v7836, 80
    %v8092 = vpop.permute.xlu0 %8091
    %vm8221 = vcmask 781952
    %8222 = vst.msk [vmem:[#allocation2] sm:$0xf] %vm8221, %v7838
    %8223 = vst.msk [vmem:[#allocation2 + $0x8] sm:$0xf] %vm8221, %v7840
    %8224 = vst.msk [vmem:[#allocation2 + $0x10] sm:$0xf] %vm8221, %v7842
    %8225 = vst.msk [vmem:[#allocation2 + $0x18] sm:$0xf] %vm8221, %v7844
    %8226 = vst.msk [vmem:[#allocation2 + $0x20] sm:$0xf] %vm8221, %v7846
    %8227 = vst.msk [vmem:[#allocation2 + $0x28] sm:$0xf] %vm8221, %v7848
    %8228 = vst.msk [vmem:[#allocation2 + $0x30] sm:$0xf] %vm8221, %v7850
    %8229 = vst.msk [vmem:[#allocation2 + $0x38] sm:$0xf] %vm8221, %v7852
    %8230 = vst.msk [vmem:[#allocation2 + $0x40] sm:$0xf] %vm8221, %v7854
    %8231 = vst.msk [vmem:[#allocation2 + $0x48] sm:$0xf] %vm8221, %v7856
    %8232 = vst.msk [vmem:[#allocation2 + $0x50] sm:$0xf] %vm8221, %v7858
    %8233 = vst.msk [vmem:[#allocation2 + $0x58] sm:$0xf] %vm8221, %v7860
    %8234 = vst.msk [vmem:[#allocation2 + $0x60] sm:$0xf] %vm8221, %v7862
    %8235 = vst.msk [vmem:[#allocation2 + $0x68] sm:$0xf] %vm8221, %v7864
    %8236 = vst.msk [vmem:[#allocation2 + $0x70] sm:$0xf] %vm8221, %v7866
    %8237 = vst.msk [vmem:[#allocation2 + $0x78] sm:$0xf] %vm8221, %v7868
    %8238 = vst.msk [vmem:[#allocation2 + $0x80] sm:$0xf] %vm8221, %v7870
    %8239 = vst.msk [vmem:[#allocation2 + $0x88] sm:$0xf] %vm8221, %v7872
    %8240 = vst.msk [vmem:[#allocation2 + $0x90] sm:$0xf] %vm8221, %v7874
    %8241 = vst.msk [vmem:[#allocation2 + $0x98] sm:$0xf] %vm8221, %v7876
    %8242 = vst.msk [vmem:[#allocation2 + $0xa0] sm:$0xf] %vm8221, %v7878
    %8243 = vst.msk [vmem:[#allocation2 + $0xa8] sm:$0xf] %vm8221, %v7880
    %8244 = vst.msk [vmem:[#allocation2 + $0xb0] sm:$0xf] %vm8221, %v7882
    %8245 = vst.msk [vmem:[#allocation2 + $0xb8] sm:$0xf] %vm8221, %v7884
    %8246 = vst.msk [vmem:[#allocation2 + $0xc0] sm:$0xf] %vm8221, %v7886
    %8247 = vst.msk [vmem:[#allocation2 + $0xc8] sm:$0xf] %vm8221, %v7888
    %8248 = vst.msk [vmem:[#allocation2 + $0xd0] sm:$0xf] %vm8221, %v7890
    %8249 = vst.msk [vmem:[#allocation2 + $0xd8] sm:$0xf] %vm8221, %v7892
    %8250 = vst.msk [vmem:[#allocation2 + $0xe0] sm:$0xf] %vm8221, %v7894
    %8251 = vst.msk [vmem:[#allocation2 + $0xe8] sm:$0xf] %vm8221, %v7896
    %8252 = vst.msk [vmem:[#allocation2 + $0xf0] sm:$0xf] %vm8221, %v7898
    %8253 = vst.msk [vmem:[#allocation2 + $0xf8] sm:$0xf] %vm8221, %v7900
    %8254 = vst.msk [vmem:[#allocation2 + $0x100] sm:$0xf] %vm8221, %v7902
    %8255 = vst.msk [vmem:[#allocation2 + $0x108] sm:$0xf] %vm8221, %v7904
    %8256 = vst.msk [vmem:[#allocation2 + $0x110] sm:$0xf] %vm8221, %v7906
    %8257 = vst.msk [vmem:[#allocation2 + $0x118] sm:$0xf] %vm8221, %v7908
    %8258 = vst.msk [vmem:[#allocation2 + $0x120] sm:$0xf] %vm8221, %v7910
    %8259 = vst.msk [vmem:[#allocation2 + $0x128] sm:$0xf] %vm8221, %v7912
    %8260 = vst.msk [vmem:[#allocation2 + $0x130] sm:$0xf] %vm8221, %v7914
    %8261 = vst.msk [vmem:[#allocation2 + $0x138] sm:$0xf] %vm8221, %v7916
    %8262 = vst.msk [vmem:[#allocation2 + $0x140] sm:$0xf] %vm8221, %v7918
    %8263 = vst.msk [vmem:[#allocation2 + $0x148] sm:$0xf] %vm8221, %v7920
    %8264 = vst.msk [vmem:[#allocation2 + $0x150] sm:$0xf] %vm8221, %v7922
    %8265 = vst.msk [vmem:[#allocation2 + $0x158] sm:$0xf] %vm8221, %v7924
    %8266 = vst.msk [vmem:[#allocation2 + $0x160] sm:$0xf] %vm8221, %v7926
    %8267 = vst.msk [vmem:[#allocation2 + $0x168] sm:$0xf] %vm8221, %v7928
    %8268 = vst.msk [vmem:[#allocation2 + $0x170] sm:$0xf] %vm8221, %v7930
    %8269 = vst.msk [vmem:[#allocation2 + $0x178] sm:$0xf] %vm8221, %v7932
    %8270 = vst.msk [vmem:[#allocation2 + $0x180] sm:$0xf] %vm8221, %v7934
    %8271 = vst.msk [vmem:[#allocation2 + $0x188] sm:$0xf] %vm8221, %v7936
    %8272 = vst.msk [vmem:[#allocation2 + $0x190] sm:$0xf] %vm8221, %v7938
    %8273 = vst.msk [vmem:[#allocation2 + $0x198] sm:$0xf] %vm8221, %v7940
    %8274 = vst.msk [vmem:[#allocation2 + $0x1a0] sm:$0xf] %vm8221, %v7942
    %8275 = vst.msk [vmem:[#allocation2 + $0x1a8] sm:$0xf] %vm8221, %v7944
    %8276 = vst.msk [vmem:[#allocation2 + $0x1b0] sm:$0xf] %vm8221, %v7946
    %8277 = vst.msk [vmem:[#allocation2 + $0x1b8] sm:$0xf] %vm8221, %v7948
    %8278 = vst.msk [vmem:[#allocation2 + $0x1c0] sm:$0xf] %vm8221, %v7950
    %8279 = vst.msk [vmem:[#allocation2 + $0x1c8] sm:$0xf] %vm8221, %v7952
    %8280 = vst.msk [vmem:[#allocation2 + $0x1d0] sm:$0xf] %vm8221, %v7954
    %8281 = vst.msk [vmem:[#allocation2 + $0x1d8] sm:$0xf] %vm8221, %v7956
    %8282 = vst.msk [vmem:[#allocation2 + $0x1e0] sm:$0xf] %vm8221, %v7958
    %8283 = vst.msk [vmem:[#allocation2 + $0x1e8] sm:$0xf] %vm8221, %v7960
    %8284 = vst.msk [vmem:[#allocation2 + $0x1f0] sm:$0xf] %vm8221, %v7962
    %8285 = vst.msk [vmem:[#allocation2 + $0x1f8] sm:$0xf] %vm8221, %v7964
    %8286 = vst.msk [vmem:[#allocation2 + $0x200] sm:$0xf] %vm8221, %v7966
    %8287 = vst.msk [vmem:[#allocation2 + $0x208] sm:$0xf] %vm8221, %v7968
    %8288 = vst.msk [vmem:[#allocation2 + $0x210] sm:$0xf] %vm8221, %v7970
    %8289 = vst.msk [vmem:[#allocation2 + $0x218] sm:$0xf] %vm8221, %v7972
    %8290 = vst.msk [vmem:[#allocation2 + $0x220] sm:$0xf] %vm8221, %v7974
    %8291 = vst.msk [vmem:[#allocation2 + $0x228] sm:$0xf] %vm8221, %v7976
    %8292 = vst.msk [vmem:[#allocation2 + $0x230] sm:$0xf] %vm8221, %v7978
    %8293 = vst.msk [vmem:[#allocation2 + $0x238] sm:$0xf] %vm8221, %v7980
    %8294 = vst.msk [vmem:[#allocation2 + $0x240] sm:$0xf] %vm8221, %v7982
    %8295 = vst.msk [vmem:[#allocation2 + $0x248] sm:$0xf] %vm8221, %v7984
    %8296 = vst.msk [vmem:[#allocation2 + $0x250] sm:$0xf] %vm8221, %v7986
    %8297 = vst.msk [vmem:[#allocation2 + $0x258] sm:$0xf] %vm8221, %v7988
    %8298 = vst.msk [vmem:[#allocation2 + $0x260] sm:$0xf] %vm8221, %v7990
    %8299 = vst.msk [vmem:[#allocation2 + $0x268] sm:$0xf] %vm8221, %v7992
    %8300 = vst.msk [vmem:[#allocation2 + $0x270] sm:$0xf] %vm8221, %v7994
    %8301 = vst.msk [vmem:[#allocation2 + $0x278] sm:$0xf] %vm8221, %v7996
    %8302 = vst.msk [vmem:[#allocation2 + $0x280] sm:$0xf] %vm8221, %v7998
    %8303 = vst.msk [vmem:[#allocation2 + $0x288] sm:$0xf] %vm8221, %v8000
    %8304 = vst.msk [vmem:[#allocation2 + $0x290] sm:$0xf] %vm8221, %v8002
    %8305 = vst.msk [vmem:[#allocation2 + $0x298] sm:$0xf] %vm8221, %v8004
    %8306 = vst.msk [vmem:[#allocation2 + $0x2a0] sm:$0xf] %vm8221, %v8006
    %8307 = vst.msk [vmem:[#allocation2 + $0x2a8] sm:$0xf] %vm8221, %v8008
    %8308 = vst.msk [vmem:[#allocation2 + $0x2b0] sm:$0xf] %vm8221, %v8010
    %8309 = vst.msk [vmem:[#allocation2 + $0x2b8] sm:$0xf] %vm8221, %v8012
    %8310 = vst.msk [vmem:[#allocation2 + $0x2c0] sm:$0xf] %vm8221, %v8014
    %8311 = vst.msk [vmem:[#allocation2 + $0x2c8] sm:$0xf] %vm8221, %v8016
    %8312 = vst.msk [vmem:[#allocation2 + $0x2d0] sm:$0xf] %vm8221, %v8018
    %8313 = vst.msk [vmem:[#allocation2 + $0x2d8] sm:$0xf] %vm8221, %v8020
    %8314 = vst.msk [vmem:[#allocation2 + $0x2e0] sm:$0xf] %vm8221, %v8022
    %8315 = vst.msk [vmem:[#allocation2 + $0x2e8] sm:$0xf] %vm8221, %v8024
    %8316 = vst.msk [vmem:[#allocation2 + $0x2f0] sm:$0xf] %vm8221, %v8026
    %8317 = vst.msk [vmem:[#allocation2 + $0x2f8] sm:$0xf] %vm8221, %v8028
    %8318 = vst.msk [vmem:[#allocation2 + $0x300] sm:$0xf] %vm8221, %v8030
    %8319 = vst.msk [vmem:[#allocation2 + $0x308] sm:$0xf] %vm8221, %v8032
    %8320 = vst.msk [vmem:[#allocation2 + $0x310] sm:$0xf] %vm8221, %v8034
    %8321 = vst.msk [vmem:[#allocation2 + $0x318] sm:$0xf] %vm8221, %v8036
    %8322 = vst.msk [vmem:[#allocation2 + $0x320] sm:$0xf] %vm8221, %v8038
    %8323 = vst.msk [vmem:[#allocation2 + $0x328] sm:$0xf] %vm8221, %v8040
    %8324 = vst.msk [vmem:[#allocation2 + $0x330] sm:$0xf] %vm8221, %v8042
    %8325 = vst.msk [vmem:[#allocation2 + $0x338] sm:$0xf] %vm8221, %v8044
    %8326 = vst.msk [vmem:[#allocation2 + $0x340] sm:$0xf] %vm8221, %v8046
    %8327 = vst.msk [vmem:[#allocation2 + $0x348] sm:$0xf] %vm8221, %v8048
    %8328 = vst.msk [vmem:[#allocation2 + $0x350] sm:$0xf] %vm8221, %v8050
    %8329 = vst.msk [vmem:[#allocation2 + $0x358] sm:$0xf] %vm8221, %v8052
    %8330 = vst.msk [vmem:[#allocation2 + $0x360] sm:$0xf] %vm8221, %v8054
    %8331 = vst.msk [vmem:[#allocation2 + $0x368] sm:$0xf] %vm8221, %v8056
    %8332 = vst.msk [vmem:[#allocation2 + $0x370] sm:$0xf] %vm8221, %v8058
    %8333 = vst.msk [vmem:[#allocation2 + $0x378] sm:$0xf] %vm8221, %v8060
    %8334 = vst.msk [vmem:[#allocation2 + $0x380] sm:$0xf] %vm8221, %v8062
    %8335 = vst.msk [vmem:[#allocation2 + $0x388] sm:$0xf] %vm8221, %v8064
    %8336 = vst.msk [vmem:[#allocation2 + $0x390] sm:$0xf] %vm8221, %v8066
    %8337 = vst.msk [vmem:[#allocation2 + $0x398] sm:$0xf] %vm8221, %v8068
    %8338 = vst.msk [vmem:[#allocation2 + $0x3a0] sm:$0xf] %vm8221, %v8070
    %8339 = vst.msk [vmem:[#allocation2 + $0x3a8] sm:$0xf] %vm8221, %v8072
    %8340 = vst.msk [vmem:[#allocation2 + $0x3b0] sm:$0xf] %vm8221, %v8074
    %8341 = vst.msk [vmem:[#allocation2 + $0x3b8] sm:$0xf] %vm8221, %v8076
    %8342 = vst.msk [vmem:[#allocation2 + $0x3c0] sm:$0xf] %vm8221, %v8078
    %8343 = vst.msk [vmem:[#allocation2 + $0x3c8] sm:$0xf] %vm8221, %v8080
    %8344 = vst.msk [vmem:[#allocation2 + $0x3d0] sm:$0xf] %vm8221, %v8082
    %8345 = vst.msk [vmem:[#allocation2 + $0x3d8] sm:$0xf] %vm8221, %v8084
    %8346 = vst.msk [vmem:[#allocation2 + $0x3e0] sm:$0xf] %vm8221, %v8086
    %8347 = vst.msk [vmem:[#allocation2 + $0x3e8] sm:$0xf] %vm8221, %v8088
    %8348 = vst.msk [vmem:[#allocation2 + $0x3f0] sm:$0xf] %vm8221, %v8090
    %8349 = vst.msk [vmem:[#allocation2 + $0x3f8] sm:$0xf] %vm8221, %v8092
    %s8350 = scalar_lea.vmem %s0, 24
    %v8351 = vld [vmem:[%s8350] sm:$0xf]
    %v8352 = vld [vmem:[%s8350 + $0x4] sm:$0xf]
    %v8353 = vld [vmem:[%s8350 + $0xc] sm:$0xf]
    %v8354 = vld [vmem:[%s8350 + $0x10] sm:$0xf]
    %v8355 = vld [vmem:[%s8350 + $0x18] sm:$0xf]
    %v8356 = vld [vmem:[%s8350 + $0x1c] sm:$0xf]
    %v8357 = vld [vmem:[%s8350 + $0x24] sm:$0xf]
    %v8358 = vld [vmem:[%s8350 + $0x28] sm:$0xf]
    %v8359 = vld [vmem:[%s8350 + $0x30] sm:$0xf]
    %v8360 = vld [vmem:[%s8350 + $0x34] sm:$0xf]
    %v8361 = vld [vmem:[%s8350 + $0x3c] sm:$0xf]
    %v8362 = vld [vmem:[%s8350 + $0x40] sm:$0xf]
    %v8363 = vld [vmem:[%s8350 + $0x48] sm:$0xf]
    %v8364 = vld [vmem:[%s8350 + $0x4c] sm:$0xf]
    %v8365 = vld [vmem:[%s8350 + $0x54] sm:$0xf]
    %v8366 = vld [vmem:[%s8350 + $0x58] sm:$0xf]
    %v8367 = vld [vmem:[%s8350 + $0x60] sm:$0xf]
    %v8368 = vld [vmem:[%s8350 + $0x64] sm:$0xf]
    %v8369 = vld [vmem:[%s8350 + $0x6c] sm:$0xf]
    %v8370 = vld [vmem:[%s8350 + $0x70] sm:$0xf]
    %v8371 = vld [vmem:[%s8350 + $0x78] sm:$0xf]
    %v8372 = vld [vmem:[%s8350 + $0x7c] sm:$0xf]
    %v8373 = vld [vmem:[%s8350 + $0x84] sm:$0xf]
    %v8374 = vld [vmem:[%s8350 + $0x88] sm:$0xf]
    %v8375 = vld [vmem:[%s8350 + $0x90] sm:$0xf]
    %v8376 = vld [vmem:[%s8350 + $0x94] sm:$0xf]
    %v8377 = vld [vmem:[%s8350 + $0x9c] sm:$0xf]
    %v8378 = vld [vmem:[%s8350 + $0xa0] sm:$0xf]
    %v8379 = vld [vmem:[%s8350 + $0xa8] sm:$0xf]
    %v8380 = vld [vmem:[%s8350 + $0xac] sm:$0xf]
    %v8381 = vld [vmem:[%s8350 + $0xb4] sm:$0xf]
    %v8382 = vld [vmem:[%s8350 + $0xb8] sm:$0xf]
    %v8383 = vld [vmem:[%s8350 + $0xd8] sm:$0xf]
    %v8384 = vld [vmem:[%s8350 + $0xdc] sm:$0xf]
    %v8385 = vld [vmem:[%s8350 + $0xe4] sm:$0xf]
    %v8386 = vld [vmem:[%s8350 + $0xe8] sm:$0xf]
    %v8387 = vld [vmem:[%s8350 + $0xf0] sm:$0xf]
    %v8388 = vld [vmem:[%s8350 + $0xf4] sm:$0xf]
    %v8389 = vld [vmem:[%s8350 + $0xfc] sm:$0xf]
    %v8390 = vld [vmem:[%s8350 + $0x100] sm:$0xf]
    %v8391 = vld [vmem:[%s8350 + $0x108] sm:$0xf]
    %v8392 = vld [vmem:[%s8350 + $0x10c] sm:$0xf]
    %v8393 = vld [vmem:[%s8350 + $0x114] sm:$0xf]
    %v8394 = vld [vmem:[%s8350 + $0x118] sm:$0xf]
    %v8395 = vld [vmem:[%s8350 + $0x120] sm:$0xf]
    %v8396 = vld [vmem:[%s8350 + $0x124] sm:$0xf]
    %v8397 = vld [vmem:[%s8350 + $0x12c] sm:$0xf]
    %v8398 = vld [vmem:[%s8350 + $0x130] sm:$0xf]
    %v8399 = vld [vmem:[%s8350 + $0x138] sm:$0xf]
    %v8400 = vld [vmem:[%s8350 + $0x13c] sm:$0xf]
    %v8401 = vld [vmem:[%s8350 + $0x144] sm:$0xf]
    %v8402 = vld [vmem:[%s8350 + $0x148] sm:$0xf]
    %v8403 = vld [vmem:[%s8350 + $0x150] sm:$0xf]
    %v8404 = vld [vmem:[%s8350 + $0x154] sm:$0xf]
    %v8405 = vld [vmem:[%s8350 + $0x15c] sm:$0xf]
    %v8406 = vld [vmem:[%s8350 + $0x160] sm:$0xf]
    %v8407 = vld [vmem:[%s8350 + $0x168] sm:$0xf]
    %v8408 = vld [vmem:[%s8350 + $0x16c] sm:$0xf]
    %v8409 = vld [vmem:[%s8350 + $0x174] sm:$0xf]
    %v8410 = vld [vmem:[%s8350 + $0x178] sm:$0xf]
    %v8411 = vld [vmem:[%s8350 + $0x180] sm:$0xf]
    %v8412 = vld [vmem:[%s8350 + $0x184] sm:$0xf]
    %v8413 = vld [vmem:[%s8350 + $0x18c] sm:$0xf]
    %v8414 = vld [vmem:[%s8350 + $0x190] sm:$0xf]
    %v8415 = vld [vmem:[%s8350 + $0x1b0] sm:$0xf]
    %v8416 = vld [vmem:[%s8350 + $0x1b4] sm:$0xf]
    %v8417 = vld [vmem:[%s8350 + $0x1bc] sm:$0xf]
    %v8418 = vld [vmem:[%s8350 + $0x1c0] sm:$0xf]
    %v8419 = vld [vmem:[%s8350 + $0x1c8] sm:$0xf]
    %v8420 = vld [vmem:[%s8350 + $0x1cc] sm:$0xf]
    %v8421 = vld [vmem:[%s8350 + $0x1d4] sm:$0xf]
    %v8422 = vld [vmem:[%s8350 + $0x1d8] sm:$0xf]
    %v8423 = vld [vmem:[%s8350 + $0x1e0] sm:$0xf]
    %v8424 = vld [vmem:[%s8350 + $0x1e4] sm:$0xf]
    %v8425 = vld [vmem:[%s8350 + $0x1ec] sm:$0xf]
    %v8426 = vld [vmem:[%s8350 + $0x1f0] sm:$0xf]
    %v8427 = vld [vmem:[%s8350 + $0x1f8] sm:$0xf]
    %v8428 = vld [vmem:[%s8350 + $0x1fc] sm:$0xf]
    %v8429 = vld [vmem:[%s8350 + $0x204] sm:$0xf]
    %v8430 = vld [vmem:[%s8350 + $0x208] sm:$0xf]
    %v8431 = vld [vmem:[%s8350 + $0x210] sm:$0xf]
    %v8432 = vld [vmem:[%s8350 + $0x214] sm:$0xf]
    %v8433 = vld [vmem:[%s8350 + $0x21c] sm:$0xf]
    %v8434 = vld [vmem:[%s8350 + $0x220] sm:$0xf]
    %v8435 = vld [vmem:[%s8350 + $0x228] sm:$0xf]
    %v8436 = vld [vmem:[%s8350 + $0x22c] sm:$0xf]
    %v8437 = vld [vmem:[%s8350 + $0x234] sm:$0xf]
    %v8438 = vld [vmem:[%s8350 + $0x238] sm:$0xf]
    %v8439 = vld [vmem:[%s8350 + $0x240] sm:$0xf]
    %v8440 = vld [vmem:[%s8350 + $0x244] sm:$0xf]
    %v8441 = vld [vmem:[%s8350 + $0x24c] sm:$0xf]
    %v8442 = vld [vmem:[%s8350 + $0x250] sm:$0xf]
    %v8443 = vld [vmem:[%s8350 + $0x258] sm:$0xf]
    %v8444 = vld [vmem:[%s8350 + $0x25c] sm:$0xf]
    %v8445 = vld [vmem:[%s8350 + $0x264] sm:$0xf]
    %v8446 = vld [vmem:[%s8350 + $0x268] sm:$0xf]
    %v8447 = vld [vmem:[%s8350 + $0x288] sm:$0xf]
    %v8448 = vld [vmem:[%s8350 + $0x28c] sm:$0xf]
    %v8449 = vld [vmem:[%s8350 + $0x294] sm:$0xf]
    %v8450 = vld [vmem:[%s8350 + $0x298] sm:$0xf]
    %v8451 = vld [vmem:[%s8350 + $0x2a0] sm:$0xf]
    %v8452 = vld [vmem:[%s8350 + $0x2a4] sm:$0xf]
    %v8453 = vld [vmem:[%s8350 + $0x2ac] sm:$0xf]
    %v8454 = vld [vmem:[%s8350 + $0x2b0] sm:$0xf]
    %v8455 = vld [vmem:[%s8350 + $0x2b8] sm:$0xf]
    %v8456 = vld [vmem:[%s8350 + $0x2bc] sm:$0xf]
    %v8457 = vld [vmem:[%s8350 + $0x2c4] sm:$0xf]
    %v8458 = vld [vmem:[%s8350 + $0x2c8] sm:$0xf]
    %v8459 = vld [vmem:[%s8350 + $0x2d0] sm:$0xf]
    %v8460 = vld [vmem:[%s8350 + $0x2d4] sm:$0xf]
    %v8461 = vld [vmem:[%s8350 + $0x2dc] sm:$0xf]
    %v8462 = vld [vmem:[%s8350 + $0x2e0] sm:$0xf]
    %v8463 = vld [vmem:[%s8350 + $0x2e8] sm:$0xf]
    %v8464 = vld [vmem:[%s8350 + $0x2ec] sm:$0xf]
    %v8465 = vld [vmem:[%s8350 + $0x2f4] sm:$0xf]
    %v8466 = vld [vmem:[%s8350 + $0x2f8] sm:$0xf]
    %v8467 = vld [vmem:[%s8350 + $0x300] sm:$0xf]
    %v8468 = vld [vmem:[%s8350 + $0x304] sm:$0xf]
    %v8469 = vld [vmem:[%s8350 + $0x30c] sm:$0xf]
    %v8470 = vld [vmem:[%s8350 + $0x310] sm:$0xf]
    %v8471 = vld [vmem:[%s8350 + $0x318] sm:$0xf]
    %v8472 = vld [vmem:[%s8350 + $0x31c] sm:$0xf]
    %v8473 = vld [vmem:[%s8350 + $0x324] sm:$0xf]
    %v8474 = vld [vmem:[%s8350 + $0x328] sm:$0xf]
    %v8475 = vld [vmem:[%s8350 + $0x330] sm:$0xf]
    %v8476 = vld [vmem:[%s8350 + $0x334] sm:$0xf]
    %v8477 = vld [vmem:[%s8350 + $0x33c] sm:$0xf]
    %v8478 = vld [vmem:[%s8350 + $0x340] sm:$0xf]
    %8607 = vrot.lane.b32.xlu0 %v8351, 96
    %v8608 = vpop.permute.xlu0 %8607
    %8609 = vrot.lane.b32.xlu0 %v8352, 96
    %v8610 = vpop.permute.xlu0 %8609
    %8611 = vrot.lane.b32.xlu0 %v8353, 96
    %v8612 = vpop.permute.xlu0 %8611
    %8613 = vrot.lane.b32.xlu0 %v8354, 96
    %v8614 = vpop.permute.xlu0 %8613
    %8615 = vrot.lane.b32.xlu0 %v8355, 96
    %v8616 = vpop.permute.xlu0 %8615
    %8617 = vrot.lane.b32.xlu0 %v8356, 96
    %v8618 = vpop.permute.xlu0 %8617
    %8619 = vrot.lane.b32.xlu0 %v8357, 96
    %v8620 = vpop.permute.xlu0 %8619
    %8621 = vrot.lane.b32.xlu0 %v8358, 96
    %v8622 = vpop.permute.xlu0 %8621
    %8623 = vrot.lane.b32.xlu0 %v8359, 96
    %v8624 = vpop.permute.xlu0 %8623
    %8625 = vrot.lane.b32.xlu0 %v8360, 96
    %v8626 = vpop.permute.xlu0 %8625
    %8627 = vrot.lane.b32.xlu0 %v8361, 96
    %v8628 = vpop.permute.xlu0 %8627
    %8629 = vrot.lane.b32.xlu0 %v8362, 96
    %v8630 = vpop.permute.xlu0 %8629
    %8631 = vrot.lane.b32.xlu0 %v8363, 96
    %v8632 = vpop.permute.xlu0 %8631
    %8633 = vrot.lane.b32.xlu0 %v8364, 96
    %v8634 = vpop.permute.xlu0 %8633
    %8635 = vrot.lane.b32.xlu0 %v8365, 96
    %v8636 = vpop.permute.xlu0 %8635
    %8637 = vrot.lane.b32.xlu0 %v8366, 96
    %v8638 = vpop.permute.xlu0 %8637
    %8639 = vrot.lane.b32.xlu0 %v8367, 96
    %v8640 = vpop.permute.xlu0 %8639
    %8641 = vrot.lane.b32.xlu0 %v8368, 96
    %v8642 = vpop.permute.xlu0 %8641
    %8643 = vrot.lane.b32.xlu0 %v8369, 96
    %v8644 = vpop.permute.xlu0 %8643
    %8645 = vrot.lane.b32.xlu0 %v8370, 96
    %v8646 = vpop.permute.xlu0 %8645
    %8647 = vrot.lane.b32.xlu0 %v8371, 96
    %v8648 = vpop.permute.xlu0 %8647
    %8649 = vrot.lane.b32.xlu0 %v8372, 96
    %v8650 = vpop.permute.xlu0 %8649
    %8651 = vrot.lane.b32.xlu0 %v8373, 96
    %v8652 = vpop.permute.xlu0 %8651
    %8653 = vrot.lane.b32.xlu0 %v8374, 96
    %v8654 = vpop.permute.xlu0 %8653
    %8655 = vrot.lane.b32.xlu0 %v8375, 96
    %v8656 = vpop.permute.xlu0 %8655
    %8657 = vrot.lane.b32.xlu0 %v8376, 96
    %v8658 = vpop.permute.xlu0 %8657
    %8659 = vrot.lane.b32.xlu0 %v8377, 96
    %v8660 = vpop.permute.xlu0 %8659
    %8661 = vrot.lane.b32.xlu0 %v8378, 96
    %v8662 = vpop.permute.xlu0 %8661
    %8663 = vrot.lane.b32.xlu0 %v8379, 96
    %v8664 = vpop.permute.xlu0 %8663
    %8665 = vrot.lane.b32.xlu0 %v8380, 96
    %v8666 = vpop.permute.xlu0 %8665
    %8667 = vrot.lane.b32.xlu0 %v8381, 96
    %v8668 = vpop.permute.xlu0 %8667
    %8669 = vrot.lane.b32.xlu0 %v8382, 96
    %v8670 = vpop.permute.xlu0 %8669
    %8671 = vrot.lane.b32.xlu0 %v8383, 96
    %v8672 = vpop.permute.xlu0 %8671
    %8673 = vrot.lane.b32.xlu0 %v8384, 96
    %v8674 = vpop.permute.xlu0 %8673
    %8675 = vrot.lane.b32.xlu0 %v8385, 96
    %v8676 = vpop.permute.xlu0 %8675
    %8677 = vrot.lane.b32.xlu0 %v8386, 96
    %v8678 = vpop.permute.xlu0 %8677
    %8679 = vrot.lane.b32.xlu0 %v8387, 96
    %v8680 = vpop.permute.xlu0 %8679
    %8681 = vrot.lane.b32.xlu0 %v8388, 96
    %v8682 = vpop.permute.xlu0 %8681
    %8683 = vrot.lane.b32.xlu0 %v8389, 96
    %v8684 = vpop.permute.xlu0 %8683
    %8685 = vrot.lane.b32.xlu0 %v8390, 96
    %v8686 = vpop.permute.xlu0 %8685
    %8687 = vrot.lane.b32.xlu0 %v8391, 96
    %v8688 = vpop.permute.xlu0 %8687
    %8689 = vrot.lane.b32.xlu0 %v8392, 96
    %v8690 = vpop.permute.xlu0 %8689
    %8691 = vrot.lane.b32.xlu0 %v8393, 96
    %v8692 = vpop.permute.xlu0 %8691
    %8693 = vrot.lane.b32.xlu0 %v8394, 96
    %v8694 = vpop.permute.xlu0 %8693
    %8695 = vrot.lane.b32.xlu0 %v8395, 96
    %v8696 = vpop.permute.xlu0 %8695
    %8697 = vrot.lane.b32.xlu0 %v8396, 96
    %v8698 = vpop.permute.xlu0 %8697
    %8699 = vrot.lane.b32.xlu0 %v8397, 96
    %v8700 = vpop.permute.xlu0 %8699
    %8701 = vrot.lane.b32.xlu0 %v8398, 96
    %v8702 = vpop.permute.xlu0 %8701
    %8703 = vrot.lane.b32.xlu0 %v8399, 96
    %v8704 = vpop.permute.xlu0 %8703
    %8705 = vrot.lane.b32.xlu0 %v8400, 96
    %v8706 = vpop.permute.xlu0 %8705
    %8707 = vrot.lane.b32.xlu0 %v8401, 96
    %v8708 = vpop.permute.xlu0 %8707
    %8709 = vrot.lane.b32.xlu0 %v8402, 96
    %v8710 = vpop.permute.xlu0 %8709
    %8711 = vrot.lane.b32.xlu0 %v8403, 96
    %v8712 = vpop.permute.xlu0 %8711
    %8713 = vrot.lane.b32.xlu0 %v8404, 96
    %v8714 = vpop.permute.xlu0 %8713
    %8715 = vrot.lane.b32.xlu0 %v8405, 96
    %v8716 = vpop.permute.xlu0 %8715
    %8717 = vrot.lane.b32.xlu0 %v8406, 96
    %v8718 = vpop.permute.xlu0 %8717
    %8719 = vrot.lane.b32.xlu0 %v8407, 96
    %v8720 = vpop.permute.xlu0 %8719
    %8721 = vrot.lane.b32.xlu0 %v8408, 96
    %v8722 = vpop.permute.xlu0 %8721
    %8723 = vrot.lane.b32.xlu0 %v8409, 96
    %v8724 = vpop.permute.xlu0 %8723
    %8725 = vrot.lane.b32.xlu0 %v8410, 96
    %v8726 = vpop.permute.xlu0 %8725
    %8727 = vrot.lane.b32.xlu0 %v8411, 96
    %v8728 = vpop.permute.xlu0 %8727
    %8729 = vrot.lane.b32.xlu0 %v8412, 96
    %v8730 = vpop.permute.xlu0 %8729
    %8731 = vrot.lane.b32.xlu0 %v8413, 96
    %v8732 = vpop.permute.xlu0 %8731
    %8733 = vrot.lane.b32.xlu0 %v8414, 96
    %v8734 = vpop.permute.xlu0 %8733
    %8735 = vrot.lane.b32.xlu0 %v8415, 96
    %v8736 = vpop.permute.xlu0 %8735
    %8737 = vrot.lane.b32.xlu0 %v8416, 96
    %v8738 = vpop.permute.xlu0 %8737
    %8739 = vrot.lane.b32.xlu0 %v8417, 96
    %v8740 = vpop.permute.xlu0 %8739
    %8741 = vrot.lane.b32.xlu0 %v8418, 96
    %v8742 = vpop.permute.xlu0 %8741
    %8743 = vrot.lane.b32.xlu0 %v8419, 96
    %v8744 = vpop.permute.xlu0 %8743
    %8745 = vrot.lane.b32.xlu0 %v8420, 96
    %v8746 = vpop.permute.xlu0 %8745
    %8747 = vrot.lane.b32.xlu0 %v8421, 96
    %v8748 = vpop.permute.xlu0 %8747
    %8749 = vrot.lane.b32.xlu0 %v8422, 96
    %v8750 = vpop.permute.xlu0 %8749
    %8751 = vrot.lane.b32.xlu0 %v8423, 96
    %v8752 = vpop.permute.xlu0 %8751
    %8753 = vrot.lane.b32.xlu0 %v8424, 96
    %v8754 = vpop.permute.xlu0 %8753
    %8755 = vrot.lane.b32.xlu0 %v8425, 96
    %v8756 = vpop.permute.xlu0 %8755
    %8757 = vrot.lane.b32.xlu0 %v8426, 96
    %v8758 = vpop.permute.xlu0 %8757
    %8759 = vrot.lane.b32.xlu0 %v8427, 96
    %v8760 = vpop.permute.xlu0 %8759
    %8761 = vrot.lane.b32.xlu0 %v8428, 96
    %v8762 = vpop.permute.xlu0 %8761
    %8763 = vrot.lane.b32.xlu0 %v8429, 96
    %v8764 = vpop.permute.xlu0 %8763
    %8765 = vrot.lane.b32.xlu0 %v8430, 96
    %v8766 = vpop.permute.xlu0 %8765
    %8767 = vrot.lane.b32.xlu0 %v8431, 96
    %v8768 = vpop.permute.xlu0 %8767
    %8769 = vrot.lane.b32.xlu0 %v8432, 96
    %v8770 = vpop.permute.xlu0 %8769
    %8771 = vrot.lane.b32.xlu0 %v8433, 96
    %v8772 = vpop.permute.xlu0 %8771
    %8773 = vrot.lane.b32.xlu0 %v8434, 96
    %v8774 = vpop.permute.xlu0 %8773
    %8775 = vrot.lane.b32.xlu0 %v8435, 96
    %v8776 = vpop.permute.xlu0 %8775
    %8777 = vrot.lane.b32.xlu0 %v8436, 96
    %v8778 = vpop.permute.xlu0 %8777
    %8779 = vrot.lane.b32.xlu0 %v8437, 96
    %v8780 = vpop.permute.xlu0 %8779
    %8781 = vrot.lane.b32.xlu0 %v8438, 96
    %v8782 = vpop.permute.xlu0 %8781
    %8783 = vrot.lane.b32.xlu0 %v8439, 96
    %v8784 = vpop.permute.xlu0 %8783
    %8785 = vrot.lane.b32.xlu0 %v8440, 96
    %v8786 = vpop.permute.xlu0 %8785
    %8787 = vrot.lane.b32.xlu0 %v8441, 96
    %v8788 = vpop.permute.xlu0 %8787
    %8789 = vrot.lane.b32.xlu0 %v8442, 96
    %v8790 = vpop.permute.xlu0 %8789
    %8791 = vrot.lane.b32.xlu0 %v8443, 96
    %v8792 = vpop.permute.xlu0 %8791
    %8793 = vrot.lane.b32.xlu0 %v8444, 96
    %v8794 = vpop.permute.xlu0 %8793
    %8795 = vrot.lane.b32.xlu0 %v8445, 96
    %v8796 = vpop.permute.xlu0 %8795
    %8797 = vrot.lane.b32.xlu0 %v8446, 96
    %v8798 = vpop.permute.xlu0 %8797
    %8799 = vrot.lane.b32.xlu0 %v8447, 96
    %v8800 = vpop.permute.xlu0 %8799
    %8801 = vrot.lane.b32.xlu0 %v8448, 96
    %v8802 = vpop.permute.xlu0 %8801
    %8803 = vrot.lane.b32.xlu0 %v8449, 96
    %v8804 = vpop.permute.xlu0 %8803
    %8805 = vrot.lane.b32.xlu0 %v8450, 96
    %v8806 = vpop.permute.xlu0 %8805
    %8807 = vrot.lane.b32.xlu0 %v8451, 96
    %v8808 = vpop.permute.xlu0 %8807
    %8809 = vrot.lane.b32.xlu0 %v8452, 96
    %v8810 = vpop.permute.xlu0 %8809
    %8811 = vrot.lane.b32.xlu0 %v8453, 96
    %v8812 = vpop.permute.xlu0 %8811
    %8813 = vrot.lane.b32.xlu0 %v8454, 96
    %v8814 = vpop.permute.xlu0 %8813
    %8815 = vrot.lane.b32.xlu0 %v8455, 96
    %v8816 = vpop.permute.xlu0 %8815
    %8817 = vrot.lane.b32.xlu0 %v8456, 96
    %v8818 = vpop.permute.xlu0 %8817
    %8819 = vrot.lane.b32.xlu0 %v8457, 96
    %v8820 = vpop.permute.xlu0 %8819
    %8821 = vrot.lane.b32.xlu0 %v8458, 96
    %v8822 = vpop.permute.xlu0 %8821
    %8823 = vrot.lane.b32.xlu0 %v8459, 96
    %v8824 = vpop.permute.xlu0 %8823
    %8825 = vrot.lane.b32.xlu0 %v8460, 96
    %v8826 = vpop.permute.xlu0 %8825
    %8827 = vrot.lane.b32.xlu0 %v8461, 96
    %v8828 = vpop.permute.xlu0 %8827
    %8829 = vrot.lane.b32.xlu0 %v8462, 96
    %v8830 = vpop.permute.xlu0 %8829
    %8831 = vrot.lane.b32.xlu0 %v8463, 96
    %v8832 = vpop.permute.xlu0 %8831
    %8833 = vrot.lane.b32.xlu0 %v8464, 96
    %v8834 = vpop.permute.xlu0 %8833
    %8835 = vrot.lane.b32.xlu0 %v8465, 96
    %v8836 = vpop.permute.xlu0 %8835
    %8837 = vrot.lane.b32.xlu0 %v8466, 96
    %v8838 = vpop.permute.xlu0 %8837
    %8839 = vrot.lane.b32.xlu0 %v8467, 96
    %v8840 = vpop.permute.xlu0 %8839
    %8841 = vrot.lane.b32.xlu0 %v8468, 96
    %v8842 = vpop.permute.xlu0 %8841
    %8843 = vrot.lane.b32.xlu0 %v8469, 96
    %v8844 = vpop.permute.xlu0 %8843
    %8845 = vrot.lane.b32.xlu0 %v8470, 96
    %v8846 = vpop.permute.xlu0 %8845
    %8847 = vrot.lane.b32.xlu0 %v8471, 96
    %v8848 = vpop.permute.xlu0 %8847
    %8849 = vrot.lane.b32.xlu0 %v8472, 96
    %v8850 = vpop.permute.xlu0 %8849
    %8851 = vrot.lane.b32.xlu0 %v8473, 96
    %v8852 = vpop.permute.xlu0 %8851
    %8853 = vrot.lane.b32.xlu0 %v8474, 96
    %v8854 = vpop.permute.xlu0 %8853
    %8855 = vrot.lane.b32.xlu0 %v8475, 96
    %v8856 = vpop.permute.xlu0 %8855
    %8857 = vrot.lane.b32.xlu0 %v8476, 96
    %v8858 = vpop.permute.xlu0 %8857
    %8859 = vrot.lane.b32.xlu0 %v8477, 96
    %v8860 = vpop.permute.xlu0 %8859
    %8861 = vrot.lane.b32.xlu0 %v8478, 96
    %v8862 = vpop.permute.xlu0 %8861
    %vm8991 = vcmask 913152
    %8992 = vst.msk [vmem:[#allocation2] sm:$0xf] %vm8991, %v8608
    %8993 = vst.msk [vmem:[#allocation2 + $0x8] sm:$0xf] %vm8991, %v8610
    %8994 = vst.msk [vmem:[#allocation2 + $0x10] sm:$0xf] %vm8991, %v8612
    %8995 = vst.msk [vmem:[#allocation2 + $0x18] sm:$0xf] %vm8991, %v8614
    %8996 = vst.msk [vmem:[#allocation2 + $0x20] sm:$0xf] %vm8991, %v8616
    %8997 = vst.msk [vmem:[#allocation2 + $0x28] sm:$0xf] %vm8991, %v8618
    %8998 = vst.msk [vmem:[#allocation2 + $0x30] sm:$0xf] %vm8991, %v8620
    %8999 = vst.msk [vmem:[#allocation2 + $0x38] sm:$0xf] %vm8991, %v8622
    %9000 = vst.msk [vmem:[#allocation2 + $0x40] sm:$0xf] %vm8991, %v8624
    %9001 = vst.msk [vmem:[#allocation2 + $0x48] sm:$0xf] %vm8991, %v8626
    %9002 = vst.msk [vmem:[#allocation2 + $0x50] sm:$0xf] %vm8991, %v8628
    %9003 = vst.msk [vmem:[#allocation2 + $0x58] sm:$0xf] %vm8991, %v8630
    %9004 = vst.msk [vmem:[#allocation2 + $0x60] sm:$0xf] %vm8991, %v8632
    %9005 = vst.msk [vmem:[#allocation2 + $0x68] sm:$0xf] %vm8991, %v8634
    %9006 = vst.msk [vmem:[#allocation2 + $0x70] sm:$0xf] %vm8991, %v8636
    %9007 = vst.msk [vmem:[#allocation2 + $0x78] sm:$0xf] %vm8991, %v8638
    %9008 = vst.msk [vmem:[#allocation2 + $0x80] sm:$0xf] %vm8991, %v8640
    %9009 = vst.msk [vmem:[#allocation2 + $0x88] sm:$0xf] %vm8991, %v8642
    %9010 = vst.msk [vmem:[#allocation2 + $0x90] sm:$0xf] %vm8991, %v8644
    %9011 = vst.msk [vmem:[#allocation2 + $0x98] sm:$0xf] %vm8991, %v8646
    %9012 = vst.msk [vmem:[#allocation2 + $0xa0] sm:$0xf] %vm8991, %v8648
    %9013 = vst.msk [vmem:[#allocation2 + $0xa8] sm:$0xf] %vm8991, %v8650
    %9014 = vst.msk [vmem:[#allocation2 + $0xb0] sm:$0xf] %vm8991, %v8652
    %9015 = vst.msk [vmem:[#allocation2 + $0xb8] sm:$0xf] %vm8991, %v8654
    %9016 = vst.msk [vmem:[#allocation2 + $0xc0] sm:$0xf] %vm8991, %v8656
    %9017 = vst.msk [vmem:[#allocation2 + $0xc8] sm:$0xf] %vm8991, %v8658
    %9018 = vst.msk [vmem:[#allocation2 + $0xd0] sm:$0xf] %vm8991, %v8660
    %9019 = vst.msk [vmem:[#allocation2 + $0xd8] sm:$0xf] %vm8991, %v8662
    %9020 = vst.msk [vmem:[#allocation2 + $0xe0] sm:$0xf] %vm8991, %v8664
    %9021 = vst.msk [vmem:[#allocation2 + $0xe8] sm:$0xf] %vm8991, %v8666
    %9022 = vst.msk [vmem:[#allocation2 + $0xf0] sm:$0xf] %vm8991, %v8668
    %9023 = vst.msk [vmem:[#allocation2 + $0xf8] sm:$0xf] %vm8991, %v8670
    %9024 = vst.msk [vmem:[#allocation2 + $0x100] sm:$0xf] %vm8991, %v8672
    %9025 = vst.msk [vmem:[#allocation2 + $0x108] sm:$0xf] %vm8991, %v8674
    %9026 = vst.msk [vmem:[#allocation2 + $0x110] sm:$0xf] %vm8991, %v8676
    %9027 = vst.msk [vmem:[#allocation2 + $0x118] sm:$0xf] %vm8991, %v8678
    %9028 = vst.msk [vmem:[#allocation2 + $0x120] sm:$0xf] %vm8991, %v8680
    %9029 = vst.msk [vmem:[#allocation2 + $0x128] sm:$0xf] %vm8991, %v8682
    %9030 = vst.msk [vmem:[#allocation2 + $0x130] sm:$0xf] %vm8991, %v8684
    %9031 = vst.msk [vmem:[#allocation2 + $0x138] sm:$0xf] %vm8991, %v8686
    %9032 = vst.msk [vmem:[#allocation2 + $0x140] sm:$0xf] %vm8991, %v8688
    %9033 = vst.msk [vmem:[#allocation2 + $0x148] sm:$0xf] %vm8991, %v8690
    %9034 = vst.msk [vmem:[#allocation2 + $0x150] sm:$0xf] %vm8991, %v8692
    %9035 = vst.msk [vmem:[#allocation2 + $0x158] sm:$0xf] %vm8991, %v8694
    %9036 = vst.msk [vmem:[#allocation2 + $0x160] sm:$0xf] %vm8991, %v8696
    %9037 = vst.msk [vmem:[#allocation2 + $0x168] sm:$0xf] %vm8991, %v8698
    %9038 = vst.msk [vmem:[#allocation2 + $0x170] sm:$0xf] %vm8991, %v8700
    %9039 = vst.msk [vmem:[#allocation2 + $0x178] sm:$0xf] %vm8991, %v8702
    %9040 = vst.msk [vmem:[#allocation2 + $0x180] sm:$0xf] %vm8991, %v8704
    %9041 = vst.msk [vmem:[#allocation2 + $0x188] sm:$0xf] %vm8991, %v8706
    %9042 = vst.msk [vmem:[#allocation2 + $0x190] sm:$0xf] %vm8991, %v8708
    %9043 = vst.msk [vmem:[#allocation2 + $0x198] sm:$0xf] %vm8991, %v8710
    %9044 = vst.msk [vmem:[#allocation2 + $0x1a0] sm:$0xf] %vm8991, %v8712
    %9045 = vst.msk [vmem:[#allocation2 + $0x1a8] sm:$0xf] %vm8991, %v8714
    %9046 = vst.msk [vmem:[#allocation2 + $0x1b0] sm:$0xf] %vm8991, %v8716
    %9047 = vst.msk [vmem:[#allocation2 + $0x1b8] sm:$0xf] %vm8991, %v8718
    %9048 = vst.msk [vmem:[#allocation2 + $0x1c0] sm:$0xf] %vm8991, %v8720
    %9049 = vst.msk [vmem:[#allocation2 + $0x1c8] sm:$0xf] %vm8991, %v8722
    %9050 = vst.msk [vmem:[#allocation2 + $0x1d0] sm:$0xf] %vm8991, %v8724
    %9051 = vst.msk [vmem:[#allocation2 + $0x1d8] sm:$0xf] %vm8991, %v8726
    %9052 = vst.msk [vmem:[#allocation2 + $0x1e0] sm:$0xf] %vm8991, %v8728
    %9053 = vst.msk [vmem:[#allocation2 + $0x1e8] sm:$0xf] %vm8991, %v8730
    %9054 = vst.msk [vmem:[#allocation2 + $0x1f0] sm:$0xf] %vm8991, %v8732
    %9055 = vst.msk [vmem:[#allocation2 + $0x1f8] sm:$0xf] %vm8991, %v8734
    %9056 = vst.msk [vmem:[#allocation2 + $0x200] sm:$0xf] %vm8991, %v8736
    %9057 = vst.msk [vmem:[#allocation2 + $0x208] sm:$0xf] %vm8991, %v8738
    %9058 = vst.msk [vmem:[#allocation2 + $0x210] sm:$0xf] %vm8991, %v8740
    %9059 = vst.msk [vmem:[#allocation2 + $0x218] sm:$0xf] %vm8991, %v8742
    %9060 = vst.msk [vmem:[#allocation2 + $0x220] sm:$0xf] %vm8991, %v8744
    %9061 = vst.msk [vmem:[#allocation2 + $0x228] sm:$0xf] %vm8991, %v8746
    %9062 = vst.msk [vmem:[#allocation2 + $0x230] sm:$0xf] %vm8991, %v8748
    %9063 = vst.msk [vmem:[#allocation2 + $0x238] sm:$0xf] %vm8991, %v8750
    %9064 = vst.msk [vmem:[#allocation2 + $0x240] sm:$0xf] %vm8991, %v8752
    %9065 = vst.msk [vmem:[#allocation2 + $0x248] sm:$0xf] %vm8991, %v8754
    %9066 = vst.msk [vmem:[#allocation2 + $0x250] sm:$0xf] %vm8991, %v8756
    %9067 = vst.msk [vmem:[#allocation2 + $0x258] sm:$0xf] %vm8991, %v8758
    %9068 = vst.msk [vmem:[#allocation2 + $0x260] sm:$0xf] %vm8991, %v8760
    %9069 = vst.msk [vmem:[#allocation2 + $0x268] sm:$0xf] %vm8991, %v8762
    %9070 = vst.msk [vmem:[#allocation2 + $0x270] sm:$0xf] %vm8991, %v8764
    %9071 = vst.msk [vmem:[#allocation2 + $0x278] sm:$0xf] %vm8991, %v8766
    %9072 = vst.msk [vmem:[#allocation2 + $0x280] sm:$0xf] %vm8991, %v8768
    %9073 = vst.msk [vmem:[#allocation2 + $0x288] sm:$0xf] %vm8991, %v8770
    %9074 = vst.msk [vmem:[#allocation2 + $0x290] sm:$0xf] %vm8991, %v8772
    %9075 = vst.msk [vmem:[#allocation2 + $0x298] sm:$0xf] %vm8991, %v8774
    %9076 = vst.msk [vmem:[#allocation2 + $0x2a0] sm:$0xf] %vm8991, %v8776
    %9077 = vst.msk [vmem:[#allocation2 + $0x2a8] sm:$0xf] %vm8991, %v8778
    %9078 = vst.msk [vmem:[#allocation2 + $0x2b0] sm:$0xf] %vm8991, %v8780
    %9079 = vst.msk [vmem:[#allocation2 + $0x2b8] sm:$0xf] %vm8991, %v8782
    %9080 = vst.msk [vmem:[#allocation2 + $0x2c0] sm:$0xf] %vm8991, %v8784
    %9081 = vst.msk [vmem:[#allocation2 + $0x2c8] sm:$0xf] %vm8991, %v8786
    %9082 = vst.msk [vmem:[#allocation2 + $0x2d0] sm:$0xf] %vm8991, %v8788
    %9083 = vst.msk [vmem:[#allocation2 + $0x2d8] sm:$0xf] %vm8991, %v8790
    %9084 = vst.msk [vmem:[#allocation2 + $0x2e0] sm:$0xf] %vm8991, %v8792
    %9085 = vst.msk [vmem:[#allocation2 + $0x2e8] sm:$0xf] %vm8991, %v8794
    %9086 = vst.msk [vmem:[#allocation2 + $0x2f0] sm:$0xf] %vm8991, %v8796
    %9087 = vst.msk [vmem:[#allocation2 + $0x2f8] sm:$0xf] %vm8991, %v8798
    %9088 = vst.msk [vmem:[#allocation2 + $0x300] sm:$0xf] %vm8991, %v8800
    %9089 = vst.msk [vmem:[#allocation2 + $0x308] sm:$0xf] %vm8991, %v8802
    %9090 = vst.msk [vmem:[#allocation2 + $0x310] sm:$0xf] %vm8991, %v8804
    %9091 = vst.msk [vmem:[#allocation2 + $0x318] sm:$0xf] %vm8991, %v8806
    %9092 = vst.msk [vmem:[#allocation2 + $0x320] sm:$0xf] %vm8991, %v8808
    %9093 = vst.msk [vmem:[#allocation2 + $0x328] sm:$0xf] %vm8991, %v8810
    %9094 = vst.msk [vmem:[#allocation2 + $0x330] sm:$0xf] %vm8991, %v8812
    %9095 = vst.msk [vmem:[#allocation2 + $0x338] sm:$0xf] %vm8991, %v8814
    %9096 = vst.msk [vmem:[#allocation2 + $0x340] sm:$0xf] %vm8991, %v8816
    %9097 = vst.msk [vmem:[#allocation2 + $0x348] sm:$0xf] %vm8991, %v8818
    %9098 = vst.msk [vmem:[#allocation2 + $0x350] sm:$0xf] %vm8991, %v8820
    %9099 = vst.msk [vmem:[#allocation2 + $0x358] sm:$0xf] %vm8991, %v8822
    %9100 = vst.msk [vmem:[#allocation2 + $0x360] sm:$0xf] %vm8991, %v8824
    %9101 = vst.msk [vmem:[#allocation2 + $0x368] sm:$0xf] %vm8991, %v8826
    %9102 = vst.msk [vmem:[#allocation2 + $0x370] sm:$0xf] %vm8991, %v8828
    %9103 = vst.msk [vmem:[#allocation2 + $0x378] sm:$0xf] %vm8991, %v8830
    %9104 = vst.msk [vmem:[#allocation2 + $0x380] sm:$0xf] %vm8991, %v8832
    %9105 = vst.msk [vmem:[#allocation2 + $0x388] sm:$0xf] %vm8991, %v8834
    %9106 = vst.msk [vmem:[#allocation2 + $0x390] sm:$0xf] %vm8991, %v8836
    %9107 = vst.msk [vmem:[#allocation2 + $0x398] sm:$0xf] %vm8991, %v8838
    %9108 = vst.msk [vmem:[#allocation2 + $0x3a0] sm:$0xf] %vm8991, %v8840
    %9109 = vst.msk [vmem:[#allocation2 + $0x3a8] sm:$0xf] %vm8991, %v8842
    %9110 = vst.msk [vmem:[#allocation2 + $0x3b0] sm:$0xf] %vm8991, %v8844
    %9111 = vst.msk [vmem:[#allocation2 + $0x3b8] sm:$0xf] %vm8991, %v8846
    %9112 = vst.msk [vmem:[#allocation2 + $0x3c0] sm:$0xf] %vm8991, %v8848
    %9113 = vst.msk [vmem:[#allocation2 + $0x3c8] sm:$0xf] %vm8991, %v8850
    %9114 = vst.msk [vmem:[#allocation2 + $0x3d0] sm:$0xf] %vm8991, %v8852
    %9115 = vst.msk [vmem:[#allocation2 + $0x3d8] sm:$0xf] %vm8991, %v8854
    %9116 = vst.msk [vmem:[#allocation2 + $0x3e0] sm:$0xf] %vm8991, %v8856
    %9117 = vst.msk [vmem:[#allocation2 + $0x3e8] sm:$0xf] %vm8991, %v8858
    %9118 = vst.msk [vmem:[#allocation2 + $0x3f0] sm:$0xf] %vm8991, %v8860
    %9119 = vst.msk [vmem:[#allocation2 + $0x3f8] sm:$0xf] %vm8991, %v8862
    %v9120 = vld [vmem:[%s8350] sm:$0xf]
    %v9121 = vld [vmem:[%s8350 + $0x4] sm:$0xf]
    %v9122 = vld [vmem:[%s8350 + $0x8] sm:$0x1]
    %v9123 = vld [vmem:[%s8350 + $0xc] sm:$0xf]
    %v9124 = vld [vmem:[%s8350 + $0x10] sm:$0xf]
    %v9125 = vld [vmem:[%s8350 + $0x14] sm:$0x1]
    %v9126 = vld [vmem:[%s8350 + $0x18] sm:$0xf]
    %v9127 = vld [vmem:[%s8350 + $0x1c] sm:$0xf]
    %v9128 = vld [vmem:[%s8350 + $0x20] sm:$0x1]
    %v9129 = vld [vmem:[%s8350 + $0x24] sm:$0xf]
    %v9130 = vld [vmem:[%s8350 + $0x28] sm:$0xf]
    %v9131 = vld [vmem:[%s8350 + $0x2c] sm:$0x1]
    %v9132 = vld [vmem:[%s8350 + $0x30] sm:$0xf]
    %v9133 = vld [vmem:[%s8350 + $0x34] sm:$0xf]
    %v9134 = vld [vmem:[%s8350 + $0x38] sm:$0x1]
    %v9135 = vld [vmem:[%s8350 + $0x3c] sm:$0xf]
    %v9136 = vld [vmem:[%s8350 + $0x40] sm:$0xf]
    %v9137 = vld [vmem:[%s8350 + $0x44] sm:$0x1]
    %v9138 = vld [vmem:[%s8350 + $0x48] sm:$0xf]
    %v9139 = vld [vmem:[%s8350 + $0x4c] sm:$0xf]
    %v9140 = vld [vmem:[%s8350 + $0x50] sm:$0x1]
    %v9141 = vld [vmem:[%s8350 + $0x54] sm:$0xf]
    %v9142 = vld [vmem:[%s8350 + $0x58] sm:$0xf]
    %v9143 = vld [vmem:[%s8350 + $0x5c] sm:$0x1]
    %v9144 = vld [vmem:[%s8350 + $0x60] sm:$0xf]
    %v9145 = vld [vmem:[%s8350 + $0x64] sm:$0xf]
    %v9146 = vld [vmem:[%s8350 + $0x68] sm:$0x1]
    %v9147 = vld [vmem:[%s8350 + $0x6c] sm:$0xf]
    %v9148 = vld [vmem:[%s8350 + $0x70] sm:$0xf]
    %v9149 = vld [vmem:[%s8350 + $0x74] sm:$0x1]
    %v9150 = vld [vmem:[%s8350 + $0x78] sm:$0xf]
    %v9151 = vld [vmem:[%s8350 + $0x7c] sm:$0xf]
    %v9152 = vld [vmem:[%s8350 + $0x80] sm:$0x1]
    %v9153 = vld [vmem:[%s8350 + $0x84] sm:$0xf]
    %v9154 = vld [vmem:[%s8350 + $0x88] sm:$0xf]
    %v9155 = vld [vmem:[%s8350 + $0x8c] sm:$0x1]
    %v9156 = vld [vmem:[%s8350 + $0x90] sm:$0xf]
    %v9157 = vld [vmem:[%s8350 + $0x94] sm:$0xf]
    %v9158 = vld [vmem:[%s8350 + $0x98] sm:$0x1]
    %v9159 = vld [vmem:[%s8350 + $0x9c] sm:$0xf]
    %v9160 = vld [vmem:[%s8350 + $0xa0] sm:$0xf]
    %v9161 = vld [vmem:[%s8350 + $0xa4] sm:$0x1]
    %v9162 = vld [vmem:[%s8350 + $0xa8] sm:$0xf]
    %v9163 = vld [vmem:[%s8350 + $0xac] sm:$0xf]
    %v9164 = vld [vmem:[%s8350 + $0xb0] sm:$0x1]
    %v9165 = vld [vmem:[%s8350 + $0xb4] sm:$0xf]
    %v9166 = vld [vmem:[%s8350 + $0xb8] sm:$0xf]
    %v9167 = vld [vmem:[%s8350 + $0xbc] sm:$0x1]
    %v9168 = vld [vmem:[%s8350 + $0xd8] sm:$0xf]
    %v9169 = vld [vmem:[%s8350 + $0xdc] sm:$0xf]
    %v9170 = vld [vmem:[%s8350 + $0xe0] sm:$0x1]
    %v9171 = vld [vmem:[%s8350 + $0xe4] sm:$0xf]
    %v9172 = vld [vmem:[%s8350 + $0xe8] sm:$0xf]
    %v9173 = vld [vmem:[%s8350 + $0xec] sm:$0x1]
    %v9174 = vld [vmem:[%s8350 + $0xf0] sm:$0xf]
    %v9175 = vld [vmem:[%s8350 + $0xf4] sm:$0xf]
    %v9176 = vld [vmem:[%s8350 + $0xf8] sm:$0x1]
    %v9177 = vld [vmem:[%s8350 + $0xfc] sm:$0xf]
    %v9178 = vld [vmem:[%s8350 + $0x100] sm:$0xf]
    %v9179 = vld [vmem:[%s8350 + $0x104] sm:$0x1]
    %v9180 = vld [vmem:[%s8350 + $0x108] sm:$0xf]
    %v9181 = vld [vmem:[%s8350 + $0x10c] sm:$0xf]
    %v9182 = vld [vmem:[%s8350 + $0x110] sm:$0x1]
    %v9183 = vld [vmem:[%s8350 + $0x114] sm:$0xf]
    %v9184 = vld [vmem:[%s8350 + $0x118] sm:$0xf]
    %v9185 = vld [vmem:[%s8350 + $0x11c] sm:$0x1]
    %v9186 = vld [vmem:[%s8350 + $0x120] sm:$0xf]
    %v9187 = vld [vmem:[%s8350 + $0x124] sm:$0xf]
    %v9188 = vld [vmem:[%s8350 + $0x128] sm:$0x1]
    %v9189 = vld [vmem:[%s8350 + $0x12c] sm:$0xf]
    %v9190 = vld [vmem:[%s8350 + $0x130] sm:$0xf]
    %v9191 = vld [vmem:[%s8350 + $0x134] sm:$0x1]
    %v9192 = vld [vmem:[%s8350 + $0x138] sm:$0xf]
    %v9193 = vld [vmem:[%s8350 + $0x13c] sm:$0xf]
    %v9194 = vld [vmem:[%s8350 + $0x140] sm:$0x1]
    %v9195 = vld [vmem:[%s8350 + $0x144] sm:$0xf]
    %v9196 = vld [vmem:[%s8350 + $0x148] sm:$0xf]
    %v9197 = vld [vmem:[%s8350 + $0x14c] sm:$0x1]
    %v9198 = vld [vmem:[%s8350 + $0x150] sm:$0xf]
    %v9199 = vld [vmem:[%s8350 + $0x154] sm:$0xf]
    %v9200 = vld [vmem:[%s8350 + $0x158] sm:$0x1]
    %v9201 = vld [vmem:[%s8350 + $0x15c] sm:$0xf]
    %v9202 = vld [vmem:[%s8350 + $0x160] sm:$0xf]
    %v9203 = vld [vmem:[%s8350 + $0x164] sm:$0x1]
    %v9204 = vld [vmem:[%s8350 + $0x168] sm:$0xf]
    %v9205 = vld [vmem:[%s8350 + $0x16c] sm:$0xf]
    %v9206 = vld [vmem:[%s8350 + $0x170] sm:$0x1]
    %v9207 = vld [vmem:[%s8350 + $0x174] sm:$0xf]
    %v9208 = vld [vmem:[%s8350 + $0x178] sm:$0xf]
    %v9209 = vld [vmem:[%s8350 + $0x17c] sm:$0x1]
    %v9210 = vld [vmem:[%s8350 + $0x180] sm:$0xf]
    %v9211 = vld [vmem:[%s8350 + $0x184] sm:$0xf]
    %v9212 = vld [vmem:[%s8350 + $0x188] sm:$0x1]
    %v9213 = vld [vmem:[%s8350 + $0x18c] sm:$0xf]
    %v9214 = vld [vmem:[%s8350 + $0x190] sm:$0xf]
    %v9215 = vld [vmem:[%s8350 + $0x194] sm:$0x1]
    %v9216 = vld [vmem:[%s8350 + $0x1b0] sm:$0xf]
    %v9217 = vld [vmem:[%s8350 + $0x1b4] sm:$0xf]
    %v9218 = vld [vmem:[%s8350 + $0x1b8] sm:$0x1]
    %v9219 = vld [vmem:[%s8350 + $0x1bc] sm:$0xf]
    %v9220 = vld [vmem:[%s8350 + $0x1c0] sm:$0xf]
    %v9221 = vld [vmem:[%s8350 + $0x1c4] sm:$0x1]
    %v9222 = vld [vmem:[%s8350 + $0x1c8] sm:$0xf]
    %v9223 = vld [vmem:[%s8350 + $0x1cc] sm:$0xf]
    %v9224 = vld [vmem:[%s8350 + $0x1d0] sm:$0x1]
    %v9225 = vld [vmem:[%s8350 + $0x1d4] sm:$0xf]
    %v9226 = vld [vmem:[%s8350 + $0x1d8] sm:$0xf]
    %v9227 = vld [vmem:[%s8350 + $0x1dc] sm:$0x1]
    %v9228 = vld [vmem:[%s8350 + $0x1e0] sm:$0xf]
    %v9229 = vld [vmem:[%s8350 + $0x1e4] sm:$0xf]
    %v9230 = vld [vmem:[%s8350 + $0x1e8] sm:$0x1]
    %v9231 = vld [vmem:[%s8350 + $0x1ec] sm:$0xf]
    %v9232 = vld [vmem:[%s8350 + $0x1f0] sm:$0xf]
    %v9233 = vld [vmem:[%s8350 + $0x1f4] sm:$0x1]
    %v9234 = vld [vmem:[%s8350 + $0x1f8] sm:$0xf]
    %v9235 = vld [vmem:[%s8350 + $0x1fc] sm:$0xf]
    %v9236 = vld [vmem:[%s8350 + $0x200] sm:$0x1]
    %v9237 = vld [vmem:[%s8350 + $0x204] sm:$0xf]
    %v9238 = vld [vmem:[%s8350 + $0x208] sm:$0xf]
    %v9239 = vld [vmem:[%s8350 + $0x20c] sm:$0x1]
    %v9240 = vld [vmem:[%s8350 + $0x210] sm:$0xf]
    %v9241 = vld [vmem:[%s8350 + $0x214] sm:$0xf]
    %v9242 = vld [vmem:[%s8350 + $0x218] sm:$0x1]
    %v9243 = vld [vmem:[%s8350 + $0x21c] sm:$0xf]
    %v9244 = vld [vmem:[%s8350 + $0x220] sm:$0xf]
    %v9245 = vld [vmem:[%s8350 + $0x224] sm:$0x1]
    %v9246 = vld [vmem:[%s8350 + $0x228] sm:$0xf]
    %v9247 = vld [vmem:[%s8350 + $0x22c] sm:$0xf]
    %v9248 = vld [vmem:[%s8350 + $0x230] sm:$0x1]
    %v9249 = vld [vmem:[%s8350 + $0x234] sm:$0xf]
    %v9250 = vld [vmem:[%s8350 + $0x238] sm:$0xf]
    %v9251 = vld [vmem:[%s8350 + $0x23c] sm:$0x1]
    %v9252 = vld [vmem:[%s8350 + $0x240] sm:$0xf]
    %v9253 = vld [vmem:[%s8350 + $0x244] sm:$0xf]
    %v9254 = vld [vmem:[%s8350 + $0x248] sm:$0x1]
    %v9255 = vld [vmem:[%s8350 + $0x24c] sm:$0xf]
    %v9256 = vld [vmem:[%s8350 + $0x250] sm:$0xf]
    %v9257 = vld [vmem:[%s8350 + $0x254] sm:$0x1]
    %v9258 = vld [vmem:[%s8350 + $0x258] sm:$0xf]
    %v9259 = vld [vmem:[%s8350 + $0x25c] sm:$0xf]
    %v9260 = vld [vmem:[%s8350 + $0x260] sm:$0x1]
    %v9261 = vld [vmem:[%s8350 + $0x264] sm:$0xf]
    %v9262 = vld [vmem:[%s8350 + $0x268] sm:$0xf]
    %v9263 = vld [vmem:[%s8350 + $0x26c] sm:$0x1]
    %v9264 = vld [vmem:[%s8350 + $0x288] sm:$0xf]
    %v9265 = vld [vmem:[%s8350 + $0x28c] sm:$0xf]
    %v9266 = vld [vmem:[%s8350 + $0x290] sm:$0x1]
    %v9267 = vld [vmem:[%s8350 + $0x294] sm:$0xf]
    %v9268 = vld [vmem:[%s8350 + $0x298] sm:$0xf]
    %v9269 = vld [vmem:[%s8350 + $0x29c] sm:$0x1]
    %v9270 = vld [vmem:[%s8350 + $0x2a0] sm:$0xf]
    %v9271 = vld [vmem:[%s8350 + $0x2a4] sm:$0xf]
    %v9272 = vld [vmem:[%s8350 + $0x2a8] sm:$0x1]
    %v9273 = vld [vmem:[%s8350 + $0x2ac] sm:$0xf]
    %v9274 = vld [vmem:[%s8350 + $0x2b0] sm:$0xf]
    %v9275 = vld [vmem:[%s8350 + $0x2b4] sm:$0x1]
    %v9276 = vld [vmem:[%s8350 + $0x2b8] sm:$0xf]
    %v9277 = vld [vmem:[%s8350 + $0x2bc] sm:$0xf]
    %v9278 = vld [vmem:[%s8350 + $0x2c0] sm:$0x1]
    %v9279 = vld [vmem:[%s8350 + $0x2c4] sm:$0xf]
    %v9280 = vld [vmem:[%s8350 + $0x2c8] sm:$0xf]
    %v9281 = vld [vmem:[%s8350 + $0x2cc] sm:$0x1]
    %v9282 = vld [vmem:[%s8350 + $0x2d0] sm:$0xf]
    %v9283 = vld [vmem:[%s8350 + $0x2d4] sm:$0xf]
    %v9284 = vld [vmem:[%s8350 + $0x2d8] sm:$0x1]
    %v9285 = vld [vmem:[%s8350 + $0x2dc] sm:$0xf]
    %v9286 = vld [vmem:[%s8350 + $0x2e0] sm:$0xf]
    %v9287 = vld [vmem:[%s8350 + $0x2e4] sm:$0x1]
    %v9288 = vld [vmem:[%s8350 + $0x2e8] sm:$0xf]
    %v9289 = vld [vmem:[%s8350 + $0x2ec] sm:$0xf]
    %v9290 = vld [vmem:[%s8350 + $0x2f0] sm:$0x1]
    %v9291 = vld [vmem:[%s8350 + $0x2f4] sm:$0xf]
    %v9292 = vld [vmem:[%s8350 + $0x2f8] sm:$0xf]
    %v9293 = vld [vmem:[%s8350 + $0x2fc] sm:$0x1]
    %v9294 = vld [vmem:[%s8350 + $0x300] sm:$0xf]
    %v9295 = vld [vmem:[%s8350 + $0x304] sm:$0xf]
    %v9296 = vld [vmem:[%s8350 + $0x308] sm:$0x1]
    %v9297 = vld [vmem:[%s8350 + $0x30c] sm:$0xf]
    %v9298 = vld [vmem:[%s8350 + $0x310] sm:$0xf]
    %v9299 = vld [vmem:[%s8350 + $0x314] sm:$0x1]
    %v9300 = vld [vmem:[%s8350 + $0x318] sm:$0xf]
    %v9301 = vld [vmem:[%s8350 + $0x31c] sm:$0xf]
    %v9302 = vld [vmem:[%s8350 + $0x320] sm:$0x1]
    %v9303 = vld [vmem:[%s8350 + $0x324] sm:$0xf]
    %v9304 = vld [vmem:[%s8350 + $0x328] sm:$0xf]
    %v9305 = vld [vmem:[%s8350 + $0x32c] sm:$0x1]
    %v9306 = vld [vmem:[%s8350 + $0x330] sm:$0xf]
    %v9307 = vld [vmem:[%s8350 + $0x334] sm:$0xf]
    %v9308 = vld [vmem:[%s8350 + $0x338] sm:$0x1]
    %v9309 = vld [vmem:[%s8350 + $0x33c] sm:$0xf]
    %v9310 = vld [vmem:[%s8350 + $0x340] sm:$0xf]
    %v9311 = vld [vmem:[%s8350 + $0x344] sm:$0x1]
    %v9313 = vshrl.u32 %v9120, 16
    %v9315 = vrot.slane %v9313, 4
    %v9316 = vshll.u32 %v9120, 16
    %v9318 = vrot.slane %v9316, 5
    %v9319 = vor.u32 %v9315, %v9318
    %v9320 = vrot.slane %v9319, 4
    %v9322 = vshll.u32 %v9121, 16
    %v9324 = vrot.slane %v9322, 5
    %v9325 = vsel %vm596, %v9320, %v9324
    %v9326 = vshrl.u32 %v9121, 16
    %v9328 = vrot.slane %v9326, 4
    %v9329 = vor.u32 %v9328, %v9324
    %v9330 = vrot.slane %v9329, 4
    %v9332 = vshll.u32 %v9122, 16
    %v9334 = vrot.slane %v9332, 5
    %v9335 = vsel %vm596, %v9330, %v9334
    %v9337 = vshrl.u32 %v9123, 16
    %v9339 = vrot.slane %v9337, 4
    %v9340 = vshll.u32 %v9123, 16
    %v9342 = vrot.slane %v9340, 5
    %v9343 = vor.u32 %v9339, %v9342
    %v9344 = vrot.slane %v9343, 4
    %v9346 = vshll.u32 %v9124, 16
    %v9348 = vrot.slane %v9346, 5
    %v9349 = vsel %vm596, %v9344, %v9348
    %v9350 = vshrl.u32 %v9124, 16
    %v9352 = vrot.slane %v9350, 4
    %v9353 = vor.u32 %v9352, %v9348
    %v9354 = vrot.slane %v9353, 4
    %v9356 = vshll.u32 %v9125, 16
    %v9358 = vrot.slane %v9356, 5
    %v9359 = vsel %vm596, %v9354, %v9358
    %v9361 = vshrl.u32 %v9126, 16
    %v9363 = vrot.slane %v9361, 4
    %v9364 = vshll.u32 %v9126, 16
    %v9366 = vrot.slane %v9364, 5
    %v9367 = vor.u32 %v9363, %v9366
    %v9368 = vrot.slane %v9367, 4
    %v9370 = vshll.u32 %v9127, 16
    %v9372 = vrot.slane %v9370, 5
    %v9373 = vsel %vm596, %v9368, %v9372
    %v9374 = vshrl.u32 %v9127, 16
    %v9376 = vrot.slane %v9374, 4
    %v9377 = vor.u32 %v9376, %v9372
    %v9378 = vrot.slane %v9377, 4
    %v9380 = vshll.u32 %v9128, 16
    %v9382 = vrot.slane %v9380, 5
    %v9383 = vsel %vm596, %v9378, %v9382
    %v9385 = vshrl.u32 %v9129, 16
    %v9387 = vrot.slane %v9385, 4
    %v9388 = vshll.u32 %v9129, 16
    %v9390 = vrot.slane %v9388, 5
    %v9391 = vor.u32 %v9387, %v9390
    %v9392 = vrot.slane %v9391, 4
    %v9394 = vshll.u32 %v9130, 16
    %v9396 = vrot.slane %v9394, 5
    %v9397 = vsel %vm596, %v9392, %v9396
    %v9398 = vshrl.u32 %v9130, 16
    %v9400 = vrot.slane %v9398, 4
    %v9401 = vor.u32 %v9400, %v9396
    %v9402 = vrot.slane %v9401, 4
    %v9404 = vshll.u32 %v9131, 16
    %v9406 = vrot.slane %v9404, 5
    %v9407 = vsel %vm596, %v9402, %v9406
    %v9409 = vshrl.u32 %v9132, 16
    %v9411 = vrot.slane %v9409, 4
    %v9412 = vshll.u32 %v9132, 16
    %v9414 = vrot.slane %v9412, 5
    %v9415 = vor.u32 %v9411, %v9414
    %v9416 = vrot.slane %v9415, 4
    %v9418 = vshll.u32 %v9133, 16
    %v9420 = vrot.slane %v9418, 5
    %v9421 = vsel %vm596, %v9416, %v9420
    %v9422 = vshrl.u32 %v9133, 16
    %v9424 = vrot.slane %v9422, 4
    %v9425 = vor.u32 %v9424, %v9420
    %v9426 = vrot.slane %v9425, 4
    %v9428 = vshll.u32 %v9134, 16
    %v9430 = vrot.slane %v9428, 5
    %v9431 = vsel %vm596, %v9426, %v9430
    %v9433 = vshrl.u32 %v9135, 16
    %v9435 = vrot.slane %v9433, 4
    %v9436 = vshll.u32 %v9135, 16
    %v9438 = vrot.slane %v9436, 5
    %v9439 = vor.u32 %v9435, %v9438
    %v9440 = vrot.slane %v9439, 4
    %v9442 = vshll.u32 %v9136, 16
    %v9444 = vrot.slane %v9442, 5
    %v9445 = vsel %vm596, %v9440, %v9444
    %v9446 = vshrl.u32 %v9136, 16
    %v9448 = vrot.slane %v9446, 4
    %v9449 = vor.u32 %v9448, %v9444
    %v9450 = vrot.slane %v9449, 4
    %v9452 = vshll.u32 %v9137, 16
    %v9454 = vrot.slane %v9452, 5
    %v9455 = vsel %vm596, %v9450, %v9454
    %v9457 = vshrl.u32 %v9138, 16
    %v9459 = vrot.slane %v9457, 4
    %v9460 = vshll.u32 %v9138, 16
    %v9462 = vrot.slane %v9460, 5
    %v9463 = vor.u32 %v9459, %v9462
    %v9464 = vrot.slane %v9463, 4
    %v9466 = vshll.u32 %v9139, 16
    %v9468 = vrot.slane %v9466, 5
    %v9469 = vsel %vm596, %v9464, %v9468
    %v9470 = vshrl.u32 %v9139, 16
    %v9472 = vrot.slane %v9470, 4
    %v9473 = vor.u32 %v9472, %v9468
    %v9474 = vrot.slane %v9473, 4
    %v9476 = vshll.u32 %v9140, 16
    %v9478 = vrot.slane %v9476, 5
    %v9479 = vsel %vm596, %v9474, %v9478
    %v9481 = vshrl.u32 %v9141, 16
    %v9483 = vrot.slane %v9481, 4
    %v9484 = vshll.u32 %v9141, 16
    %v9486 = vrot.slane %v9484, 5
    %v9487 = vor.u32 %v9483, %v9486
    %v9488 = vrot.slane %v9487, 4
    %v9490 = vshll.u32 %v9142, 16
    %v9492 = vrot.slane %v9490, 5
    %v9493 = vsel %vm596, %v9488, %v9492
    %v9494 = vshrl.u32 %v9142, 16
    %v9496 = vrot.slane %v9494, 4
    %v9497 = vor.u32 %v9496, %v9492
    %v9498 = vrot.slane %v9497, 4
    %v9500 = vshll.u32 %v9143, 16
    %v9502 = vrot.slane %v9500, 5
    %v9503 = vsel %vm596, %v9498, %v9502
    %v9505 = vshrl.u32 %v9144, 16
    %v9507 = vrot.slane %v9505, 4
    %v9508 = vshll.u32 %v9144, 16
    %v9510 = vrot.slane %v9508, 5
    %v9511 = vor.u32 %v9507, %v9510
    %v9512 = vrot.slane %v9511, 4
    %v9514 = vshll.u32 %v9145, 16
    %v9516 = vrot.slane %v9514, 5
    %v9517 = vsel %vm596, %v9512, %v9516
    %v9518 = vshrl.u32 %v9145, 16
    %v9520 = vrot.slane %v9518, 4
    %v9521 = vor.u32 %v9520, %v9516
    %v9522 = vrot.slane %v9521, 4
    %v9524 = vshll.u32 %v9146, 16
    %v9526 = vrot.slane %v9524, 5
    %v9527 = vsel %vm596, %v9522, %v9526
    %v9529 = vshrl.u32 %v9147, 16
    %v9531 = vrot.slane %v9529, 4
    %v9532 = vshll.u32 %v9147, 16
    %v9534 = vrot.slane %v9532, 5
    %v9535 = vor.u32 %v9531, %v9534
    %v9536 = vrot.slane %v9535, 4
    %v9538 = vshll.u32 %v9148, 16
    %v9540 = vrot.slane %v9538, 5
    %v9541 = vsel %vm596, %v9536, %v9540
    %v9542 = vshrl.u32 %v9148, 16
    %v9544 = vrot.slane %v9542, 4
    %v9545 = vor.u32 %v9544, %v9540
    %v9546 = vrot.slane %v9545, 4
    %v9548 = vshll.u32 %v9149, 16
    %v9550 = vrot.slane %v9548, 5
    %v9551 = vsel %vm596, %v9546, %v9550
    %v9553 = vshrl.u32 %v9150, 16
    %v9555 = vrot.slane %v9553, 4
    %v9556 = vshll.u32 %v9150, 16
    %v9558 = vrot.slane %v9556, 5
    %v9559 = vor.u32 %v9555, %v9558
    %v9560 = vrot.slane %v9559, 4
    %v9562 = vshll.u32 %v9151, 16
    %v9564 = vrot.slane %v9562, 5
    %v9565 = vsel %vm596, %v9560, %v9564
    %v9566 = vshrl.u32 %v9151, 16
    %v9568 = vrot.slane %v9566, 4
    %v9569 = vor.u32 %v9568, %v9564
    %v9570 = vrot.slane %v9569, 4
    %v9572 = vshll.u32 %v9152, 16
    %v9574 = vrot.slane %v9572, 5
    %v9575 = vsel %vm596, %v9570, %v9574
    %v9577 = vshrl.u32 %v9153, 16
    %v9579 = vrot.slane %v9577, 4
    %v9580 = vshll.u32 %v9153, 16
    %v9582 = vrot.slane %v9580, 5
    %v9583 = vor.u32 %v9579, %v9582
    %v9584 = vrot.slane %v9583, 4
    %v9586 = vshll.u32 %v9154, 16
    %v9588 = vrot.slane %v9586, 5
    %v9589 = vsel %vm596, %v9584, %v9588
    %v9590 = vshrl.u32 %v9154, 16
    %v9592 = vrot.slane %v9590, 4
    %v9593 = vor.u32 %v9592, %v9588
    %v9594 = vrot.slane %v9593, 4
    %v9596 = vshll.u32 %v9155, 16
    %v9598 = vrot.slane %v9596, 5
    %v9599 = vsel %vm596, %v9594, %v9598
    %v9601 = vshrl.u32 %v9156, 16
    %v9603 = vrot.slane %v9601, 4
    %v9604 = vshll.u32 %v9156, 16
    %v9606 = vrot.slane %v9604, 5
    %v9607 = vor.u32 %v9603, %v9606
    %v9608 = vrot.slane %v9607, 4
    %v9610 = vshll.u32 %v9157, 16
    %v9612 = vrot.slane %v9610, 5
    %v9613 = vsel %vm596, %v9608, %v9612
    %v9614 = vshrl.u32 %v9157, 16
    %v9616 = vrot.slane %v9614, 4
    %v9617 = vor.u32 %v9616, %v9612
    %v9618 = vrot.slane %v9617, 4
    %v9620 = vshll.u32 %v9158, 16
    %v9622 = vrot.slane %v9620, 5
    %v9623 = vsel %vm596, %v9618, %v9622
    %v9625 = vshrl.u32 %v9159, 16
    %v9627 = vrot.slane %v9625, 4
    %v9628 = vshll.u32 %v9159, 16
    %v9630 = vrot.slane %v9628, 5
    %v9631 = vor.u32 %v9627, %v9630
    %v9632 = vrot.slane %v9631, 4
    %v9634 = vshll.u32 %v9160, 16
    %v9636 = vrot.slane %v9634, 5
    %v9637 = vsel %vm596, %v9632, %v9636
    %v9638 = vshrl.u32 %v9160, 16
    %v9640 = vrot.slane %v9638, 4
    %v9641 = vor.u32 %v9640, %v9636
    %v9642 = vrot.slane %v9641, 4
    %v9644 = vshll.u32 %v9161, 16
    %v9646 = vrot.slane %v9644, 5
    %v9647 = vsel %vm596, %v9642, %v9646
    %v9649 = vshrl.u32 %v9162, 16
    %v9651 = vrot.slane %v9649, 4
    %v9652 = vshll.u32 %v9162, 16
    %v9654 = vrot.slane %v9652, 5
    %v9655 = vor.u32 %v9651, %v9654
    %v9656 = vrot.slane %v9655, 4
    %v9658 = vshll.u32 %v9163, 16
    %v9660 = vrot.slane %v9658, 5
    %v9661 = vsel %vm596, %v9656, %v9660
    %v9662 = vshrl.u32 %v9163, 16
    %v9664 = vrot.slane %v9662, 4
    %v9665 = vor.u32 %v9664, %v9660
    %v9666 = vrot.slane %v9665, 4
    %v9668 = vshll.u32 %v9164, 16
    %v9670 = vrot.slane %v9668, 5
    %v9671 = vsel %vm596, %v9666, %v9670
    %v9673 = vshrl.u32 %v9165, 16
    %v9675 = vrot.slane %v9673, 4
    %v9676 = vshll.u32 %v9165, 16
    %v9678 = vrot.slane %v9676, 5
    %v9679 = vor.u32 %v9675, %v9678
    %v9680 = vrot.slane %v9679, 4
    %v9682 = vshll.u32 %v9166, 16
    %v9684 = vrot.slane %v9682, 5
    %v9685 = vsel %vm596, %v9680, %v9684
    %v9686 = vshrl.u32 %v9166, 16
    %v9688 = vrot.slane %v9686, 4
    %v9689 = vor.u32 %v9688, %v9684
    %v9690 = vrot.slane %v9689, 4
    %v9692 = vshll.u32 %v9167, 16
    %v9694 = vrot.slane %v9692, 5
    %v9695 = vsel %vm596, %v9690, %v9694
    %v9697 = vshrl.u32 %v9168, 16
    %v9699 = vrot.slane %v9697, 4
    %v9700 = vshll.u32 %v9168, 16
    %v9702 = vrot.slane %v9700, 5
    %v9703 = vor.u32 %v9699, %v9702
    %v9704 = vrot.slane %v9703, 4
    %v9706 = vshll.u32 %v9169, 16
    %v9708 = vrot.slane %v9706, 5
    %v9709 = vsel %vm596, %v9704, %v9708
    %v9710 = vshrl.u32 %v9169, 16
    %v9712 = vrot.slane %v9710, 4
    %v9713 = vor.u32 %v9712, %v9708
    %v9714 = vrot.slane %v9713, 4
    %v9716 = vshll.u32 %v9170, 16
    %v9718 = vrot.slane %v9716, 5
    %v9719 = vsel %vm596, %v9714, %v9718
    %v9721 = vshrl.u32 %v9171, 16
    %v9723 = vrot.slane %v9721, 4
    %v9724 = vshll.u32 %v9171, 16
    %v9726 = vrot.slane %v9724, 5
    %v9727 = vor.u32 %v9723, %v9726
    %v9728 = vrot.slane %v9727, 4
    %v9730 = vshll.u32 %v9172, 16
    %v9732 = vrot.slane %v9730, 5
    %v9733 = vsel %vm596, %v9728, %v9732
    %v9734 = vshrl.u32 %v9172, 16
    %v9736 = vrot.slane %v9734, 4
    %v9737 = vor.u32 %v9736, %v9732
    %v9738 = vrot.slane %v9737, 4
    %v9740 = vshll.u32 %v9173, 16
    %v9742 = vrot.slane %v9740, 5
    %v9743 = vsel %vm596, %v9738, %v9742
    %v9745 = vshrl.u32 %v9174, 16
    %v9747 = vrot.slane %v9745, 4
    %v9748 = vshll.u32 %v9174, 16
    %v9750 = vrot.slane %v9748, 5
    %v9751 = vor.u32 %v9747, %v9750
    %v9752 = vrot.slane %v9751, 4
    %v9754 = vshll.u32 %v9175, 16
    %v9756 = vrot.slane %v9754, 5
    %v9757 = vsel %vm596, %v9752, %v9756
    %v9758 = vshrl.u32 %v9175, 16
    %v9760 = vrot.slane %v9758, 4
    %v9761 = vor.u32 %v9760, %v9756
    %v9762 = vrot.slane %v9761, 4
    %v9764 = vshll.u32 %v9176, 16
    %v9766 = vrot.slane %v9764, 5
    %v9767 = vsel %vm596, %v9762, %v9766
    %v9769 = vshrl.u32 %v9177, 16
    %v9771 = vrot.slane %v9769, 4
    %v9772 = vshll.u32 %v9177, 16
    %v9774 = vrot.slane %v9772, 5
    %v9775 = vor.u32 %v9771, %v9774
    %v9776 = vrot.slane %v9775, 4
    %v9778 = vshll.u32 %v9178, 16
    %v9780 = vrot.slane %v9778, 5
    %v9781 = vsel %vm596, %v9776, %v9780
    %v9782 = vshrl.u32 %v9178, 16
    %v9784 = vrot.slane %v9782, 4
    %v9785 = vor.u32 %v9784, %v9780
    %v9786 = vrot.slane %v9785, 4
    %v9788 = vshll.u32 %v9179, 16
    %v9790 = vrot.slane %v9788, 5
    %v9791 = vsel %vm596, %v9786, %v9790
    %v9793 = vshrl.u32 %v9180, 16
    %v9795 = vrot.slane %v9793, 4
    %v9796 = vshll.u32 %v9180, 16
    %v9798 = vrot.slane %v9796, 5
    %v9799 = vor.u32 %v9795, %v9798
    %v9800 = vrot.slane %v9799, 4
    %v9802 = vshll.u32 %v9181, 16
    %v9804 = vrot.slane %v9802, 5
    %v9805 = vsel %vm596, %v9800, %v9804
    %v9806 = vshrl.u32 %v9181, 16
    %v9808 = vrot.slane %v9806, 4
    %v9809 = vor.u32 %v9808, %v9804
    %v9810 = vrot.slane %v9809, 4
    %v9812 = vshll.u32 %v9182, 16
    %v9814 = vrot.slane %v9812, 5
    %v9815 = vsel %vm596, %v9810, %v9814
    %v9817 = vshrl.u32 %v9183, 16
    %v9819 = vrot.slane %v9817, 4
    %v9820 = vshll.u32 %v9183, 16
    %v9822 = vrot.slane %v9820, 5
    %v9823 = vor.u32 %v9819, %v9822
    %v9824 = vrot.slane %v9823, 4
    %v9826 = vshll.u32 %v9184, 16
    %v9828 = vrot.slane %v9826, 5
    %v9829 = vsel %vm596, %v9824, %v9828
    %v9830 = vshrl.u32 %v9184, 16
    %v9832 = vrot.slane %v9830, 4
    %v9833 = vor.u32 %v9832, %v9828
    %v9834 = vrot.slane %v9833, 4
    %v9836 = vshll.u32 %v9185, 16
    %v9838 = vrot.slane %v9836, 5
    %v9839 = vsel %vm596, %v9834, %v9838
    %v9841 = vshrl.u32 %v9186, 16
    %v9843 = vrot.slane %v9841, 4
    %v9844 = vshll.u32 %v9186, 16
    %v9846 = vrot.slane %v9844, 5
    %v9847 = vor.u32 %v9843, %v9846
    %v9848 = vrot.slane %v9847, 4
    %v9850 = vshll.u32 %v9187, 16
    %v9852 = vrot.slane %v9850, 5
    %v9853 = vsel %vm596, %v9848, %v9852
    %v9854 = vshrl.u32 %v9187, 16
    %v9856 = vrot.slane %v9854, 4
    %v9857 = vor.u32 %v9856, %v9852
    %v9858 = vrot.slane %v9857, 4
    %v9860 = vshll.u32 %v9188, 16
    %v9862 = vrot.slane %v9860, 5
    %v9863 = vsel %vm596, %v9858, %v9862
    %v9865 = vshrl.u32 %v9189, 16
    %v9867 = vrot.slane %v9865, 4
    %v9868 = vshll.u32 %v9189, 16
    %v9870 = vrot.slane %v9868, 5
    %v9871 = vor.u32 %v9867, %v9870
    %v9872 = vrot.slane %v9871, 4
    %v9874 = vshll.u32 %v9190, 16
    %v9876 = vrot.slane %v9874, 5
    %v9877 = vsel %vm596, %v9872, %v9876
    %v9878 = vshrl.u32 %v9190, 16
    %v9880 = vrot.slane %v9878, 4
    %v9881 = vor.u32 %v9880, %v9876
    %v9882 = vrot.slane %v9881, 4
    %v9884 = vshll.u32 %v9191, 16
    %v9886 = vrot.slane %v9884, 5
    %v9887 = vsel %vm596, %v9882, %v9886
    %v9889 = vshrl.u32 %v9192, 16
    %v9891 = vrot.slane %v9889, 4
    %v9892 = vshll.u32 %v9192, 16
    %v9894 = vrot.slane %v9892, 5
    %v9895 = vor.u32 %v9891, %v9894
    %v9896 = vrot.slane %v9895, 4
    %v9898 = vshll.u32 %v9193, 16
    %v9900 = vrot.slane %v9898, 5
    %v9901 = vsel %vm596, %v9896, %v9900
    %v9902 = vshrl.u32 %v9193, 16
    %v9904 = vrot.slane %v9902, 4
    %v9905 = vor.u32 %v9904, %v9900
    %v9906 = vrot.slane %v9905, 4
    %v9908 = vshll.u32 %v9194, 16
    %v9910 = vrot.slane %v9908, 5
    %v9911 = vsel %vm596, %v9906, %v9910
    %v9913 = vshrl.u32 %v9195, 16
    %v9915 = vrot.slane %v9913, 4
    %v9916 = vshll.u32 %v9195, 16
    %v9918 = vrot.slane %v9916, 5
    %v9919 = vor.u32 %v9915, %v9918
    %v9920 = vrot.slane %v9919, 4
    %v9922 = vshll.u32 %v9196, 16
    %v9924 = vrot.slane %v9922, 5
    %v9925 = vsel %vm596, %v9920, %v9924
    %v9926 = vshrl.u32 %v9196, 16
    %v9928 = vrot.slane %v9926, 4
    %v9929 = vor.u32 %v9928, %v9924
    %v9930 = vrot.slane %v9929, 4
    %v9932 = vshll.u32 %v9197, 16
    %v9934 = vrot.slane %v9932, 5
    %v9935 = vsel %vm596, %v9930, %v9934
    %v9937 = vshrl.u32 %v9198, 16
    %v9939 = vrot.slane %v9937, 4
    %v9940 = vshll.u32 %v9198, 16
    %v9942 = vrot.slane %v9940, 5
    %v9943 = vor.u32 %v9939, %v9942
    %v9944 = vrot.slane %v9943, 4
    %v9946 = vshll.u32 %v9199, 16
    %v9948 = vrot.slane %v9946, 5
    %v9949 = vsel %vm596, %v9944, %v9948
    %v9950 = vshrl.u32 %v9199, 16
    %v9952 = vrot.slane %v9950, 4
    %v9953 = vor.u32 %v9952, %v9948
    %v9954 = vrot.slane %v9953, 4
    %v9956 = vshll.u32 %v9200, 16
    %v9958 = vrot.slane %v9956, 5
    %v9959 = vsel %vm596, %v9954, %v9958
    %v9961 = vshrl.u32 %v9201, 16
    %v9963 = vrot.slane %v9961, 4
    %v9964 = vshll.u32 %v9201, 16
    %v9966 = vrot.slane %v9964, 5
    %v9967 = vor.u32 %v9963, %v9966
    %v9968 = vrot.slane %v9967, 4
    %v9970 = vshll.u32 %v9202, 16
    %v9972 = vrot.slane %v9970, 5
    %v9973 = vsel %vm596, %v9968, %v9972
    %v9974 = vshrl.u32 %v9202, 16
    %v9976 = vrot.slane %v9974, 4
    %v9977 = vor.u32 %v9976, %v9972
    %v9978 = vrot.slane %v9977, 4
    %v9980 = vshll.u32 %v9203, 16
    %v9982 = vrot.slane %v9980, 5
    %v9983 = vsel %vm596, %v9978, %v9982
    %v9985 = vshrl.u32 %v9204, 16
    %v9987 = vrot.slane %v9985, 4
    %v9988 = vshll.u32 %v9204, 16
    %v9990 = vrot.slane %v9988, 5
    %v9991 = vor.u32 %v9987, %v9990
    %v9992 = vrot.slane %v9991, 4
    %v9994 = vshll.u32 %v9205, 16
    %v9996 = vrot.slane %v9994, 5
    %v9997 = vsel %vm596, %v9992, %v9996
    %v9998 = vshrl.u32 %v9205, 16
    %v10000 = vrot.slane %v9998, 4
    %v10001 = vor.u32 %v10000, %v9996
    %v10002 = vrot.slane %v10001, 4
    %v10004 = vshll.u32 %v9206, 16
    %v10006 = vrot.slane %v10004, 5
    %v10007 = vsel %vm596, %v10002, %v10006
    %v10009 = vshrl.u32 %v9207, 16
    %v10011 = vrot.slane %v10009, 4
    %v10012 = vshll.u32 %v9207, 16
    %v10014 = vrot.slane %v10012, 5
    %v10015 = vor.u32 %v10011, %v10014
    %v10016 = vrot.slane %v10015, 4
    %v10018 = vshll.u32 %v9208, 16
    %v10020 = vrot.slane %v10018, 5
    %v10021 = vsel %vm596, %v10016, %v10020
    %v10022 = vshrl.u32 %v9208, 16
    %v10024 = vrot.slane %v10022, 4
    %v10025 = vor.u32 %v10024, %v10020
    %v10026 = vrot.slane %v10025, 4
    %v10028 = vshll.u32 %v9209, 16
    %v10030 = vrot.slane %v10028, 5
    %v10031 = vsel %vm596, %v10026, %v10030
    %v10033 = vshrl.u32 %v9210, 16
    %v10035 = vrot.slane %v10033, 4
    %v10036 = vshll.u32 %v9210, 16
    %v10038 = vrot.slane %v10036, 5
    %v10039 = vor.u32 %v10035, %v10038
    %v10040 = vrot.slane %v10039, 4
    %v10042 = vshll.u32 %v9211, 16
    %v10044 = vrot.slane %v10042, 5
    %v10045 = vsel %vm596, %v10040, %v10044
    %v10046 = vshrl.u32 %v9211, 16
    %v10048 = vrot.slane %v10046, 4
    %v10049 = vor.u32 %v10048, %v10044
    %v10050 = vrot.slane %v10049, 4
    %v10052 = vshll.u32 %v9212, 16
    %v10054 = vrot.slane %v10052, 5
    %v10055 = vsel %vm596, %v10050, %v10054
    %v10057 = vshrl.u32 %v9213, 16
    %v10059 = vrot.slane %v10057, 4
    %v10060 = vshll.u32 %v9213, 16
    %v10062 = vrot.slane %v10060, 5
    %v10063 = vor.u32 %v10059, %v10062
    %v10064 = vrot.slane %v10063, 4
    %v10066 = vshll.u32 %v9214, 16
    %v10068 = vrot.slane %v10066, 5
    %v10069 = vsel %vm596, %v10064, %v10068
    %v10070 = vshrl.u32 %v9214, 16
    %v10072 = vrot.slane %v10070, 4
    %v10073 = vor.u32 %v10072, %v10068
    %v10074 = vrot.slane %v10073, 4
    %v10076 = vshll.u32 %v9215, 16
    %v10078 = vrot.slane %v10076, 5
    %v10079 = vsel %vm596, %v10074, %v10078
    %v10081 = vshrl.u32 %v9216, 16
    %v10083 = vrot.slane %v10081, 4
    %v10084 = vshll.u32 %v9216, 16
    %v10086 = vrot.slane %v10084, 5
    %v10087 = vor.u32 %v10083, %v10086
    %v10088 = vrot.slane %v10087, 4
    %v10090 = vshll.u32 %v9217, 16
    %v10092 = vrot.slane %v10090, 5
    %v10093 = vsel %vm596, %v10088, %v10092
    %v10094 = vshrl.u32 %v9217, 16
    %v10096 = vrot.slane %v10094, 4
    %v10097 = vor.u32 %v10096, %v10092
    %v10098 = vrot.slane %v10097, 4
    %v10100 = vshll.u32 %v9218, 16
    %v10102 = vrot.slane %v10100, 5
    %v10103 = vsel %vm596, %v10098, %v10102
    %v10105 = vshrl.u32 %v9219, 16
    %v10107 = vrot.slane %v10105, 4
    %v10108 = vshll.u32 %v9219, 16
    %v10110 = vrot.slane %v10108, 5
    %v10111 = vor.u32 %v10107, %v10110
    %v10112 = vrot.slane %v10111, 4
    %v10114 = vshll.u32 %v9220, 16
    %v10116 = vrot.slane %v10114, 5
    %v10117 = vsel %vm596, %v10112, %v10116
    %v10118 = vshrl.u32 %v9220, 16
    %v10120 = vrot.slane %v10118, 4
    %v10121 = vor.u32 %v10120, %v10116
    %v10122 = vrot.slane %v10121, 4
    %v10124 = vshll.u32 %v9221, 16
    %v10126 = vrot.slane %v10124, 5
    %v10127 = vsel %vm596, %v10122, %v10126
    %v10129 = vshrl.u32 %v9222, 16
    %v10131 = vrot.slane %v10129, 4
    %v10132 = vshll.u32 %v9222, 16
    %v10134 = vrot.slane %v10132, 5
    %v10135 = vor.u32 %v10131, %v10134
    %v10136 = vrot.slane %v10135, 4
    %v10138 = vshll.u32 %v9223, 16
    %v10140 = vrot.slane %v10138, 5
    %v10141 = vsel %vm596, %v10136, %v10140
    %v10142 = vshrl.u32 %v9223, 16
    %v10144 = vrot.slane %v10142, 4
    %v10145 = vor.u32 %v10144, %v10140
    %v10146 = vrot.slane %v10145, 4
    %v10148 = vshll.u32 %v9224, 16
    %v10150 = vrot.slane %v10148, 5
    %v10151 = vsel %vm596, %v10146, %v10150
    %v10153 = vshrl.u32 %v9225, 16
    %v10155 = vrot.slane %v10153, 4
    %v10156 = vshll.u32 %v9225, 16
    %v10158 = vrot.slane %v10156, 5
    %v10159 = vor.u32 %v10155, %v10158
    %v10160 = vrot.slane %v10159, 4
    %v10162 = vshll.u32 %v9226, 16
    %v10164 = vrot.slane %v10162, 5
    %v10165 = vsel %vm596, %v10160, %v10164
    %v10166 = vshrl.u32 %v9226, 16
    %v10168 = vrot.slane %v10166, 4
    %v10169 = vor.u32 %v10168, %v10164
    %v10170 = vrot.slane %v10169, 4
    %v10172 = vshll.u32 %v9227, 16
    %v10174 = vrot.slane %v10172, 5
    %v10175 = vsel %vm596, %v10170, %v10174
    %v10177 = vshrl.u32 %v9228, 16
    %v10179 = vrot.slane %v10177, 4
    %v10180 = vshll.u32 %v9228, 16
    %v10182 = vrot.slane %v10180, 5
    %v10183 = vor.u32 %v10179, %v10182
    %v10184 = vrot.slane %v10183, 4
    %v10186 = vshll.u32 %v9229, 16
    %v10188 = vrot.slane %v10186, 5
    %v10189 = vsel %vm596, %v10184, %v10188
    %v10190 = vshrl.u32 %v9229, 16
    %v10192 = vrot.slane %v10190, 4
    %v10193 = vor.u32 %v10192, %v10188
    %v10194 = vrot.slane %v10193, 4
    %v10196 = vshll.u32 %v9230, 16
    %v10198 = vrot.slane %v10196, 5
    %v10199 = vsel %vm596, %v10194, %v10198
    %v10201 = vshrl.u32 %v9231, 16
    %v10203 = vrot.slane %v10201, 4
    %v10204 = vshll.u32 %v9231, 16
    %v10206 = vrot.slane %v10204, 5
    %v10207 = vor.u32 %v10203, %v10206
    %v10208 = vrot.slane %v10207, 4
    %v10210 = vshll.u32 %v9232, 16
    %v10212 = vrot.slane %v10210, 5
    %v10213 = vsel %vm596, %v10208, %v10212
    %v10214 = vshrl.u32 %v9232, 16
    %v10216 = vrot.slane %v10214, 4
    %v10217 = vor.u32 %v10216, %v10212
    %v10218 = vrot.slane %v10217, 4
    %v10220 = vshll.u32 %v9233, 16
    %v10222 = vrot.slane %v10220, 5
    %v10223 = vsel %vm596, %v10218, %v10222
    %v10225 = vshrl.u32 %v9234, 16
    %v10227 = vrot.slane %v10225, 4
    %v10228 = vshll.u32 %v9234, 16
    %v10230 = vrot.slane %v10228, 5
    %v10231 = vor.u32 %v10227, %v10230
    %v10232 = vrot.slane %v10231, 4
    %v10234 = vshll.u32 %v9235, 16
    %v10236 = vrot.slane %v10234, 5
    %v10237 = vsel %vm596, %v10232, %v10236
    %v10238 = vshrl.u32 %v9235, 16
    %v10240 = vrot.slane %v10238, 4
    %v10241 = vor.u32 %v10240, %v10236
    %v10242 = vrot.slane %v10241, 4
    %v10244 = vshll.u32 %v9236, 16
    %v10246 = vrot.slane %v10244, 5
    %v10247 = vsel %vm596, %v10242, %v10246
    %v10249 = vshrl.u32 %v9237, 16
    %v10251 = vrot.slane %v10249, 4
    %v10252 = vshll.u32 %v9237, 16
    %v10254 = vrot.slane %v10252, 5
    %v10255 = vor.u32 %v10251, %v10254
    %v10256 = vrot.slane %v10255, 4
    %v10258 = vshll.u32 %v9238, 16
    %v10260 = vrot.slane %v10258, 5
    %v10261 = vsel %vm596, %v10256, %v10260
    %v10262 = vshrl.u32 %v9238, 16
    %v10264 = vrot.slane %v10262, 4
    %v10265 = vor.u32 %v10264, %v10260
    %v10266 = vrot.slane %v10265, 4
    %v10268 = vshll.u32 %v9239, 16
    %v10270 = vrot.slane %v10268, 5
    %v10271 = vsel %vm596, %v10266, %v10270
    %v10273 = vshrl.u32 %v9240, 16
    %v10275 = vrot.slane %v10273, 4
    %v10276 = vshll.u32 %v9240, 16
    %v10278 = vrot.slane %v10276, 5
    %v10279 = vor.u32 %v10275, %v10278
    %v10280 = vrot.slane %v10279, 4
    %v10282 = vshll.u32 %v9241, 16
    %v10284 = vrot.slane %v10282, 5
    %v10285 = vsel %vm596, %v10280, %v10284
    %v10286 = vshrl.u32 %v9241, 16
    %v10288 = vrot.slane %v10286, 4
    %v10289 = vor.u32 %v10288, %v10284
    %v10290 = vrot.slane %v10289, 4
    %v10292 = vshll.u32 %v9242, 16
    %v10294 = vrot.slane %v10292, 5
    %v10295 = vsel %vm596, %v10290, %v10294
    %v10297 = vshrl.u32 %v9243, 16
    %v10299 = vrot.slane %v10297, 4
    %v10300 = vshll.u32 %v9243, 16
    %v10302 = vrot.slane %v10300, 5
    %v10303 = vor.u32 %v10299, %v10302
    %v10304 = vrot.slane %v10303, 4
    %v10306 = vshll.u32 %v9244, 16
    %v10308 = vrot.slane %v10306, 5
    %v10309 = vsel %vm596, %v10304, %v10308
    %v10310 = vshrl.u32 %v9244, 16
    %v10312 = vrot.slane %v10310, 4
    %v10313 = vor.u32 %v10312, %v10308
    %v10314 = vrot.slane %v10313, 4
    %v10316 = vshll.u32 %v9245, 16
    %v10318 = vrot.slane %v10316, 5
    %v10319 = vsel %vm596, %v10314, %v10318
    %v10321 = vshrl.u32 %v9246, 16
    %v10323 = vrot.slane %v10321, 4
    %v10324 = vshll.u32 %v9246, 16
    %v10326 = vrot.slane %v10324, 5
    %v10327 = vor.u32 %v10323, %v10326
    %v10328 = vrot.slane %v10327, 4
    %v10330 = vshll.u32 %v9247, 16
    %v10332 = vrot.slane %v10330, 5
    %v10333 = vsel %vm596, %v10328, %v10332
    %v10334 = vshrl.u32 %v9247, 16
    %v10336 = vrot.slane %v10334, 4
    %v10337 = vor.u32 %v10336, %v10332
    %v10338 = vrot.slane %v10337, 4
    %v10340 = vshll.u32 %v9248, 16
    %v10342 = vrot.slane %v10340, 5
    %v10343 = vsel %vm596, %v10338, %v10342
    %v10345 = vshrl.u32 %v9249, 16
    %v10347 = vrot.slane %v10345, 4
    %v10348 = vshll.u32 %v9249, 16
    %v10350 = vrot.slane %v10348, 5
    %v10351 = vor.u32 %v10347, %v10350
    %v10352 = vrot.slane %v10351, 4
    %v10354 = vshll.u32 %v9250, 16
    %v10356 = vrot.slane %v10354, 5
    %v10357 = vsel %vm596, %v10352, %v10356
    %v10358 = vshrl.u32 %v9250, 16
    %v10360 = vrot.slane %v10358, 4
    %v10361 = vor.u32 %v10360, %v10356
    %v10362 = vrot.slane %v10361, 4
    %v10364 = vshll.u32 %v9251, 16
    %v10366 = vrot.slane %v10364, 5
    %v10367 = vsel %vm596, %v10362, %v10366
    %v10369 = vshrl.u32 %v9252, 16
    %v10371 = vrot.slane %v10369, 4
    %v10372 = vshll.u32 %v9252, 16
    %v10374 = vrot.slane %v10372, 5
    %v10375 = vor.u32 %v10371, %v10374
    %v10376 = vrot.slane %v10375, 4
    %v10378 = vshll.u32 %v9253, 16
    %v10380 = vrot.slane %v10378, 5
    %v10381 = vsel %vm596, %v10376, %v10380
    %v10382 = vshrl.u32 %v9253, 16
    %v10384 = vrot.slane %v10382, 4
    %v10385 = vor.u32 %v10384, %v10380
    %v10386 = vrot.slane %v10385, 4
    %v10388 = vshll.u32 %v9254, 16
    %v10390 = vrot.slane %v10388, 5
    %v10391 = vsel %vm596, %v10386, %v10390
    %v10393 = vshrl.u32 %v9255, 16
    %v10395 = vrot.slane %v10393, 4
    %v10396 = vshll.u32 %v9255, 16
    %v10398 = vrot.slane %v10396, 5
    %v10399 = vor.u32 %v10395, %v10398
    %v10400 = vrot.slane %v10399, 4
    %v10402 = vshll.u32 %v9256, 16
    %v10404 = vrot.slane %v10402, 5
    %v10405 = vsel %vm596, %v10400, %v10404
    %v10406 = vshrl.u32 %v9256, 16
    %v10408 = vrot.slane %v10406, 4
    %v10409 = vor.u32 %v10408, %v10404
    %v10410 = vrot.slane %v10409, 4
    %v10412 = vshll.u32 %v9257, 16
    %v10414 = vrot.slane %v10412, 5
    %v10415 = vsel %vm596, %v10410, %v10414
    %v10417 = vshrl.u32 %v9258, 16
    %v10419 = vrot.slane %v10417, 4
    %v10420 = vshll.u32 %v9258, 16
    %v10422 = vrot.slane %v10420, 5
    %v10423 = vor.u32 %v10419, %v10422
    %v10424 = vrot.slane %v10423, 4
    %v10426 = vshll.u32 %v9259, 16
    %v10428 = vrot.slane %v10426, 5
    %v10429 = vsel %vm596, %v10424, %v10428
    %v10430 = vshrl.u32 %v9259, 16
    %v10432 = vrot.slane %v10430, 4
    %v10433 = vor.u32 %v10432, %v10428
    %v10434 = vrot.slane %v10433, 4
    %v10436 = vshll.u32 %v9260, 16
    %v10438 = vrot.slane %v10436, 5
    %v10439 = vsel %vm596, %v10434, %v10438
    %v10441 = vshrl.u32 %v9261, 16
    %v10443 = vrot.slane %v10441, 4
    %v10444 = vshll.u32 %v9261, 16
    %v10446 = vrot.slane %v10444, 5
    %v10447 = vor.u32 %v10443, %v10446
    %v10448 = vrot.slane %v10447, 4
    %v10450 = vshll.u32 %v9262, 16
    %v10452 = vrot.slane %v10450, 5
    %v10453 = vsel %vm596, %v10448, %v10452
    %v10454 = vshrl.u32 %v9262, 16
    %v10456 = vrot.slane %v10454, 4
    %v10457 = vor.u32 %v10456, %v10452
    %v10458 = vrot.slane %v10457, 4
    %v10460 = vshll.u32 %v9263, 16
    %v10462 = vrot.slane %v10460, 5
    %v10463 = vsel %vm596, %v10458, %v10462
    %v10465 = vshrl.u32 %v9264, 16
    %v10467 = vrot.slane %v10465, 4
    %v10468 = vshll.u32 %v9264, 16
    %v10470 = vrot.slane %v10468, 5
    %v10471 = vor.u32 %v10467, %v10470
    %v10472 = vrot.slane %v10471, 4
    %v10474 = vshll.u32 %v9265, 16
    %v10476 = vrot.slane %v10474, 5
    %v10477 = vsel %vm596, %v10472, %v10476
    %v10478 = vshrl.u32 %v9265, 16
    %v10480 = vrot.slane %v10478, 4
    %v10481 = vor.u32 %v10480, %v10476
    %v10482 = vrot.slane %v10481, 4
    %v10484 = vshll.u32 %v9266, 16
    %v10486 = vrot.slane %v10484, 5
    %v10487 = vsel %vm596, %v10482, %v10486
    %v10489 = vshrl.u32 %v9267, 16
    %v10491 = vrot.slane %v10489, 4
    %v10492 = vshll.u32 %v9267, 16
    %v10494 = vrot.slane %v10492, 5
    %v10495 = vor.u32 %v10491, %v10494
    %v10496 = vrot.slane %v10495, 4
    %v10498 = vshll.u32 %v9268, 16
    %v10500 = vrot.slane %v10498, 5
    %v10501 = vsel %vm596, %v10496, %v10500
    %v10502 = vshrl.u32 %v9268, 16
    %v10504 = vrot.slane %v10502, 4
    %v10505 = vor.u32 %v10504, %v10500
    %v10506 = vrot.slane %v10505, 4
    %v10508 = vshll.u32 %v9269, 16
    %v10510 = vrot.slane %v10508, 5
    %v10511 = vsel %vm596, %v10506, %v10510
    %v10513 = vshrl.u32 %v9270, 16
    %v10515 = vrot.slane %v10513, 4
    %v10516 = vshll.u32 %v9270, 16
    %v10518 = vrot.slane %v10516, 5
    %v10519 = vor.u32 %v10515, %v10518
    %v10520 = vrot.slane %v10519, 4
    %v10522 = vshll.u32 %v9271, 16
    %v10524 = vrot.slane %v10522, 5
    %v10525 = vsel %vm596, %v10520, %v10524
    %v10526 = vshrl.u32 %v9271, 16
    %v10528 = vrot.slane %v10526, 4
    %v10529 = vor.u32 %v10528, %v10524
    %v10530 = vrot.slane %v10529, 4
    %v10532 = vshll.u32 %v9272, 16
    %v10534 = vrot.slane %v10532, 5
    %v10535 = vsel %vm596, %v10530, %v10534
    %v10537 = vshrl.u32 %v9273, 16
    %v10539 = vrot.slane %v10537, 4
    %v10540 = vshll.u32 %v9273, 16
    %v10542 = vrot.slane %v10540, 5
    %v10543 = vor.u32 %v10539, %v10542
    %v10544 = vrot.slane %v10543, 4
    %v10546 = vshll.u32 %v9274, 16
    %v10548 = vrot.slane %v10546, 5
    %v10549 = vsel %vm596, %v10544, %v10548
    %v10550 = vshrl.u32 %v9274, 16
    %v10552 = vrot.slane %v10550, 4
    %v10553 = vor.u32 %v10552, %v10548
    %v10554 = vrot.slane %v10553, 4
    %v10556 = vshll.u32 %v9275, 16
    %v10558 = vrot.slane %v10556, 5
    %v10559 = vsel %vm596, %v10554, %v10558
    %v10561 = vshrl.u32 %v9276, 16
    %v10563 = vrot.slane %v10561, 4
    %v10564 = vshll.u32 %v9276, 16
    %v10566 = vrot.slane %v10564, 5
    %v10567 = vor.u32 %v10563, %v10566
    %v10568 = vrot.slane %v10567, 4
    %v10570 = vshll.u32 %v9277, 16
    %v10572 = vrot.slane %v10570, 5
    %v10573 = vsel %vm596, %v10568, %v10572
    %v10574 = vshrl.u32 %v9277, 16
    %v10576 = vrot.slane %v10574, 4
    %v10577 = vor.u32 %v10576, %v10572
    %v10578 = vrot.slane %v10577, 4
    %v10580 = vshll.u32 %v9278, 16
    %v10582 = vrot.slane %v10580, 5
    %v10583 = vsel %vm596, %v10578, %v10582
    %v10585 = vshrl.u32 %v9279, 16
    %v10587 = vrot.slane %v10585, 4
    %v10588 = vshll.u32 %v9279, 16
    %v10590 = vrot.slane %v10588, 5
    %v10591 = vor.u32 %v10587, %v10590
    %v10592 = vrot.slane %v10591, 4
    %v10594 = vshll.u32 %v9280, 16
    %v10596 = vrot.slane %v10594, 5
    %v10597 = vsel %vm596, %v10592, %v10596
    %v10598 = vshrl.u32 %v9280, 16
    %v10600 = vrot.slane %v10598, 4
    %v10601 = vor.u32 %v10600, %v10596
    %v10602 = vrot.slane %v10601, 4
    %v10604 = vshll.u32 %v9281, 16
    %v10606 = vrot.slane %v10604, 5
    %v10607 = vsel %vm596, %v10602, %v10606
    %v10609 = vshrl.u32 %v9282, 16
    %v10611 = vrot.slane %v10609, 4
    %v10612 = vshll.u32 %v9282, 16
    %v10614 = vrot.slane %v10612, 5
    %v10615 = vor.u32 %v10611, %v10614
    %v10616 = vrot.slane %v10615, 4
    %v10618 = vshll.u32 %v9283, 16
    %v10620 = vrot.slane %v10618, 5
    %v10621 = vsel %vm596, %v10616, %v10620
    %v10622 = vshrl.u32 %v9283, 16
    %v10624 = vrot.slane %v10622, 4
    %v10625 = vor.u32 %v10624, %v10620
    %v10626 = vrot.slane %v10625, 4
    %v10628 = vshll.u32 %v9284, 16
    %v10630 = vrot.slane %v10628, 5
    %v10631 = vsel %vm596, %v10626, %v10630
    %v10633 = vshrl.u32 %v9285, 16
    %v10635 = vrot.slane %v10633, 4
    %v10636 = vshll.u32 %v9285, 16
    %v10638 = vrot.slane %v10636, 5
    %v10639 = vor.u32 %v10635, %v10638
    %v10640 = vrot.slane %v10639, 4
    %v10642 = vshll.u32 %v9286, 16
    %v10644 = vrot.slane %v10642, 5
    %v10645 = vsel %vm596, %v10640, %v10644
    %v10646 = vshrl.u32 %v9286, 16
    %v10648 = vrot.slane %v10646, 4
    %v10649 = vor.u32 %v10648, %v10644
    %v10650 = vrot.slane %v10649, 4
    %v10652 = vshll.u32 %v9287, 16
    %v10654 = vrot.slane %v10652, 5
    %v10655 = vsel %vm596, %v10650, %v10654
    %v10657 = vshrl.u32 %v9288, 16
    %v10659 = vrot.slane %v10657, 4
    %v10660 = vshll.u32 %v9288, 16
    %v10662 = vrot.slane %v10660, 5
    %v10663 = vor.u32 %v10659, %v10662
    %v10664 = vrot.slane %v10663, 4
    %v10666 = vshll.u32 %v9289, 16
    %v10668 = vrot.slane %v10666, 5
    %v10669 = vsel %vm596, %v10664, %v10668
    %v10670 = vshrl.u32 %v9289, 16
    %v10672 = vrot.slane %v10670, 4
    %v10673 = vor.u32 %v10672, %v10668
    %v10674 = vrot.slane %v10673, 4
    %v10676 = vshll.u32 %v9290, 16
    %v10678 = vrot.slane %v10676, 5
    %v10679 = vsel %vm596, %v10674, %v10678
    %v10681 = vshrl.u32 %v9291, 16
    %v10683 = vrot.slane %v10681, 4
    %v10684 = vshll.u32 %v9291, 16
    %v10686 = vrot.slane %v10684, 5
    %v10687 = vor.u32 %v10683, %v10686
    %v10688 = vrot.slane %v10687, 4
    %v10690 = vshll.u32 %v9292, 16
    %v10692 = vrot.slane %v10690, 5
    %v10693 = vsel %vm596, %v10688, %v10692
    %v10694 = vshrl.u32 %v9292, 16
    %v10696 = vrot.slane %v10694, 4
    %v10697 = vor.u32 %v10696, %v10692
    %v10698 = vrot.slane %v10697, 4
    %v10700 = vshll.u32 %v9293, 16
    %v10702 = vrot.slane %v10700, 5
    %v10703 = vsel %vm596, %v10698, %v10702
    %v10705 = vshrl.u32 %v9294, 16
    %v10707 = vrot.slane %v10705, 4
    %v10708 = vshll.u32 %v9294, 16
    %v10710 = vrot.slane %v10708, 5
    %v10711 = vor.u32 %v10707, %v10710
    %v10712 = vrot.slane %v10711, 4
    %v10714 = vshll.u32 %v9295, 16
    %v10716 = vrot.slane %v10714, 5
    %v10717 = vsel %vm596, %v10712, %v10716
    %v10718 = vshrl.u32 %v9295, 16
    %v10720 = vrot.slane %v10718, 4
    %v10721 = vor.u32 %v10720, %v10716
    %v10722 = vrot.slane %v10721, 4
    %v10724 = vshll.u32 %v9296, 16
    %v10726 = vrot.slane %v10724, 5
    %v10727 = vsel %vm596, %v10722, %v10726
    %v10729 = vshrl.u32 %v9297, 16
    %v10731 = vrot.slane %v10729, 4
    %v10732 = vshll.u32 %v9297, 16
    %v10734 = vrot.slane %v10732, 5
    %v10735 = vor.u32 %v10731, %v10734
    %v10736 = vrot.slane %v10735, 4
    %v10738 = vshll.u32 %v9298, 16
    %v10740 = vrot.slane %v10738, 5
    %v10741 = vsel %vm596, %v10736, %v10740
    %v10742 = vshrl.u32 %v9298, 16
    %v10744 = vrot.slane %v10742, 4
    %v10745 = vor.u32 %v10744, %v10740
    %v10746 = vrot.slane %v10745, 4
    %v10748 = vshll.u32 %v9299, 16
    %v10750 = vrot.slane %v10748, 5
    %v10751 = vsel %vm596, %v10746, %v10750
    %v10753 = vshrl.u32 %v9300, 16
    %v10755 = vrot.slane %v10753, 4
    %v10756 = vshll.u32 %v9300, 16
    %v10758 = vrot.slane %v10756, 5
    %v10759 = vor.u32 %v10755, %v10758
    %v10760 = vrot.slane %v10759, 4
    %v10762 = vshll.u32 %v9301, 16
    %v10764 = vrot.slane %v10762, 5
    %v10765 = vsel %vm596, %v10760, %v10764
    %v10766 = vshrl.u32 %v9301, 16
    %v10768 = vrot.slane %v10766, 4
    %v10769 = vor.u32 %v10768, %v10764
    %v10770 = vrot.slane %v10769, 4
    %v10772 = vshll.u32 %v9302, 16
    %v10774 = vrot.slane %v10772, 5
    %v10775 = vsel %vm596, %v10770, %v10774
    %v10777 = vshrl.u32 %v9303, 16
    %v10779 = vrot.slane %v10777, 4
    %v10780 = vshll.u32 %v9303, 16
    %v10782 = vrot.slane %v10780, 5
    %v10783 = vor.u32 %v10779, %v10782
    %v10784 = vrot.slane %v10783, 4
    %v10786 = vshll.u32 %v9304, 16
    %v10788 = vrot.slane %v10786, 5
    %v10789 = vsel %vm596, %v10784, %v10788
    %v10790 = vshrl.u32 %v9304, 16
    %v10792 = vrot.slane %v10790, 4
    %v10793 = vor.u32 %v10792, %v10788
    %v10794 = vrot.slane %v10793, 4
    %v10796 = vshll.u32 %v9305, 16
    %v10798 = vrot.slane %v10796, 5
    %v10799 = vsel %vm596, %v10794, %v10798
    %v10801 = vshrl.u32 %v9306, 16
    %v10803 = vrot.slane %v10801, 4
    %v10804 = vshll.u32 %v9306, 16
    %v10806 = vrot.slane %v10804, 5
    %v10807 = vor.u32 %v10803, %v10806
    %v10808 = vrot.slane %v10807, 4
    %v10810 = vshll.u32 %v9307, 16
    %v10812 = vrot.slane %v10810, 5
    %v10813 = vsel %vm596, %v10808, %v10812
    %v10814 = vshrl.u32 %v9307, 16
    %v10816 = vrot.slane %v10814, 4
    %v10817 = vor.u32 %v10816, %v10812
    %v10818 = vrot.slane %v10817, 4
    %v10820 = vshll.u32 %v9308, 16
    %v10822 = vrot.slane %v10820, 5
    %v10823 = vsel %vm596, %v10818, %v10822
    %v10825 = vshrl.u32 %v9309, 16
    %v10827 = vrot.slane %v10825, 4
    %v10828 = vshll.u32 %v9309, 16
    %v10830 = vrot.slane %v10828, 5
    %v10831 = vor.u32 %v10827, %v10830
    %v10832 = vrot.slane %v10831, 4
    %v10834 = vshll.u32 %v9310, 16
    %v10836 = vrot.slane %v10834, 5
    %v10837 = vsel %vm596, %v10832, %v10836
    %v10838 = vshrl.u32 %v9310, 16
    %v10840 = vrot.slane %v10838, 4
    %v10841 = vor.u32 %v10840, %v10836
    %v10842 = vrot.slane %v10841, 4
    %v10844 = vshll.u32 %v9311, 16
    %v10846 = vrot.slane %v10844, 5
    %v10847 = vsel %vm596, %v10842, %v10846
    %10848 = vrot.lane.b32.xlu0 %v9325, 112
    %v10849 = vpop.permute.xlu0 %10848
    %10850 = vrot.lane.b32.xlu0 %v9335, 112
    %v10851 = vpop.permute.xlu0 %10850
    %10852 = vrot.lane.b32.xlu0 %v9349, 112
    %v10853 = vpop.permute.xlu0 %10852
    %10854 = vrot.lane.b32.xlu0 %v9359, 112
    %v10855 = vpop.permute.xlu0 %10854
    %10856 = vrot.lane.b32.xlu0 %v9373, 112
    %v10857 = vpop.permute.xlu0 %10856
    %10858 = vrot.lane.b32.xlu0 %v9383, 112
    %v10859 = vpop.permute.xlu0 %10858
    %10860 = vrot.lane.b32.xlu0 %v9397, 112
    %v10861 = vpop.permute.xlu0 %10860
    %10862 = vrot.lane.b32.xlu0 %v9407, 112
    %v10863 = vpop.permute.xlu0 %10862
    %10864 = vrot.lane.b32.xlu0 %v9421, 112
    %v10865 = vpop.permute.xlu0 %10864
    %10866 = vrot.lane.b32.xlu0 %v9431, 112
    %v10867 = vpop.permute.xlu0 %10866
    %10868 = vrot.lane.b32.xlu0 %v9445, 112
    %v10869 = vpop.permute.xlu0 %10868
    %10870 = vrot.lane.b32.xlu0 %v9455, 112
    %v10871 = vpop.permute.xlu0 %10870
    %10872 = vrot.lane.b32.xlu0 %v9469, 112
    %v10873 = vpop.permute.xlu0 %10872
    %10874 = vrot.lane.b32.xlu0 %v9479, 112
    %v10875 = vpop.permute.xlu0 %10874
    %10876 = vrot.lane.b32.xlu0 %v9493, 112
    %v10877 = vpop.permute.xlu0 %10876
    %10878 = vrot.lane.b32.xlu0 %v9503, 112
    %v10879 = vpop.permute.xlu0 %10878
    %10880 = vrot.lane.b32.xlu0 %v9517, 112
    %v10881 = vpop.permute.xlu0 %10880
    %10882 = vrot.lane.b32.xlu0 %v9527, 112
    %v10883 = vpop.permute.xlu0 %10882
    %10884 = vrot.lane.b32.xlu0 %v9541, 112
    %v10885 = vpop.permute.xlu0 %10884
    %10886 = vrot.lane.b32.xlu0 %v9551, 112
    %v10887 = vpop.permute.xlu0 %10886
    %10888 = vrot.lane.b32.xlu0 %v9565, 112
    %v10889 = vpop.permute.xlu0 %10888
    %10890 = vrot.lane.b32.xlu0 %v9575, 112
    %v10891 = vpop.permute.xlu0 %10890
    %10892 = vrot.lane.b32.xlu0 %v9589, 112
    %v10893 = vpop.permute.xlu0 %10892
    %10894 = vrot.lane.b32.xlu0 %v9599, 112
    %v10895 = vpop.permute.xlu0 %10894
    %10896 = vrot.lane.b32.xlu0 %v9613, 112
    %v10897 = vpop.permute.xlu0 %10896
    %10898 = vrot.lane.b32.xlu0 %v9623, 112
    %v10899 = vpop.permute.xlu0 %10898
    %10900 = vrot.lane.b32.xlu0 %v9637, 112
    %v10901 = vpop.permute.xlu0 %10900
    %10902 = vrot.lane.b32.xlu0 %v9647, 112
    %v10903 = vpop.permute.xlu0 %10902
    %10904 = vrot.lane.b32.xlu0 %v9661, 112
    %v10905 = vpop.permute.xlu0 %10904
    %10906 = vrot.lane.b32.xlu0 %v9671, 112
    %v10907 = vpop.permute.xlu0 %10906
    %10908 = vrot.lane.b32.xlu0 %v9685, 112
    %v10909 = vpop.permute.xlu0 %10908
    %10910 = vrot.lane.b32.xlu0 %v9695, 112
    %v10911 = vpop.permute.xlu0 %10910
    %10912 = vrot.lane.b32.xlu0 %v9709, 112
    %v10913 = vpop.permute.xlu0 %10912
    %10914 = vrot.lane.b32.xlu0 %v9719, 112
    %v10915 = vpop.permute.xlu0 %10914
    %10916 = vrot.lane.b32.xlu0 %v9733, 112
    %v10917 = vpop.permute.xlu0 %10916
    %10918 = vrot.lane.b32.xlu0 %v9743, 112
    %v10919 = vpop.permute.xlu0 %10918
    %10920 = vrot.lane.b32.xlu0 %v9757, 112
    %v10921 = vpop.permute.xlu0 %10920
    %10922 = vrot.lane.b32.xlu0 %v9767, 112
    %v10923 = vpop.permute.xlu0 %10922
    %10924 = vrot.lane.b32.xlu0 %v9781, 112
    %v10925 = vpop.permute.xlu0 %10924
    %10926 = vrot.lane.b32.xlu0 %v9791, 112
    %v10927 = vpop.permute.xlu0 %10926
    %10928 = vrot.lane.b32.xlu0 %v9805, 112
    %v10929 = vpop.permute.xlu0 %10928
    %10930 = vrot.lane.b32.xlu0 %v9815, 112
    %v10931 = vpop.permute.xlu0 %10930
    %10932 = vrot.lane.b32.xlu0 %v9829, 112
    %v10933 = vpop.permute.xlu0 %10932
    %10934 = vrot.lane.b32.xlu0 %v9839, 112
    %v10935 = vpop.permute.xlu0 %10934
    %10936 = vrot.lane.b32.xlu0 %v9853, 112
    %v10937 = vpop.permute.xlu0 %10936
    %10938 = vrot.lane.b32.xlu0 %v9863, 112
    %v10939 = vpop.permute.xlu0 %10938
    %10940 = vrot.lane.b32.xlu0 %v9877, 112
    %v10941 = vpop.permute.xlu0 %10940
    %10942 = vrot.lane.b32.xlu0 %v9887, 112
    %v10943 = vpop.permute.xlu0 %10942
    %10944 = vrot.lane.b32.xlu0 %v9901, 112
    %v10945 = vpop.permute.xlu0 %10944
    %10946 = vrot.lane.b32.xlu0 %v9911, 112
    %v10947 = vpop.permute.xlu0 %10946
    %10948 = vrot.lane.b32.xlu0 %v9925, 112
    %v10949 = vpop.permute.xlu0 %10948
    %10950 = vrot.lane.b32.xlu0 %v9935, 112
    %v10951 = vpop.permute.xlu0 %10950
    %10952 = vrot.lane.b32.xlu0 %v9949, 112
    %v10953 = vpop.permute.xlu0 %10952
    %10954 = vrot.lane.b32.xlu0 %v9959, 112
    %v10955 = vpop.permute.xlu0 %10954
    %10956 = vrot.lane.b32.xlu0 %v9973, 112
    %v10957 = vpop.permute.xlu0 %10956
    %10958 = vrot.lane.b32.xlu0 %v9983, 112
    %v10959 = vpop.permute.xlu0 %10958
    %10960 = vrot.lane.b32.xlu0 %v9997, 112
    %v10961 = vpop.permute.xlu0 %10960
    %10962 = vrot.lane.b32.xlu0 %v10007, 112
    %v10963 = vpop.permute.xlu0 %10962
    %10964 = vrot.lane.b32.xlu0 %v10021, 112
    %v10965 = vpop.permute.xlu0 %10964
    %10966 = vrot.lane.b32.xlu0 %v10031, 112
    %v10967 = vpop.permute.xlu0 %10966
    %10968 = vrot.lane.b32.xlu0 %v10045, 112
    %v10969 = vpop.permute.xlu0 %10968
    %10970 = vrot.lane.b32.xlu0 %v10055, 112
    %v10971 = vpop.permute.xlu0 %10970
    %10972 = vrot.lane.b32.xlu0 %v10069, 112
    %v10973 = vpop.permute.xlu0 %10972
    %10974 = vrot.lane.b32.xlu0 %v10079, 112
    %v10975 = vpop.permute.xlu0 %10974
    %10976 = vrot.lane.b32.xlu0 %v10093, 112
    %v10977 = vpop.permute.xlu0 %10976
    %10978 = vrot.lane.b32.xlu0 %v10103, 112
    %v10979 = vpop.permute.xlu0 %10978
    %10980 = vrot.lane.b32.xlu0 %v10117, 112
    %v10981 = vpop.permute.xlu0 %10980
    %10982 = vrot.lane.b32.xlu0 %v10127, 112
    %v10983 = vpop.permute.xlu0 %10982
    %10984 = vrot.lane.b32.xlu0 %v10141, 112
    %v10985 = vpop.permute.xlu0 %10984
    %10986 = vrot.lane.b32.xlu0 %v10151, 112
    %v10987 = vpop.permute.xlu0 %10986
    %10988 = vrot.lane.b32.xlu0 %v10165, 112
    %v10989 = vpop.permute.xlu0 %10988
    %10990 = vrot.lane.b32.xlu0 %v10175, 112
    %v10991 = vpop.permute.xlu0 %10990
    %10992 = vrot.lane.b32.xlu0 %v10189, 112
    %v10993 = vpop.permute.xlu0 %10992
    %10994 = vrot.lane.b32.xlu0 %v10199, 112
    %v10995 = vpop.permute.xlu0 %10994
    %10996 = vrot.lane.b32.xlu0 %v10213, 112
    %v10997 = vpop.permute.xlu0 %10996
    %10998 = vrot.lane.b32.xlu0 %v10223, 112
    %v10999 = vpop.permute.xlu0 %10998
    %11000 = vrot.lane.b32.xlu0 %v10237, 112
    %v11001 = vpop.permute.xlu0 %11000
    %11002 = vrot.lane.b32.xlu0 %v10247, 112
    %v11003 = vpop.permute.xlu0 %11002
    %11004 = vrot.lane.b32.xlu0 %v10261, 112
    %v11005 = vpop.permute.xlu0 %11004
    %11006 = vrot.lane.b32.xlu0 %v10271, 112
    %v11007 = vpop.permute.xlu0 %11006
    %11008 = vrot.lane.b32.xlu0 %v10285, 112
    %v11009 = vpop.permute.xlu0 %11008
    %11010 = vrot.lane.b32.xlu0 %v10295, 112
    %v11011 = vpop.permute.xlu0 %11010
    %11012 = vrot.lane.b32.xlu0 %v10309, 112
    %v11013 = vpop.permute.xlu0 %11012
    %11014 = vrot.lane.b32.xlu0 %v10319, 112
    %v11015 = vpop.permute.xlu0 %11014
    %11016 = vrot.lane.b32.xlu0 %v10333, 112
    %v11017 = vpop.permute.xlu0 %11016
    %11018 = vrot.lane.b32.xlu0 %v10343, 112
    %v11019 = vpop.permute.xlu0 %11018
    %11020 = vrot.lane.b32.xlu0 %v10357, 112
    %v11021 = vpop.permute.xlu0 %11020
    %11022 = vrot.lane.b32.xlu0 %v10367, 112
    %v11023 = vpop.permute.xlu0 %11022
    %11024 = vrot.lane.b32.xlu0 %v10381, 112
    %v11025 = vpop.permute.xlu0 %11024
    %11026 = vrot.lane.b32.xlu0 %v10391, 112
    %v11027 = vpop.permute.xlu0 %11026
    %11028 = vrot.lane.b32.xlu0 %v10405, 112
    %v11029 = vpop.permute.xlu0 %11028
    %11030 = vrot.lane.b32.xlu0 %v10415, 112
    %v11031 = vpop.permute.xlu0 %11030
    %11032 = vrot.lane.b32.xlu0 %v10429, 112
    %v11033 = vpop.permute.xlu0 %11032
    %11034 = vrot.lane.b32.xlu0 %v10439, 112
    %v11035 = vpop.permute.xlu0 %11034
    %11036 = vrot.lane.b32.xlu0 %v10453, 112
    %v11037 = vpop.permute.xlu0 %11036
    %11038 = vrot.lane.b32.xlu0 %v10463, 112
    %v11039 = vpop.permute.xlu0 %11038
    %11040 = vrot.lane.b32.xlu0 %v10477, 112
    %v11041 = vpop.permute.xlu0 %11040
    %11042 = vrot.lane.b32.xlu0 %v10487, 112
    %v11043 = vpop.permute.xlu0 %11042
    %11044 = vrot.lane.b32.xlu0 %v10501, 112
    %v11045 = vpop.permute.xlu0 %11044
    %11046 = vrot.lane.b32.xlu0 %v10511, 112
    %v11047 = vpop.permute.xlu0 %11046
    %11048 = vrot.lane.b32.xlu0 %v10525, 112
    %v11049 = vpop.permute.xlu0 %11048
    %11050 = vrot.lane.b32.xlu0 %v10535, 112
    %v11051 = vpop.permute.xlu0 %11050
    %11052 = vrot.lane.b32.xlu0 %v10549, 112
    %v11053 = vpop.permute.xlu0 %11052
    %11054 = vrot.lane.b32.xlu0 %v10559, 112
    %v11055 = vpop.permute.xlu0 %11054
    %11056 = vrot.lane.b32.xlu0 %v10573, 112
    %v11057 = vpop.permute.xlu0 %11056
    %11058 = vrot.lane.b32.xlu0 %v10583, 112
    %v11059 = vpop.permute.xlu0 %11058
    %11060 = vrot.lane.b32.xlu0 %v10597, 112
    %v11061 = vpop.permute.xlu0 %11060
    %11062 = vrot.lane.b32.xlu0 %v10607, 112
    %v11063 = vpop.permute.xlu0 %11062
    %11064 = vrot.lane.b32.xlu0 %v10621, 112
    %v11065 = vpop.permute.xlu0 %11064
    %11066 = vrot.lane.b32.xlu0 %v10631, 112
    %v11067 = vpop.permute.xlu0 %11066
    %11068 = vrot.lane.b32.xlu0 %v10645, 112
    %v11069 = vpop.permute.xlu0 %11068
    %11070 = vrot.lane.b32.xlu0 %v10655, 112
    %v11071 = vpop.permute.xlu0 %11070
    %11072 = vrot.lane.b32.xlu0 %v10669, 112
    %v11073 = vpop.permute.xlu0 %11072
    %11074 = vrot.lane.b32.xlu0 %v10679, 112
    %v11075 = vpop.permute.xlu0 %11074
    %11076 = vrot.lane.b32.xlu0 %v10693, 112
    %v11077 = vpop.permute.xlu0 %11076
    %11078 = vrot.lane.b32.xlu0 %v10703, 112
    %v11079 = vpop.permute.xlu0 %11078
    %11080 = vrot.lane.b32.xlu0 %v10717, 112
    %v11081 = vpop.permute.xlu0 %11080
    %11082 = vrot.lane.b32.xlu0 %v10727, 112
    %v11083 = vpop.permute.xlu0 %11082
    %11084 = vrot.lane.b32.xlu0 %v10741, 112
    %v11085 = vpop.permute.xlu0 %11084
    %11086 = vrot.lane.b32.xlu0 %v10751, 112
    %v11087 = vpop.permute.xlu0 %11086
    %11088 = vrot.lane.b32.xlu0 %v10765, 112
    %v11089 = vpop.permute.xlu0 %11088
    %11090 = vrot.lane.b32.xlu0 %v10775, 112
    %v11091 = vpop.permute.xlu0 %11090
    %11092 = vrot.lane.b32.xlu0 %v10789, 112
    %v11093 = vpop.permute.xlu0 %11092
    %11094 = vrot.lane.b32.xlu0 %v10799, 112
    %v11095 = vpop.permute.xlu0 %11094
    %11096 = vrot.lane.b32.xlu0 %v10813, 112
    %v11097 = vpop.permute.xlu0 %11096
    %11098 = vrot.lane.b32.xlu0 %v10823, 112
    %v11099 = vpop.permute.xlu0 %11098
    %11100 = vrot.lane.b32.xlu0 %v10837, 112
    %v11101 = vpop.permute.xlu0 %11100
    %11102 = vrot.lane.b32.xlu0 %v10847, 112
    %v11103 = vpop.permute.xlu0 %11102
    %vm11232 = vcmask 1044352
    %11233 = vst.msk [vmem:[#allocation2] sm:$0xf] %vm11232, %v10849
    %11234 = vst.msk [vmem:[#allocation2 + $0x8] sm:$0xf] %vm11232, %v10851
    %11235 = vst.msk [vmem:[#allocation2 + $0x10] sm:$0xf] %vm11232, %v10853
    %11236 = vst.msk [vmem:[#allocation2 + $0x18] sm:$0xf] %vm11232, %v10855
    %11237 = vst.msk [vmem:[#allocation2 + $0x20] sm:$0xf] %vm11232, %v10857
    %11238 = vst.msk [vmem:[#allocation2 + $0x28] sm:$0xf] %vm11232, %v10859
    %11239 = vst.msk [vmem:[#allocation2 + $0x30] sm:$0xf] %vm11232, %v10861
    %11240 = vst.msk [vmem:[#allocation2 + $0x38] sm:$0xf] %vm11232, %v10863
    %11241 = vst.msk [vmem:[#allocation2 + $0x40] sm:$0xf] %vm11232, %v10865
    %11242 = vst.msk [vmem:[#allocation2 + $0x48] sm:$0xf] %vm11232, %v10867
    %11243 = vst.msk [vmem:[#allocation2 + $0x50] sm:$0xf] %vm11232, %v10869
    %11244 = vst.msk [vmem:[#allocation2 + $0x58] sm:$0xf] %vm11232, %v10871
    %11245 = vst.msk [vmem:[#allocation2 + $0x60] sm:$0xf] %vm11232, %v10873
    %11246 = vst.msk [vmem:[#allocation2 + $0x68] sm:$0xf] %vm11232, %v10875
    %11247 = vst.msk [vmem:[#allocation2 + $0x70] sm:$0xf] %vm11232, %v10877
    %11248 = vst.msk [vmem:[#allocation2 + $0x78] sm:$0xf] %vm11232, %v10879
    %11249 = vst.msk [vmem:[#allocation2 + $0x80] sm:$0xf] %vm11232, %v10881
    %11250 = vst.msk [vmem:[#allocation2 + $0x88] sm:$0xf] %vm11232, %v10883
    %11251 = vst.msk [vmem:[#allocation2 + $0x90] sm:$0xf] %vm11232, %v10885
    %11252 = vst.msk [vmem:[#allocation2 + $0x98] sm:$0xf] %vm11232, %v10887
    %11253 = vst.msk [vmem:[#allocation2 + $0xa0] sm:$0xf] %vm11232, %v10889
    %11254 = vst.msk [vmem:[#allocation2 + $0xa8] sm:$0xf] %vm11232, %v10891
    %11255 = vst.msk [vmem:[#allocation2 + $0xb0] sm:$0xf] %vm11232, %v10893
    %11256 = vst.msk [vmem:[#allocation2 + $0xb8] sm:$0xf] %vm11232, %v10895
    %11257 = vst.msk [vmem:[#allocation2 + $0xc0] sm:$0xf] %vm11232, %v10897
    %11258 = vst.msk [vmem:[#allocation2 + $0xc8] sm:$0xf] %vm11232, %v10899
    %11259 = vst.msk [vmem:[#allocation2 + $0xd0] sm:$0xf] %vm11232, %v10901
    %11260 = vst.msk [vmem:[#allocation2 + $0xd8] sm:$0xf] %vm11232, %v10903
    %11261 = vst.msk [vmem:[#allocation2 + $0xe0] sm:$0xf] %vm11232, %v10905
    %11262 = vst.msk [vmem:[#allocation2 + $0xe8] sm:$0xf] %vm11232, %v10907
    %11263 = vst.msk [vmem:[#allocation2 + $0xf0] sm:$0xf] %vm11232, %v10909
    %11264 = vst.msk [vmem:[#allocation2 + $0xf8] sm:$0xf] %vm11232, %v10911
    %11265 = vst.msk [vmem:[#allocation2 + $0x100] sm:$0xf] %vm11232, %v10913
    %11266 = vst.msk [vmem:[#allocation2 + $0x108] sm:$0xf] %vm11232, %v10915
    %11267 = vst.msk [vmem:[#allocation2 + $0x110] sm:$0xf] %vm11232, %v10917
    %11268 = vst.msk [vmem:[#allocation2 + $0x118] sm:$0xf] %vm11232, %v10919
    %11269 = vst.msk [vmem:[#allocation2 + $0x120] sm:$0xf] %vm11232, %v10921
    %11270 = vst.msk [vmem:[#allocation2 + $0x128] sm:$0xf] %vm11232, %v10923
    %11271 = vst.msk [vmem:[#allocation2 + $0x130] sm:$0xf] %vm11232, %v10925
    %11272 = vst.msk [vmem:[#allocation2 + $0x138] sm:$0xf] %vm11232, %v10927
    %11273 = vst.msk [vmem:[#allocation2 + $0x140] sm:$0xf] %vm11232, %v10929
    %11274 = vst.msk [vmem:[#allocation2 + $0x148] sm:$0xf] %vm11232, %v10931
    %11275 = vst.msk [vmem:[#allocation2 + $0x150] sm:$0xf] %vm11232, %v10933
    %11276 = vst.msk [vmem:[#allocation2 + $0x158] sm:$0xf] %vm11232, %v10935
    %11277 = vst.msk [vmem:[#allocation2 + $0x160] sm:$0xf] %vm11232, %v10937
    %11278 = vst.msk [vmem:[#allocation2 + $0x168] sm:$0xf] %vm11232, %v10939
    %11279 = vst.msk [vmem:[#allocation2 + $0x170] sm:$0xf] %vm11232, %v10941
    %11280 = vst.msk [vmem:[#allocation2 + $0x178] sm:$0xf] %vm11232, %v10943
    %11281 = vst.msk [vmem:[#allocation2 + $0x180] sm:$0xf] %vm11232, %v10945
    %11282 = vst.msk [vmem:[#allocation2 + $0x188] sm:$0xf] %vm11232, %v10947
    %11283 = vst.msk [vmem:[#allocation2 + $0x190] sm:$0xf] %vm11232, %v10949
    %11284 = vst.msk [vmem:[#allocation2 + $0x198] sm:$0xf] %vm11232, %v10951
    %11285 = vst.msk [vmem:[#allocation2 + $0x1a0] sm:$0xf] %vm11232, %v10953
    %11286 = vst.msk [vmem:[#allocation2 + $0x1a8] sm:$0xf] %vm11232, %v10955
    %11287 = vst.msk [vmem:[#allocation2 + $0x1b0] sm:$0xf] %vm11232, %v10957
    %11288 = vst.msk [vmem:[#allocation2 + $0x1b8] sm:$0xf] %vm11232, %v10959
    %11289 = vst.msk [vmem:[#allocation2 + $0x1c0] sm:$0xf] %vm11232, %v10961
    %11290 = vst.msk [vmem:[#allocation2 + $0x1c8] sm:$0xf] %vm11232, %v10963
    %11291 = vst.msk [vmem:[#allocation2 + $0x1d0] sm:$0xf] %vm11232, %v10965
    %11292 = vst.msk [vmem:[#allocation2 + $0x1d8] sm:$0xf] %vm11232, %v10967
    %11293 = vst.msk [vmem:[#allocation2 + $0x1e0] sm:$0xf] %vm11232, %v10969
    %11294 = vst.msk [vmem:[#allocation2 + $0x1e8] sm:$0xf] %vm11232, %v10971
    %11295 = vst.msk [vmem:[#allocation2 + $0x1f0] sm:$0xf] %vm11232, %v10973
    %11296 = vst.msk [vmem:[#allocation2 + $0x1f8] sm:$0xf] %vm11232, %v10975
    %11297 = vst.msk [vmem:[#allocation2 + $0x200] sm:$0xf] %vm11232, %v10977
    %11298 = vst.msk [vmem:[#allocation2 + $0x208] sm:$0xf] %vm11232, %v10979
    %11299 = vst.msk [vmem:[#allocation2 + $0x210] sm:$0xf] %vm11232, %v10981
    %11300 = vst.msk [vmem:[#allocation2 + $0x218] sm:$0xf] %vm11232, %v10983
    %11301 = vst.msk [vmem:[#allocation2 + $0x220] sm:$0xf] %vm11232, %v10985
    %11302 = vst.msk [vmem:[#allocation2 + $0x228] sm:$0xf] %vm11232, %v10987
    %11303 = vst.msk [vmem:[#allocation2 + $0x230] sm:$0xf] %vm11232, %v10989
    %11304 = vst.msk [vmem:[#allocation2 + $0x238] sm:$0xf] %vm11232, %v10991
    %11305 = vst.msk [vmem:[#allocation2 + $0x240] sm:$0xf] %vm11232, %v10993
    %11306 = vst.msk [vmem:[#allocation2 + $0x248] sm:$0xf] %vm11232, %v10995
    %11307 = vst.msk [vmem:[#allocation2 + $0x250] sm:$0xf] %vm11232, %v10997
    %11308 = vst.msk [vmem:[#allocation2 + $0x258] sm:$0xf] %vm11232, %v10999
    %11309 = vst.msk [vmem:[#allocation2 + $0x260] sm:$0xf] %vm11232, %v11001
    %11310 = vst.msk [vmem:[#allocation2 + $0x268] sm:$0xf] %vm11232, %v11003
    %11311 = vst.msk [vmem:[#allocation2 + $0x270] sm:$0xf] %vm11232, %v11005
    %11312 = vst.msk [vmem:[#allocation2 + $0x278] sm:$0xf] %vm11232, %v11007
    %11313 = vst.msk [vmem:[#allocation2 + $0x280] sm:$0xf] %vm11232, %v11009
    %11314 = vst.msk [vmem:[#allocation2 + $0x288] sm:$0xf] %vm11232, %v11011
    %11315 = vst.msk [vmem:[#allocation2 + $0x290] sm:$0xf] %vm11232, %v11013
    %11316 = vst.msk [vmem:[#allocation2 + $0x298] sm:$0xf] %vm11232, %v11015
    %11317 = vst.msk [vmem:[#allocation2 + $0x2a0] sm:$0xf] %vm11232, %v11017
    %11318 = vst.msk [vmem:[#allocation2 + $0x2a8] sm:$0xf] %vm11232, %v11019
    %11319 = vst.msk [vmem:[#allocation2 + $0x2b0] sm:$0xf] %vm11232, %v11021
    %11320 = vst.msk [vmem:[#allocation2 + $0x2b8] sm:$0xf] %vm11232, %v11023
    %11321 = vst.msk [vmem:[#allocation2 + $0x2c0] sm:$0xf] %vm11232, %v11025
    %11322 = vst.msk [vmem:[#allocation2 + $0x2c8] sm:$0xf] %vm11232, %v11027
    %11323 = vst.msk [vmem:[#allocation2 + $0x2d0] sm:$0xf] %vm11232, %v11029
    %11324 = vst.msk [vmem:[#allocation2 + $0x2d8] sm:$0xf] %vm11232, %v11031
    %11325 = vst.msk [vmem:[#allocation2 + $0x2e0] sm:$0xf] %vm11232, %v11033
    %11326 = vst.msk [vmem:[#allocation2 + $0x2e8] sm:$0xf] %vm11232, %v11035
    %11327 = vst.msk [vmem:[#allocation2 + $0x2f0] sm:$0xf] %vm11232, %v11037
    %11328 = vst.msk [vmem:[#allocation2 + $0x2f8] sm:$0xf] %vm11232, %v11039
    %11329 = vst.msk [vmem:[#allocation2 + $0x300] sm:$0xf] %vm11232, %v11041
    %11330 = vst.msk [vmem:[#allocation2 + $0x308] sm:$0xf] %vm11232, %v11043
    %11331 = vst.msk [vmem:[#allocation2 + $0x310] sm:$0xf] %vm11232, %v11045
    %11332 = vst.msk [vmem:[#allocation2 + $0x318] sm:$0xf] %vm11232, %v11047
    %11333 = vst.msk [vmem:[#allocation2 + $0x320] sm:$0xf] %vm11232, %v11049
    %11334 = vst.msk [vmem:[#allocation2 + $0x328] sm:$0xf] %vm11232, %v11051
    %11335 = vst.msk [vmem:[#allocation2 + $0x330] sm:$0xf] %vm11232, %v11053
    %11336 = vst.msk [vmem:[#allocation2 + $0x338] sm:$0xf] %vm11232, %v11055
    %11337 = vst.msk [vmem:[#allocation2 + $0x340] sm:$0xf] %vm11232, %v11057
    %11338 = vst.msk [vmem:[#allocation2 + $0x348] sm:$0xf] %vm11232, %v11059
    %11339 = vst.msk [vmem:[#allocation2 + $0x350] sm:$0xf] %vm11232, %v11061
    %11340 = vst.msk [vmem:[#allocation2 + $0x358] sm:$0xf] %vm11232, %v11063
    %11341 = vst.msk [vmem:[#allocation2 + $0x360] sm:$0xf] %vm11232, %v11065
    %11342 = vst.msk [vmem:[#allocation2 + $0x368] sm:$0xf] %vm11232, %v11067
    %11343 = vst.msk [vmem:[#allocation2 + $0x370] sm:$0xf] %vm11232, %v11069
    %11344 = vst.msk [vmem:[#allocation2 + $0x378] sm:$0xf] %vm11232, %v11071
    %11345 = vst.msk [vmem:[#allocation2 + $0x380] sm:$0xf] %vm11232, %v11073
    %11346 = vst.msk [vmem:[#allocation2 + $0x388] sm:$0xf] %vm11232, %v11075
    %11347 = vst.msk [vmem:[#allocation2 + $0x390] sm:$0xf] %vm11232, %v11077
    %11348 = vst.msk [vmem:[#allocation2 + $0x398] sm:$0xf] %vm11232, %v11079
    %11349 = vst.msk [vmem:[#allocation2 + $0x3a0] sm:$0xf] %vm11232, %v11081
    %11350 = vst.msk [vmem:[#allocation2 + $0x3a8] sm:$0xf] %vm11232, %v11083
    %11351 = vst.msk [vmem:[#allocation2 + $0x3b0] sm:$0xf] %vm11232, %v11085
    %11352 = vst.msk [vmem:[#allocation2 + $0x3b8] sm:$0xf] %vm11232, %v11087
    %11353 = vst.msk [vmem:[#allocation2 + $0x3c0] sm:$0xf] %vm11232, %v11089
    %11354 = vst.msk [vmem:[#allocation2 + $0x3c8] sm:$0xf] %vm11232, %v11091
    %11355 = vst.msk [vmem:[#allocation2 + $0x3d0] sm:$0xf] %vm11232, %v11093
    %11356 = vst.msk [vmem:[#allocation2 + $0x3d8] sm:$0xf] %vm11232, %v11095
    %11357 = vst.msk [vmem:[#allocation2 + $0x3e0] sm:$0xf] %vm11232, %v11097
    %11358 = vst.msk [vmem:[#allocation2 + $0x3e8] sm:$0xf] %vm11232, %v11099
    %11359 = vst.msk [vmem:[#allocation2 + $0x3f0] sm:$0xf] %vm11232, %v11101
    %11360 = vst.msk [vmem:[#allocation2 + $0x3f8] sm:$0xf] %vm11232, %v11103
    %v11361 = vld [vmem:[%s8350] sm:$0xe]
    %v11362 = vld [vmem:[%s8350 + $0x4] sm:$0xf]
    %v11363 = vld [vmem:[%s8350 + $0x8] sm:$0x1]
    %v11364 = vld [vmem:[%s8350 + $0xc] sm:$0xe]
    %v11365 = vld [vmem:[%s8350 + $0x10] sm:$0xf]
    %v11366 = vld [vmem:[%s8350 + $0x14] sm:$0x1]
    %v11367 = vld [vmem:[%s8350 + $0x18] sm:$0xe]
    %v11368 = vld [vmem:[%s8350 + $0x1c] sm:$0xf]
    %v11369 = vld [vmem:[%s8350 + $0x20] sm:$0x1]
    %v11370 = vld [vmem:[%s8350 + $0x24] sm:$0xe]
    %v11371 = vld [vmem:[%s8350 + $0x28] sm:$0xf]
    %v11372 = vld [vmem:[%s8350 + $0x2c] sm:$0x1]
    %v11373 = vld [vmem:[%s8350 + $0x30] sm:$0xe]
    %v11374 = vld [vmem:[%s8350 + $0x34] sm:$0xf]
    %v11375 = vld [vmem:[%s8350 + $0x38] sm:$0x1]
    %v11376 = vld [vmem:[%s8350 + $0x3c] sm:$0xe]
    %v11377 = vld [vmem:[%s8350 + $0x40] sm:$0xf]
    %v11378 = vld [vmem:[%s8350 + $0x44] sm:$0x1]
    %v11379 = vld [vmem:[%s8350 + $0x48] sm:$0xe]
    %v11380 = vld [vmem:[%s8350 + $0x4c] sm:$0xf]
    %v11381 = vld [vmem:[%s8350 + $0x50] sm:$0x1]
    %v11382 = vld [vmem:[%s8350 + $0x54] sm:$0xe]
    %v11383 = vld [vmem:[%s8350 + $0x58] sm:$0xf]
    %v11384 = vld [vmem:[%s8350 + $0x5c] sm:$0x1]
    %v11385 = vld [vmem:[%s8350 + $0x60] sm:$0xe]
    %v11386 = vld [vmem:[%s8350 + $0x64] sm:$0xf]
    %v11387 = vld [vmem:[%s8350 + $0x68] sm:$0x1]
    %v11388 = vld [vmem:[%s8350 + $0x6c] sm:$0xe]
    %v11389 = vld [vmem:[%s8350 + $0x70] sm:$0xf]
    %v11390 = vld [vmem:[%s8350 + $0x74] sm:$0x1]
    %v11391 = vld [vmem:[%s8350 + $0x78] sm:$0xe]
    %v11392 = vld [vmem:[%s8350 + $0x7c] sm:$0xf]
    %v11393 = vld [vmem:[%s8350 + $0x80] sm:$0x1]
    %v11394 = vld [vmem:[%s8350 + $0x84] sm:$0xe]
    %v11395 = vld [vmem:[%s8350 + $0x88] sm:$0xf]
    %v11396 = vld [vmem:[%s8350 + $0x8c] sm:$0x1]
    %v11397 = vld [vmem:[%s8350 + $0x90] sm:$0xe]
    %v11398 = vld [vmem:[%s8350 + $0x94] sm:$0xf]
    %v11399 = vld [vmem:[%s8350 + $0x98] sm:$0x1]
    %v11400 = vld [vmem:[%s8350 + $0x9c] sm:$0xe]
    %v11401 = vld [vmem:[%s8350 + $0xa0] sm:$0xf]
    %v11402 = vld [vmem:[%s8350 + $0xa4] sm:$0x1]
    %v11403 = vld [vmem:[%s8350 + $0xa8] sm:$0xe]
    %v11404 = vld [vmem:[%s8350 + $0xac] sm:$0xf]
    %v11405 = vld [vmem:[%s8350 + $0xb0] sm:$0x1]
    %v11406 = vld [vmem:[%s8350 + $0xb4] sm:$0xe]
    %v11407 = vld [vmem:[%s8350 + $0xb8] sm:$0xf]
    %v11408 = vld [vmem:[%s8350 + $0xbc] sm:$0x1]
    %v11409 = vld [vmem:[%s8350 + $0xd8] sm:$0xe]
    %v11410 = vld [vmem:[%s8350 + $0xdc] sm:$0xf]
    %v11411 = vld [vmem:[%s8350 + $0xe0] sm:$0x1]
    %v11412 = vld [vmem:[%s8350 + $0xe4] sm:$0xe]
    %v11413 = vld [vmem:[%s8350 + $0xe8] sm:$0xf]
    %v11414 = vld [vmem:[%s8350 + $0xec] sm:$0x1]
    %v11415 = vld [vmem:[%s8350 + $0xf0] sm:$0xe]
    %v11416 = vld [vmem:[%s8350 + $0xf4] sm:$0xf]
    %v11417 = vld [vmem:[%s8350 + $0xf8] sm:$0x1]
    %v11418 = vld [vmem:[%s8350 + $0xfc] sm:$0xe]
    %v11419 = vld [vmem:[%s8350 + $0x100] sm:$0xf]
    %v11420 = vld [vmem:[%s8350 + $0x104] sm:$0x1]
    %v11421 = vld [vmem:[%s8350 + $0x108] sm:$0xe]
    %v11422 = vld [vmem:[%s8350 + $0x10c] sm:$0xf]
    %v11423 = vld [vmem:[%s8350 + $0x110] sm:$0x1]
    %v11424 = vld [vmem:[%s8350 + $0x114] sm:$0xe]
    %v11425 = vld [vmem:[%s8350 + $0x118] sm:$0xf]
    %v11426 = vld [vmem:[%s8350 + $0x11c] sm:$0x1]
    %v11427 = vld [vmem:[%s8350 + $0x120] sm:$0xe]
    %v11428 = vld [vmem:[%s8350 + $0x124] sm:$0xf]
    %v11429 = vld [vmem:[%s8350 + $0x128] sm:$0x1]
    %v11430 = vld [vmem:[%s8350 + $0x12c] sm:$0xe]
    %v11431 = vld [vmem:[%s8350 + $0x130] sm:$0xf]
    %v11432 = vld [vmem:[%s8350 + $0x134] sm:$0x1]
    %v11433 = vld [vmem:[%s8350 + $0x138] sm:$0xe]
    %v11434 = vld [vmem:[%s8350 + $0x13c] sm:$0xf]
    %v11435 = vld [vmem:[%s8350 + $0x140] sm:$0x1]
    %v11436 = vld [vmem:[%s8350 + $0x144] sm:$0xe]
    %v11437 = vld [vmem:[%s8350 + $0x148] sm:$0xf]
    %v11438 = vld [vmem:[%s8350 + $0x14c] sm:$0x1]
    %v11439 = vld [vmem:[%s8350 + $0x150] sm:$0xe]
    %v11440 = vld [vmem:[%s8350 + $0x154] sm:$0xf]
    %v11441 = vld [vmem:[%s8350 + $0x158] sm:$0x1]
    %v11442 = vld [vmem:[%s8350 + $0x15c] sm:$0xe]
    %v11443 = vld [vmem:[%s8350 + $0x160] sm:$0xf]
    %v11444 = vld [vmem:[%s8350 + $0x164] sm:$0x1]
    %v11445 = vld [vmem:[%s8350 + $0x168] sm:$0xe]
    %v11446 = vld [vmem:[%s8350 + $0x16c] sm:$0xf]
    %v11447 = vld [vmem:[%s8350 + $0x170] sm:$0x1]
    %v11448 = vld [vmem:[%s8350 + $0x174] sm:$0xe]
    %v11449 = vld [vmem:[%s8350 + $0x178] sm:$0xf]
    %v11450 = vld [vmem:[%s8350 + $0x17c] sm:$0x1]
    %v11451 = vld [vmem:[%s8350 + $0x180] sm:$0xe]
    %v11452 = vld [vmem:[%s8350 + $0x184] sm:$0xf]
    %v11453 = vld [vmem:[%s8350 + $0x188] sm:$0x1]
    %v11454 = vld [vmem:[%s8350 + $0x18c] sm:$0xe]
    %v11455 = vld [vmem:[%s8350 + $0x190] sm:$0xf]
    %v11456 = vld [vmem:[%s8350 + $0x194] sm:$0x1]
    %v11457 = vld [vmem:[%s8350 + $0x1b0] sm:$0xe]
    %v11458 = vld [vmem:[%s8350 + $0x1b4] sm:$0xf]
    %v11459 = vld [vmem:[%s8350 + $0x1b8] sm:$0x1]
    %v11460 = vld [vmem:[%s8350 + $0x1bc] sm:$0xe]
    %v11461 = vld [vmem:[%s8350 + $0x1c0] sm:$0xf]
    %v11462 = vld [vmem:[%s8350 + $0x1c4] sm:$0x1]
    %v11463 = vld [vmem:[%s8350 + $0x1c8] sm:$0xe]
    %v11464 = vld [vmem:[%s8350 + $0x1cc] sm:$0xf]
    %v11465 = vld [vmem:[%s8350 + $0x1d0] sm:$0x1]
    %v11466 = vld [vmem:[%s8350 + $0x1d4] sm:$0xe]
    %v11467 = vld [vmem:[%s8350 + $0x1d8] sm:$0xf]
    %v11468 = vld [vmem:[%s8350 + $0x1dc] sm:$0x1]
    %v11469 = vld [vmem:[%s8350 + $0x1e0] sm:$0xe]
    %v11470 = vld [vmem:[%s8350 + $0x1e4] sm:$0xf]
    %v11471 = vld [vmem:[%s8350 + $0x1e8] sm:$0x1]
    %v11472 = vld [vmem:[%s8350 + $0x1ec] sm:$0xe]
    %v11473 = vld [vmem:[%s8350 + $0x1f0] sm:$0xf]
    %v11474 = vld [vmem:[%s8350 + $0x1f4] sm:$0x1]
    %v11475 = vld [vmem:[%s8350 + $0x1f8] sm:$0xe]
    %v11476 = vld [vmem:[%s8350 + $0x1fc] sm:$0xf]
    %v11477 = vld [vmem:[%s8350 + $0x200] sm:$0x1]
    %v11478 = vld [vmem:[%s8350 + $0x204] sm:$0xe]
    %v11479 = vld [vmem:[%s8350 + $0x208] sm:$0xf]
    %v11480 = vld [vmem:[%s8350 + $0x20c] sm:$0x1]
    %v11481 = vld [vmem:[%s8350 + $0x210] sm:$0xe]
    %v11482 = vld [vmem:[%s8350 + $0x214] sm:$0xf]
    %v11483 = vld [vmem:[%s8350 + $0x218] sm:$0x1]
    %v11484 = vld [vmem:[%s8350 + $0x21c] sm:$0xe]
    %v11485 = vld [vmem:[%s8350 + $0x220] sm:$0xf]
    %v11486 = vld [vmem:[%s8350 + $0x224] sm:$0x1]
    %v11487 = vld [vmem:[%s8350 + $0x228] sm:$0xe]
    %v11488 = vld [vmem:[%s8350 + $0x22c] sm:$0xf]
    %v11489 = vld [vmem:[%s8350 + $0x230] sm:$0x1]
    %v11490 = vld [vmem:[%s8350 + $0x234] sm:$0xe]
    %v11491 = vld [vmem:[%s8350 + $0x238] sm:$0xf]
    %v11492 = vld [vmem:[%s8350 + $0x23c] sm:$0x1]
    %v11493 = vld [vmem:[%s8350 + $0x240] sm:$0xe]
    %v11494 = vld [vmem:[%s8350 + $0x244] sm:$0xf]
    %v11495 = vld [vmem:[%s8350 + $0x248] sm:$0x1]
    %v11496 = vld [vmem:[%s8350 + $0x24c] sm:$0xe]
    %v11497 = vld [vmem:[%s8350 + $0x250] sm:$0xf]
    %v11498 = vld [vmem:[%s8350 + $0x254] sm:$0x1]
    %v11499 = vld [vmem:[%s8350 + $0x258] sm:$0xe]
    %v11500 = vld [vmem:[%s8350 + $0x25c] sm:$0xf]
    %v11501 = vld [vmem:[%s8350 + $0x260] sm:$0x1]
    %v11502 = vld [vmem:[%s8350 + $0x264] sm:$0xe]
    %v11503 = vld [vmem:[%s8350 + $0x268] sm:$0xf]
    %v11504 = vld [vmem:[%s8350 + $0x26c] sm:$0x1]
    %v11505 = vld [vmem:[%s8350 + $0x288] sm:$0xe]
    %v11506 = vld [vmem:[%s8350 + $0x28c] sm:$0xf]
    %v11507 = vld [vmem:[%s8350 + $0x290] sm:$0x1]
    %v11508 = vld [vmem:[%s8350 + $0x294] sm:$0xe]
    %v11509 = vld [vmem:[%s8350 + $0x298] sm:$0xf]
    %v11510 = vld [vmem:[%s8350 + $0x29c] sm:$0x1]
    %v11511 = vld [vmem:[%s8350 + $0x2a0] sm:$0xe]
    %v11512 = vld [vmem:[%s8350 + $0x2a4] sm:$0xf]
    %v11513 = vld [vmem:[%s8350 + $0x2a8] sm:$0x1]
    %v11514 = vld [vmem:[%s8350 + $0x2ac] sm:$0xe]
    %v11515 = vld [vmem:[%s8350 + $0x2b0] sm:$0xf]
    %v11516 = vld [vmem:[%s8350 + $0x2b4] sm:$0x1]
    %v11517 = vld [vmem:[%s8350 + $0x2b8] sm:$0xe]
    %v11518 = vld [vmem:[%s8350 + $0x2bc] sm:$0xf]
    %v11519 = vld [vmem:[%s8350 + $0x2c0] sm:$0x1]
    %v11520 = vld [vmem:[%s8350 + $0x2c4] sm:$0xe]
    %v11521 = vld [vmem:[%s8350 + $0x2c8] sm:$0xf]
    %v11522 = vld [vmem:[%s8350 + $0x2cc] sm:$0x1]
    %v11523 = vld [vmem:[%s8350 + $0x2d0] sm:$0xe]
    %v11524 = vld [vmem:[%s8350 + $0x2d4] sm:$0xf]
    %v11525 = vld [vmem:[%s8350 + $0x2d8] sm:$0x1]
    %v11526 = vld [vmem:[%s8350 + $0x2dc] sm:$0xe]
    %v11527 = vld [vmem:[%s8350 + $0x2e0] sm:$0xf]
    %v11528 = vld [vmem:[%s8350 + $0x2e4] sm:$0x1]
    %v11529 = vld [vmem:[%s8350 + $0x2e8] sm:$0xe]
    %v11530 = vld [vmem:[%s8350 + $0x2ec] sm:$0xf]
    %v11531 = vld [vmem:[%s8350 + $0x2f0] sm:$0x1]
    %v11532 = vld [vmem:[%s8350 + $0x2f4] sm:$0xe]
    %v11533 = vld [vmem:[%s8350 + $0x2f8] sm:$0xf]
    %v11534 = vld [vmem:[%s8350 + $0x2fc] sm:$0x1]
    %v11535 = vld [vmem:[%s8350 + $0x300] sm:$0xe]
    %v11536 = vld [vmem:[%s8350 + $0x304] sm:$0xf]
    %v11537 = vld [vmem:[%s8350 + $0x308] sm:$0x1]
    %v11538 = vld [vmem:[%s8350 + $0x30c] sm:$0xe]
    %v11539 = vld [vmem:[%s8350 + $0x310] sm:$0xf]
    %v11540 = vld [vmem:[%s8350 + $0x314] sm:$0x1]
    %v11541 = vld [vmem:[%s8350 + $0x318] sm:$0xe]
    %v11542 = vld [vmem:[%s8350 + $0x31c] sm:$0xf]
    %v11543 = vld [vmem:[%s8350 + $0x320] sm:$0x1]
    %v11544 = vld [vmem:[%s8350 + $0x324] sm:$0xe]
    %v11545 = vld [vmem:[%s8350 + $0x328] sm:$0xf]
    %v11546 = vld [vmem:[%s8350 + $0x32c] sm:$0x1]
    %v11547 = vld [vmem:[%s8350 + $0x330] sm:$0xe]
    %v11548 = vld [vmem:[%s8350 + $0x334] sm:$0xf]
    %v11549 = vld [vmem:[%s8350 + $0x338] sm:$0x1]
    %v11550 = vld [vmem:[%s8350 + $0x33c] sm:$0xe]
    %v11551 = vld [vmem:[%s8350 + $0x340] sm:$0xf]
    %v11552 = vld [vmem:[%s8350 + $0x344] sm:$0x1]
    %v11745 = vrot.slane %v11361, 5
    %v11746 = vrot.slane %v11745, 4
    %v11747 = vrot.slane %v11362, 5
    %v11748 = vsel %vm3032, %v11746, %v11747
    %v11749 = vrot.slane %v11747, 4
    %v11750 = vrot.slane %v11363, 5
    %v11751 = vsel %vm3032, %v11749, %v11750
    %v11752 = vrot.slane %v11364, 5
    %v11753 = vrot.slane %v11752, 4
    %v11754 = vrot.slane %v11365, 5
    %v11755 = vsel %vm3032, %v11753, %v11754
    %v11756 = vrot.slane %v11754, 4
    %v11757 = vrot.slane %v11366, 5
    %v11758 = vsel %vm3032, %v11756, %v11757
    %v11759 = vrot.slane %v11367, 5
    %v11760 = vrot.slane %v11759, 4
    %v11761 = vrot.slane %v11368, 5
    %v11762 = vsel %vm3032, %v11760, %v11761
    %v11763 = vrot.slane %v11761, 4
    %v11764 = vrot.slane %v11369, 5
    %v11765 = vsel %vm3032, %v11763, %v11764
    %v11766 = vrot.slane %v11370, 5
    %v11767 = vrot.slane %v11766, 4
    %v11768 = vrot.slane %v11371, 5
    %v11769 = vsel %vm3032, %v11767, %v11768
    %v11770 = vrot.slane %v11768, 4
    %v11771 = vrot.slane %v11372, 5
    %v11772 = vsel %vm3032, %v11770, %v11771
    %v11773 = vrot.slane %v11373, 5
    %v11774 = vrot.slane %v11773, 4
    %v11775 = vrot.slane %v11374, 5
    %v11776 = vsel %vm3032, %v11774, %v11775
    %v11777 = vrot.slane %v11775, 4
    %v11778 = vrot.slane %v11375, 5
    %v11779 = vsel %vm3032, %v11777, %v11778
    %v11780 = vrot.slane %v11376, 5
    %v11781 = vrot.slane %v11780, 4
    %v11782 = vrot.slane %v11377, 5
    %v11783 = vsel %vm3032, %v11781, %v11782
    %v11784 = vrot.slane %v11782, 4
    %v11785 = vrot.slane %v11378, 5
    %v11786 = vsel %vm3032, %v11784, %v11785
    %v11787 = vrot.slane %v11379, 5
    %v11788 = vrot.slane %v11787, 4
    %v11789 = vrot.slane %v11380, 5
    %v11790 = vsel %vm3032, %v11788, %v11789
    %v11791 = vrot.slane %v11789, 4
    %v11792 = vrot.slane %v11381, 5
    %v11793 = vsel %vm3032, %v11791, %v11792
    %v11794 = vrot.slane %v11382, 5
    %v11795 = vrot.slane %v11794, 4
    %v11796 = vrot.slane %v11383, 5
    %v11797 = vsel %vm3032, %v11795, %v11796
    %v11798 = vrot.slane %v11796, 4
    %v11799 = vrot.slane %v11384, 5
    %v11800 = vsel %vm3032, %v11798, %v11799
    %v11801 = vrot.slane %v11385, 5
    %v11802 = vrot.slane %v11801, 4
    %v11803 = vrot.slane %v11386, 5
    %v11804 = vsel %vm3032, %v11802, %v11803
    %v11805 = vrot.slane %v11803, 4
    %v11806 = vrot.slane %v11387, 5
    %v11807 = vsel %vm3032, %v11805, %v11806
    %v11808 = vrot.slane %v11388, 5
    %v11809 = vrot.slane %v11808, 4
    %v11810 = vrot.slane %v11389, 5
    %v11811 = vsel %vm3032, %v11809, %v11810
    %v11812 = vrot.slane %v11810, 4
    %v11813 = vrot.slane %v11390, 5
    %v11814 = vsel %vm3032, %v11812, %v11813
    %v11815 = vrot.slane %v11391, 5
    %v11816 = vrot.slane %v11815, 4
    %v11817 = vrot.slane %v11392, 5
    %v11818 = vsel %vm3032, %v11816, %v11817
    %v11819 = vrot.slane %v11817, 4
    %v11820 = vrot.slane %v11393, 5
    %v11821 = vsel %vm3032, %v11819, %v11820
    %v11822 = vrot.slane %v11394, 5
    %v11823 = vrot.slane %v11822, 4
    %v11824 = vrot.slane %v11395, 5
    %v11825 = vsel %vm3032, %v11823, %v11824
    %v11826 = vrot.slane %v11824, 4
    %v11827 = vrot.slane %v11396, 5
    %v11828 = vsel %vm3032, %v11826, %v11827
    %v11829 = vrot.slane %v11397, 5
    %v11830 = vrot.slane %v11829, 4
    %v11831 = vrot.slane %v11398, 5
    %v11832 = vsel %vm3032, %v11830, %v11831
    %v11833 = vrot.slane %v11831, 4
    %v11834 = vrot.slane %v11399, 5
    %v11835 = vsel %vm3032, %v11833, %v11834
    %v11836 = vrot.slane %v11400, 5
    %v11837 = vrot.slane %v11836, 4
    %v11838 = vrot.slane %v11401, 5
    %v11839 = vsel %vm3032, %v11837, %v11838
    %v11840 = vrot.slane %v11838, 4
    %v11841 = vrot.slane %v11402, 5
    %v11842 = vsel %vm3032, %v11840, %v11841
    %v11843 = vrot.slane %v11403, 5
    %v11844 = vrot.slane %v11843, 4
    %v11845 = vrot.slane %v11404, 5
    %v11846 = vsel %vm3032, %v11844, %v11845
    %v11847 = vrot.slane %v11845, 4
    %v11848 = vrot.slane %v11405, 5
    %v11849 = vsel %vm3032, %v11847, %v11848
    %v11850 = vrot.slane %v11406, 5
    %v11851 = vrot.slane %v11850, 4
    %v11852 = vrot.slane %v11407, 5
    %v11853 = vsel %vm3032, %v11851, %v11852
    %v11854 = vrot.slane %v11852, 4
    %v11855 = vrot.slane %v11408, 5
    %v11856 = vsel %vm3032, %v11854, %v11855
    %v11857 = vrot.slane %v11409, 5
    %v11858 = vrot.slane %v11857, 4
    %v11859 = vrot.slane %v11410, 5
    %v11860 = vsel %vm3032, %v11858, %v11859
    %v11861 = vrot.slane %v11859, 4
    %v11862 = vrot.slane %v11411, 5
    %v11863 = vsel %vm3032, %v11861, %v11862
    %v11864 = vrot.slane %v11412, 5
    %v11865 = vrot.slane %v11864, 4
    %v11866 = vrot.slane %v11413, 5
    %v11867 = vsel %vm3032, %v11865, %v11866
    %v11868 = vrot.slane %v11866, 4
    %v11869 = vrot.slane %v11414, 5
    %v11870 = vsel %vm3032, %v11868, %v11869
    %v11871 = vrot.slane %v11415, 5
    %v11872 = vrot.slane %v11871, 4
    %v11873 = vrot.slane %v11416, 5
    %v11874 = vsel %vm3032, %v11872, %v11873
    %v11875 = vrot.slane %v11873, 4
    %v11876 = vrot.slane %v11417, 5
    %v11877 = vsel %vm3032, %v11875, %v11876
    %v11878 = vrot.slane %v11418, 5
    %v11879 = vrot.slane %v11878, 4
    %v11880 = vrot.slane %v11419, 5
    %v11881 = vsel %vm3032, %v11879, %v11880
    %v11882 = vrot.slane %v11880, 4
    %v11883 = vrot.slane %v11420, 5
    %v11884 = vsel %vm3032, %v11882, %v11883
    %v11885 = vrot.slane %v11421, 5
    %v11886 = vrot.slane %v11885, 4
    %v11887 = vrot.slane %v11422, 5
    %v11888 = vsel %vm3032, %v11886, %v11887
    %v11889 = vrot.slane %v11887, 4
    %v11890 = vrot.slane %v11423, 5
    %v11891 = vsel %vm3032, %v11889, %v11890
    %v11892 = vrot.slane %v11424, 5
    %v11893 = vrot.slane %v11892, 4
    %v11894 = vrot.slane %v11425, 5
    %v11895 = vsel %vm3032, %v11893, %v11894
    %v11896 = vrot.slane %v11894, 4
    %v11897 = vrot.slane %v11426, 5
    %v11898 = vsel %vm3032, %v11896, %v11897
    %v11899 = vrot.slane %v11427, 5
    %v11900 = vrot.slane %v11899, 4
    %v11901 = vrot.slane %v11428, 5
    %v11902 = vsel %vm3032, %v11900, %v11901
    %v11903 = vrot.slane %v11901, 4
    %v11904 = vrot.slane %v11429, 5
    %v11905 = vsel %vm3032, %v11903, %v11904
    %v11906 = vrot.slane %v11430, 5
    %v11907 = vrot.slane %v11906, 4
    %v11908 = vrot.slane %v11431, 5
    %v11909 = vsel %vm3032, %v11907, %v11908
    %v11910 = vrot.slane %v11908, 4
    %v11911 = vrot.slane %v11432, 5
    %v11912 = vsel %vm3032, %v11910, %v11911
    %v11913 = vrot.slane %v11433, 5
    %v11914 = vrot.slane %v11913, 4
    %v11915 = vrot.slane %v11434, 5
    %v11916 = vsel %vm3032, %v11914, %v11915
    %v11917 = vrot.slane %v11915, 4
    %v11918 = vrot.slane %v11435, 5
    %v11919 = vsel %vm3032, %v11917, %v11918
    %v11920 = vrot.slane %v11436, 5
    %v11921 = vrot.slane %v11920, 4
    %v11922 = vrot.slane %v11437, 5
    %v11923 = vsel %vm3032, %v11921, %v11922
    %v11924 = vrot.slane %v11922, 4
    %v11925 = vrot.slane %v11438, 5
    %v11926 = vsel %vm3032, %v11924, %v11925
    %v11927 = vrot.slane %v11439, 5
    %v11928 = vrot.slane %v11927, 4
    %v11929 = vrot.slane %v11440, 5
    %v11930 = vsel %vm3032, %v11928, %v11929
    %v11931 = vrot.slane %v11929, 4
    %v11932 = vrot.slane %v11441, 5
    %v11933 = vsel %vm3032, %v11931, %v11932
    %v11934 = vrot.slane %v11442, 5
    %v11935 = vrot.slane %v11934, 4
    %v11936 = vrot.slane %v11443, 5
    %v11937 = vsel %vm3032, %v11935, %v11936
    %v11938 = vrot.slane %v11936, 4
    %v11939 = vrot.slane %v11444, 5
    %v11940 = vsel %vm3032, %v11938, %v11939
    %v11941 = vrot.slane %v11445, 5
    %v11942 = vrot.slane %v11941, 4
    %v11943 = vrot.slane %v11446, 5
    %v11944 = vsel %vm3032, %v11942, %v11943
    %v11945 = vrot.slane %v11943, 4
    %v11946 = vrot.slane %v11447, 5
    %v11947 = vsel %vm3032, %v11945, %v11946
    %v11948 = vrot.slane %v11448, 5
    %v11949 = vrot.slane %v11948, 4
    %v11950 = vrot.slane %v11449, 5
    %v11951 = vsel %vm3032, %v11949, %v11950
    %v11952 = vrot.slane %v11950, 4
    %v11953 = vrot.slane %v11450, 5
    %v11954 = vsel %vm3032, %v11952, %v11953
    %v11955 = vrot.slane %v11451, 5
    %v11956 = vrot.slane %v11955, 4
    %v11957 = vrot.slane %v11452, 5
    %v11958 = vsel %vm3032, %v11956, %v11957
    %v11959 = vrot.slane %v11957, 4
    %v11960 = vrot.slane %v11453, 5
    %v11961 = vsel %vm3032, %v11959, %v11960
    %v11962 = vrot.slane %v11454, 5
    %v11963 = vrot.slane %v11962, 4
    %v11964 = vrot.slane %v11455, 5
    %v11965 = vsel %vm3032, %v11963, %v11964
    %v11966 = vrot.slane %v11964, 4
    %v11967 = vrot.slane %v11456, 5
    %v11968 = vsel %vm3032, %v11966, %v11967
    %v11969 = vrot.slane %v11457, 5
    %v11970 = vrot.slane %v11969, 4
    %v11971 = vrot.slane %v11458, 5
    %v11972 = vsel %vm3032, %v11970, %v11971
    %v11973 = vrot.slane %v11971, 4
    %v11974 = vrot.slane %v11459, 5
    %v11975 = vsel %vm3032, %v11973, %v11974
    %v11976 = vrot.slane %v11460, 5
    %v11977 = vrot.slane %v11976, 4
    %v11978 = vrot.slane %v11461, 5
    %v11979 = vsel %vm3032, %v11977, %v11978
    %v11980 = vrot.slane %v11978, 4
    %v11981 = vrot.slane %v11462, 5
    %v11982 = vsel %vm3032, %v11980, %v11981
    %v11983 = vrot.slane %v11463, 5
    %v11984 = vrot.slane %v11983, 4
    %v11985 = vrot.slane %v11464, 5
    %v11986 = vsel %vm3032, %v11984, %v11985
    %v11987 = vrot.slane %v11985, 4
    %v11988 = vrot.slane %v11465, 5
    %v11989 = vsel %vm3032, %v11987, %v11988
    %v11990 = vrot.slane %v11466, 5
    %v11991 = vrot.slane %v11990, 4
    %v11992 = vrot.slane %v11467, 5
    %v11993 = vsel %vm3032, %v11991, %v11992
    %v11994 = vrot.slane %v11992, 4
    %v11995 = vrot.slane %v11468, 5
    %v11996 = vsel %vm3032, %v11994, %v11995
    %v11997 = vrot.slane %v11469, 5
    %v11998 = vrot.slane %v11997, 4
    %v11999 = vrot.slane %v11470, 5
    %v12000 = vsel %vm3032, %v11998, %v11999
    %v12001 = vrot.slane %v11999, 4
    %v12002 = vrot.slane %v11471, 5
    %v12003 = vsel %vm3032, %v12001, %v12002
    %v12004 = vrot.slane %v11472, 5
    %v12005 = vrot.slane %v12004, 4
    %v12006 = vrot.slane %v11473, 5
    %v12007 = vsel %vm3032, %v12005, %v12006
    %v12008 = vrot.slane %v12006, 4
    %v12009 = vrot.slane %v11474, 5
    %v12010 = vsel %vm3032, %v12008, %v12009
    %v12011 = vrot.slane %v11475, 5
    %v12012 = vrot.slane %v12011, 4
    %v12013 = vrot.slane %v11476, 5
    %v12014 = vsel %vm3032, %v12012, %v12013
    %v12015 = vrot.slane %v12013, 4
    %v12016 = vrot.slane %v11477, 5
    %v12017 = vsel %vm3032, %v12015, %v12016
    %v12018 = vrot.slane %v11478, 5
    %v12019 = vrot.slane %v12018, 4
    %v12020 = vrot.slane %v11479, 5
    %v12021 = vsel %vm3032, %v12019, %v12020
    %v12022 = vrot.slane %v12020, 4
    %v12023 = vrot.slane %v11480, 5
    %v12024 = vsel %vm3032, %v12022, %v12023
    %v12025 = vrot.slane %v11481, 5
    %v12026 = vrot.slane %v12025, 4
    %v12027 = vrot.slane %v11482, 5
    %v12028 = vsel %vm3032, %v12026, %v12027
    %v12029 = vrot.slane %v12027, 4
    %v12030 = vrot.slane %v11483, 5
    %v12031 = vsel %vm3032, %v12029, %v12030
    %v12032 = vrot.slane %v11484, 5
    %v12033 = vrot.slane %v12032, 4
    %v12034 = vrot.slane %v11485, 5
    %v12035 = vsel %vm3032, %v12033, %v12034
    %v12036 = vrot.slane %v12034, 4
    %v12037 = vrot.slane %v11486, 5
    %v12038 = vsel %vm3032, %v12036, %v12037
    %v12039 = vrot.slane %v11487, 5
    %v12040 = vrot.slane %v12039, 4
    %v12041 = vrot.slane %v11488, 5
    %v12042 = vsel %vm3032, %v12040, %v12041
    %v12043 = vrot.slane %v12041, 4
    %v12044 = vrot.slane %v11489, 5
    %v12045 = vsel %vm3032, %v12043, %v12044
    %v12046 = vrot.slane %v11490, 5
    %v12047 = vrot.slane %v12046, 4
    %v12048 = vrot.slane %v11491, 5
    %v12049 = vsel %vm3032, %v12047, %v12048
    %v12050 = vrot.slane %v12048, 4
    %v12051 = vrot.slane %v11492, 5
    %v12052 = vsel %vm3032, %v12050, %v12051
    %v12053 = vrot.slane %v11493, 5
    %v12054 = vrot.slane %v12053, 4
    %v12055 = vrot.slane %v11494, 5
    %v12056 = vsel %vm3032, %v12054, %v12055
    %v12057 = vrot.slane %v12055, 4
    %v12058 = vrot.slane %v11495, 5
    %v12059 = vsel %vm3032, %v12057, %v12058
    %v12060 = vrot.slane %v11496, 5
    %v12061 = vrot.slane %v12060, 4
    %v12062 = vrot.slane %v11497, 5
    %v12063 = vsel %vm3032, %v12061, %v12062
    %v12064 = vrot.slane %v12062, 4
    %v12065 = vrot.slane %v11498, 5
    %v12066 = vsel %vm3032, %v12064, %v12065
    %v12067 = vrot.slane %v11499, 5
    %v12068 = vrot.slane %v12067, 4
    %v12069 = vrot.slane %v11500, 5
    %v12070 = vsel %vm3032, %v12068, %v12069
    %v12071 = vrot.slane %v12069, 4
    %v12072 = vrot.slane %v11501, 5
    %v12073 = vsel %vm3032, %v12071, %v12072
    %v12074 = vrot.slane %v11502, 5
    %v12075 = vrot.slane %v12074, 4
    %v12076 = vrot.slane %v11503, 5
    %v12077 = vsel %vm3032, %v12075, %v12076
    %v12078 = vrot.slane %v12076, 4
    %v12079 = vrot.slane %v11504, 5
    %v12080 = vsel %vm3032, %v12078, %v12079
    %v12081 = vrot.slane %v11505, 5
    %v12082 = vrot.slane %v12081, 4
    %v12083 = vrot.slane %v11506, 5
    %v12084 = vsel %vm3032, %v12082, %v12083
    %v12085 = vrot.slane %v12083, 4
    %v12086 = vrot.slane %v11507, 5
    %v12087 = vsel %vm3032, %v12085, %v12086
    %v12088 = vrot.slane %v11508, 5
    %v12089 = vrot.slane %v12088, 4
    %v12090 = vrot.slane %v11509, 5
    %v12091 = vsel %vm3032, %v12089, %v12090
    %v12092 = vrot.slane %v12090, 4
    %v12093 = vrot.slane %v11510, 5
    %v12094 = vsel %vm3032, %v12092, %v12093
    %v12095 = vrot.slane %v11511, 5
    %v12096 = vrot.slane %v12095, 4
    %v12097 = vrot.slane %v11512, 5
    %v12098 = vsel %vm3032, %v12096, %v12097
    %v12099 = vrot.slane %v12097, 4
    %v12100 = vrot.slane %v11513, 5
    %v12101 = vsel %vm3032, %v12099, %v12100
    %v12102 = vrot.slane %v11514, 5
    %v12103 = vrot.slane %v12102, 4
    %v12104 = vrot.slane %v11515, 5
    %v12105 = vsel %vm3032, %v12103, %v12104
    %v12106 = vrot.slane %v12104, 4
    %v12107 = vrot.slane %v11516, 5
    %v12108 = vsel %vm3032, %v12106, %v12107
    %v12109 = vrot.slane %v11517, 5
    %v12110 = vrot.slane %v12109, 4
    %v12111 = vrot.slane %v11518, 5
    %v12112 = vsel %vm3032, %v12110, %v12111
    %v12113 = vrot.slane %v12111, 4
    %v12114 = vrot.slane %v11519, 5
    %v12115 = vsel %vm3032, %v12113, %v12114
    %v12116 = vrot.slane %v11520, 5
    %v12117 = vrot.slane %v12116, 4
    %v12118 = vrot.slane %v11521, 5
    %v12119 = vsel %vm3032, %v12117, %v12118
    %v12120 = vrot.slane %v12118, 4
    %v12121 = vrot.slane %v11522, 5
    %v12122 = vsel %vm3032, %v12120, %v12121
    %v12123 = vrot.slane %v11523, 5
    %v12124 = vrot.slane %v12123, 4
    %v12125 = vrot.slane %v11524, 5
    %v12126 = vsel %vm3032, %v12124, %v12125
    %v12127 = vrot.slane %v12125, 4
    %v12128 = vrot.slane %v11525, 5
    %v12129 = vsel %vm3032, %v12127, %v12128
    %v12130 = vrot.slane %v11526, 5
    %v12131 = vrot.slane %v12130, 4
    %v12132 = vrot.slane %v11527, 5
    %v12133 = vsel %vm3032, %v12131, %v12132
    %v12134 = vrot.slane %v12132, 4
    %v12135 = vrot.slane %v11528, 5
    %v12136 = vsel %vm3032, %v12134, %v12135
    %v12137 = vrot.slane %v11529, 5
    %v12138 = vrot.slane %v12137, 4
    %v12139 = vrot.slane %v11530, 5
    %v12140 = vsel %vm3032, %v12138, %v12139
    %v12141 = vrot.slane %v12139, 4
    %v12142 = vrot.slane %v11531, 5
    %v12143 = vsel %vm3032, %v12141, %v12142
    %v12144 = vrot.slane %v11532, 5
    %v12145 = vrot.slane %v12144, 4
    %v12146 = vrot.slane %v11533, 5
    %v12147 = vsel %vm3032, %v12145, %v12146
    %v12148 = vrot.slane %v12146, 4
    %v12149 = vrot.slane %v11534, 5
    %v12150 = vsel %vm3032, %v12148, %v12149
    %v12151 = vrot.slane %v11535, 5
    %v12152 = vrot.slane %v12151, 4
    %v12153 = vrot.slane %v11536, 5
    %v12154 = vsel %vm3032, %v12152, %v12153
    %v12155 = vrot.slane %v12153, 4
    %v12156 = vrot.slane %v11537, 5
    %v12157 = vsel %vm3032, %v12155, %v12156
    %v12158 = vrot.slane %v11538, 5
    %v12159 = vrot.slane %v12158, 4
    %v12160 = vrot.slane %v11539, 5
    %v12161 = vsel %vm3032, %v12159, %v12160
    %v12162 = vrot.slane %v12160, 4
    %v12163 = vrot.slane %v11540, 5
    %v12164 = vsel %vm3032, %v12162, %v12163
    %v12165 = vrot.slane %v11541, 5
    %v12166 = vrot.slane %v12165, 4
    %v12167 = vrot.slane %v11542, 5
    %v12168 = vsel %vm3032, %v12166, %v12167
    %v12169 = vrot.slane %v12167, 4
    %v12170 = vrot.slane %v11543, 5
    %v12171 = vsel %vm3032, %v12169, %v12170
    %v12172 = vrot.slane %v11544, 5
    %v12173 = vrot.slane %v12172, 4
    %v12174 = vrot.slane %v11545, 5
    %v12175 = vsel %vm3032, %v12173, %v12174
    %v12176 = vrot.slane %v12174, 4
    %v12177 = vrot.slane %v11546, 5
    %v12178 = vsel %vm3032, %v12176, %v12177
    %v12179 = vrot.slane %v11547, 5
    %v12180 = vrot.slane %v12179, 4
    %v12181 = vrot.slane %v11548, 5
    %v12182 = vsel %vm3032, %v12180, %v12181
    %v12183 = vrot.slane %v12181, 4
    %v12184 = vrot.slane %v11549, 5
    %v12185 = vsel %vm3032, %v12183, %v12184
    %v12186 = vrot.slane %v11550, 5
    %v12187 = vrot.slane %v12186, 4
    %v12188 = vrot.slane %v11551, 5
    %v12189 = vsel %vm3032, %v12187, %v12188
    %v12190 = vrot.slane %v12188, 4
    %v12191 = vrot.slane %v11552, 5
    %v12192 = vsel %vm3032, %v12190, %v12191
    %12321 = vst.msk [vmem:[#allocation2 + $0x4] sm:$0xf] %vm273, %v11748
    %12322 = vst.msk [vmem:[#allocation2 + $0xc] sm:$0xf] %vm273, %v11751
    %12323 = vst.msk [vmem:[#allocation2 + $0x14] sm:$0xf] %vm273, %v11755
    %12324 = vst.msk [vmem:[#allocation2 + $0x1c] sm:$0xf] %vm273, %v11758
    %12325 = vst.msk [vmem:[#allocation2 + $0x24] sm:$0xf] %vm273, %v11762
    %12326 = vst.msk [vmem:[#allocation2 + $0x2c] sm:$0xf] %vm273, %v11765
    %12327 = vst.msk [vmem:[#allocation2 + $0x34] sm:$0xf] %vm273, %v11769
    %12328 = vst.msk [vmem:[#allocation2 + $0x3c] sm:$0xf] %vm273, %v11772
    %12329 = vst.msk [vmem:[#allocation2 + $0x44] sm:$0xf] %vm273, %v11776
    %12330 = vst.msk [vmem:[#allocation2 + $0x4c] sm:$0xf] %vm273, %v11779
    %12331 = vst.msk [vmem:[#allocation2 + $0x54] sm:$0xf] %vm273, %v11783
    %12332 = vst.msk [vmem:[#allocation2 + $0x5c] sm:$0xf] %vm273, %v11786
    %12333 = vst.msk [vmem:[#allocation2 + $0x64] sm:$0xf] %vm273, %v11790
    %12334 = vst.msk [vmem:[#allocation2 + $0x6c] sm:$0xf] %vm273, %v11793
    %12335 = vst.msk [vmem:[#allocation2 + $0x74] sm:$0xf] %vm273, %v11797
    %12336 = vst.msk [vmem:[#allocation2 + $0x7c] sm:$0xf] %vm273, %v11800
    %12337 = vst.msk [vmem:[#allocation2 + $0x84] sm:$0xf] %vm273, %v11804
    %12338 = vst.msk [vmem:[#allocation2 + $0x8c] sm:$0xf] %vm273, %v11807
    %12339 = vst.msk [vmem:[#allocation2 + $0x94] sm:$0xf] %vm273, %v11811
    %12340 = vst.msk [vmem:[#allocation2 + $0x9c] sm:$0xf] %vm273, %v11814
    %12341 = vst.msk [vmem:[#allocation2 + $0xa4] sm:$0xf] %vm273, %v11818
    %12342 = vst.msk [vmem:[#allocation2 + $0xac] sm:$0xf] %vm273, %v11821
    %12343 = vst.msk [vmem:[#allocation2 + $0xb4] sm:$0xf] %vm273, %v11825
    %12344 = vst.msk [vmem:[#allocation2 + $0xbc] sm:$0xf] %vm273, %v11828
    %12345 = vst.msk [vmem:[#allocation2 + $0xc4] sm:$0xf] %vm273, %v11832
    %12346 = vst.msk [vmem:[#allocation2 + $0xcc] sm:$0xf] %vm273, %v11835
    %12347 = vst.msk [vmem:[#allocation2 + $0xd4] sm:$0xf] %vm273, %v11839
    %12348 = vst.msk [vmem:[#allocation2 + $0xdc] sm:$0xf] %vm273, %v11842
    %12349 = vst.msk [vmem:[#allocation2 + $0xe4] sm:$0xf] %vm273, %v11846
    %12350 = vst.msk [vmem:[#allocation2 + $0xec] sm:$0xf] %vm273, %v11849
    %12351 = vst.msk [vmem:[#allocation2 + $0xf4] sm:$0xf] %vm273, %v11853
    %12352 = vst.msk [vmem:[#allocation2 + $0xfc] sm:$0xf] %vm273, %v11856
    %12353 = vst.msk [vmem:[#allocation2 + $0x104] sm:$0xf] %vm273, %v11860
    %12354 = vst.msk [vmem:[#allocation2 + $0x10c] sm:$0xf] %vm273, %v11863
    %12355 = vst.msk [vmem:[#allocation2 + $0x114] sm:$0xf] %vm273, %v11867
    %12356 = vst.msk [vmem:[#allocation2 + $0x11c] sm:$0xf] %vm273, %v11870
    %12357 = vst.msk [vmem:[#allocation2 + $0x124] sm:$0xf] %vm273, %v11874
    %12358 = vst.msk [vmem:[#allocation2 + $0x12c] sm:$0xf] %vm273, %v11877
    %12359 = vst.msk [vmem:[#allocation2 + $0x134] sm:$0xf] %vm273, %v11881
    %12360 = vst.msk [vmem:[#allocation2 + $0x13c] sm:$0xf] %vm273, %v11884
    %12361 = vst.msk [vmem:[#allocation2 + $0x144] sm:$0xf] %vm273, %v11888
    %12362 = vst.msk [vmem:[#allocation2 + $0x14c] sm:$0xf] %vm273, %v11891
    %12363 = vst.msk [vmem:[#allocation2 + $0x154] sm:$0xf] %vm273, %v11895
    %12364 = vst.msk [vmem:[#allocation2 + $0x15c] sm:$0xf] %vm273, %v11898
    %12365 = vst.msk [vmem:[#allocation2 + $0x164] sm:$0xf] %vm273, %v11902
    %12366 = vst.msk [vmem:[#allocation2 + $0x16c] sm:$0xf] %vm273, %v11905
    %12367 = vst.msk [vmem:[#allocation2 + $0x174] sm:$0xf] %vm273, %v11909
    %12368 = vst.msk [vmem:[#allocation2 + $0x17c] sm:$0xf] %vm273, %v11912
    %12369 = vst.msk [vmem:[#allocation2 + $0x184] sm:$0xf] %vm273, %v11916
    %12370 = vst.msk [vmem:[#allocation2 + $0x18c] sm:$0xf] %vm273, %v11919
    %12371 = vst.msk [vmem:[#allocation2 + $0x194] sm:$0xf] %vm273, %v11923
    %12372 = vst.msk [vmem:[#allocation2 + $0x19c] sm:$0xf] %vm273, %v11926
    %12373 = vst.msk [vmem:[#allocation2 + $0x1a4] sm:$0xf] %vm273, %v11930
    %12374 = vst.msk [vmem:[#allocation2 + $0x1ac] sm:$0xf] %vm273, %v11933
    %12375 = vst.msk [vmem:[#allocation2 + $0x1b4] sm:$0xf] %vm273, %v11937
    %12376 = vst.msk [vmem:[#allocation2 + $0x1bc] sm:$0xf] %vm273, %v11940
    %12377 = vst.msk [vmem:[#allocation2 + $0x1c4] sm:$0xf] %vm273, %v11944
    %12378 = vst.msk [vmem:[#allocation2 + $0x1cc] sm:$0xf] %vm273, %v11947
    %12379 = vst.msk [vmem:[#allocation2 + $0x1d4] sm:$0xf] %vm273, %v11951
    %12380 = vst.msk [vmem:[#allocation2 + $0x1dc] sm:$0xf] %vm273, %v11954
    %12381 = vst.msk [vmem:[#allocation2 + $0x1e4] sm:$0xf] %vm273, %v11958
    %12382 = vst.msk [vmem:[#allocation2 + $0x1ec] sm:$0xf] %vm273, %v11961
    %12383 = vst.msk [vmem:[#allocation2 + $0x1f4] sm:$0xf] %vm273, %v11965
    %12384 = vst.msk [vmem:[#allocation2 + $0x1fc] sm:$0xf] %vm273, %v11968
    %12385 = vst.msk [vmem:[#allocation2 + $0x204] sm:$0xf] %vm273, %v11972
    %12386 = vst.msk [vmem:[#allocation2 + $0x20c] sm:$0xf] %vm273, %v11975
    %12387 = vst.msk [vmem:[#allocation2 + $0x214] sm:$0xf] %vm273, %v11979
    %12388 = vst.msk [vmem:[#allocation2 + $0x21c] sm:$0xf] %vm273, %v11982
    %12389 = vst.msk [vmem:[#allocation2 + $0x224] sm:$0xf] %vm273, %v11986
    %12390 = vst.msk [vmem:[#allocation2 + $0x22c] sm:$0xf] %vm273, %v11989
    %12391 = vst.msk [vmem:[#allocation2 + $0x234] sm:$0xf] %vm273, %v11993
    %12392 = vst.msk [vmem:[#allocation2 + $0x23c] sm:$0xf] %vm273, %v11996
    %12393 = vst.msk [vmem:[#allocation2 + $0x244] sm:$0xf] %vm273, %v12000
    %12394 = vst.msk [vmem:[#allocation2 + $0x24c] sm:$0xf] %vm273, %v12003
    %12395 = vst.msk [vmem:[#allocation2 + $0x254] sm:$0xf] %vm273, %v12007
    %12396 = vst.msk [vmem:[#allocation2 + $0x25c] sm:$0xf] %vm273, %v12010
    %12397 = vst.msk [vmem:[#allocation2 + $0x264] sm:$0xf] %vm273, %v12014
    %12398 = vst.msk [vmem:[#allocation2 + $0x26c] sm:$0xf] %vm273, %v12017
    %12399 = vst.msk [vmem:[#allocation2 + $0x274] sm:$0xf] %vm273, %v12021
    %12400 = vst.msk [vmem:[#allocation2 + $0x27c] sm:$0xf] %vm273, %v12024
    %12401 = vst.msk [vmem:[#allocation2 + $0x284] sm:$0xf] %vm273, %v12028
    %12402 = vst.msk [vmem:[#allocation2 + $0x28c] sm:$0xf] %vm273, %v12031
    %12403 = vst.msk [vmem:[#allocation2 + $0x294] sm:$0xf] %vm273, %v12035
    %12404 = vst.msk [vmem:[#allocation2 + $0x29c] sm:$0xf] %vm273, %v12038
    %12405 = vst.msk [vmem:[#allocation2 + $0x2a4] sm:$0xf] %vm273, %v12042
    %12406 = vst.msk [vmem:[#allocation2 + $0x2ac] sm:$0xf] %vm273, %v12045
    %12407 = vst.msk [vmem:[#allocation2 + $0x2b4] sm:$0xf] %vm273, %v12049
    %12408 = vst.msk [vmem:[#allocation2 + $0x2bc] sm:$0xf] %vm273, %v12052
    %12409 = vst.msk [vmem:[#allocation2 + $0x2c4] sm:$0xf] %vm273, %v12056
    %12410 = vst.msk [vmem:[#allocation2 + $0x2cc] sm:$0xf] %vm273, %v12059
    %12411 = vst.msk [vmem:[#allocation2 + $0x2d4] sm:$0xf] %vm273, %v12063
    %12412 = vst.msk [vmem:[#allocation2 + $0x2dc] sm:$0xf] %vm273, %v12066
    %12413 = vst.msk [vmem:[#allocation2 + $0x2e4] sm:$0xf] %vm273, %v12070
    %12414 = vst.msk [vmem:[#allocation2 + $0x2ec] sm:$0xf] %vm273, %v12073
    %12415 = vst.msk [vmem:[#allocation2 + $0x2f4] sm:$0xf] %vm273, %v12077
    %12416 = vst.msk [vmem:[#allocation2 + $0x2fc] sm:$0xf] %vm273, %v12080
    %12417 = vst.msk [vmem:[#allocation2 + $0x304] sm:$0xf] %vm273, %v12084
    %12418 = vst.msk [vmem:[#allocation2 + $0x30c] sm:$0xf] %vm273, %v12087
    %12419 = vst.msk [vmem:[#allocation2 + $0x314] sm:$0xf] %vm273, %v12091
    %12420 = vst.msk [vmem:[#allocation2 + $0x31c] sm:$0xf] %vm273, %v12094
    %12421 = vst.msk [vmem:[#allocation2 + $0x324] sm:$0xf] %vm273, %v12098
    %12422 = vst.msk [vmem:[#allocation2 + $0x32c] sm:$0xf] %vm273, %v12101
    %12423 = vst.msk [vmem:[#allocation2 + $0x334] sm:$0xf] %vm273, %v12105
    %12424 = vst.msk [vmem:[#allocation2 + $0x33c] sm:$0xf] %vm273, %v12108
    %12425 = vst.msk [vmem:[#allocation2 + $0x344] sm:$0xf] %vm273, %v12112
    %12426 = vst.msk [vmem:[#allocation2 + $0x34c] sm:$0xf] %vm273, %v12115
    %12427 = vst.msk [vmem:[#allocation2 + $0x354] sm:$0xf] %vm273, %v12119
    %12428 = vst.msk [vmem:[#allocation2 + $0x35c] sm:$0xf] %vm273, %v12122
    %12429 = vst.msk [vmem:[#allocation2 + $0x364] sm:$0xf] %vm273, %v12126
    %12430 = vst.msk [vmem:[#allocation2 + $0x36c] sm:$0xf] %vm273, %v12129
    %12431 = vst.msk [vmem:[#allocation2 + $0x374] sm:$0xf] %vm273, %v12133
    %12432 = vst.msk [vmem:[#allocation2 + $0x37c] sm:$0xf] %vm273, %v12136
    %12433 = vst.msk [vmem:[#allocation2 + $0x384] sm:$0xf] %vm273, %v12140
    %12434 = vst.msk [vmem:[#allocation2 + $0x38c] sm:$0xf] %vm273, %v12143
    %12435 = vst.msk [vmem:[#allocation2 + $0x394] sm:$0xf] %vm273, %v12147
    %12436 = vst.msk [vmem:[#allocation2 + $0x39c] sm:$0xf] %vm273, %v12150
    %12437 = vst.msk [vmem:[#allocation2 + $0x3a4] sm:$0xf] %vm273, %v12154
    %12438 = vst.msk [vmem:[#allocation2 + $0x3ac] sm:$0xf] %vm273, %v12157
    %12439 = vst.msk [vmem:[#allocation2 + $0x3b4] sm:$0xf] %vm273, %v12161
    %12440 = vst.msk [vmem:[#allocation2 + $0x3bc] sm:$0xf] %vm273, %v12164
    %12441 = vst.msk [vmem:[#allocation2 + $0x3c4] sm:$0xf] %vm273, %v12168
    %12442 = vst.msk [vmem:[#allocation2 + $0x3cc] sm:$0xf] %vm273, %v12171
    %12443 = vst.msk [vmem:[#allocation2 + $0x3d4] sm:$0xf] %vm273, %v12175
    %12444 = vst.msk [vmem:[#allocation2 + $0x3dc] sm:$0xf] %vm273, %v12178
    %12445 = vst.msk [vmem:[#allocation2 + $0x3e4] sm:$0xf] %vm273, %v12182
    %12446 = vst.msk [vmem:[#allocation2 + $0x3ec] sm:$0xf] %vm273, %v12185
    %12447 = vst.msk [vmem:[#allocation2 + $0x3f4] sm:$0xf] %vm273, %v12189
    %12448 = vst.msk [vmem:[#allocation2 + $0x3fc] sm:$0xf] %vm273, %v12192
    %v12449 = vld [vmem:[%s1] sm:$0xf]
    %v12450 = vld [vmem:[%s1 + $0x4] sm:$0xf]
    %v12451 = vld [vmem:[%s1 + $0x8] sm:$0xf]
    %v12452 = vld [vmem:[%s1 + $0xc] sm:$0xf]
    %v12453 = vld [vmem:[%s1 + $0x10] sm:$0xf]
    %v12454 = vld [vmem:[%s1 + $0x14] sm:$0xf]
    %v12455 = vld [vmem:[%s1 + $0x18] sm:$0xf]
    %v12456 = vld [vmem:[%s1 + $0x1c] sm:$0xf]
    %v12457 = vld [vmem:[%s1 + $0x20] sm:$0xf]
    %v12458 = vld [vmem:[%s1 + $0x24] sm:$0xf]
    %v12459 = vld [vmem:[%s1 + $0x28] sm:$0xf]
    %v12460 = vld [vmem:[%s1 + $0x2c] sm:$0xf]
    %v12461 = vld [vmem:[%s1 + $0x30] sm:$0xf]
    %v12462 = vld [vmem:[%s1 + $0x34] sm:$0xf]
    %v12463 = vld [vmem:[%s1 + $0x38] sm:$0xf]
    %v12464 = vld [vmem:[%s1 + $0x3c] sm:$0xf]
    %v12465 = vld [vmem:[%s1 + $0x40] sm:$0xf]
    %v12466 = vld [vmem:[%s1 + $0x44] sm:$0xf]
    %v12467 = vld [vmem:[%s1 + $0x48] sm:$0xf]
    %v12468 = vld [vmem:[%s1 + $0x4c] sm:$0xf]
    %v12469 = vld [vmem:[%s1 + $0x50] sm:$0xf]
    %v12470 = vld [vmem:[%s1 + $0x54] sm:$0xf]
    %v12471 = vld [vmem:[%s1 + $0x58] sm:$0xf]
    %v12472 = vld [vmem:[%s1 + $0x5c] sm:$0xf]
    %v12473 = vld [vmem:[%s1 + $0x60] sm:$0xf]
    %v12474 = vld [vmem:[%s1 + $0x64] sm:$0xf]
    %v12475 = vld [vmem:[%s1 + $0x68] sm:$0xf]
    %v12476 = vld [vmem:[%s1 + $0x6c] sm:$0xf]
    %v12477 = vld [vmem:[%s1 + $0x70] sm:$0xf]
    %v12478 = vld [vmem:[%s1 + $0x74] sm:$0xf]
    %v12479 = vld [vmem:[%s1 + $0x78] sm:$0xf]
    %v12480 = vld [vmem:[%s1 + $0x7c] sm:$0xf]
    %v12481 = vld [vmem:[%s2] sm:$0x1]
    %v12482 = vld [vmem:[#allocation2] sm:$0xff]
    %v12483 = vld [vmem:[#allocation2 + $0x8] sm:$0xff]
    %v12484 = vld [vmem:[#allocation2 + $0x10] sm:$0xff]
    %v12485 = vld [vmem:[#allocation2 + $0x18] sm:$0xff]
    %v12486 = vld [vmem:[#allocation2 + $0x20] sm:$0xff]
    %v12487 = vld [vmem:[#allocation2 + $0x28] sm:$0xff]
    %v12488 = vld [vmem:[#allocation2 + $0x30] sm:$0xff]
    %v12489 = vld [vmem:[#allocation2 + $0x38] sm:$0xff]
    %v12490 = vld [vmem:[#allocation2 + $0x40] sm:$0xff]
    %v12491 = vld [vmem:[#allocation2 + $0x48] sm:$0xff]
    %v12492 = vld [vmem:[#allocation2 + $0x50] sm:$0xff]
    %v12493 = vld [vmem:[#allocation2 + $0x58] sm:$0xff]
    %v12494 = vld [vmem:[#allocation2 + $0x60] sm:$0xff]
    %v12495 = vld [vmem:[#allocation2 + $0x68] sm:$0xff]
    %v12496 = vld [vmem:[#allocation2 + $0x70] sm:$0xff]
    %v12497 = vld [vmem:[#allocation2 + $0x78] sm:$0xff]
    %v12498 = vld [vmem:[#allocation2 + $0x80] sm:$0xff]
    %v12499 = vld [vmem:[#allocation2 + $0x88] sm:$0xff]
    %v12500 = vld [vmem:[#allocation2 + $0x90] sm:$0xff]
    %v12501 = vld [vmem:[#allocation2 + $0x98] sm:$0xff]
    %v12502 = vld [vmem:[#allocation2 + $0xa0] sm:$0xff]
    %v12503 = vld [vmem:[#allocation2 + $0xa8] sm:$0xff]
    %v12504 = vld [vmem:[#allocation2 + $0xb0] sm:$0xff]
    %v12505 = vld [vmem:[#allocation2 + $0xb8] sm:$0xff]
    %v12506 = vld [vmem:[#allocation2 + $0xc0] sm:$0xff]
    %v12507 = vld [vmem:[#allocation2 + $0xc8] sm:$0xff]
    %v12508 = vld [vmem:[#allocation2 + $0xd0] sm:$0xff]
    %v12509 = vld [vmem:[#allocation2 + $0xd8] sm:$0xff]
    %v12510 = vld [vmem:[#allocation2 + $0xe0] sm:$0xff]
    %v12511 = vld [vmem:[#allocation2 + $0xe8] sm:$0xff]
    %v12512 = vld [vmem:[#allocation2 + $0xf0] sm:$0xff]
    %v12513 = vld [vmem:[#allocation2 + $0xf8] sm:$0xff]
    %v12515 = vlaneseq
    %v12516 = vshrl.u32 %v12515, 7
    %v12517 = vsub.s32 0, %v12516
    %v12518 = vrot.slane %v12481, %v12517
    %v12552 = vunpack.c.l.b16 %v12482
    %v12553 = vunpack.c.h.b16 %v12482
    %v12554 = vunpack.c.l.b16 %v12483
    %v12555 = vunpack.c.h.b16 %v12483
    %v12556 = vunpack.c.l.b16 %v12484
    %v12557 = vunpack.c.h.b16 %v12484
    %v12558 = vunpack.c.l.b16 %v12485
    %v12559 = vunpack.c.h.b16 %v12485
    %v12560 = vunpack.c.l.b16 %v12486
    %v12561 = vunpack.c.h.b16 %v12486
    %v12562 = vunpack.c.l.b16 %v12487
    %v12563 = vunpack.c.h.b16 %v12487
    %v12564 = vunpack.c.l.b16 %v12488
    %v12565 = vunpack.c.h.b16 %v12488
    %v12566 = vunpack.c.l.b16 %v12489
    %v12567 = vunpack.c.h.b16 %v12489
    %v12568 = vunpack.c.l.b16 %v12490
    %v12569 = vunpack.c.h.b16 %v12490
    %v12570 = vunpack.c.l.b16 %v12491
    %v12571 = vunpack.c.h.b16 %v12491
    %v12572 = vunpack.c.l.b16 %v12492
    %v12573 = vunpack.c.h.b16 %v12492
    %v12574 = vunpack.c.l.b16 %v12493
    %v12575 = vunpack.c.h.b16 %v12493
    %v12576 = vunpack.c.l.b16 %v12494
    %v12577 = vunpack.c.h.b16 %v12494
    %v12578 = vunpack.c.l.b16 %v12495
    %v12579 = vunpack.c.h.b16 %v12495
    %v12580 = vunpack.c.l.b16 %v12496
    %v12581 = vunpack.c.h.b16 %v12496
    %v12582 = vunpack.c.l.b16 %v12497
    %v12583 = vunpack.c.h.b16 %v12497
    %v12584 = vunpack.c.l.b16 %v12498
    %v12585 = vunpack.c.h.b16 %v12498
    %v12586 = vunpack.c.l.b16 %v12499
    %v12587 = vunpack.c.h.b16 %v12499
    %v12588 = vunpack.c.l.b16 %v12500
    %v12589 = vunpack.c.h.b16 %v12500
    %v12590 = vunpack.c.l.b16 %v12501
    %v12591 = vunpack.c.h.b16 %v12501
    %v12592 = vunpack.c.l.b16 %v12502
    %v12593 = vunpack.c.h.b16 %v12502
    %v12594 = vunpack.c.l.b16 %v12503
    %v12595 = vunpack.c.h.b16 %v12503
    %v12596 = vunpack.c.l.b16 %v12504
    %v12597 = vunpack.c.h.b16 %v12504
    %v12598 = vunpack.c.l.b16 %v12505
    %v12599 = vunpack.c.h.b16 %v12505
    %v12600 = vunpack.c.l.b16 %v12506
    %v12601 = vunpack.c.h.b16 %v12506
    %v12602 = vunpack.c.l.b16 %v12507
    %v12603 = vunpack.c.h.b16 %v12507
    %v12604 = vunpack.c.l.b16 %v12508
    %v12605 = vunpack.c.h.b16 %v12508
    %v12606 = vunpack.c.l.b16 %v12509
    %v12607 = vunpack.c.h.b16 %v12509
    %v12608 = vunpack.c.l.b16 %v12510
    %v12609 = vunpack.c.h.b16 %v12510
    %v12610 = vunpack.c.l.b16 %v12511
    %v12611 = vunpack.c.h.b16 %v12511
    %v12612 = vunpack.c.l.b16 %v12512
    %v12613 = vunpack.c.h.b16 %v12512
    %v12614 = vunpack.c.l.b16 %v12513
    %v12615 = vunpack.c.h.b16 %v12513
    %v12616 = vpack.c.b16 %v12554, %v12552
    %v12617 = vpack.c.b16 %v12555, %v12553
    %v12618 = vpack.c.b16 %v12558, %v12556
    %v12619 = vpack.c.b16 %v12559, %v12557
    %v12620 = vpack.c.b16 %v12562, %v12560
    %v12621 = vpack.c.b16 %v12563, %v12561
    %v12622 = vpack.c.b16 %v12566, %v12564
    %v12623 = vpack.c.b16 %v12567, %v12565
    %v12624 = vpack.c.b16 %v12570, %v12568
    %v12625 = vpack.c.b16 %v12571, %v12569
    %v12626 = vpack.c.b16 %v12574, %v12572
    %v12627 = vpack.c.b16 %v12575, %v12573
    %v12628 = vpack.c.b16 %v12578, %v12576
    %v12629 = vpack.c.b16 %v12579, %v12577
    %v12630 = vpack.c.b16 %v12582, %v12580
    %v12631 = vpack.c.b16 %v12583, %v12581
    %v12632 = vpack.c.b16 %v12586, %v12584
    %v12633 = vpack.c.b16 %v12587, %v12585
    %v12634 = vpack.c.b16 %v12590, %v12588
    %v12635 = vpack.c.b16 %v12591, %v12589
    %v12636 = vpack.c.b16 %v12594, %v12592
    %v12637 = vpack.c.b16 %v12595, %v12593
    %v12638 = vpack.c.b16 %v12598, %v12596
    %v12639 = vpack.c.b16 %v12599, %v12597
    %v12640 = vpack.c.b16 %v12602, %v12600
    %v12641 = vpack.c.b16 %v12603, %v12601
    %v12642 = vpack.c.b16 %v12606, %v12604
    %v12643 = vpack.c.b16 %v12607, %v12605
    %v12644 = vpack.c.b16 %v12610, %v12608
    %v12645 = vpack.c.b16 %v12611, %v12609
    %v12646 = vpack.c.b16 %v12614, %v12612
    %v12647 = vpack.c.b16 %v12615, %v12613
    %v12712 = vunpack.c.l.b16 %v12449
    %v12713 = vunpack.c.l.b16 %v12450
    %v12714 = vunpack.c.l.b16 %v12451
    %v12715 = vunpack.c.l.b16 %v12452
    %v12716 = vunpack.c.l.b16 %v12453
    %v12717 = vunpack.c.l.b16 %v12454
    %v12718 = vunpack.c.l.b16 %v12455
    %v12719 = vunpack.c.l.b16 %v12456
    %v12720 = vunpack.c.l.b16 %v12457
    %v12721 = vunpack.c.l.b16 %v12458
    %v12722 = vunpack.c.l.b16 %v12459
    %v12723 = vunpack.c.l.b16 %v12460
    %v12724 = vunpack.c.l.b16 %v12461
    %v12725 = vunpack.c.l.b16 %v12462
    %v12726 = vunpack.c.l.b16 %v12463
    %v12727 = vunpack.c.l.b16 %v12464
    %v12728 = vunpack.c.l.b16 %v12465
    %v12729 = vunpack.c.l.b16 %v12466
    %v12730 = vunpack.c.l.b16 %v12467
    %v12731 = vunpack.c.l.b16 %v12468
    %v12732 = vunpack.c.l.b16 %v12469
    %v12733 = vunpack.c.l.b16 %v12470
    %v12734 = vunpack.c.l.b16 %v12471
    %v12735 = vunpack.c.l.b16 %v12472
    %v12736 = vunpack.c.l.b16 %v12473
    %v12737 = vunpack.c.l.b16 %v12474
    %v12738 = vunpack.c.l.b16 %v12475
    %v12739 = vunpack.c.l.b16 %v12476
    %v12740 = vunpack.c.l.b16 %v12477
    %v12741 = vunpack.c.l.b16 %v12478
    %v12742 = vunpack.c.l.b16 %v12479
    %v12743 = vunpack.c.l.b16 %v12480
    %v12744 = vpack.c.b16 %v12713, %v12712
    %v12745 = vpack.c.b16 %v12715, %v12714
    %v12746 = vpack.c.b16 %v12717, %v12716
    %v12747 = vpack.c.b16 %v12719, %v12718
    %v12748 = vpack.c.b16 %v12721, %v12720
    %v12749 = vpack.c.b16 %v12723, %v12722
    %v12750 = vpack.c.b16 %v12725, %v12724
    %v12751 = vpack.c.b16 %v12727, %v12726
    %v12752 = vpack.c.b16 %v12729, %v12728
    %v12753 = vpack.c.b16 %v12731, %v12730
    %v12754 = vpack.c.b16 %v12733, %v12732
    %v12755 = vpack.c.b16 %v12735, %v12734
    %v12756 = vpack.c.b16 %v12737, %v12736
    %v12757 = vpack.c.b16 %v12739, %v12738
    %v12758 = vpack.c.b16 %v12741, %v12740
    %v12759 = vpack.c.b16 %v12743, %v12742
    %12776 = vmatprep.subr.bf16.mxu0 0
    %12777 = vmatpush1.bf16.msra.mxu0 %v12751
    %12778 = vmatprep.subr.bf16.mxu0 0
    %12779 = vmatpush1.bf16.msra.mxu0 %v12750
    %12780 = vmatprep.subr.bf16.mxu0 0
    %12781 = vmatpush1.bf16.msra.mxu0 %v12749
    %12782 = vmatprep.subr.bf16.mxu0 0
    %12783 = vmatpush1.bf16.msra.mxu0 %v12748
    %12784 = vmatprep.subr.bf16.mxu0 0
    %12785 = vmatpush1.bf16.msra.mxu0 %v12747
    %12786 = vmatprep.subr.bf16.mxu0 0
    %12787 = vmatpush1.bf16.msra.mxu0 %v12746
    %12788 = vmatprep.subr.bf16.mxu0 0
    %12789 = vmatpush1.bf16.msra.mxu0 %v12745
    %12790 = vmatprep.subr.bf16.mxu0 0
    %12791 = vmatpush1.bf16.msra.mxu0 %v12744
    %12792 = vmatprep.subr.bf16.mxu0 0
    %12793 = vmatpush2.bf16.msra.mxu0 %v12759
    %12794 = vmatprep.subr.bf16.mxu0 0
    %12795 = vmatpush2.bf16.msra.mxu0 %v12758
    %12796 = vmatprep.subr.bf16.mxu0 0
    %12797 = vmatpush2.bf16.msra.mxu0 %v12757
    %12798 = vmatprep.subr.bf16.mxu0 0
    %12799 = vmatpush2.bf16.msra.mxu0 %v12756
    %12800 = vmatprep.subr.bf16.mxu0 0
    %12801 = vmatpush2.bf16.msra.mxu0 %v12755
    %12802 = vmatprep.subr.bf16.mxu0 0
    %12803 = vmatpush2.bf16.msra.mxu0 %v12754
    %12804 = vmatprep.subr.bf16.mxu0 0
    %12805 = vmatpush2.bf16.msra.mxu0 %v12753
    %12806 = vmatprep.subr.bf16.mxu0 0
    %12807 = vmatpush2.bf16.msra.mxu0 %v12752
    %12808 = vmatprep.mubr.bf16.mxu0 %v12617
    %12809 = vmatmul.mubr.bf16.gmra.mxu0 %v12616
    %v12810 = vpop.f32.mrf.mxu0
    %v12811 = vadd.f32 %v12518, %v12810
    %v12812 = vpop.f32.mrf.mxu0
    %v12813 = vpop.f32.mrf.mxu0
    %v12814 = vadd.f32 %v12518, %v12813
    %v12815 = vpop.f32.mrf.mxu0
    %12816 = vmatprep.mubr.bf16.mxu0 %v12619
    %12817 = vmatmul.mubr.bf16.gmra.mxu0 %v12618
    %v12818 = vpop.f32.mrf.mxu0
    %v12819 = vadd.f32 %v12518, %v12818
    %v12820 = vpop.f32.mrf.mxu0
    %v12821 = vpop.f32.mrf.mxu0
    %v12822 = vadd.f32 %v12518, %v12821
    %v12823 = vpop.f32.mrf.mxu0
    %12824 = vmatprep.mubr.bf16.mxu0 %v12621
    %12825 = vmatmul.mubr.bf16.gmra.mxu0 %v12620
    %v12826 = vpop.f32.mrf.mxu0
    %v12827 = vadd.f32 %v12518, %v12826
    %v12828 = vpop.f32.mrf.mxu0
    %v12829 = vpop.f32.mrf.mxu0
    %v12830 = vadd.f32 %v12518, %v12829
    %v12831 = vpop.f32.mrf.mxu0
    %12832 = vmatprep.mubr.bf16.mxu0 %v12623
    %12833 = vmatmul.mubr.bf16.gmra.mxu0 %v12622
    %v12834 = vpop.f32.mrf.mxu0
    %v12835 = vadd.f32 %v12518, %v12834
    %v12836 = vpop.f32.mrf.mxu0
    %v12837 = vpop.f32.mrf.mxu0
    %v12838 = vadd.f32 %v12518, %v12837
    %v12839 = vpop.f32.mrf.mxu0
    %12840 = vmatprep.mubr.bf16.mxu0 %v12625
    %12841 = vmatmul.mubr.bf16.gmra.mxu0 %v12624
    %v12842 = vpop.f32.mrf.mxu0
    %v12843 = vadd.f32 %v12518, %v12842
    %v12844 = vpop.f32.mrf.mxu0
    %v12845 = vpop.f32.mrf.mxu0
    %v12846 = vadd.f32 %v12518, %v12845
    %v12847 = vpop.f32.mrf.mxu0
    %12848 = vmatprep.mubr.bf16.mxu0 %v12627
    %12849 = vmatmul.mubr.bf16.gmra.mxu0 %v12626
    %v12850 = vpop.f32.mrf.mxu0
    %v12851 = vadd.f32 %v12518, %v12850
    %v12852 = vpop.f32.mrf.mxu0
    %v12853 = vpop.f32.mrf.mxu0
    %v12854 = vadd.f32 %v12518, %v12853
    %v12855 = vpop.f32.mrf.mxu0
    %12856 = vmatprep.mubr.bf16.mxu0 %v12629
    %12857 = vmatmul.mubr.bf16.gmra.mxu0 %v12628
    %v12858 = vpop.f32.mrf.mxu0
    %v12859 = vadd.f32 %v12518, %v12858
    %v12860 = vpop.f32.mrf.mxu0
    %v12861 = vpop.f32.mrf.mxu0
    %v12862 = vadd.f32 %v12518, %v12861
    %v12863 = vpop.f32.mrf.mxu0
    %12864 = vmatprep.mubr.bf16.mxu0 %v12631
    %12865 = vmatmul.mubr.bf16.gmra.mxu0 %v12630
    %v12866 = vpop.f32.mrf.mxu0
    %v12867 = vadd.f32 %v12518, %v12866
    %v12868 = vpop.f32.mrf.mxu0
    %v12869 = vpop.f32.mrf.mxu0
    %v12870 = vadd.f32 %v12518, %v12869
    %v12871 = vpop.f32.mrf.mxu0
    %12872 = vmatprep.mubr.bf16.mxu0 %v12633
    %12873 = vmatmul.mubr.bf16.gmra.mxu0 %v12632
    %v12874 = vpop.f32.mrf.mxu0
    %v12875 = vadd.f32 %v12518, %v12874
    %v12876 = vpop.f32.mrf.mxu0
    %v12877 = vpop.f32.mrf.mxu0
    %v12878 = vadd.f32 %v12518, %v12877
    %v12879 = vpop.f32.mrf.mxu0
    %12880 = vmatprep.mubr.bf16.mxu0 %v12635
    %12881 = vmatmul.mubr.bf16.gmra.mxu0 %v12634
    %v12882 = vpop.f32.mrf.mxu0
    %v12883 = vadd.f32 %v12518, %v12882
    %v12884 = vpop.f32.mrf.mxu0
    %v12885 = vpop.f32.mrf.mxu0
    %v12886 = vadd.f32 %v12518, %v12885
    %v12887 = vpop.f32.mrf.mxu0
    %12888 = vmatprep.mubr.bf16.mxu0 %v12637
    %12889 = vmatmul.mubr.bf16.gmra.mxu0 %v12636
    %v12890 = vpop.f32.mrf.mxu0
    %v12891 = vadd.f32 %v12518, %v12890
    %v12892 = vpop.f32.mrf.mxu0
    %v12893 = vpop.f32.mrf.mxu0
    %v12894 = vadd.f32 %v12518, %v12893
    %v12895 = vpop.f32.mrf.mxu0
    %12896 = vmatprep.mubr.bf16.mxu0 %v12639
    %12897 = vmatmul.mubr.bf16.gmra.mxu0 %v12638
    %v12898 = vpop.f32.mrf.mxu0
    %v12899 = vadd.f32 %v12518, %v12898
    %v12900 = vpop.f32.mrf.mxu0
    %v12901 = vpop.f32.mrf.mxu0
    %v12902 = vadd.f32 %v12518, %v12901
    %v12903 = vpop.f32.mrf.mxu0
    %12904 = vmatprep.mubr.bf16.mxu0 %v12641
    %12905 = vmatmul.mubr.bf16.gmra.mxu0 %v12640
    %v12906 = vpop.f32.mrf.mxu0
    %v12907 = vadd.f32 %v12518, %v12906
    %v12908 = vpop.f32.mrf.mxu0
    %v12909 = vpop.f32.mrf.mxu0
    %v12910 = vadd.f32 %v12518, %v12909
    %v12911 = vpop.f32.mrf.mxu0
    %12912 = vmatprep.mubr.bf16.mxu0 %v12643
    %12913 = vmatmul.mubr.bf16.gmra.mxu0 %v12642
    %v12914 = vpop.f32.mrf.mxu0
    %v12915 = vadd.f32 %v12518, %v12914
    %v12916 = vpop.f32.mrf.mxu0
    %v12917 = vpop.f32.mrf.mxu0
    %v12918 = vadd.f32 %v12518, %v12917
    %v12919 = vpop.f32.mrf.mxu0
    %12920 = vmatprep.mubr.bf16.mxu0 %v12645
    %12921 = vmatmul.mubr.bf16.gmra.mxu0 %v12644
    %v12922 = vpop.f32.mrf.mxu0
    %v12923 = vadd.f32 %v12518, %v12922
    %v12924 = vpop.f32.mrf.mxu0
    %v12925 = vpop.f32.mrf.mxu0
    %v12926 = vadd.f32 %v12518, %v12925
    %v12927 = vpop.f32.mrf.mxu0
    %12928 = vmatprep.mubr.bf16.mxu0 %v12647
    %12929 = vmatmul.mubr.bf16.gmra.mxu0 %v12646
    %v12930 = vpop.f32.mrf.mxu0
    %v12931 = vadd.f32 %v12518, %v12930
    %v12932 = vpop.f32.mrf.mxu0
    %v12933 = vpop.f32.mrf.mxu0
    %v12934 = vadd.f32 %v12518, %v12933
    %v12935 = vpop.f32.mrf.mxu0
    %12936 = vdwg.mxu0
    %12937 = vst [vmem:[#allocation3] sm:$0xff] %v12811
    %12938 = vst [vmem:[#allocation3 + $0x8] sm:$0xff] %v12814
    %12939 = vst [vmem:[#allocation3 + $0x10] sm:$0xff] %v12819
    %12940 = vst [vmem:[#allocation3 + $0x18] sm:$0xff] %v12822
    %12941 = vst [vmem:[#allocation3 + $0x20] sm:$0xff] %v12827
    %12942 = vst [vmem:[#allocation3 + $0x28] sm:$0xff] %v12830
    %12943 = vst [vmem:[#allocation3 + $0x30] sm:$0xff] %v12835
    %12944 = vst [vmem:[#allocation3 + $0x38] sm:$0xff] %v12838
    %12945 = vst [vmem:[#allocation3 + $0x40] sm:$0xff] %v12843
    %12946 = vst [vmem:[#allocation3 + $0x48] sm:$0xff] %v12846
    %12947 = vst [vmem:[#allocation3 + $0x50] sm:$0xff] %v12851
    %12948 = vst [vmem:[#allocation3 + $0x58] sm:$0xff] %v12854
    %12949 = vst [vmem:[#allocation3 + $0x60] sm:$0xff] %v12859
    %12950 = vst [vmem:[#allocation3 + $0x68] sm:$0xff] %v12862
    %12951 = vst [vmem:[#allocation3 + $0x70] sm:$0xff] %v12867
    %12952 = vst [vmem:[#allocation3 + $0x78] sm:$0xff] %v12870
    %12953 = vst [vmem:[#allocation3 + $0x80] sm:$0xff] %v12875
    %12954 = vst [vmem:[#allocation3 + $0x88] sm:$0xff] %v12878
    %12955 = vst [vmem:[#allocation3 + $0x90] sm:$0xff] %v12883
    %12956 = vst [vmem:[#allocation3 + $0x98] sm:$0xff] %v12886
    %12957 = vst [vmem:[#allocation3 + $0xa0] sm:$0xff] %v12891
    %12958 = vst [vmem:[#allocation3 + $0xa8] sm:$0xff] %v12894
    %12959 = vst [vmem:[#allocation3 + $0xb0] sm:$0xff] %v12899
    %12960 = vst [vmem:[#allocation3 + $0xb8] sm:$0xff] %v12902
    %12961 = vst [vmem:[#allocation3 + $0xc0] sm:$0xff] %v12907
    %12962 = vst [vmem:[#allocation3 + $0xc8] sm:$0xff] %v12910
    %12963 = vst [vmem:[#allocation3 + $0xd0] sm:$0xff] %v12915
    %12964 = vst [vmem:[#allocation3 + $0xd8] sm:$0xff] %v12918
    %12965 = vst [vmem:[#allocation3 + $0xe0] sm:$0xff] %v12923
    %12966 = vst [vmem:[#allocation3 + $0xe8] sm:$0xff] %v12926
    %12967 = vst [vmem:[#allocation3 + $0xf0] sm:$0xff] %v12931
    %12968 = vst [vmem:[#allocation3 + $0xf8] sm:$0xff] %v12934
    %s12969 = scalar_lea.vmem [#allocation2], 256
    %v12970 = vld [vmem:[%s12969] sm:$0xff]
    %v12971 = vld [vmem:[%s12969 + $0x8] sm:$0xff]
    %v12972 = vld [vmem:[%s12969 + $0x10] sm:$0xff]
    %v12973 = vld [vmem:[%s12969 + $0x18] sm:$0xff]
    %v12974 = vld [vmem:[%s12969 + $0x20] sm:$0xff]
    %v12975 = vld [vmem:[%s12969 + $0x28] sm:$0xff]
    %v12976 = vld [vmem:[%s12969 + $0x30] sm:$0xff]
    %v12977 = vld [vmem:[%s12969 + $0x38] sm:$0xff]
    %v12978 = vld [vmem:[%s12969 + $0x40] sm:$0xff]
    %v12979 = vld [vmem:[%s12969 + $0x48] sm:$0xff]
    %v12980 = vld [vmem:[%s12969 + $0x50] sm:$0xff]
    %v12981 = vld [vmem:[%s12969 + $0x58] sm:$0xff]
    %v12982 = vld [vmem:[%s12969 + $0x60] sm:$0xff]
    %v12983 = vld [vmem:[%s12969 + $0x68] sm:$0xff]
    %v12984 = vld [vmem:[%s12969 + $0x70] sm:$0xff]
    %v12985 = vld [vmem:[%s12969 + $0x78] sm:$0xff]
    %v12986 = vld [vmem:[%s12969 + $0x80] sm:$0xff]
    %v12987 = vld [vmem:[%s12969 + $0x88] sm:$0xff]
    %v12988 = vld [vmem:[%s12969 + $0x90] sm:$0xff]
    %v12989 = vld [vmem:[%s12969 + $0x98] sm:$0xff]
    %v12990 = vld [vmem:[%s12969 + $0xa0] sm:$0xff]
    %v12991 = vld [vmem:[%s12969 + $0xa8] sm:$0xff]
    %v12992 = vld [vmem:[%s12969 + $0xb0] sm:$0xff]
    %v12993 = vld [vmem:[%s12969 + $0xb8] sm:$0xff]
    %v12994 = vld [vmem:[%s12969 + $0xc0] sm:$0xff]
    %v12995 = vld [vmem:[%s12969 + $0xc8] sm:$0xff]
    %v12996 = vld [vmem:[%s12969 + $0xd0] sm:$0xff]
    %v12997 = vld [vmem:[%s12969 + $0xd8] sm:$0xff]
    %v12998 = vld [vmem:[%s12969 + $0xe0] sm:$0xff]
    %v12999 = vld [vmem:[%s12969 + $0xe8] sm:$0xff]
    %v13000 = vld [vmem:[%s12969 + $0xf0] sm:$0xff]
    %v13001 = vld [vmem:[%s12969 + $0xf8] sm:$0xff]
    %v13034 = vunpack.c.l.b16 %v12970
    %v13035 = vunpack.c.h.b16 %v12970
    %v13036 = vunpack.c.l.b16 %v12971
    %v13037 = vunpack.c.h.b16 %v12971
    %v13038 = vunpack.c.l.b16 %v12972
    %v13039 = vunpack.c.h.b16 %v12972
    %v13040 = vunpack.c.l.b16 %v12973
    %v13041 = vunpack.c.h.b16 %v12973
    %v13042 = vunpack.c.l.b16 %v12974
    %v13043 = vunpack.c.h.b16 %v12974
    %v13044 = vunpack.c.l.b16 %v12975
    %v13045 = vunpack.c.h.b16 %v12975
    %v13046 = vunpack.c.l.b16 %v12976
    %v13047 = vunpack.c.h.b16 %v12976
    %v13048 = vunpack.c.l.b16 %v12977
    %v13049 = vunpack.c.h.b16 %v12977
    %v13050 = vunpack.c.l.b16 %v12978
    %v13051 = vunpack.c.h.b16 %v12978
    %v13052 = vunpack.c.l.b16 %v12979
    %v13053 = vunpack.c.h.b16 %v12979
    %v13054 = vunpack.c.l.b16 %v12980
    %v13055 = vunpack.c.h.b16 %v12980
    %v13056 = vunpack.c.l.b16 %v12981
    %v13057 = vunpack.c.h.b16 %v12981
    %v13058 = vunpack.c.l.b16 %v12982
    %v13059 = vunpack.c.h.b16 %v12982
    %v13060 = vunpack.c.l.b16 %v12983
    %v13061 = vunpack.c.h.b16 %v12983
    %v13062 = vunpack.c.l.b16 %v12984
    %v13063 = vunpack.c.h.b16 %v12984
    %v13064 = vunpack.c.l.b16 %v12985
    %v13065 = vunpack.c.h.b16 %v12985
    %v13066 = vunpack.c.l.b16 %v12986
    %v13067 = vunpack.c.h.b16 %v12986
    %v13068 = vunpack.c.l.b16 %v12987
    %v13069 = vunpack.c.h.b16 %v12987
    %v13070 = vunpack.c.l.b16 %v12988
    %v13071 = vunpack.c.h.b16 %v12988
    %v13072 = vunpack.c.l.b16 %v12989
    %v13073 = vunpack.c.h.b16 %v12989
    %v13074 = vunpack.c.l.b16 %v12990
    %v13075 = vunpack.c.h.b16 %v12990
    %v13076 = vunpack.c.l.b16 %v12991
    %v13077 = vunpack.c.h.b16 %v12991
    %v13078 = vunpack.c.l.b16 %v12992
    %v13079 = vunpack.c.h.b16 %v12992
    %v13080 = vunpack.c.l.b16 %v12993
    %v13081 = vunpack.c.h.b16 %v12993
    %v13082 = vunpack.c.l.b16 %v12994
    %v13083 = vunpack.c.h.b16 %v12994
    %v13084 = vunpack.c.l.b16 %v12995
    %v13085 = vunpack.c.h.b16 %v12995
    %v13086 = vunpack.c.l.b16 %v12996
    %v13087 = vunpack.c.h.b16 %v12996
    %v13088 = vunpack.c.l.b16 %v12997
    %v13089 = vunpack.c.h.b16 %v12997
    %v13090 = vunpack.c.l.b16 %v12998
    %v13091 = vunpack.c.h.b16 %v12998
    %v13092 = vunpack.c.l.b16 %v12999
    %v13093 = vunpack.c.h.b16 %v12999
    %v13094 = vunpack.c.l.b16 %v13000
    %v13095 = vunpack.c.h.b16 %v13000
    %v13096 = vunpack.c.l.b16 %v13001
    %v13097 = vunpack.c.h.b16 %v13001
    %v13098 = vpack.c.b16 %v13036, %v13034
    %v13099 = vpack.c.b16 %v13037, %v13035
    %v13100 = vpack.c.b16 %v13040, %v13038
    %v13101 = vpack.c.b16 %v13041, %v13039
    %v13102 = vpack.c.b16 %v13044, %v13042
    %v13103 = vpack.c.b16 %v13045, %v13043
    %v13104 = vpack.c.b16 %v13048, %v13046
    %v13105 = vpack.c.b16 %v13049, %v13047
    %v13106 = vpack.c.b16 %v13052, %v13050
    %v13107 = vpack.c.b16 %v13053, %v13051
    %v13108 = vpack.c.b16 %v13056, %v13054
    %v13109 = vpack.c.b16 %v13057, %v13055
    %v13110 = vpack.c.b16 %v13060, %v13058
    %v13111 = vpack.c.b16 %v13061, %v13059
    %v13112 = vpack.c.b16 %v13064, %v13062
    %v13113 = vpack.c.b16 %v13065, %v13063
    %v13114 = vpack.c.b16 %v13068, %v13066
    %v13115 = vpack.c.b16 %v13069, %v13067
    %v13116 = vpack.c.b16 %v13072, %v13070
    %v13117 = vpack.c.b16 %v13073, %v13071
    %v13118 = vpack.c.b16 %v13076, %v13074
    %v13119 = vpack.c.b16 %v13077, %v13075
    %v13120 = vpack.c.b16 %v13080, %v13078
    %v13121 = vpack.c.b16 %v13081, %v13079
    %v13122 = vpack.c.b16 %v13084, %v13082
    %v13123 = vpack.c.b16 %v13085, %v13083
    %v13124 = vpack.c.b16 %v13088, %v13086
    %v13125 = vpack.c.b16 %v13089, %v13087
    %v13126 = vpack.c.b16 %v13092, %v13090
    %v13127 = vpack.c.b16 %v13093, %v13091
    %v13128 = vpack.c.b16 %v13096, %v13094
    %v13129 = vpack.c.b16 %v13097, %v13095
    %13162 = vmatprep.subr.bf16.mxu0 0
    %13163 = vmatpush1.bf16.msra.mxu0 %v12751
    %13164 = vmatprep.subr.bf16.mxu0 0
    %13165 = vmatpush1.bf16.msra.mxu0 %v12750
    %13166 = vmatprep.subr.bf16.mxu0 0
    %13167 = vmatpush1.bf16.msra.mxu0 %v12749
    %13168 = vmatprep.subr.bf16.mxu0 0
    %13169 = vmatpush1.bf16.msra.mxu0 %v12748
    %13170 = vmatprep.subr.bf16.mxu0 0
    %13171 = vmatpush1.bf16.msra.mxu0 %v12747
    %13172 = vmatprep.subr.bf16.mxu0 0
    %13173 = vmatpush1.bf16.msra.mxu0 %v12746
    %13174 = vmatprep.subr.bf16.mxu0 0
    %13175 = vmatpush1.bf16.msra.mxu0 %v12745
    %13176 = vmatprep.subr.bf16.mxu0 0
    %13177 = vmatpush1.bf16.msra.mxu0 %v12744
    %13178 = vmatprep.subr.bf16.mxu0 0
    %13179 = vmatpush2.bf16.msra.mxu0 %v12759
    %13180 = vmatprep.subr.bf16.mxu0 0
    %13181 = vmatpush2.bf16.msra.mxu0 %v12758
    %13182 = vmatprep.subr.bf16.mxu0 0
    %13183 = vmatpush2.bf16.msra.mxu0 %v12757
    %13184 = vmatprep.subr.bf16.mxu0 0
    %13185 = vmatpush2.bf16.msra.mxu0 %v12756
    %13186 = vmatprep.subr.bf16.mxu0 0
    %13187 = vmatpush2.bf16.msra.mxu0 %v12755
    %13188 = vmatprep.subr.bf16.mxu0 0
    %13189 = vmatpush2.bf16.msra.mxu0 %v12754
    %13190 = vmatprep.subr.bf16.mxu0 0
    %13191 = vmatpush2.bf16.msra.mxu0 %v12753
    %13192 = vmatprep.subr.bf16.mxu0 0
    %13193 = vmatpush2.bf16.msra.mxu0 %v12752
    %13194 = vmatprep.mubr.bf16.mxu0 %v13099
    %13195 = vmatmul.mubr.bf16.gmra.mxu0 %v13098
    %v13196 = vpop.f32.mrf.mxu0
    %v13197 = vadd.f32 %v12518, %v13196
    %v13198 = vpop.f32.mrf.mxu0
    %v13199 = vpop.f32.mrf.mxu0
    %v13200 = vadd.f32 %v12518, %v13199
    %v13201 = vpop.f32.mrf.mxu0
    %13202 = vmatprep.mubr.bf16.mxu0 %v13101
    %13203 = vmatmul.mubr.bf16.gmra.mxu0 %v13100
    %v13204 = vpop.f32.mrf.mxu0
    %v13205 = vadd.f32 %v12518, %v13204
    %v13206 = vpop.f32.mrf.mxu0
    %v13207 = vpop.f32.mrf.mxu0
    %v13208 = vadd.f32 %v12518, %v13207
    %v13209 = vpop.f32.mrf.mxu0
    %13210 = vmatprep.mubr.bf16.mxu0 %v13103
    %13211 = vmatmul.mubr.bf16.gmra.mxu0 %v13102
    %v13212 = vpop.f32.mrf.mxu0
    %v13213 = vadd.f32 %v12518, %v13212
    %v13214 = vpop.f32.mrf.mxu0
    %v13215 = vpop.f32.mrf.mxu0
    %v13216 = vadd.f32 %v12518, %v13215
    %v13217 = vpop.f32.mrf.mxu0
    %13218 = vmatprep.mubr.bf16.mxu0 %v13105
    %13219 = vmatmul.mubr.bf16.gmra.mxu0 %v13104
    %v13220 = vpop.f32.mrf.mxu0
    %v13221 = vadd.f32 %v12518, %v13220
    %v13222 = vpop.f32.mrf.mxu0
    %v13223 = vpop.f32.mrf.mxu0
    %v13224 = vadd.f32 %v12518, %v13223
    %v13225 = vpop.f32.mrf.mxu0
    %13226 = vmatprep.mubr.bf16.mxu0 %v13107
    %13227 = vmatmul.mubr.bf16.gmra.mxu0 %v13106
    %v13228 = vpop.f32.mrf.mxu0
    %v13229 = vadd.f32 %v12518, %v13228
    %v13230 = vpop.f32.mrf.mxu0
    %v13231 = vpop.f32.mrf.mxu0
    %v13232 = vadd.f32 %v12518, %v13231
    %v13233 = vpop.f32.mrf.mxu0
    %13234 = vmatprep.mubr.bf16.mxu0 %v13109
    %13235 = vmatmul.mubr.bf16.gmra.mxu0 %v13108
    %v13236 = vpop.f32.mrf.mxu0
    %v13237 = vadd.f32 %v12518, %v13236
    %v13238 = vpop.f32.mrf.mxu0
    %v13239 = vpop.f32.mrf.mxu0
    %v13240 = vadd.f32 %v12518, %v13239
    %v13241 = vpop.f32.mrf.mxu0
    %13242 = vmatprep.mubr.bf16.mxu0 %v13111
    %13243 = vmatmul.mubr.bf16.gmra.mxu0 %v13110
    %v13244 = vpop.f32.mrf.mxu0
    %v13245 = vadd.f32 %v12518, %v13244
    %v13246 = vpop.f32.mrf.mxu0
    %v13247 = vpop.f32.mrf.mxu0
    %v13248 = vadd.f32 %v12518, %v13247
    %v13249 = vpop.f32.mrf.mxu0
    %13250 = vmatprep.mubr.bf16.mxu0 %v13113
    %13251 = vmatmul.mubr.bf16.gmra.mxu0 %v13112
    %v13252 = vpop.f32.mrf.mxu0
    %v13253 = vadd.f32 %v12518, %v13252
    %v13254 = vpop.f32.mrf.mxu0
    %v13255 = vpop.f32.mrf.mxu0
    %v13256 = vadd.f32 %v12518, %v13255
    %v13257 = vpop.f32.mrf.mxu0
    %13258 = vmatprep.mubr.bf16.mxu0 %v13115
    %13259 = vmatmul.mubr.bf16.gmra.mxu0 %v13114
    %v13260 = vpop.f32.mrf.mxu0
    %v13261 = vadd.f32 %v12518, %v13260
    %v13262 = vpop.f32.mrf.mxu0
    %v13263 = vpop.f32.mrf.mxu0
    %v13264 = vadd.f32 %v12518, %v13263
    %v13265 = vpop.f32.mrf.mxu0
    %13266 = vmatprep.mubr.bf16.mxu0 %v13117
    %13267 = vmatmul.mubr.bf16.gmra.mxu0 %v13116
    %v13268 = vpop.f32.mrf.mxu0
    %v13269 = vadd.f32 %v12518, %v13268
    %v13270 = vpop.f32.mrf.mxu0
    %v13271 = vpop.f32.mrf.mxu0
    %v13272 = vadd.f32 %v12518, %v13271
    %v13273 = vpop.f32.mrf.mxu0
    %13274 = vmatprep.mubr.bf16.mxu0 %v13119
    %13275 = vmatmul.mubr.bf16.gmra.mxu0 %v13118
    %v13276 = vpop.f32.mrf.mxu0
    %v13277 = vadd.f32 %v12518, %v13276
    %v13278 = vpop.f32.mrf.mxu0
    %v13279 = vpop.f32.mrf.mxu0
    %v13280 = vadd.f32 %v12518, %v13279
    %v13281 = vpop.f32.mrf.mxu0
    %13282 = vmatprep.mubr.bf16.mxu0 %v13121
    %13283 = vmatmul.mubr.bf16.gmra.mxu0 %v13120
    %v13284 = vpop.f32.mrf.mxu0
    %v13285 = vadd.f32 %v12518, %v13284
    %v13286 = vpop.f32.mrf.mxu0
    %v13287 = vpop.f32.mrf.mxu0
    %v13288 = vadd.f32 %v12518, %v13287
    %v13289 = vpop.f32.mrf.mxu0
    %13290 = vmatprep.mubr.bf16.mxu0 %v13123
    %13291 = vmatmul.mubr.bf16.gmra.mxu0 %v13122
    %v13292 = vpop.f32.mrf.mxu0
    %v13293 = vadd.f32 %v12518, %v13292
    %v13294 = vpop.f32.mrf.mxu0
    %v13295 = vpop.f32.mrf.mxu0
    %v13296 = vadd.f32 %v12518, %v13295
    %v13297 = vpop.f32.mrf.mxu0
    %13298 = vmatprep.mubr.bf16.mxu0 %v13125
    %13299 = vmatmul.mubr.bf16.gmra.mxu0 %v13124
    %v13300 = vpop.f32.mrf.mxu0
    %v13301 = vadd.f32 %v12518, %v13300
    %v13302 = vpop.f32.mrf.mxu0
    %v13303 = vpop.f32.mrf.mxu0
    %v13304 = vadd.f32 %v12518, %v13303
    %v13305 = vpop.f32.mrf.mxu0
    %13306 = vmatprep.mubr.bf16.mxu0 %v13127
    %13307 = vmatmul.mubr.bf16.gmra.mxu0 %v13126
    %v13308 = vpop.f32.mrf.mxu0
    %v13309 = vadd.f32 %v12518, %v13308
    %v13310 = vpop.f32.mrf.mxu0
    %v13311 = vpop.f32.mrf.mxu0
    %v13312 = vadd.f32 %v12518, %v13311
    %v13313 = vpop.f32.mrf.mxu0
    %13314 = vmatprep.mubr.bf16.mxu0 %v13129
    %13315 = vmatmul.mubr.bf16.gmra.mxu0 %v13128
    %v13316 = vpop.f32.mrf.mxu0
    %v13317 = vadd.f32 %v12518, %v13316
    %v13318 = vpop.f32.mrf.mxu0
    %v13319 = vpop.f32.mrf.mxu0
    %v13320 = vadd.f32 %v12518, %v13319
    %v13321 = vpop.f32.mrf.mxu0
    %13322 = vdwg.mxu0
    %s13323 = scalar_lea.vmem [#allocation3], 256
    %13324 = vst [vmem:[%s13323] sm:$0xff] %v13197
    %13325 = vst [vmem:[%s13323 + $0x8] sm:$0xff] %v13200
    %13326 = vst [vmem:[%s13323 + $0x10] sm:$0xff] %v13205
    %13327 = vst [vmem:[%s13323 + $0x18] sm:$0xff] %v13208
    %13328 = vst [vmem:[%s13323 + $0x20] sm:$0xff] %v13213
    %13329 = vst [vmem:[%s13323 + $0x28] sm:$0xff] %v13216
    %13330 = vst [vmem:[%s13323 + $0x30] sm:$0xff] %v13221
    %13331 = vst [vmem:[%s13323 + $0x38] sm:$0xff] %v13224
    %13332 = vst [vmem:[%s13323 + $0x40] sm:$0xff] %v13229
    %13333 = vst [vmem:[%s13323 + $0x48] sm:$0xff] %v13232
    %13334 = vst [vmem:[%s13323 + $0x50] sm:$0xff] %v13237
    %13335 = vst [vmem:[%s13323 + $0x58] sm:$0xff] %v13240
    %13336 = vst [vmem:[%s13323 + $0x60] sm:$0xff] %v13245
    %13337 = vst [vmem:[%s13323 + $0x68] sm:$0xff] %v13248
    %13338 = vst [vmem:[%s13323 + $0x70] sm:$0xff] %v13253
    %13339 = vst [vmem:[%s13323 + $0x78] sm:$0xff] %v13256
    %13340 = vst [vmem:[%s13323 + $0x80] sm:$0xff] %v13261
    %13341 = vst [vmem:[%s13323 + $0x88] sm:$0xff] %v13264
    %13342 = vst [vmem:[%s13323 + $0x90] sm:$0xff] %v13269
    %13343 = vst [vmem:[%s13323 + $0x98] sm:$0xff] %v13272
    %13344 = vst [vmem:[%s13323 + $0xa0] sm:$0xff] %v13277
    %13345 = vst [vmem:[%s13323 + $0xa8] sm:$0xff] %v13280
    %13346 = vst [vmem:[%s13323 + $0xb0] sm:$0xff] %v13285
    %13347 = vst [vmem:[%s13323 + $0xb8] sm:$0xff] %v13288
    %13348 = vst [vmem:[%s13323 + $0xc0] sm:$0xff] %v13293
    %13349 = vst [vmem:[%s13323 + $0xc8] sm:$0xff] %v13296
    %13350 = vst [vmem:[%s13323 + $0xd0] sm:$0xff] %v13301
    %13351 = vst [vmem:[%s13323 + $0xd8] sm:$0xff] %v13304
    %13352 = vst [vmem:[%s13323 + $0xe0] sm:$0xff] %v13309
    %13353 = vst [vmem:[%s13323 + $0xe8] sm:$0xff] %v13312
    %13354 = vst [vmem:[%s13323 + $0xf0] sm:$0xff] %v13317
    %13355 = vst [vmem:[%s13323 + $0xf8] sm:$0xff] %v13320
    %s13356 = scalar_lea.vmem [#allocation2], 512
    %v13357 = vld [vmem:[%s13356] sm:$0xff]
    %v13358 = vld [vmem:[%s13356 + $0x8] sm:$0xff]
    %v13359 = vld [vmem:[%s13356 + $0x10] sm:$0xff]
    %v13360 = vld [vmem:[%s13356 + $0x18] sm:$0xff]
    %v13361 = vld [vmem:[%s13356 + $0x20] sm:$0xff]
    %v13362 = vld [vmem:[%s13356 + $0x28] sm:$0xff]
    %v13363 = vld [vmem:[%s13356 + $0x30] sm:$0xff]
    %v13364 = vld [vmem:[%s13356 + $0x38] sm:$0xff]
    %v13365 = vld [vmem:[%s13356 + $0x40] sm:$0xff]
    %v13366 = vld [vmem:[%s13356 + $0x48] sm:$0xff]
    %v13367 = vld [vmem:[%s13356 + $0x50] sm:$0xff]
    %v13368 = vld [vmem:[%s13356 + $0x58] sm:$0xff]
    %v13369 = vld [vmem:[%s13356 + $0x60] sm:$0xff]
    %v13370 = vld [vmem:[%s13356 + $0x68] sm:$0xff]
    %v13371 = vld [vmem:[%s13356 + $0x70] sm:$0xff]
    %v13372 = vld [vmem:[%s13356 + $0x78] sm:$0xff]
    %v13373 = vld [vmem:[%s13356 + $0x80] sm:$0xff]
    %v13374 = vld [vmem:[%s13356 + $0x88] sm:$0xff]
    %v13375 = vld [vmem:[%s13356 + $0x90] sm:$0xff]
    %v13376 = vld [vmem:[%s13356 + $0x98] sm:$0xff]
    %v13377 = vld [vmem:[%s13356 + $0xa0] sm:$0xff]
    %v13378 = vld [vmem:[%s13356 + $0xa8] sm:$0xff]
    %v13379 = vld [vmem:[%s13356 + $0xb0] sm:$0xff]
    %v13380 = vld [vmem:[%s13356 + $0xb8] sm:$0xff]
    %v13381 = vld [vmem:[%s13356 + $0xc0] sm:$0xff]
    %v13382 = vld [vmem:[%s13356 + $0xc8] sm:$0xff]
    %v13383 = vld [vmem:[%s13356 + $0xd0] sm:$0xff]
    %v13384 = vld [vmem:[%s13356 + $0xd8] sm:$0xff]
    %v13385 = vld [vmem:[%s13356 + $0xe0] sm:$0xff]
    %v13386 = vld [vmem:[%s13356 + $0xe8] sm:$0xff]
    %v13387 = vld [vmem:[%s13356 + $0xf0] sm:$0xff]
    %v13388 = vld [vmem:[%s13356 + $0xf8] sm:$0xff]
    %v13421 = vunpack.c.l.b16 %v13357
    %v13422 = vunpack.c.h.b16 %v13357
    %v13423 = vunpack.c.l.b16 %v13358
    %v13424 = vunpack.c.h.b16 %v13358
    %v13425 = vunpack.c.l.b16 %v13359
    %v13426 = vunpack.c.h.b16 %v13359
    %v13427 = vunpack.c.l.b16 %v13360
    %v13428 = vunpack.c.h.b16 %v13360
    %v13429 = vunpack.c.l.b16 %v13361
    %v13430 = vunpack.c.h.b16 %v13361
    %v13431 = vunpack.c.l.b16 %v13362
    %v13432 = vunpack.c.h.b16 %v13362
    %v13433 = vunpack.c.l.b16 %v13363
    %v13434 = vunpack.c.h.b16 %v13363
    %v13435 = vunpack.c.l.b16 %v13364
    %v13436 = vunpack.c.h.b16 %v13364
    %v13437 = vunpack.c.l.b16 %v13365
    %v13438 = vunpack.c.h.b16 %v13365
    %v13439 = vunpack.c.l.b16 %v13366
    %v13440 = vunpack.c.h.b16 %v13366
    %v13441 = vunpack.c.l.b16 %v13367
    %v13442 = vunpack.c.h.b16 %v13367
    %v13443 = vunpack.c.l.b16 %v13368
    %v13444 = vunpack.c.h.b16 %v13368
    %v13445 = vunpack.c.l.b16 %v13369
    %v13446 = vunpack.c.h.b16 %v13369
    %v13447 = vunpack.c.l.b16 %v13370
    %v13448 = vunpack.c.h.b16 %v13370
    %v13449 = vunpack.c.l.b16 %v13371
    %v13450 = vunpack.c.h.b16 %v13371
    %v13451 = vunpack.c.l.b16 %v13372
    %v13452 = vunpack.c.h.b16 %v13372
    %v13453 = vunpack.c.l.b16 %v13373
    %v13454 = vunpack.c.h.b16 %v13373
    %v13455 = vunpack.c.l.b16 %v13374
    %v13456 = vunpack.c.h.b16 %v13374
    %v13457 = vunpack.c.l.b16 %v13375
    %v13458 = vunpack.c.h.b16 %v13375
    %v13459 = vunpack.c.l.b16 %v13376
    %v13460 = vunpack.c.h.b16 %v13376
    %v13461 = vunpack.c.l.b16 %v13377
    %v13462 = vunpack.c.h.b16 %v13377
    %v13463 = vunpack.c.l.b16 %v13378
    %v13464 = vunpack.c.h.b16 %v13378
    %v13465 = vunpack.c.l.b16 %v13379
    %v13466 = vunpack.c.h.b16 %v13379
    %v13467 = vunpack.c.l.b16 %v13380
    %v13468 = vunpack.c.h.b16 %v13380
    %v13469 = vunpack.c.l.b16 %v13381
    %v13470 = vunpack.c.h.b16 %v13381
    %v13471 = vunpack.c.l.b16 %v13382
    %v13472 = vunpack.c.h.b16 %v13382
    %v13473 = vunpack.c.l.b16 %v13383
    %v13474 = vunpack.c.h.b16 %v13383
    %v13475 = vunpack.c.l.b16 %v13384
    %v13476 = vunpack.c.h.b16 %v13384
    %v13477 = vunpack.c.l.b16 %v13385
    %v13478 = vunpack.c.h.b16 %v13385
    %v13479 = vunpack.c.l.b16 %v13386
    %v13480 = vunpack.c.h.b16 %v13386
    %v13481 = vunpack.c.l.b16 %v13387
    %v13482 = vunpack.c.h.b16 %v13387
    %v13483 = vunpack.c.l.b16 %v13388
    %v13484 = vunpack.c.h.b16 %v13388
    %v13485 = vpack.c.b16 %v13423, %v13421
    %v13486 = vpack.c.b16 %v13424, %v13422
    %v13487 = vpack.c.b16 %v13427, %v13425
    %v13488 = vpack.c.b16 %v13428, %v13426
    %v13489 = vpack.c.b16 %v13431, %v13429
    %v13490 = vpack.c.b16 %v13432, %v13430
    %v13491 = vpack.c.b16 %v13435, %v13433
    %v13492 = vpack.c.b16 %v13436, %v13434
    %v13493 = vpack.c.b16 %v13439, %v13437
    %v13494 = vpack.c.b16 %v13440, %v13438
    %v13495 = vpack.c.b16 %v13443, %v13441
    %v13496 = vpack.c.b16 %v13444, %v13442
    %v13497 = vpack.c.b16 %v13447, %v13445
    %v13498 = vpack.c.b16 %v13448, %v13446
    %v13499 = vpack.c.b16 %v13451, %v13449
    %v13500 = vpack.c.b16 %v13452, %v13450
    %v13501 = vpack.c.b16 %v13455, %v13453
    %v13502 = vpack.c.b16 %v13456, %v13454
    %v13503 = vpack.c.b16 %v13459, %v13457
    %v13504 = vpack.c.b16 %v13460, %v13458
    %v13505 = vpack.c.b16 %v13463, %v13461
    %v13506 = vpack.c.b16 %v13464, %v13462
    %v13507 = vpack.c.b16 %v13467, %v13465
    %v13508 = vpack.c.b16 %v13468, %v13466
    %v13509 = vpack.c.b16 %v13471, %v13469
    %v13510 = vpack.c.b16 %v13472, %v13470
    %v13511 = vpack.c.b16 %v13475, %v13473
    %v13512 = vpack.c.b16 %v13476, %v13474
    %v13513 = vpack.c.b16 %v13479, %v13477
    %v13514 = vpack.c.b16 %v13480, %v13478
    %v13515 = vpack.c.b16 %v13483, %v13481
    %v13516 = vpack.c.b16 %v13484, %v13482
    %13549 = vmatprep.subr.bf16.mxu0 0
    %13550 = vmatpush1.bf16.msra.mxu0 %v12751
    %13551 = vmatprep.subr.bf16.mxu0 0
    %13552 = vmatpush1.bf16.msra.mxu0 %v12750
    %13553 = vmatprep.subr.bf16.mxu0 0
    %13554 = vmatpush1.bf16.msra.mxu0 %v12749
    %13555 = vmatprep.subr.bf16.mxu0 0
    %13556 = vmatpush1.bf16.msra.mxu0 %v12748
    %13557 = vmatprep.subr.bf16.mxu0 0
    %13558 = vmatpush1.bf16.msra.mxu0 %v12747
    %13559 = vmatprep.subr.bf16.mxu0 0
    %13560 = vmatpush1.bf16.msra.mxu0 %v12746
    %13561 = vmatprep.subr.bf16.mxu0 0
    %13562 = vmatpush1.bf16.msra.mxu0 %v12745
    %13563 = vmatprep.subr.bf16.mxu0 0
    %13564 = vmatpush1.bf16.msra.mxu0 %v12744
    %13565 = vmatprep.subr.bf16.mxu0 0
    %13566 = vmatpush2.bf16.msra.mxu0 %v12759
    %13567 = vmatprep.subr.bf16.mxu0 0
    %13568 = vmatpush2.bf16.msra.mxu0 %v12758
    %13569 = vmatprep.subr.bf16.mxu0 0
    %13570 = vmatpush2.bf16.msra.mxu0 %v12757
    %13571 = vmatprep.subr.bf16.mxu0 0
    %13572 = vmatpush2.bf16.msra.mxu0 %v12756
    %13573 = vmatprep.subr.bf16.mxu0 0
    %13574 = vmatpush2.bf16.msra.mxu0 %v12755
    %13575 = vmatprep.subr.bf16.mxu0 0
    %13576 = vmatpush2.bf16.msra.mxu0 %v12754
    %13577 = vmatprep.subr.bf16.mxu0 0
    %13578 = vmatpush2.bf16.msra.mxu0 %v12753
    %13579 = vmatprep.subr.bf16.mxu0 0
    %13580 = vmatpush2.bf16.msra.mxu0 %v12752
    %13581 = vmatprep.mubr.bf16.mxu0 %v13486
    %13582 = vmatmul.mubr.bf16.gmra.mxu0 %v13485
    %v13583 = vpop.f32.mrf.mxu0
    %v13584 = vadd.f32 %v12518, %v13583
    %v13585 = vpop.f32.mrf.mxu0
    %v13586 = vpop.f32.mrf.mxu0
    %v13587 = vadd.f32 %v12518, %v13586
    %v13588 = vpop.f32.mrf.mxu0
    %13589 = vmatprep.mubr.bf16.mxu0 %v13488
    %13590 = vmatmul.mubr.bf16.gmra.mxu0 %v13487
    %v13591 = vpop.f32.mrf.mxu0
    %v13592 = vadd.f32 %v12518, %v13591
    %v13593 = vpop.f32.mrf.mxu0
    %v13594 = vpop.f32.mrf.mxu0
    %v13595 = vadd.f32 %v12518, %v13594
    %v13596 = vpop.f32.mrf.mxu0
    %13597 = vmatprep.mubr.bf16.mxu0 %v13490
    %13598 = vmatmul.mubr.bf16.gmra.mxu0 %v13489
    %v13599 = vpop.f32.mrf.mxu0
    %v13600 = vadd.f32 %v12518, %v13599
    %v13601 = vpop.f32.mrf.mxu0
    %v13602 = vpop.f32.mrf.mxu0
    %v13603 = vadd.f32 %v12518, %v13602
    %v13604 = vpop.f32.mrf.mxu0
    %13605 = vmatprep.mubr.bf16.mxu0 %v13492
    %13606 = vmatmul.mubr.bf16.gmra.mxu0 %v13491
    %v13607 = vpop.f32.mrf.mxu0
    %v13608 = vadd.f32 %v12518, %v13607
    %v13609 = vpop.f32.mrf.mxu0
    %v13610 = vpop.f32.mrf.mxu0
    %v13611 = vadd.f32 %v12518, %v13610
    %v13612 = vpop.f32.mrf.mxu0
    %13613 = vmatprep.mubr.bf16.mxu0 %v13494
    %13614 = vmatmul.mubr.bf16.gmra.mxu0 %v13493
    %v13615 = vpop.f32.mrf.mxu0
    %v13616 = vadd.f32 %v12518, %v13615
    %v13617 = vpop.f32.mrf.mxu0
    %v13618 = vpop.f32.mrf.mxu0
    %v13619 = vadd.f32 %v12518, %v13618
    %v13620 = vpop.f32.mrf.mxu0
    %13621 = vmatprep.mubr.bf16.mxu0 %v13496
    %13622 = vmatmul.mubr.bf16.gmra.mxu0 %v13495
    %v13623 = vpop.f32.mrf.mxu0
    %v13624 = vadd.f32 %v12518, %v13623
    %v13625 = vpop.f32.mrf.mxu0
    %v13626 = vpop.f32.mrf.mxu0
    %v13627 = vadd.f32 %v12518, %v13626
    %v13628 = vpop.f32.mrf.mxu0
    %13629 = vmatprep.mubr.bf16.mxu0 %v13498
    %13630 = vmatmul.mubr.bf16.gmra.mxu0 %v13497
    %v13631 = vpop.f32.mrf.mxu0
    %v13632 = vadd.f32 %v12518, %v13631
    %v13633 = vpop.f32.mrf.mxu0
    %v13634 = vpop.f32.mrf.mxu0
    %v13635 = vadd.f32 %v12518, %v13634
    %v13636 = vpop.f32.mrf.mxu0
    %13637 = vmatprep.mubr.bf16.mxu0 %v13500
    %13638 = vmatmul.mubr.bf16.gmra.mxu0 %v13499
    %v13639 = vpop.f32.mrf.mxu0
    %v13640 = vadd.f32 %v12518, %v13639
    %v13641 = vpop.f32.mrf.mxu0
    %v13642 = vpop.f32.mrf.mxu0
    %v13643 = vadd.f32 %v12518, %v13642
    %v13644 = vpop.f32.mrf.mxu0
    %13645 = vmatprep.mubr.bf16.mxu0 %v13502
    %13646 = vmatmul.mubr.bf16.gmra.mxu0 %v13501
    %v13647 = vpop.f32.mrf.mxu0
    %v13648 = vadd.f32 %v12518, %v13647
    %v13649 = vpop.f32.mrf.mxu0
    %v13650 = vpop.f32.mrf.mxu0
    %v13651 = vadd.f32 %v12518, %v13650
    %v13652 = vpop.f32.mrf.mxu0
    %13653 = vmatprep.mubr.bf16.mxu0 %v13504
    %13654 = vmatmul.mubr.bf16.gmra.mxu0 %v13503
    %v13655 = vpop.f32.mrf.mxu0
    %v13656 = vadd.f32 %v12518, %v13655
    %v13657 = vpop.f32.mrf.mxu0
    %v13658 = vpop.f32.mrf.mxu0
    %v13659 = vadd.f32 %v12518, %v13658
    %v13660 = vpop.f32.mrf.mxu0
    %13661 = vmatprep.mubr.bf16.mxu0 %v13506
    %13662 = vmatmul.mubr.bf16.gmra.mxu0 %v13505
    %v13663 = vpop.f32.mrf.mxu0
    %v13664 = vadd.f32 %v12518, %v13663
    %v13665 = vpop.f32.mrf.mxu0
    %v13666 = vpop.f32.mrf.mxu0
    %v13667 = vadd.f32 %v12518, %v13666
    %v13668 = vpop.f32.mrf.mxu0
    %13669 = vmatprep.mubr.bf16.mxu0 %v13508
    %13670 = vmatmul.mubr.bf16.gmra.mxu0 %v13507
    %v13671 = vpop.f32.mrf.mxu0
    %v13672 = vadd.f32 %v12518, %v13671
    %v13673 = vpop.f32.mrf.mxu0
    %v13674 = vpop.f32.mrf.mxu0
    %v13675 = vadd.f32 %v12518, %v13674
    %v13676 = vpop.f32.mrf.mxu0
    %13677 = vmatprep.mubr.bf16.mxu0 %v13510
    %13678 = vmatmul.mubr.bf16.gmra.mxu0 %v13509
    %v13679 = vpop.f32.mrf.mxu0
    %v13680 = vadd.f32 %v12518, %v13679
    %v13681 = vpop.f32.mrf.mxu0
    %v13682 = vpop.f32.mrf.mxu0
    %v13683 = vadd.f32 %v12518, %v13682
    %v13684 = vpop.f32.mrf.mxu0
    %13685 = vmatprep.mubr.bf16.mxu0 %v13512
    %13686 = vmatmul.mubr.bf16.gmra.mxu0 %v13511
    %v13687 = vpop.f32.mrf.mxu0
    %v13688 = vadd.f32 %v12518, %v13687
    %v13689 = vpop.f32.mrf.mxu0
    %v13690 = vpop.f32.mrf.mxu0
    %v13691 = vadd.f32 %v12518, %v13690
    %v13692 = vpop.f32.mrf.mxu0
    %13693 = vmatprep.mubr.bf16.mxu0 %v13514
    %13694 = vmatmul.mubr.bf16.gmra.mxu0 %v13513
    %v13695 = vpop.f32.mrf.mxu0
    %v13696 = vadd.f32 %v12518, %v13695
    %v13697 = vpop.f32.mrf.mxu0
    %v13698 = vpop.f32.mrf.mxu0
    %v13699 = vadd.f32 %v12518, %v13698
    %v13700 = vpop.f32.mrf.mxu0
    %13701 = vmatprep.mubr.bf16.mxu0 %v13516
    %13702 = vmatmul.mubr.bf16.gmra.mxu0 %v13515
    %v13703 = vpop.f32.mrf.mxu0
    %v13704 = vadd.f32 %v12518, %v13703
    %v13705 = vpop.f32.mrf.mxu0
    %v13706 = vpop.f32.mrf.mxu0
    %v13707 = vadd.f32 %v12518, %v13706
    %v13708 = vpop.f32.mrf.mxu0
    %13709 = vdwg.mxu0
    %s13710 = scalar_lea.vmem [#allocation3], 512
    %13711 = vst [vmem:[%s13710] sm:$0xff] %v13584
    %13712 = vst [vmem:[%s13710 + $0x8] sm:$0xff] %v13587
    %13713 = vst [vmem:[%s13710 + $0x10] sm:$0xff] %v13592
    %13714 = vst [vmem:[%s13710 + $0x18] sm:$0xff] %v13595
    %13715 = vst [vmem:[%s13710 + $0x20] sm:$0xff] %v13600
    %13716 = vst [vmem:[%s13710 + $0x28] sm:$0xff] %v13603
    %13717 = vst [vmem:[%s13710 + $0x30] sm:$0xff] %v13608
    %13718 = vst [vmem:[%s13710 + $0x38] sm:$0xff] %v13611
    %13719 = vst [vmem:[%s13710 + $0x40] sm:$0xff] %v13616
    %13720 = vst [vmem:[%s13710 + $0x48] sm:$0xff] %v13619
    %13721 = vst [vmem:[%s13710 + $0x50] sm:$0xff] %v13624
    %13722 = vst [vmem:[%s13710 + $0x58] sm:$0xff] %v13627
    %13723 = vst [vmem:[%s13710 + $0x60] sm:$0xff] %v13632
    %13724 = vst [vmem:[%s13710 + $0x68] sm:$0xff] %v13635
    %13725 = vst [vmem:[%s13710 + $0x70] sm:$0xff] %v13640
    %13726 = vst [vmem:[%s13710 + $0x78] sm:$0xff] %v13643
    %13727 = vst [vmem:[%s13710 + $0x80] sm:$0xff] %v13648
    %13728 = vst [vmem:[%s13710 + $0x88] sm:$0xff] %v13651
    %13729 = vst [vmem:[%s13710 + $0x90] sm:$0xff] %v13656
    %13730 = vst [vmem:[%s13710 + $0x98] sm:$0xff] %v13659
    %13731 = vst [vmem:[%s13710 + $0xa0] sm:$0xff] %v13664
    %13732 = vst [vmem:[%s13710 + $0xa8] sm:$0xff] %v13667
    %13733 = vst [vmem:[%s13710 + $0xb0] sm:$0xff] %v13672
    %13734 = vst [vmem:[%s13710 + $0xb8] sm:$0xff] %v13675
    %13735 = vst [vmem:[%s13710 + $0xc0] sm:$0xff] %v13680
    %13736 = vst [vmem:[%s13710 + $0xc8] sm:$0xff] %v13683
    %13737 = vst [vmem:[%s13710 + $0xd0] sm:$0xff] %v13688
    %13738 = vst [vmem:[%s13710 + $0xd8] sm:$0xff] %v13691
    %13739 = vst [vmem:[%s13710 + $0xe0] sm:$0xff] %v13696
    %13740 = vst [vmem:[%s13710 + $0xe8] sm:$0xff] %v13699
    %13741 = vst [vmem:[%s13710 + $0xf0] sm:$0xff] %v13704
    %13742 = vst [vmem:[%s13710 + $0xf8] sm:$0xff] %v13707
    %s13743 = scalar_lea.vmem [#allocation2], 768
    %v13744 = vld [vmem:[%s13743] sm:$0xff]
    %v13745 = vld [vmem:[%s13743 + $0x8] sm:$0xff]
    %v13746 = vld [vmem:[%s13743 + $0x10] sm:$0xff]
    %v13747 = vld [vmem:[%s13743 + $0x18] sm:$0xff]
    %v13748 = vld [vmem:[%s13743 + $0x20] sm:$0xff]
    %v13749 = vld [vmem:[%s13743 + $0x28] sm:$0xff]
    %v13750 = vld [vmem:[%s13743 + $0x30] sm:$0xff]
    %v13751 = vld [vmem:[%s13743 + $0x38] sm:$0xff]
    %v13752 = vld [vmem:[%s13743 + $0x40] sm:$0xff]
    %v13753 = vld [vmem:[%s13743 + $0x48] sm:$0xff]
    %v13754 = vld [vmem:[%s13743 + $0x50] sm:$0xff]
    %v13755 = vld [vmem:[%s13743 + $0x58] sm:$0xff]
    %v13756 = vld [vmem:[%s13743 + $0x60] sm:$0xff]
    %v13757 = vld [vmem:[%s13743 + $0x68] sm:$0xff]
    %v13758 = vld [vmem:[%s13743 + $0x70] sm:$0xff]
    %v13759 = vld [vmem:[%s13743 + $0x78] sm:$0xff]
    %v13760 = vld [vmem:[%s13743 + $0x80] sm:$0xff]
    %v13761 = vld [vmem:[%s13743 + $0x88] sm:$0xff]
    %v13762 = vld [vmem:[%s13743 + $0x90] sm:$0xff]
    %v13763 = vld [vmem:[%s13743 + $0x98] sm:$0xff]
    %v13764 = vld [vmem:[%s13743 + $0xa0] sm:$0xff]
    %v13765 = vld [vmem:[%s13743 + $0xa8] sm:$0xff]
    %v13766 = vld [vmem:[%s13743 + $0xb0] sm:$0xff]
    %v13767 = vld [vmem:[%s13743 + $0xb8] sm:$0xff]
    %v13768 = vld [vmem:[%s13743 + $0xc0] sm:$0xff]
    %v13769 = vld [vmem:[%s13743 + $0xc8] sm:$0xff]
    %v13770 = vld [vmem:[%s13743 + $0xd0] sm:$0xff]
    %v13771 = vld [vmem:[%s13743 + $0xd8] sm:$0xff]
    %v13772 = vld [vmem:[%s13743 + $0xe0] sm:$0xff]
    %v13773 = vld [vmem:[%s13743 + $0xe8] sm:$0xff]
    %v13774 = vld [vmem:[%s13743 + $0xf0] sm:$0xff]
    %v13775 = vld [vmem:[%s13743 + $0xf8] sm:$0xff]
    %v13808 = vunpack.c.l.b16 %v13744
    %v13809 = vunpack.c.h.b16 %v13744
    %v13810 = vunpack.c.l.b16 %v13745
    %v13811 = vunpack.c.h.b16 %v13745
    %v13812 = vunpack.c.l.b16 %v13746
    %v13813 = vunpack.c.h.b16 %v13746
    %v13814 = vunpack.c.l.b16 %v13747
    %v13815 = vunpack.c.h.b16 %v13747
    %v13816 = vunpack.c.l.b16 %v13748
    %v13817 = vunpack.c.h.b16 %v13748
    %v13818 = vunpack.c.l.b16 %v13749
    %v13819 = vunpack.c.h.b16 %v13749
    %v13820 = vunpack.c.l.b16 %v13750
    %v13821 = vunpack.c.h.b16 %v13750
    %v13822 = vunpack.c.l.b16 %v13751
    %v13823 = vunpack.c.h.b16 %v13751
    %v13824 = vunpack.c.l.b16 %v13752
    %v13825 = vunpack.c.h.b16 %v13752
    %v13826 = vunpack.c.l.b16 %v13753
    %v13827 = vunpack.c.h.b16 %v13753
    %v13828 = vunpack.c.l.b16 %v13754
    %v13829 = vunpack.c.h.b16 %v13754
    %v13830 = vunpack.c.l.b16 %v13755
    %v13831 = vunpack.c.h.b16 %v13755
    %v13832 = vunpack.c.l.b16 %v13756
    %v13833 = vunpack.c.h.b16 %v13756
    %v13834 = vunpack.c.l.b16 %v13757
    %v13835 = vunpack.c.h.b16 %v13757
    %v13836 = vunpack.c.l.b16 %v13758
    %v13837 = vunpack.c.h.b16 %v13758
    %v13838 = vunpack.c.l.b16 %v13759
    %v13839 = vunpack.c.h.b16 %v13759
    %v13840 = vunpack.c.l.b16 %v13760
    %v13841 = vunpack.c.h.b16 %v13760
    %v13842 = vunpack.c.l.b16 %v13761
    %v13843 = vunpack.c.h.b16 %v13761
    %v13844 = vunpack.c.l.b16 %v13762
    %v13845 = vunpack.c.h.b16 %v13762
    %v13846 = vunpack.c.l.b16 %v13763
    %v13847 = vunpack.c.h.b16 %v13763
    %v13848 = vunpack.c.l.b16 %v13764
    %v13849 = vunpack.c.h.b16 %v13764
    %v13850 = vunpack.c.l.b16 %v13765
    %v13851 = vunpack.c.h.b16 %v13765
    %v13852 = vunpack.c.l.b16 %v13766
    %v13853 = vunpack.c.h.b16 %v13766
    %v13854 = vunpack.c.l.b16 %v13767
    %v13855 = vunpack.c.h.b16 %v13767
    %v13856 = vunpack.c.l.b16 %v13768
    %v13857 = vunpack.c.h.b16 %v13768
    %v13858 = vunpack.c.l.b16 %v13769
    %v13859 = vunpack.c.h.b16 %v13769
    %v13860 = vunpack.c.l.b16 %v13770
    %v13861 = vunpack.c.h.b16 %v13770
    %v13862 = vunpack.c.l.b16 %v13771
    %v13863 = vunpack.c.h.b16 %v13771
    %v13864 = vunpack.c.l.b16 %v13772
    %v13865 = vunpack.c.h.b16 %v13772
    %v13866 = vunpack.c.l.b16 %v13773
    %v13867 = vunpack.c.h.b16 %v13773
    %v13868 = vunpack.c.l.b16 %v13774
    %v13869 = vunpack.c.h.b16 %v13774
    %v13870 = vunpack.c.l.b16 %v13775
    %v13871 = vunpack.c.h.b16 %v13775
    %v13872 = vpack.c.b16 %v13810, %v13808
    %v13873 = vpack.c.b16 %v13811, %v13809
    %v13874 = vpack.c.b16 %v13814, %v13812
    %v13875 = vpack.c.b16 %v13815, %v13813
    %v13876 = vpack.c.b16 %v13818, %v13816
    %v13877 = vpack.c.b16 %v13819, %v13817
    %v13878 = vpack.c.b16 %v13822, %v13820
    %v13879 = vpack.c.b16 %v13823, %v13821
    %v13880 = vpack.c.b16 %v13826, %v13824
    %v13881 = vpack.c.b16 %v13827, %v13825
    %v13882 = vpack.c.b16 %v13830, %v13828
    %v13883 = vpack.c.b16 %v13831, %v13829
    %v13884 = vpack.c.b16 %v13834, %v13832
    %v13885 = vpack.c.b16 %v13835, %v13833
    %v13886 = vpack.c.b16 %v13838, %v13836
    %v13887 = vpack.c.b16 %v13839, %v13837
    %v13888 = vpack.c.b16 %v13842, %v13840
    %v13889 = vpack.c.b16 %v13843, %v13841
    %v13890 = vpack.c.b16 %v13846, %v13844
    %v13891 = vpack.c.b16 %v13847, %v13845
    %v13892 = vpack.c.b16 %v13850, %v13848
    %v13893 = vpack.c.b16 %v13851, %v13849
    %v13894 = vpack.c.b16 %v13854, %v13852
    %v13895 = vpack.c.b16 %v13855, %v13853
    %v13896 = vpack.c.b16 %v13858, %v13856
    %v13897 = vpack.c.b16 %v13859, %v13857
    %v13898 = vpack.c.b16 %v13862, %v13860
    %v13899 = vpack.c.b16 %v13863, %v13861
    %v13900 = vpack.c.b16 %v13866, %v13864
    %v13901 = vpack.c.b16 %v13867, %v13865
    %v13902 = vpack.c.b16 %v13870, %v13868
    %v13903 = vpack.c.b16 %v13871, %v13869
    %13936 = vmatprep.subr.bf16.mxu0 0
    %13937 = vmatpush1.bf16.msra.mxu0 %v12751
    %13938 = vmatprep.subr.bf16.mxu0 0
    %13939 = vmatpush1.bf16.msra.mxu0 %v12750
    %13940 = vmatprep.subr.bf16.mxu0 0
    %13941 = vmatpush1.bf16.msra.mxu0 %v12749
    %13942 = vmatprep.subr.bf16.mxu0 0
    %13943 = vmatpush1.bf16.msra.mxu0 %v12748
    %13944 = vmatprep.subr.bf16.mxu0 0
    %13945 = vmatpush1.bf16.msra.mxu0 %v12747
    %13946 = vmatprep.subr.bf16.mxu0 0
    %13947 = vmatpush1.bf16.msra.mxu0 %v12746
    %13948 = vmatprep.subr.bf16.mxu0 0
    %13949 = vmatpush1.bf16.msra.mxu0 %v12745
    %13950 = vmatprep.subr.bf16.mxu0 0
    %13951 = vmatpush1.bf16.msra.mxu0 %v12744
    %13952 = vmatprep.subr.bf16.mxu0 0
    %13953 = vmatpush2.bf16.msra.mxu0 %v12759
    %13954 = vmatprep.subr.bf16.mxu0 0
    %13955 = vmatpush2.bf16.msra.mxu0 %v12758
    %13956 = vmatprep.subr.bf16.mxu0 0
    %13957 = vmatpush2.bf16.msra.mxu0 %v12757
    %13958 = vmatprep.subr.bf16.mxu0 0
    %13959 = vmatpush2.bf16.msra.mxu0 %v12756
    %13960 = vmatprep.subr.bf16.mxu0 0
    %13961 = vmatpush2.bf16.msra.mxu0 %v12755
    %13962 = vmatprep.subr.bf16.mxu0 0
    %13963 = vmatpush2.bf16.msra.mxu0 %v12754
    %13964 = vmatprep.subr.bf16.mxu0 0
    %13965 = vmatpush2.bf16.msra.mxu0 %v12753
    %13966 = vmatprep.subr.bf16.mxu0 0
    %13967 = vmatpush2.bf16.msra.mxu0 %v12752
    %13968 = vmatprep.mubr.bf16.mxu0 %v13873
    %13969 = vmatmul.mubr.bf16.gmra.mxu0 %v13872
    %v13970 = vpop.f32.mrf.mxu0
    %v13971 = vadd.f32 %v12518, %v13970
    %v13972 = vpop.f32.mrf.mxu0
    %v13973 = vpop.f32.mrf.mxu0
    %v13974 = vadd.f32 %v12518, %v13973
    %v13975 = vpop.f32.mrf.mxu0
    %13976 = vmatprep.mubr.bf16.mxu0 %v13875
    %13977 = vmatmul.mubr.bf16.gmra.mxu0 %v13874
    %v13978 = vpop.f32.mrf.mxu0
    %v13979 = vadd.f32 %v12518, %v13978
    %v13980 = vpop.f32.mrf.mxu0
    %v13981 = vpop.f32.mrf.mxu0
    %v13982 = vadd.f32 %v12518, %v13981
    %v13983 = vpop.f32.mrf.mxu0
    %13984 = vmatprep.mubr.bf16.mxu0 %v13877
    %13985 = vmatmul.mubr.bf16.gmra.mxu0 %v13876
    %v13986 = vpop.f32.mrf.mxu0
    %v13987 = vadd.f32 %v12518, %v13986
    %v13988 = vpop.f32.mrf.mxu0
    %v13989 = vpop.f32.mrf.mxu0
    %v13990 = vadd.f32 %v12518, %v13989
    %v13991 = vpop.f32.mrf.mxu0
    %13992 = vmatprep.mubr.bf16.mxu0 %v13879
    %13993 = vmatmul.mubr.bf16.gmra.mxu0 %v13878
    %v13994 = vpop.f32.mrf.mxu0
    %v13995 = vadd.f32 %v12518, %v13994
    %v13996 = vpop.f32.mrf.mxu0
    %v13997 = vpop.f32.mrf.mxu0
    %v13998 = vadd.f32 %v12518, %v13997
    %v13999 = vpop.f32.mrf.mxu0
    %14000 = vmatprep.mubr.bf16.mxu0 %v13881
    %14001 = vmatmul.mubr.bf16.gmra.mxu0 %v13880
    %v14002 = vpop.f32.mrf.mxu0
    %v14003 = vadd.f32 %v12518, %v14002
    %v14004 = vpop.f32.mrf.mxu0
    %v14005 = vpop.f32.mrf.mxu0
    %v14006 = vadd.f32 %v12518, %v14005
    %v14007 = vpop.f32.mrf.mxu0
    %14008 = vmatprep.mubr.bf16.mxu0 %v13883
    %14009 = vmatmul.mubr.bf16.gmra.mxu0 %v13882
    %v14010 = vpop.f32.mrf.mxu0
    %v14011 = vadd.f32 %v12518, %v14010
    %v14012 = vpop.f32.mrf.mxu0
    %v14013 = vpop.f32.mrf.mxu0
    %v14014 = vadd.f32 %v12518, %v14013
    %v14015 = vpop.f32.mrf.mxu0
    %14016 = vmatprep.mubr.bf16.mxu0 %v13885
    %14017 = vmatmul.mubr.bf16.gmra.mxu0 %v13884
    %v14018 = vpop.f32.mrf.mxu0
    %v14019 = vadd.f32 %v12518, %v14018
    %v14020 = vpop.f32.mrf.mxu0
    %v14021 = vpop.f32.mrf.mxu0
    %v14022 = vadd.f32 %v12518, %v14021
    %v14023 = vpop.f32.mrf.mxu0
    %14024 = vmatprep.mubr.bf16.mxu0 %v13887
    %14025 = vmatmul.mubr.bf16.gmra.mxu0 %v13886
    %v14026 = vpop.f32.mrf.mxu0
    %v14027 = vadd.f32 %v12518, %v14026
    %v14028 = vpop.f32.mrf.mxu0
    %v14029 = vpop.f32.mrf.mxu0
    %v14030 = vadd.f32 %v12518, %v14029
    %v14031 = vpop.f32.mrf.mxu0
    %14032 = vmatprep.mubr.bf16.mxu0 %v13889
    %14033 = vmatmul.mubr.bf16.gmra.mxu0 %v13888
    %v14034 = vpop.f32.mrf.mxu0
    %v14035 = vadd.f32 %v12518, %v14034
    %v14036 = vpop.f32.mrf.mxu0
    %v14037 = vpop.f32.mrf.mxu0
    %v14038 = vadd.f32 %v12518, %v14037
    %v14039 = vpop.f32.mrf.mxu0
    %14040 = vmatprep.mubr.bf16.mxu0 %v13891
    %14041 = vmatmul.mubr.bf16.gmra.mxu0 %v13890
    %v14042 = vpop.f32.mrf.mxu0
    %v14043 = vadd.f32 %v12518, %v14042
    %v14044 = vpop.f32.mrf.mxu0
    %v14045 = vpop.f32.mrf.mxu0
    %v14046 = vadd.f32 %v12518, %v14045
    %v14047 = vpop.f32.mrf.mxu0
    %14048 = vmatprep.mubr.bf16.mxu0 %v13893
    %14049 = vmatmul.mubr.bf16.gmra.mxu0 %v13892
    %v14050 = vpop.f32.mrf.mxu0
    %v14051 = vadd.f32 %v12518, %v14050
    %v14052 = vpop.f32.mrf.mxu0
    %v14053 = vpop.f32.mrf.mxu0
    %v14054 = vadd.f32 %v12518, %v14053
    %v14055 = vpop.f32.mrf.mxu0
    %14056 = vmatprep.mubr.bf16.mxu0 %v13895
    %14057 = vmatmul.mubr.bf16.gmra.mxu0 %v13894
    %v14058 = vpop.f32.mrf.mxu0
    %v14059 = vadd.f32 %v12518, %v14058
    %v14060 = vpop.f32.mrf.mxu0
    %v14061 = vpop.f32.mrf.mxu0
    %v14062 = vadd.f32 %v12518, %v14061
    %v14063 = vpop.f32.mrf.mxu0
    %14064 = vmatprep.mubr.bf16.mxu0 %v13897
    %14065 = vmatmul.mubr.bf16.gmra.mxu0 %v13896
    %v14066 = vpop.f32.mrf.mxu0
    %v14067 = vadd.f32 %v12518, %v14066
    %v14068 = vpop.f32.mrf.mxu0
    %v14069 = vpop.f32.mrf.mxu0
    %v14070 = vadd.f32 %v12518, %v14069
    %v14071 = vpop.f32.mrf.mxu0
    %14072 = vmatprep.mubr.bf16.mxu0 %v13899
    %14073 = vmatmul.mubr.bf16.gmra.mxu0 %v13898
    %v14074 = vpop.f32.mrf.mxu0
    %v14075 = vadd.f32 %v12518, %v14074
    %v14076 = vpop.f32.mrf.mxu0
    %v14077 = vpop.f32.mrf.mxu0
    %v14078 = vadd.f32 %v12518, %v14077
    %v14079 = vpop.f32.mrf.mxu0
    %14080 = vmatprep.mubr.bf16.mxu0 %v13901
    %14081 = vmatmul.mubr.bf16.gmra.mxu0 %v13900
    %v14082 = vpop.f32.mrf.mxu0
    %v14083 = vadd.f32 %v12518, %v14082
    %v14084 = vpop.f32.mrf.mxu0
    %v14085 = vpop.f32.mrf.mxu0
    %v14086 = vadd.f32 %v12518, %v14085
    %v14087 = vpop.f32.mrf.mxu0
    %14088 = vmatprep.mubr.bf16.mxu0 %v13903
    %14089 = vmatmul.mubr.bf16.gmra.mxu0 %v13902
    %v14090 = vpop.f32.mrf.mxu0
    %v14091 = vadd.f32 %v12518, %v14090
    %v14092 = vpop.f32.mrf.mxu0
    %v14093 = vpop.f32.mrf.mxu0
    %v14094 = vadd.f32 %v12518, %v14093
    %v14095 = vpop.f32.mrf.mxu0
    %14096 = vdwg.mxu0
    %s14097 = scalar_lea.vmem [#allocation3], 768
    %14098 = vst [vmem:[%s14097] sm:$0xff] %v13971
    %14099 = vst [vmem:[%s14097 + $0x8] sm:$0xff] %v13974
    %14100 = vst [vmem:[%s14097 + $0x10] sm:$0xff] %v13979
    %14101 = vst [vmem:[%s14097 + $0x18] sm:$0xff] %v13982
    %14102 = vst [vmem:[%s14097 + $0x20] sm:$0xff] %v13987
    %14103 = vst [vmem:[%s14097 + $0x28] sm:$0xff] %v13990
    %14104 = vst [vmem:[%s14097 + $0x30] sm:$0xff] %v13995
    %14105 = vst [vmem:[%s14097 + $0x38] sm:$0xff] %v13998
    %14106 = vst [vmem:[%s14097 + $0x40] sm:$0xff] %v14003
    %14107 = vst [vmem:[%s14097 + $0x48] sm:$0xff] %v14006
    %14108 = vst [vmem:[%s14097 + $0x50] sm:$0xff] %v14011
    %14109 = vst [vmem:[%s14097 + $0x58] sm:$0xff] %v14014
    %14110 = vst [vmem:[%s14097 + $0x60] sm:$0xff] %v14019
    %14111 = vst [vmem:[%s14097 + $0x68] sm:$0xff] %v14022
    %14112 = vst [vmem:[%s14097 + $0x70] sm:$0xff] %v14027
    %14113 = vst [vmem:[%s14097 + $0x78] sm:$0xff] %v14030
    %14114 = vst [vmem:[%s14097 + $0x80] sm:$0xff] %v14035
    %14115 = vst [vmem:[%s14097 + $0x88] sm:$0xff] %v14038
    %14116 = vst [vmem:[%s14097 + $0x90] sm:$0xff] %v14043
    %14117 = vst [vmem:[%s14097 + $0x98] sm:$0xff] %v14046
    %14118 = vst [vmem:[%s14097 + $0xa0] sm:$0xff] %v14051
    %14119 = vst [vmem:[%s14097 + $0xa8] sm:$0xff] %v14054
    %14120 = vst [vmem:[%s14097 + $0xb0] sm:$0xff] %v14059
    %14121 = vst [vmem:[%s14097 + $0xb8] sm:$0xff] %v14062
    %14122 = vst [vmem:[%s14097 + $0xc0] sm:$0xff] %v14067
    %14123 = vst [vmem:[%s14097 + $0xc8] sm:$0xff] %v14070
    %14124 = vst [vmem:[%s14097 + $0xd0] sm:$0xff] %v14075
    %14125 = vst [vmem:[%s14097 + $0xd8] sm:$0xff] %v14078
    %14126 = vst [vmem:[%s14097 + $0xe0] sm:$0xff] %v14083
    %14127 = vst [vmem:[%s14097 + $0xe8] sm:$0xff] %v14086
    %14128 = vst [vmem:[%s14097 + $0xf0] sm:$0xff] %v14091
    %14129 = vst [vmem:[%s14097 + $0xf8] sm:$0xff] %v14094
    // Predicated region
    $region14: #{tpu_custom_call.1} parent=1 // pred_check
      _
    $region15: #{tpu_custom_call.1} parent=1 // pred_check_branch
      %14131 = sbr.rel (0) target = $region17
    $region16: #{tpu_custom_call.1} parent=1 // pred_region
      %s14133 = ssub.s32 16384, 16384
      %14134 = vsyncadd [#allocation4], %s14133
      %s14135 = sshll.u32 [#allocation3], 4
      %s14136 = int_to_ptr.vmem [resolvable:$true] %s14135
      %14141 = dma.vmem_to_hbm [thread:$0]  %s14136, 16384, %s3, [#allocation4], 128, 128, 8
    $region17: #{tpu_custom_call.1} parent=1 // pred_fallthru
      _
    // Predicated region
    $region18: #{tpu_custom_call.1} parent=1 // pred_check
      _
    $region19: #{tpu_custom_call.1} parent=1 // pred_check_branch
      %14143 = sbr.rel (0) target = $region21
    $region20: #{tpu_custom_call.1} parent=1 // pred_region
      %14144 = dma.done [#allocation4], 16384
    $region21: #{tpu_custom_call.1} parent=1 // pred_fallthru
      _
    %14145 = vsyncpa [#allocation4], 1

</llo_original>
